<compile_context>
chip_gen: v7x
topology: tpu7x:2x2x1
jax: 0.10.0
libtpu: 0.0.40
codegen_flags: <defaults>
</compile_context>

<pallas_src>
import functools
import math

import jax
import jax.numpy as jnp
from jax.experimental import pallas as pl
from jax.experimental.pallas import tpu as pltpu


_PARALLEL = pltpu.CompilerParams(dimension_semantics=("parallel",))


# ----------------------------------------------------------------------------
# Kernel A: input_rep + local_rep fused (per batch element)
# ----------------------------------------------------------------------------

def input_local_kernel(xp_ref, in_dw_w_ref, in_scale_ref, in_shift_ref,
                       in_pw_w_ref, in_pw_b_ref, loc_dw_w_ref, loc_dw_b_ref,
                       xe_ref, loc_ref, pad_ref):
    """xp:[1,H+2,W+2,Cin]  ->  xe:[1,H,W,D], loc:[1,H,W,D].

    pad_ref: VMEM scratch [H+2,W+2,D] used as the zero-padded halo for the
    local_rep depthwise conv (avoids an HBM round trip + XLA pad of Xe).
    """
    H, W, D = xe_ref.shape[1], xe_ref.shape[2], xe_ref.shape[3]
    Cin = xp_ref.shape[3]

    # --- input_rep: depthwise 3x3 conv + folded BN + SiLU
    xp = xp_ref[0]                                  # [H+2, W+2, Cin]
    wdw = in_dw_w_ref[...]                          # [3, 3, Cin]
    acc = jnp.zeros((H, W, Cin), jnp.float32)
    for i in range(3):
        for j in range(3):
            acc = acc + xp[i:i + H, j:j + W, :] * wdw[i, j, :]
    h = acc * in_scale_ref[0] + in_shift_ref[0]
    h = h * jax.nn.sigmoid(h)                       # SiLU

    # --- input_rep: pointwise 1x1 conv Cin -> D (single MXU matmul)
    xe = jnp.dot(h.reshape(H * W, Cin), in_pw_w_ref[...],
                 preferred_element_type=jnp.float32) + in_pw_b_ref[...]
    xe = xe.reshape(H, W, D)
    xe_ref[0] = xe.astype(xe_ref.dtype)

    # --- local_rep: depthwise 3x3 conv + bias + SiLU on Xe (halo via scratch)
    pad_ref[...] = jnp.zeros(pad_ref.shape, pad_ref.dtype)
    pad_ref[1:H + 1, 1:W + 1, :] = xe
    wl = loc_dw_w_ref[...]                          # [3, 3, D]
    acc2 = jnp.zeros((H, W, D), jnp.float32)
    for i in range(3):
        for j in range(3):
            acc2 = acc2 + pad_ref[i:i + H, j:j + W, :] * wl[i, j, :]
    y = acc2 + loc_dw_b_ref[0]
    loc_ref[0] = (y * jax.nn.sigmoid(y)).astype(loc_ref.dtype)


def pallas_input_local(xp, in_dw_w, in_scale, in_shift, in_pw_w, in_pw_b,
                       loc_dw_w, loc_dw_b, *, H, W, D):
    B, Hp2, Wp2, Cin = xp.shape
    return pl.pallas_call(
        input_local_kernel,
        out_shape=(jax.ShapeDtypeStruct((B, H, W, D), jnp.float32),
                   jax.ShapeDtypeStruct((B, H, W, D), jnp.float32)),
        grid=(B,),
        in_specs=[
            pl.BlockSpec((1, Hp2, Wp2, Cin), lambda b: (b, 0, 0, 0)),
            pl.BlockSpec((3, 3, Cin), lambda b: (0, 0, 0)),
            pl.BlockSpec((1, Cin), lambda b: (0, 0)),
            pl.BlockSpec((1, Cin), lambda b: (0, 0)),
            pl.BlockSpec((Cin, D), lambda b: (0, 0)),
            pl.BlockSpec((1, D), lambda b: (0, 0)),
            pl.BlockSpec((3, 3, D), lambda b: (0, 0, 0)),
            pl.BlockSpec((1, D), lambda b: (0, 0)),
        ],
        out_specs=[
            pl.BlockSpec((1, H, W, D), lambda b: (b, 0, 0, 0)),
            pl.BlockSpec((1, H, W, D), lambda b: (b, 0, 0, 0)),
        ],
        scratch_shapes=[pltpu.VMEM((H + 2, W + 2, D), jnp.float32)],
        compiler_params=_PARALLEL,
    )(xp, in_dw_w, in_scale.reshape(1, Cin), in_shift.reshape(1, Cin),
      in_pw_w, in_pw_b.reshape(1, D), loc_dw_w, loc_dw_b.reshape(1, D))


# ----------------------------------------------------------------------------
# Kernel B: fused global_rep (LocalAgg -> E encoders -> GroupNorm -> LocalProp)
# ----------------------------------------------------------------------------

def global_rep_kernel(patches_ref, agg_w_ref, agg_b_ref,
                      ln1_g_ref, ln1_b_ref, wqkv_ref, bqkv_ref, wo_ref, bo_ref,
                      ln2_g_ref, ln2_b_ref, w1_ref, b1_ref, w2_ref, b2_ref,
                      gn_g_ref, gn_b_ref, prop_w_ref, prop_b_ref,
                      prop_ref, *, num_enc, dim):
    """patches:[1,Np,9,D] -> prop:[1,Np,9,D].  Everything stays in VMEM."""
    f32 = jnp.float32
    scale = 1.0 / math.sqrt(dim)

    # --- LocalAgg1: depthwise k=3,s=3 conv over each 3x3 patch -> token
    patches = patches_ref[0].astype(f32)                       # [Np, 9, D]
    tok = jnp.sum(patches * agg_w_ref[...], axis=1) + agg_b_ref[...]   # [Np, D]

    def layer_norm(x, g, b):
        mu = jnp.mean(x, axis=-1, keepdims=True)
        var = jnp.mean((x - mu) ** 2, axis=-1, keepdims=True)
        return (x - mu) * jax.lax.rsqrt(var + 1e-5) * g + b

    # --- transformer encoders (pre-LN, single head, fused QKV + fused FFN)
    for e in range(num_enc):                                    # static unroll
        h = layer_norm(tok, ln1_g_ref[e], ln1_b_ref[e])
        qkv = jnp.dot(h, wqkv_ref[e], preferred_element_type=f32) + bqkv_ref[e]
        q = qkv[:, :dim]
        k = qkv[:, dim:2 * dim]
        v = qkv[:, 2 * dim:]
        # q @ k^T without an explicit transpose (MXU-native A@B^T form)
        s = jax.lax.dot_general(q, k, (((1,), (1,)), ((), ())),
                                preferred_element_type=f32) * scale
        s = s - jnp.max(s, axis=-1, keepdims=True)
        p = jnp.exp(s)
        p = p / jnp.sum(p, axis=-1, keepdims=True)
        a = jnp.dot(p, v, preferred_element_type=f32)
        a = jnp.dot(a, wo_ref[e], preferred_element_type=f32) + bo_ref[e]
        tok = tok + a

        h = layer_norm(tok, ln2_g_ref[e], ln2_b_ref[e])
        h1 = jnp.dot(h, w1_ref[e], preferred_element_type=f32) + b1_ref[e]
        h1 = h1 * jax.nn.sigmoid(h1)                            # SiLU
        tok = tok + jnp.dot(h1, w2_ref[e], preferred_element_type=f32) + b2_ref[e]

    # --- GroupNorm(num_groups=1) over all tokens & channels of this batch elem
    mu = jnp.mean(tok, axis=(0, 1), keepdims=True)
    var = jnp.mean((tok - mu) ** 2, axis=(0, 1), keepdims=True)
    tok = (tok - mu) * jax.lax.rsqrt(var + 1e-5) * gn_g_ref[...] + gn_b_ref[...]

    # --- LocalProp: depthwise transposed conv k=3,s=3 from 1x1 -> 3x3 patch
    prop_ref[0] = (tok[:, None, :] * prop_w_ref[...] + prop_b_ref[...]
                   ).astype(prop_ref.dtype)


def pallas_global_rep(patches, p, *, dim):
    B, Np, K9, D = patches.shape
    enc = p["enc"]
    E = enc["wqkv"].shape[0]
    F = enc["w1"].shape[-1]

    def cs(arr):
        shape = arr.shape
        zeros = (0,) * len(shape)
        return pl.BlockSpec(shape, lambda b, z=zeros: z)

    args = (
        patches,
        p["agg_w"].reshape(1, K9, D), p["agg_b"].reshape(1, D),
        enc["ln1_g"].reshape(E, 1, D), enc["ln1_b"].reshape(E, 1, D),
        enc["wqkv"], enc["bqkv"].reshape(E, 1, 3 * D),
        enc["wo"], enc["bo"].reshape(E, 1, D),
        enc["ln2_g"].reshape(E, 1, D), enc["ln2_b"].reshape(E, 1, D),
        enc["w1"], enc["b1"].reshape(E, 1, F),
        enc["w2"], enc["b2"].reshape(E, 1, D),
        p["gn_gamma"].reshape(1, D), p["gn_beta"].reshape(1, D),
        p["prop_w"].reshape(1, K9, D), p["prop_b"].reshape(1, 1, D),
    )
    in_specs = [pl.BlockSpec((1, Np, K9, D), lambda b: (b, 0, 0, 0))]
    in_specs += [cs(a) for a in args[1:]]

    return pl.pallas_call(
        functools.partial(global_rep_kernel, num_enc=E, dim=dim),
        out_shape=jax.ShapeDtypeStruct((B, Np, K9, D), jnp.float32),
        grid=(B,),
        in_specs=in_specs,
        out_specs=pl.BlockSpec((1, Np, K9, D), lambda b: (b, 0, 0, 0)),
        compiler_params=_PARALLEL,
    )(*args)


# ----------------------------------------------------------------------------
# Kernel C: gating + fused concat 1x1 conv (BN folded) + residual, lane-dense
# ----------------------------------------------------------------------------

def fusion_kernel(loc_ref, glb_ref, res_ref, wfT_ref, shift_ref, out_ref):
    """loc/glb:[1,HW,D], res:[1,Cin,HW], wfT:[Cin,2D], shift:[Cin,1] -> [1,Cin,HW]."""
    loc = loc_ref[0]
    glb = glb_ref[0]
    gated_local = loc * jax.nn.sigmoid(glb)     # local  * sigmoid(globals)
    gated_global = glb * jax.nn.sigmoid(loc)    # globals * sigmoid(local)
    g = jnp.concatenate([gated_local, gated_global], axis=-1)     # [HW, 2D]
    # y[c, m] = sum_k wfT[c,k] * g[m,k]   (single fused matmul, K = 2D)
    y = jax.lax.dot_general(wfT_ref[...], g, (((1,), (1,)), ((), ())),
                            preferred_element_type=jnp.float32)   # [Cin, HW]
    out_ref[0] = (y + shift_ref[...] + res_ref[0]).astype(out_ref.dtype)


def pallas_fusion(loc, glb, res, wfT, shift):
    B, HW, D = loc.shape
    Cin = res.shape[1]
    return pl.pallas_call(
        fusion_kernel,
        out_shape=jax.ShapeDtypeStruct((B, Cin, HW), jnp.float32),
        grid=(B,),
        in_specs=[
            pl.BlockSpec((1, HW, D), lambda b: (b, 0, 0)),
            pl.BlockSpec((1, HW, D), lambda b: (b, 0, 0)),
            pl.BlockSpec((1, Cin, HW), lambda b: (b, 0, 0)),
            pl.BlockSpec((Cin, 2 * D), lambda b: (0, 0)),
            pl.BlockSpec((Cin, 1), lambda b: (0, 0)),
        ],
        out_specs=pl.BlockSpec((1, Cin, HW), lambda b: (b, 0, 0)),
        compiler_params=_PARALLEL,
    )(loc, glb, res, wfT, shift)


# ----------------------------------------------------------------------------
# Model glue (only free reshapes / one input transpose in plain JAX)
# ----------------------------------------------------------------------------

def my_vit_block(x_nchw, p, *, embed_dim, patch=3):
    B, Cin, H, W = x_nchw.shape
    D = embed_dim
    eps = 1e-5
    # TODO(synk): bilinear-interpolation branch (H/W not multiples of patch) not implemented.
    assert H % patch == 0 and W % patch == 0
    # Dropouts are identity in eval mode.

    x_nhwc = jnp.transpose(x_nchw, (0, 2, 3, 1))
    xp = jnp.pad(x_nhwc, ((0, 0), (1, 1), (1, 1), (0, 0)))

    # BN(eval) fold with running_mean=0, running_var=1 (matches the init here).
    s_in = p["in_dw_gamma"] / jnp.sqrt(1.0 + eps)

    xe, local = pallas_input_local(
        xp, p["in_dw_w"], s_in, p["in_dw_beta"], p["in_pw_w"], p["in_pw_b"],
        p["loc_dw_w"], p["loc_dw_b"], H=H, W=W, D=D)

    # unfold Xe into 3x3 patches (pure layout op, done once in XLA)
    Hp, Wp = H // patch, W // patch
    Np = Hp * Wp
    patches = xe.reshape(B, Hp, patch, Wp, patch, D)
    patches = patches.transpose(0, 1, 3, 2, 4, 5).reshape(B, Np, patch * patch, D)

    # fused global branch: LocalAgg + E encoders + GroupNorm + LocalProp
    prop = pallas_global_rep(patches, p, dim=D)                  # [B, Np, 9, D]

    # fold tokens back to the image grid (pure layout op in XLA)
    glob = prop.reshape(B, Hp, Wp, patch, patch, D)
    glob = glob.transpose(0, 1, 3, 2, 4, 5).reshape(B, H * W, D)
    loc_flat = local.reshape(B, H * W, D)
    res = x_nchw.reshape(B, Cin, H * W)                          # NCHW residual, free reshape

    # fusion 1x1 conv + BN fold; output produced directly in [Cin, HW] layout
    s_f = p["fuse_gamma"] / jnp.sqrt(1.0 + eps)
    wfT = (p["fuse_w"] * s_f[None, :]).T                         # [Cin, 2D]
    out = pallas_fusion(loc_flat, glob, res, wfT, p["fuse_beta"].reshape(Cin, 1))
    return out.reshape(B, Cin, H, W)


def init_params(key, Cin, D, F, attn_blocks):
    keys = iter(jax.random.split(key, 64))

    def nrm(shape, s=0.1):
        return s * jax.random.normal(next(keys), shape, jnp.float32)

    E = attn_blocks
    return {
        "in_dw_w": nrm((3, 3, Cin)),
        "in_dw_gamma": 1.0 + nrm((Cin,)),
        "in_dw_beta": nrm((Cin,)),
        "in_pw_w": nrm((Cin, D)),
        "in_pw_b": nrm((D,)),
        "loc_dw_w": nrm((3, 3, D)),
        "loc_dw_b": nrm((D,)),
        "agg_w": nrm((9, D)),
        "agg_b": nrm((D,)),
        "prop_w": nrm((9, D)),
        "prop_b": nrm((D,)),
        "gn_gamma": 1.0 + nrm((D,)),
        "gn_beta": nrm((D,)),
        "fuse_w": nrm((2 * D, Cin)),
        "fuse_gamma": 1.0 + nrm((Cin,)),
        "fuse_beta": nrm((Cin,)),
        "enc": {
            "ln1_g": 1.0 + nrm((E, D)), "ln1_b": nrm((E, D)),
            "wqkv": nrm((E, D, 3 * D)), "bqkv": nrm((E, 3 * D)),
            "wo": nrm((E, D, D)), "bo": nrm((E, D)),
            "ln2_g": 1.0 + nrm((E, D)), "ln2_b": nrm((E, D)),
            "w1": nrm((E, D, F)), "b1": nrm((E, F)),
            "w2": nrm((E, F, D)), "b2": nrm((E, D)),
        },
    }


if __name__ == "__main__":
    # H, W multiples of patch (3) -> no interpolation; 24 keeps reshapes sublane-aligned.
    B, Cin, H, W = 2, 4, 24, 24
    embed_dim, ffn_latent_dim = 16, 32
    attn_blocks = 2

    x = jax.random.normal(jax.random.PRNGKey(0), (B, Cin, H, W), jnp.float32)
    params = init_params(jax.random.PRNGKey(1), Cin, embed_dim, ffn_latent_dim, attn_blocks)

    out = my_vit_block(x, params, embed_dim=embed_dim, patch=3)
    out = jax.block_until_ready(out)
    assert out.shape == (B, Cin, H, W) and out.dtype == jnp.float32
    print("KERNEL_OK")
</pallas_src>

<mosaic_0001>
module attributes {stable_mosaic.version = 11 : i64} {
  func.func @input_local_kernel(%arg0: i32, %arg1: memref<1x26x26x4xf32, #tpu.memory_space<vmem>>, %arg2: memref<3x3x4xf32, #tpu.memory_space<vmem>>, %arg3: memref<1x4xf32, #tpu.memory_space<vmem>>, %arg4: memref<1x4xf32, #tpu.memory_space<vmem>>, %arg5: memref<4x16xf32, #tpu.memory_space<vmem>>, %arg6: memref<1x16xf32, #tpu.memory_space<vmem>>, %arg7: memref<3x3x16xf32, #tpu.memory_space<vmem>>, %arg8: memref<1x16xf32, #tpu.memory_space<vmem>>, %arg9: memref<1x24x24x16xf32, #tpu.memory_space<vmem>>, %arg10: memref<1x24x24x16xf32, #tpu.memory_space<vmem>>, %arg11: memref<26x26x16xf32, #tpu.memory_space<vmem>>) attributes {dimension_semantics = [#tpu.dimension_semantics<parallel>], iteration_bounds = array<i64: 2>, scalar_prefetch = 0 : i64, scratch_operands = 1 : i64, tpu.core_type = #tpu.core_type<tc>, window_params = [{transform_indices = @transform_0, window_bounds = array<i64: 1, 26, 26, 4>}, {pipeline_mode = #tpu.pipeline_mode<synchronous>, transform_indices = @transform_1, window_bounds = array<i64: 3, 3, 4>}, {pipeline_mode = #tpu.pipeline_mode<synchronous>, transform_indices = @transform_2, window_bounds = array<i64: 1, 4>}, {pipeline_mode = #tpu.pipeline_mode<synchronous>, transform_indices = @transform_3, window_bounds = array<i64: 1, 4>}, {pipeline_mode = #tpu.pipeline_mode<synchronous>, transform_indices = @transform_4, window_bounds = array<i64: 4, 16>}, {pipeline_mode = #tpu.pipeline_mode<synchronous>, transform_indices = @transform_5, window_bounds = array<i64: 1, 16>}, {pipeline_mode = #tpu.pipeline_mode<synchronous>, transform_indices = @transform_6, window_bounds = array<i64: 3, 3, 16>}, {pipeline_mode = #tpu.pipeline_mode<synchronous>, transform_indices = @transform_7, window_bounds = array<i64: 1, 16>}, {transform_indices = @transform_8, window_bounds = array<i64: 1, 24, 24, 16>}, {transform_indices = @transform_9, window_bounds = array<i64: 1, 24, 24, 16>}]} {
    %c0 = arith.constant 0 : index
    %c0_0 = arith.constant 0 : index
    %c0_1 = arith.constant 0 : index
    %c0_2 = arith.constant 0 : index
    %0 = vector.load %arg1[%c0, %c0_0, %c0_1, %c0_2] : memref<1x26x26x4xf32, #tpu.memory_space<vmem>>, vector<1x26x26x4xf32>
    %1 = vector.shape_cast %0 : vector<1x26x26x4xf32> to vector<26x26x4xf32>
    %c0_3 = arith.constant 0 : index
    %c0_4 = arith.constant 0 : index
    %c0_5 = arith.constant 0 : index
    %2 = vector.load %arg2[%c0_3, %c0_4, %c0_5] : memref<3x3x4xf32, #tpu.memory_space<vmem>>, vector<3x3x4xf32>
    %cst = arith.constant 0.000000e+00 : f32
    %3 = vector.broadcast %cst : f32 to vector<24x24x4xf32>
    %4 = vector.extract_strided_slice %1 {offsets = [0, 0, 0], sizes = [24, 24, 4], strides = [1, 1, 1]} : vector<26x26x4xf32> to vector<24x24x4xf32>
    %5 = vector.extract_strided_slice %2 {offsets = [0, 0, 0], sizes = [1, 1, 4], strides = [1, 1, 1]} : vector<3x3x4xf32> to vector<1x1x4xf32>
    %6 = vector.shape_cast %5 : vector<1x1x4xf32> to vector<4xf32>
    %7 = vector.shape_cast %6 : vector<4xf32> to vector<1x1x4xf32>
    %8 = vector.broadcast %7 : vector<1x1x4xf32> to vector<24x24x4xf32>
    %9 = arith.mulf %4, %8 : vector<24x24x4xf32>
    %10 = arith.addf %3, %9 : vector<24x24x4xf32>
    %11 = vector.extract_strided_slice %1 {offsets = [0, 1, 0], sizes = [24, 24, 4], strides = [1, 1, 1]} : vector<26x26x4xf32> to vector<24x24x4xf32>
    %12 = vector.extract_strided_slice %2 {offsets = [0, 1, 0], sizes = [1, 1, 4], strides = [1, 1, 1]} : vector<3x3x4xf32> to vector<1x1x4xf32>
    %13 = vector.shape_cast %12 : vector<1x1x4xf32> to vector<4xf32>
    %14 = vector.shape_cast %13 : vector<4xf32> to vector<1x1x4xf32>
    %15 = vector.broadcast %14 : vector<1x1x4xf32> to vector<24x24x4xf32>
    %16 = arith.mulf %11, %15 : vector<24x24x4xf32>
    %17 = arith.addf %10, %16 : vector<24x24x4xf32>
    %18 = vector.extract_strided_slice %1 {offsets = [0, 2, 0], sizes = [24, 24, 4], strides = [1, 1, 1]} : vector<26x26x4xf32> to vector<24x24x4xf32>
    %19 = vector.extract_strided_slice %2 {offsets = [0, 2, 0], sizes = [1, 1, 4], strides = [1, 1, 1]} : vector<3x3x4xf32> to vector<1x1x4xf32>
    %20 = vector.shape_cast %19 : vector<1x1x4xf32> to vector<4xf32>
    %21 = vector.shape_cast %20 : vector<4xf32> to vector<1x1x4xf32>
    %22 = vector.broadcast %21 : vector<1x1x4xf32> to vector<24x24x4xf32>
    %23 = arith.mulf %18, %22 : vector<24x24x4xf32>
    %24 = arith.addf %17, %23 : vector<24x24x4xf32>
    %25 = vector.extract_strided_slice %1 {offsets = [1, 0, 0], sizes = [24, 24, 4], strides = [1, 1, 1]} : vector<26x26x4xf32> to vector<24x24x4xf32>
    %26 = vector.extract_strided_slice %2 {offsets = [1, 0, 0], sizes = [1, 1, 4], strides = [1, 1, 1]} : vector<3x3x4xf32> to vector<1x1x4xf32>
    %27 = vector.shape_cast %26 : vector<1x1x4xf32> to vector<4xf32>
    %28 = vector.shape_cast %27 : vector<4xf32> to vector<1x1x4xf32>
    %29 = vector.broadcast %28 : vector<1x1x4xf32> to vector<24x24x4xf32>
    %30 = arith.mulf %25, %29 : vector<24x24x4xf32>
    %31 = arith.addf %24, %30 : vector<24x24x4xf32>
    %32 = vector.extract_strided_slice %1 {offsets = [1, 1, 0], sizes = [24, 24, 4], strides = [1, 1, 1]} : vector<26x26x4xf32> to vector<24x24x4xf32>
    %33 = vector.extract_strided_slice %2 {offsets = [1, 1, 0], sizes = [1, 1, 4], strides = [1, 1, 1]} : vector<3x3x4xf32> to vector<1x1x4xf32>
    %34 = vector.shape_cast %33 : vector<1x1x4xf32> to vector<4xf32>
    %35 = vector.shape_cast %34 : vector<4xf32> to vector<1x1x4xf32>
    %36 = vector.broadcast %35 : vector<1x1x4xf32> to vector<24x24x4xf32>
    %37 = arith.mulf %32, %36 : vector<24x24x4xf32>
    %38 = arith.addf %31, %37 : vector<24x24x4xf32>
    %39 = vector.extract_strided_slice %1 {offsets = [1, 2, 0], sizes = [24, 24, 4], strides = [1, 1, 1]} : vector<26x26x4xf32> to vector<24x24x4xf32>
    %40 = vector.extract_strided_slice %2 {offsets = [1, 2, 0], sizes = [1, 1, 4], strides = [1, 1, 1]} : vector<3x3x4xf32> to vector<1x1x4xf32>
    %41 = vector.shape_cast %40 : vector<1x1x4xf32> to vector<4xf32>
    %42 = vector.shape_cast %41 : vector<4xf32> to vector<1x1x4xf32>
    %43 = vector.broadcast %42 : vector<1x1x4xf32> to vector<24x24x4xf32>
    %44 = arith.mulf %39, %43 : vector<24x24x4xf32>
    %45 = arith.addf %38, %44 : vector<24x24x4xf32>
    %46 = vector.extract_strided_slice %1 {offsets = [2, 0, 0], sizes = [24, 24, 4], strides = [1, 1, 1]} : vector<26x26x4xf32> to vector<24x24x4xf32>
    %47 = vector.extract_strided_slice %2 {offsets = [2, 0, 0], sizes = [1, 1, 4], strides = [1, 1, 1]} : vector<3x3x4xf32> to vector<1x1x4xf32>
    %48 = vector.shape_cast %47 : vector<1x1x4xf32> to vector<4xf32>
    %49 = vector.shape_cast %48 : vector<4xf32> to vector<1x1x4xf32>
    %50 = vector.broadcast %49 : vector<1x1x4xf32> to vector<24x24x4xf32>
    %51 = arith.mulf %46, %50 : vector<24x24x4xf32>
    %52 = arith.addf %45, %51 : vector<24x24x4xf32>
    %53 = vector.extract_strided_slice %1 {offsets = [2, 1, 0], sizes = [24, 24, 4], strides = [1, 1, 1]} : vector<26x26x4xf32> to vector<24x24x4xf32>
    %54 = vector.extract_strided_slice %2 {offsets = [2, 1, 0], sizes = [1, 1, 4], strides = [1, 1, 1]} : vector<3x3x4xf32> to vector<1x1x4xf32>
    %55 = vector.shape_cast %54 : vector<1x1x4xf32> to vector<4xf32>
    %56 = vector.shape_cast %55 : vector<4xf32> to vector<1x1x4xf32>
    %57 = vector.broadcast %56 : vector<1x1x4xf32> to vector<24x24x4xf32>
    %58 = arith.mulf %53, %57 : vector<24x24x4xf32>
    %59 = arith.addf %52, %58 : vector<24x24x4xf32>
    %60 = vector.extract_strided_slice %1 {offsets = [2, 2, 0], sizes = [24, 24, 4], strides = [1, 1, 1]} : vector<26x26x4xf32> to vector<24x24x4xf32>
    %61 = vector.extract_strided_slice %2 {offsets = [2, 2, 0], sizes = [1, 1, 4], strides = [1, 1, 1]} : vector<3x3x4xf32> to vector<1x1x4xf32>
    %62 = vector.shape_cast %61 : vector<1x1x4xf32> to vector<4xf32>
    %63 = vector.shape_cast %62 : vector<4xf32> to vector<1x1x4xf32>
    %64 = vector.broadcast %63 : vector<1x1x4xf32> to vector<24x24x4xf32>
    %65 = arith.mulf %60, %64 : vector<24x24x4xf32>
    %66 = arith.addf %59, %65 : vector<24x24x4xf32>
    %c0_6 = arith.constant 0 : index
    %c0_7 = arith.constant 0 : index
    %67 = vector.load %arg3[%c0_6, %c0_7] : memref<1x4xf32, #tpu.memory_space<vmem>>, vector<1x4xf32>
    %68 = vector.shape_cast %67 : vector<1x4xf32> to vector<4xf32>
    %69 = vector.shape_cast %68 : vector<4xf32> to vector<1x1x4xf32>
    %70 = vector.broadcast %69 : vector<1x1x4xf32> to vector<24x24x4xf32>
    %71 = arith.mulf %66, %70 : vector<24x24x4xf32>
    %c0_8 = arith.constant 0 : index
    %c0_9 = arith.constant 0 : index
    %72 = vector.load %arg4[%c0_8, %c0_9] : memref<1x4xf32, #tpu.memory_space<vmem>>, vector<1x4xf32>
    %73 = vector.shape_cast %72 : vector<1x4xf32> to vector<4xf32>
    %74 = vector.shape_cast %73 : vector<4xf32> to vector<1x1x4xf32>
    %75 = vector.broadcast %74 : vector<1x1x4xf32> to vector<24x24x4xf32>
    %76 = arith.addf %71, %75 : vector<24x24x4xf32>
    %77 = arith.negf %76 : vector<24x24x4xf32>
    %78 = math.exp %77 : vector<24x24x4xf32>
    %cst_10 = arith.constant 1.000000e+00 : f32
    %79 = vector.broadcast %cst_10 : f32 to vector<24x24x4xf32>
    %80 = arith.addf %79, %78 : vector<24x24x4xf32>
    %81 = arith.divf %79, %80 : vector<24x24x4xf32>
    %82 = arith.mulf %76, %81 : vector<24x24x4xf32>
    %83 = vector.shape_cast %82 : vector<24x24x4xf32> to vector<576x4xf32>
    %c0_11 = arith.constant 0 : index
    %c0_12 = arith.constant 0 : index
    %84 = vector.load %arg5[%c0_11, %c0_12] : memref<4x16xf32, #tpu.memory_space<vmem>>, vector<4x16xf32>
    %cst_13 = arith.constant dense<0.000000e+00> : vector<576x16xf32>
    %85 = tpu.matmul %83, %84, %cst_13 {dimension_numbers = #tpu.dot_dimension_numbers<[1], [0], [0], [1], [0, 0, 1, 1], [], []>} : vector<576x4xf32>, vector<4x16xf32>, vector<576x16xf32> -> vector<576x16xf32>
    %c0_14 = arith.constant 0 : index
    %c0_15 = arith.constant 0 : index
    %86 = vector.load %arg6[%c0_14, %c0_15] : memref<1x16xf32, #tpu.memory_space<vmem>>, vector<1x16xf32>
    %87 = vector.broadcast %86 : vector<1x16xf32> to vector<576x16xf32>
    %88 = arith.addf %85, %87 : vector<576x16xf32>
    %89 = vector.shape_cast %88 : vector<576x16xf32> to vector<24x24x16xf32>
    %c0_16 = arith.constant 0 : index
    %c0_17 = arith.constant 0 : index
    %c0_18 = arith.constant 0 : index
    %c0_19 = arith.constant 0 : index
    %90 = vector.load %arg9[%c0_16, %c0_17, %c0_18, %c0_19] : memref<1x24x24x16xf32, #tpu.memory_space<vmem>>, vector<1x24x24x16xf32>
    %91 = vector.shape_cast %90 : vector<1x24x24x16xf32> to vector<24x24x16xf32>
    %92 = vector.shape_cast %89 : vector<24x24x16xf32> to vector<1x24x24x16xf32>
    tpu.vector_store %arg9[%c0_16, %c0_17, %c0_18, %c0_19], %92 {strides = array<i32>} : memref<1x24x24x16xf32, #tpu.memory_space<vmem>>, vector<1x24x24x16xf32>,
    %cst_20 = arith.constant 0.000000e+00 : f32
    %93 = vector.broadcast %cst_20 : f32 to vector<26x26x16xf32>
    %c0_21 = arith.constant 0 : index
    %c0_22 = arith.constant 0 : index
    %c0_23 = arith.constant 0 : index
    %94 = vector.load %arg11[%c0_21, %c0_22, %c0_23] : memref<26x26x16xf32, #tpu.memory_space<vmem>>, vector<26x26x16xf32>
    tpu.vector_store %arg11[%c0_21, %c0_22, %c0_23], %93 {strides = array<i32>} : memref<26x26x16xf32, #tpu.memory_space<vmem>>, vector<26x26x16xf32>,
    %c1 = arith.constant 1 : index
    %c1_24 = arith.constant 1 : index
    %c0_25 = arith.constant 0 : index
    %95 = vector.load %arg11[%c1, %c1_24, %c0_25] : memref<26x26x16xf32, #tpu.memory_space<vmem>>, vector<24x24x16xf32>
    tpu.vector_store %arg11[%c1, %c1_24, %c0_25], %89 {strides = array<i32>} : memref<26x26x16xf32, #tpu.memory_space<vmem>>, vector<24x24x16xf32>,
    %c0_26 = arith.constant 0 : index
    %c0_27 = arith.constant 0 : index
    %c0_28 = arith.constant 0 : index
    %96 = vector.load %arg7[%c0_26, %c0_27, %c0_28] : memref<3x3x16xf32, #tpu.memory_space<vmem>>, vector<3x3x16xf32>
    %cst_29 = arith.constant 0.000000e+00 : f32
    %97 = vector.broadcast %cst_29 : f32 to vector<24x24x16xf32>
    %c0_30 = arith.constant 0 : index
    %c0_31 = arith.constant 0 : index
    %c0_32 = arith.constant 0 : index
    %98 = vector.load %arg11[%c0_30, %c0_31, %c0_32] : memref<26x26x16xf32, #tpu.memory_space<vmem>>, vector<24x24x16xf32>
    %99 = vector.extract_strided_slice %96 {offsets = [0, 0, 0], sizes = [1, 1, 16], strides = [1, 1, 1]} : vector<3x3x16xf32> to vector<1x1x16xf32>
    %100 = vector.shape_cast %99 : vector<1x1x16xf32> to vector<16xf32>
    %101 = vector.shape_cast %100 : vector<16xf32> to vector<1x1x16xf32>
    %102 = vector.broadcast %101 : vector<1x1x16xf32> to vector<24x24x16xf32>
    %103 = arith.mulf %98, %102 : vector<24x24x16xf32>
    %104 = arith.addf %97, %103 : vector<24x24x16xf32>
    %c0_33 = arith.constant 0 : index
    %c1_34 = arith.constant 1 : index
    %c0_35 = arith.constant 0 : index
    %105 = vector.load %arg11[%c0_33, %c1_34, %c0_35] : memref<26x26x16xf32, #tpu.memory_space<vmem>>, vector<24x24x16xf32>
    %106 = vector.extract_strided_slice %96 {offsets = [0, 1, 0], sizes = [1, 1, 16], strides = [1, 1, 1]} : vector<3x3x16xf32> to vector<1x1x16xf32>
    %107 = vector.shape_cast %106 : vector<1x1x16xf32> to vector<16xf32>
    %108 = vector.shape_cast %107 : vector<16xf32> to vector<1x1x16xf32>
    %109 = vector.broadcast %108 : vector<1x1x16xf32> to vector<24x24x16xf32>
    %110 = arith.mulf %105, %109 : vector<24x24x16xf32>
    %111 = arith.addf %104, %110 : vector<24x24x16xf32>
    %c0_36 = arith.constant 0 : index
    %c2 = arith.constant 2 : index
    %c0_37 = arith.constant 0 : index
    %112 = vector.load %arg11[%c0_36, %c2, %c0_37] : memref<26x26x16xf32, #tpu.memory_space<vmem>>, vector<24x24x16xf32>
    %113 = vector.extract_strided_slice %96 {offsets = [0, 2, 0], sizes = [1, 1, 16], strides = [1, 1, 1]} : vector<3x3x16xf32> to vector<1x1x16xf32>
    %114 = vector.shape_cast %113 : vector<1x1x16xf32> to vector<16xf32>
    %115 = vector.shape_cast %114 : vector<16xf32> to vector<1x1x16xf32>
    %116 = vector.broadcast %115 : vector<1x1x16xf32> to vector<24x24x16xf32>
    %117 = arith.mulf %112, %116 : vector<24x24x16xf32>
    %118 = arith.addf %111, %117 : vector<24x24x16xf32>
    %c1_38 = arith.constant 1 : index
    %c0_39 = arith.constant 0 : index
    %c0_40 = arith.constant 0 : index
    %119 = vector.load %arg11[%c1_38, %c0_39, %c0_40] : memref<26x26x16xf32, #tpu.memory_space<vmem>>, vector<24x24x16xf32>
    %120 = vector.extract_strided_slice %96 {offsets = [1, 0, 0], sizes = [1, 1, 16], strides = [1, 1, 1]} : vector<3x3x16xf32> to vector<1x1x16xf32>
    %121 = vector.shape_cast %120 : vector<1x1x16xf32> to vector<16xf32>
    %122 = vector.shape_cast %121 : vector<16xf32> to vector<1x1x16xf32>
    %123 = vector.broadcast %122 : vector<1x1x16xf32> to vector<24x24x16xf32>
    %124 = arith.mulf %119, %123 : vector<24x24x16xf32>
    %125 = arith.addf %118, %124 : vector<24x24x16xf32>
    %c1_41 = arith.constant 1 : index
    %c1_42 = arith.constant 1 : index
    %c0_43 = arith.constant 0 : index
    %126 = vector.load %arg11[%c1_41, %c1_42, %c0_43] : memref<26x26x16xf32, #tpu.memory_space<vmem>>, vector<24x24x16xf32>
    %127 = vector.extract_strided_slice %96 {offsets = [1, 1, 0], sizes = [1, 1, 16], strides = [1, 1, 1]} : vector<3x3x16xf32> to vector<1x1x16xf32>
    %128 = vector.shape_cast %127 : vector<1x1x16xf32> to vector<16xf32>
    %129 = vector.shape_cast %128 : vector<16xf32> to vector<1x1x16xf32>
    %130 = vector.broadcast %129 : vector<1x1x16xf32> to vector<24x24x16xf32>
    %131 = arith.mulf %126, %130 : vector<24x24x16xf32>
    %132 = arith.addf %125, %131 : vector<24x24x16xf32>
    %c1_44 = arith.constant 1 : index
    %c2_45 = arith.constant 2 : index
    %c0_46 = arith.constant 0 : index
    %133 = vector.load %arg11[%c1_44, %c2_45, %c0_46] : memref<26x26x16xf32, #tpu.memory_space<vmem>>, vector<24x24x16xf32>
    %134 = vector.extract_strided_slice %96 {offsets = [1, 2, 0], sizes = [1, 1, 16], strides = [1, 1, 1]} : vector<3x3x16xf32> to vector<1x1x16xf32>
    %135 = vector.shape_cast %134 : vector<1x1x16xf32> to vector<16xf32>
    %136 = vector.shape_cast %135 : vector<16xf32> to vector<1x1x16xf32>
    %137 = vector.broadcast %136 : vector<1x1x16xf32> to vector<24x24x16xf32>
    %138 = arith.mulf %133, %137 : vector<24x24x16xf32>
    %139 = arith.addf %132, %138 : vector<24x24x16xf32>
    %c2_47 = arith.constant 2 : index
    %c0_48 = arith.constant 0 : index
    %c0_49 = arith.constant 0 : index
    %140 = vector.load %arg11[%c2_47, %c0_48, %c0_49] : memref<26x26x16xf32, #tpu.memory_space<vmem>>, vector<24x24x16xf32>
    %141 = vector.extract_strided_slice %96 {offsets = [2, 0, 0], sizes = [1, 1, 16], strides = [1, 1, 1]} : vector<3x3x16xf32> to vector<1x1x16xf32>
    %142 = vector.shape_cast %141 : vector<1x1x16xf32> to vector<16xf32>
    %143 = vector.shape_cast %142 : vector<16xf32> to vector<1x1x16xf32>
    %144 = vector.broadcast %143 : vector<1x1x16xf32> to vector<24x24x16xf32>
    %145 = arith.mulf %140, %144 : vector<24x24x16xf32>
    %146 = arith.addf %139, %145 : vector<24x24x16xf32>
    %c2_50 = arith.constant 2 : index
    %c1_51 = arith.constant 1 : index
    %c0_52 = arith.constant 0 : index
    %147 = vector.load %arg11[%c2_50, %c1_51, %c0_52] : memref<26x26x16xf32, #tpu.memory_space<vmem>>, vector<24x24x16xf32>
    %148 = vector.extract_strided_slice %96 {offsets = [2, 1, 0], sizes = [1, 1, 16], strides = [1, 1, 1]} : vector<3x3x16xf32> to vector<1x1x16xf32>
    %149 = vector.shape_cast %148 : vector<1x1x16xf32> to vector<16xf32>
    %150 = vector.shape_cast %149 : vector<16xf32> to vector<1x1x16xf32>
    %151 = vector.broadcast %150 : vector<1x1x16xf32> to vector<24x24x16xf32>
    %152 = arith.mulf %147, %151 : vector<24x24x16xf32>
    %153 = arith.addf %146, %152 : vector<24x24x16xf32>
    %c2_53 = arith.constant 2 : index
    %c2_54 = arith.constant 2 : index
    %c0_55 = arith.constant 0 : index
    %154 = vector.load %arg11[%c2_53, %c2_54, %c0_55] : memref<26x26x16xf32, #tpu.memory_space<vmem>>, vector<24x24x16xf32>
    %155 = vector.extract_strided_slice %96 {offsets = [2, 2, 0], sizes = [1, 1, 16], strides = [1, 1, 1]} : vector<3x3x16xf32> to vector<1x1x16xf32>
    %156 = vector.shape_cast %155 : vector<1x1x16xf32> to vector<16xf32>
    %157 = vector.shape_cast %156 : vector<16xf32> to vector<1x1x16xf32>
    %158 = vector.broadcast %157 : vector<1x1x16xf32> to vector<24x24x16xf32>
    %159 = arith.mulf %154, %158 : vector<24x24x16xf32>
    %160 = arith.addf %153, %159 : vector<24x24x16xf32>
    %c0_56 = arith.constant 0 : index
    %c0_57 = arith.constant 0 : index
    %161 = vector.load %arg8[%c0_56, %c0_57] : memref<1x16xf32, #tpu.memory_space<vmem>>, vector<1x16xf32>
    %162 = vector.shape_cast %161 : vector<1x16xf32> to vector<16xf32>
    %163 = vector.shape_cast %162 : vector<16xf32> to vector<1x1x16xf32>
    %164 = vector.broadcast %163 : vector<1x1x16xf32> to vector<24x24x16xf32>
    %165 = arith.addf %160, %164 : vector<24x24x16xf32>
    %166 = arith.negf %165 : vector<24x24x16xf32>
    %167 = math.exp %166 : vector<24x24x16xf32>
    %cst_58 = arith.constant 1.000000e+00 : f32
    %168 = vector.broadcast %cst_58 : f32 to vector<24x24x16xf32>
    %169 = arith.addf %168, %167 : vector<24x24x16xf32>
    %170 = arith.divf %168, %169 : vector<24x24x16xf32>
    %171 = arith.mulf %165, %170 : vector<24x24x16xf32>
    %c0_59 = arith.constant 0 : index
    %c0_60 = arith.constant 0 : index
    %c0_61 = arith.constant 0 : index
    %c0_62 = arith.constant 0 : index
    %172 = vector.load %arg10[%c0_59, %c0_60, %c0_61, %c0_62] : memref<1x24x24x16xf32, #tpu.memory_space<vmem>>, vector<1x24x24x16xf32>
    %173 = vector.shape_cast %172 : vector<1x24x24x16xf32> to vector<24x24x16xf32>
    %174 = vector.shape_cast %171 : vector<24x24x16xf32> to vector<1x24x24x16xf32>
    tpu.vector_store %arg10[%c0_59, %c0_60, %c0_61, %c0_62], %174 {strides = array<i32>} : memref<1x24x24x16xf32, #tpu.memory_space<vmem>>, vector<1x24x24x16xf32>,
    return
  }
  func.func @transform_0(%arg0: i32) -> (i32, i32, i32, i32) {
    %c0_i32 = arith.constant 0 : i32
    %c0_i32_0 = arith.constant 0 : i32
    %c0_i32_1 = arith.constant 0 : i32
    %c0_i32_2 = arith.constant 0 : i32
    return %arg0, %c0_i32, %c0_i32_0, %c0_i32_1 : i32, i32, i32, i32
  }
  func.func @transform_1(%arg0: i32) -> (i32, i32, i32) {
    %c0_i32 = arith.constant 0 : i32
    %c0_i32_0 = arith.constant 0 : i32
    %c0_i32_1 = arith.constant 0 : i32
    %c0_i32_2 = arith.constant 0 : i32
    return %c0_i32, %c0_i32_0, %c0_i32_1 : i32, i32, i32
  }
  func.func @transform_2(%arg0: i32) -> (i32, i32) {
    %c0_i32 = arith.constant 0 : i32
    %c0_i32_0 = arith.constant 0 : i32
    %c0_i32_1 = arith.constant 0 : i32
    return %c0_i32, %c0_i32_0 : i32, i32
  }
  func.func @transform_3(%arg0: i32) -> (i32, i32) {
    %c0_i32 = arith.constant 0 : i32
    %c0_i32_0 = arith.constant 0 : i32
    %c0_i32_1 = arith.constant 0 : i32
    return %c0_i32, %c0_i32_0 : i32, i32
  }
  func.func @transform_4(%arg0: i32) -> (i32, i32) {
    %c0_i32 = arith.constant 0 : i32
    %c0_i32_0 = arith.constant 0 : i32
    %c0_i32_1 = arith.constant 0 : i32
    return %c0_i32, %c0_i32_0 : i32, i32
  }
  func.func @transform_5(%arg0: i32) -> (i32, i32) {
    %c0_i32 = arith.constant 0 : i32
    %c0_i32_0 = arith.constant 0 : i32
    %c0_i32_1 = arith.constant 0 : i32
    return %c0_i32, %c0_i32_0 : i32, i32
  }
  func.func @transform_6(%arg0: i32) -> (i32, i32, i32) {
    %c0_i32 = arith.constant 0 : i32
    %c0_i32_0 = arith.constant 0 : i32
    %c0_i32_1 = arith.constant 0 : i32
    %c0_i32_2 = arith.constant 0 : i32
    return %c0_i32, %c0_i32_0, %c0_i32_1 : i32, i32, i32
  }
  func.func @transform_7(%arg0: i32) -> (i32, i32) {
    %c0_i32 = arith.constant 0 : i32
    %c0_i32_0 = arith.constant 0 : i32
    %c0_i32_1 = arith.constant 0 : i32
    return %c0_i32, %c0_i32_0 : i32, i32
  }
  func.func @transform_8(%arg0: i32) -> (i32, i32, i32, i32) {
    %c0_i32 = arith.constant 0 : i32
    %c0_i32_0 = arith.constant 0 : i32
    %c0_i32_1 = arith.constant 0 : i32
    %c0_i32_2 = arith.constant 0 : i32
    return %arg0, %c0_i32, %c0_i32_0, %c0_i32_1 : i32, i32, i32, i32
  }
  func.func @transform_9(%arg0: i32) -> (i32, i32, i32, i32) {
    %c0_i32 = arith.constant 0 : i32
    %c0_i32_0 = arith.constant 0 : i32
    %c0_i32_1 = arith.constant 0 : i32
    %c0_i32_2 = arith.constant 0 : i32
    return %arg0, %c0_i32, %c0_i32_0, %c0_i32_1 : i32, i32, i32, i32
  }
}

</mosaic_0001>

<llo_original>
// kernel: tpu_custom_call.1
$region0: #{tpu_custom_call.1}
  #allocation0 [shape = 'u32[]', space=smem, size = 0x4, offset = 0x4, fixed_abs, tag = 'smem constant byte address 0x4 - core index']
  #allocation1 [shape = 'u32[144,128]{1,0:T(1,128)}', space=vmem, size = 0x12000, scoped, tag = 'internal scratch']
  #allocation2 [shape = 'f32[26,26,16]{2,1,0:T(8,128)}', space=vmem, size = 0x68000, scoped, tag = 'scratch operand']
  %s0 = inlined_call_operand.vmem [shape: f32[2,26,26,4], index: 0, kind: input, shape index: {}]
  %s1 = inlined_call_operand.vmem [shape: f32[3,3,4], index: 1, kind: input, shape index: {}]
  %s2 = inlined_call_operand.vmem [shape: f32[1,4], index: 2, kind: input, shape index: {}]
  %s3 = inlined_call_operand.vmem [shape: f32[1,4], index: 3, kind: input, shape index: {}]
  %s4 = inlined_call_operand.vmem [shape: f32[4,16], index: 4, kind: input, shape index: {}]
  %s5 = inlined_call_operand.vmem [shape: f32[1,16], index: 5, kind: input, shape index: {}]
  %s6 = inlined_call_operand.vmem [shape: f32[3,3,16], index: 6, kind: input, shape index: {}]
  %s7 = inlined_call_operand.vmem [shape: f32[1,16], index: 7, kind: input, shape index: {}]
  %s8 = inlined_call_operand.vmem [shape: f32[2,24,24,16], index: 8, kind: output, shape index: {0}]
  %s9 = inlined_call_operand.vmem [shape: f32[2,24,24,16], index: 9, kind: output, shape index: {1}]
  %10 = xla_tuple %s8, %s9
  %s11 = sld [smem:[#allocation0]]
  $region73: #{tpu_custom_call.1} parent=0
    _
  %s13 = ssub.s32 1, %s11
  %s14 = scalar_select 0, %s13, %s11
  loop: start=0, step=1, limit=4
  $region2: #{tpu_custom_call.1} parent=0 // loop_pre_header
    _
  $region3: #{tpu_custom_call.1} parent=0 // loop_header
    %s16 = sphi 0, %s20
    %p17 = scmp.ge.s32.totalorder %s16, 4
    %s26 = sphi 0, %s28
    %s29 = sphi 0, %s26
    %s30 = sphi 0, %s29
    %s46 = sphi 0, %s30
    %s50 = sphi 0, %s50
    %s52 = sphi 0, %s50
    %s53 = sphi 0, %s52
    %s67 = sphi 0, %s53
    %s71 = sphi 0, %s71
    %s73 = sphi 0, %s71
    %s74 = sphi 0, %s73
    %s88 = sphi 0, %s74
    %s92 = sphi 0, %s92
    %s94 = sphi 0, %s92
    %s95 = sphi 0, %s94
    %s109 = sphi 0, %s95
    %s113 = sphi 0, %s113
    %s115 = sphi 0, %s113
    %s116 = sphi 0, %s115
    %s130 = sphi 0, %s116
    %s134 = sphi 0, %s134
    %s136 = sphi 0, %s134
    %s137 = sphi 0, %s136
    %s151 = sphi 0, %s137
    %s155 = sphi 0, %s155
    %s157 = sphi 0, %s155
    %s158 = sphi 0, %s157
    %s172 = sphi 0, %s158
    %s176 = sphi 0, %s176
    %s178 = sphi 0, %s176
    %s179 = sphi 0, %s178
    %s193 = sphi 0, %s179
    %s199 = sphi 0, %s201
    %s202 = sphi 0, %s199
    %s203 = sphi 0, %s202
    %s219 = sphi 0, %s203
    %s225 = sphi 0, %s227
    %s228 = sphi 0, %s225
    %s229 = sphi 0, %s228
    %s245 = sphi 0, %s229
  $region4: #{tpu_custom_call.1} parent=0 // loop_header_branch
    %19 = sbr.rel (%p17) target = $region8
  $region5: #{tpu_custom_call.1} parent=0 // loop_body
    %s21 = ssub.s32 %s16, 1
    %s22 = ssub.s32 %s16, 2
    %s23 = sadd.s32 %s16, 1
    %s24 = ssub.s32 %s16, %s23
    %p25 = scmp.eq.s32.totalorder %s24, 0
    %s27 = sadd.s32 %s26, 1
    %s28 = scalar_select %p25, %s26, %s27
    %p31 = pneg %p25
    %p32 = scmp.eq.s32.totalorder %s16, 1
    %p33 = por %p31, %p32
    %p34 = scmp.ne.s32.totalorder %s26, %s29
    %p35 = scmp.eq.s32.totalorder %s16, 0
    %p36 = por %p34, %p35
    %p37 = scmp.ne.s32.totalorder %s26, %s29
    %p38 = scmp.eq.s32.totalorder %s21, 1
    %p39 = por %p37, %p38
    %p40 = scmp.ne.s32.totalorder %s29, %s30
    %p41 = scmp.eq.s32.totalorder %s21, 0
    %p42 = por %p40, %p41
    %p43 = scmp.ne.s32.totalorder %s29, %s30
    %p44 = scmp.eq.s32.totalorder %s22, 1
    %p45 = por %p43, %p44
    %p47 = scmp.ne.s32.totalorder %s30, %s46
    %p48 = scmp.eq.s32.totalorder %s22, 0
    %p49 = por %p47, %p48
    %s51 = sadd.s32 %s50, 1
    %p54 = scmp.eq.s32.totalorder %s16, 1
    %p55 = scmp.ne.s32.totalorder %s50, %s52
    %p56 = scmp.eq.s32.totalorder %s16, 0
    %p57 = por %p55, %p56
    %p58 = scmp.ne.s32.totalorder %s50, %s52
    %p59 = scmp.eq.s32.totalorder %s21, 1
    %p60 = por %p58, %p59
    %p61 = scmp.ne.s32.totalorder %s52, %s53
    %p62 = scmp.eq.s32.totalorder %s21, 0
    %p63 = por %p61, %p62
    %p64 = scmp.ne.s32.totalorder %s52, %s53
    %p65 = scmp.eq.s32.totalorder %s22, 1
    %p66 = por %p64, %p65
    %p68 = scmp.ne.s32.totalorder %s53, %s67
    %p69 = scmp.eq.s32.totalorder %s22, 0
    %p70 = por %p68, %p69
    %s72 = sadd.s32 %s71, 1
    %p75 = scmp.eq.s32.totalorder %s16, 1
    %p76 = scmp.ne.s32.totalorder %s71, %s73
    %p77 = scmp.eq.s32.totalorder %s16, 0
    %p78 = por %p76, %p77
    %p79 = scmp.ne.s32.totalorder %s71, %s73
    %p80 = scmp.eq.s32.totalorder %s21, 1
    %p81 = por %p79, %p80
    %p82 = scmp.ne.s32.totalorder %s73, %s74
    %p83 = scmp.eq.s32.totalorder %s21, 0
    %p84 = por %p82, %p83
    %p85 = scmp.ne.s32.totalorder %s73, %s74
    %p86 = scmp.eq.s32.totalorder %s22, 1
    %p87 = por %p85, %p86
    %p89 = scmp.ne.s32.totalorder %s74, %s88
    %p90 = scmp.eq.s32.totalorder %s22, 0
    %p91 = por %p89, %p90
    %s93 = sadd.s32 %s92, 1
    %p96 = scmp.eq.s32.totalorder %s16, 1
    %p97 = scmp.ne.s32.totalorder %s92, %s94
    %p98 = scmp.eq.s32.totalorder %s16, 0
    %p99 = por %p97, %p98
    %p100 = scmp.ne.s32.totalorder %s92, %s94
    %p101 = scmp.eq.s32.totalorder %s21, 1
    %p102 = por %p100, %p101
    %p103 = scmp.ne.s32.totalorder %s94, %s95
    %p104 = scmp.eq.s32.totalorder %s21, 0
    %p105 = por %p103, %p104
    %p106 = scmp.ne.s32.totalorder %s94, %s95
    %p107 = scmp.eq.s32.totalorder %s22, 1
    %p108 = por %p106, %p107
    %p110 = scmp.ne.s32.totalorder %s95, %s109
    %p111 = scmp.eq.s32.totalorder %s22, 0
    %p112 = por %p110, %p111
    %s114 = sadd.s32 %s113, 1
    %p117 = scmp.eq.s32.totalorder %s16, 1
    %p118 = scmp.ne.s32.totalorder %s113, %s115
    %p119 = scmp.eq.s32.totalorder %s16, 0
    %p120 = por %p118, %p119
    %p121 = scmp.ne.s32.totalorder %s113, %s115
    %p122 = scmp.eq.s32.totalorder %s21, 1
    %p123 = por %p121, %p122
    %p124 = scmp.ne.s32.totalorder %s115, %s116
    %p125 = scmp.eq.s32.totalorder %s21, 0
    %p126 = por %p124, %p125
    %p127 = scmp.ne.s32.totalorder %s115, %s116
    %p128 = scmp.eq.s32.totalorder %s22, 1
    %p129 = por %p127, %p128
    %p131 = scmp.ne.s32.totalorder %s116, %s130
    %p132 = scmp.eq.s32.totalorder %s22, 0
    %p133 = por %p131, %p132
    %s135 = sadd.s32 %s134, 1
    %p138 = scmp.eq.s32.totalorder %s16, 1
    %p139 = scmp.ne.s32.totalorder %s134, %s136
    %p140 = scmp.eq.s32.totalorder %s16, 0
    %p141 = por %p139, %p140
    %p142 = scmp.ne.s32.totalorder %s134, %s136
    %p143 = scmp.eq.s32.totalorder %s21, 1
    %p144 = por %p142, %p143
    %p145 = scmp.ne.s32.totalorder %s136, %s137
    %p146 = scmp.eq.s32.totalorder %s21, 0
    %p147 = por %p145, %p146
    %p148 = scmp.ne.s32.totalorder %s136, %s137
    %p149 = scmp.eq.s32.totalorder %s22, 1
    %p150 = por %p148, %p149
    %p152 = scmp.ne.s32.totalorder %s137, %s151
    %p153 = scmp.eq.s32.totalorder %s22, 0
    %p154 = por %p152, %p153
    %s156 = sadd.s32 %s155, 1
    %p159 = scmp.eq.s32.totalorder %s16, 1
    %p160 = scmp.ne.s32.totalorder %s155, %s157
    %p161 = scmp.eq.s32.totalorder %s16, 0
    %p162 = por %p160, %p161
    %p163 = scmp.ne.s32.totalorder %s155, %s157
    %p164 = scmp.eq.s32.totalorder %s21, 1
    %p165 = por %p163, %p164
    %p166 = scmp.ne.s32.totalorder %s157, %s158
    %p167 = scmp.eq.s32.totalorder %s21, 0
    %p168 = por %p166, %p167
    %p169 = scmp.ne.s32.totalorder %s157, %s158
    %p170 = scmp.eq.s32.totalorder %s22, 1
    %p171 = por %p169, %p170
    %p173 = scmp.ne.s32.totalorder %s158, %s172
    %p174 = scmp.eq.s32.totalorder %s22, 0
    %p175 = por %p173, %p174
    %s177 = sadd.s32 %s176, 1
    %p180 = scmp.eq.s32.totalorder %s16, 1
    %p181 = scmp.ne.s32.totalorder %s176, %s178
    %p182 = scmp.eq.s32.totalorder %s16, 0
    %p183 = por %p181, %p182
    %p184 = scmp.ne.s32.totalorder %s176, %s178
    %p185 = scmp.eq.s32.totalorder %s21, 1
    %p186 = por %p184, %p185
    %p187 = scmp.ne.s32.totalorder %s178, %s179
    %p188 = scmp.eq.s32.totalorder %s21, 0
    %p189 = por %p187, %p188
    %p190 = scmp.ne.s32.totalorder %s178, %s179
    %p191 = scmp.eq.s32.totalorder %s22, 1
    %p192 = por %p190, %p191
    %p194 = scmp.ne.s32.totalorder %s179, %s193
    %p195 = scmp.eq.s32.totalorder %s22, 0
    %p196 = por %p194, %p195
    %s197 = ssub.s32 %s16, %s23
    %p198 = scmp.eq.s32.totalorder %s197, 0
    %s200 = sadd.s32 %s199, 1
    %s201 = scalar_select %p198, %s199, %s200
    %p204 = pneg %p198
    %p205 = scmp.eq.s32.totalorder %s16, 1
    %p206 = por %p204, %p205
    %p207 = scmp.ne.s32.totalorder %s199, %s202
    %p208 = scmp.eq.s32.totalorder %s16, 0
    %p209 = por %p207, %p208
    %p210 = scmp.ne.s32.totalorder %s199, %s202
    %p211 = scmp.eq.s32.totalorder %s21, 1
    %p212 = por %p210, %p211
    %p213 = scmp.ne.s32.totalorder %s202, %s203
    %p214 = scmp.eq.s32.totalorder %s21, 0
    %p215 = por %p213, %p214
    %p216 = scmp.ne.s32.totalorder %s202, %s203
    %p217 = scmp.eq.s32.totalorder %s22, 1
    %p218 = por %p216, %p217
    %p220 = scmp.ne.s32.totalorder %s203, %s219
    %p221 = scmp.eq.s32.totalorder %s22, 0
    %p222 = por %p220, %p221
    %s223 = ssub.s32 %s16, %s23
    %p224 = scmp.eq.s32.totalorder %s223, 0
    %s226 = sadd.s32 %s225, 1
    %s227 = scalar_select %p224, %s225, %s226
    %p230 = pneg %p224
    %p231 = scmp.eq.s32.totalorder %s16, 1
    %p232 = por %p230, %p231
    %p233 = scmp.ne.s32.totalorder %s225, %s228
    %p234 = scmp.eq.s32.totalorder %s16, 0
    %p235 = por %p233, %p234
    %p236 = scmp.ne.s32.totalorder %s225, %s228
    %p237 = scmp.eq.s32.totalorder %s21, 1
    %p238 = por %p236, %p237
    %p239 = scmp.ne.s32.totalorder %s228, %s229
    %p240 = scmp.eq.s32.totalorder %s21, 0
    %p241 = por %p239, %p240
    %p242 = scmp.ne.s32.totalorder %s228, %s229
    %p243 = scmp.eq.s32.totalorder %s22, 1
    %p244 = por %p242, %p243
    %p246 = scmp.ne.s32.totalorder %s229, %s245
    %p247 = scmp.eq.s32.totalorder %s22, 0
    %p248 = por %p246, %p247
    %p249 = scmp.le.s32.totalorder 1, %s16
    %p250 = scmp.lt.s32.totalorder %s16, 3
    %p251 = pnand %p249, %p250
    %p252 = pneg %p251
    // Predicated region
    $region9: #{tpu_custom_call.1} parent=5 // pred_check
      _
    $region10: #{tpu_custom_call.1} parent=5 // pred_check_branch
      %254 = sbr.rel (%p251) target = $region12
    $region11: #{tpu_custom_call.1} parent=5 // pred_region
      %s255 = ssub.s32 %s16, 1
      // Predicated region
      $region13: #{tpu_custom_call.1} parent=11 // pred_check
        %p256 = pneg %p63
      $region14: #{tpu_custom_call.1} parent=11 // pred_check_branch
        %258 = sbr.rel (%p256) target = $region16
      $region15: #{tpu_custom_call.1} parent=11 // pred_region
        _
      $region16: #{tpu_custom_call.1} parent=11 // pred_fallthru
        _
      // Predicated region
      $region17: #{tpu_custom_call.1} parent=11 // pred_check
        %p259 = pneg %p84
      $region18: #{tpu_custom_call.1} parent=11 // pred_check_branch
        %261 = sbr.rel (%p259) target = $region20
      $region19: #{tpu_custom_call.1} parent=11 // pred_region
        _
      $region20: #{tpu_custom_call.1} parent=11 // pred_fallthru
        _
      // Predicated region
      $region21: #{tpu_custom_call.1} parent=11 // pred_check
        %p262 = pneg %p105
      $region22: #{tpu_custom_call.1} parent=11 // pred_check_branch
        %264 = sbr.rel (%p262) target = $region24
      $region23: #{tpu_custom_call.1} parent=11 // pred_region
        _
      $region24: #{tpu_custom_call.1} parent=11 // pred_fallthru
        _
      // Predicated region
      $region25: #{tpu_custom_call.1} parent=11 // pred_check
        %p265 = pneg %p126
      $region26: #{tpu_custom_call.1} parent=11 // pred_check_branch
        %267 = sbr.rel (%p265) target = $region28
      $region27: #{tpu_custom_call.1} parent=11 // pred_region
        _
      $region28: #{tpu_custom_call.1} parent=11 // pred_fallthru
        _
      // Predicated region
      $region29: #{tpu_custom_call.1} parent=11 // pred_check
        %p268 = pneg %p147
      $region30: #{tpu_custom_call.1} parent=11 // pred_check_branch
        %270 = sbr.rel (%p268) target = $region32
      $region31: #{tpu_custom_call.1} parent=11 // pred_region
        _
      $region32: #{tpu_custom_call.1} parent=11 // pred_fallthru
        _
      // Predicated region
      $region33: #{tpu_custom_call.1} parent=11 // pred_check
        %p271 = pneg %p168
      $region34: #{tpu_custom_call.1} parent=11 // pred_check_branch
        %273 = sbr.rel (%p271) target = $region36
      $region35: #{tpu_custom_call.1} parent=11 // pred_region
        _
      $region36: #{tpu_custom_call.1} parent=11 // pred_fallthru
        _
      // Predicated region
      $region37: #{tpu_custom_call.1} parent=11 // pred_check
        %p274 = pneg %p189
      $region38: #{tpu_custom_call.1} parent=11 // pred_check_branch
        %276 = sbr.rel (%p274) target = $region40
      $region39: #{tpu_custom_call.1} parent=11 // pred_region
        _
      $region40: #{tpu_custom_call.1} parent=11 // pred_fallthru
        _
    $region12: #{tpu_custom_call.1} parent=5 // pred_fallthru
      _
    %p277 = scmp.lt.s32.totalorder %s16, 2
    // Predicated region
    $region41: #{tpu_custom_call.1} parent=5 // pred_check
      %p278 = pneg %p277
    $region42: #{tpu_custom_call.1} parent=5 // pred_check_branch
      %280 = sbr.rel (%p278) target = $region44
    $region43: #{tpu_custom_call.1} parent=5 // pred_region
      // Predicated region
      $region45: #{tpu_custom_call.1} parent=43 // pred_check
        %p281 = pneg %p36
      $region46: #{tpu_custom_call.1} parent=43 // pred_check_branch
        %283 = sbr.rel (%p281) target = $region48
      $region47: #{tpu_custom_call.1} parent=43 // pred_region
        %p284 = scmp.lt.s32.totalorder %s16, 1
        %s285 = scalar_select %p284, %s16, 1
        %s286 = smul.addr %s285, 104
        %s287 = smul.addr %s286, 8
        %s288 = scalar_lea.vmem %s0, %s287
      $region48: #{tpu_custom_call.1} parent=43 // pred_fallthru
        _
    $region44: #{tpu_custom_call.1} parent=5 // pred_fallthru
      _
    %p289 = scmp.le.s32.totalorder 1, %s16
    %p290 = scmp.lt.s32.totalorder %s16, 3
    %p291 = pnand %p289, %p290
    %p292 = pneg %p291
    // Predicated region
    $region49: #{tpu_custom_call.1} parent=5 // pred_check
      _
    $region50: #{tpu_custom_call.1} parent=5 // pred_check_branch
      %294 = sbr.rel (%p291) target = $region52
    $region51: #{tpu_custom_call.1} parent=5 // pred_region
      %s295 = ssub.s32 %s16, 1
      %p296 = scmp.lt.s32.totalorder %s21, 1
      %s297 = scalar_select %p296, %s21, 1
      %s298 = smul.addr %s297, 104
      %s299 = smul.addr %s298, 8
      %s300 = scalar_lea.vmem %s0, %s299
      %p301 = pneg %p42
      %p302 = pneg %p39
      %p303 = pneg %p63
      %p304 = pneg %p60
      %p305 = pneg %p84
      %p306 = pneg %p81
      %p307 = pneg %p105
      %p308 = pneg %p102
      %p309 = pneg %p126
      %p310 = pneg %p123
      %p311 = pneg %p147
      %p312 = pneg %p144
      %p313 = pneg %p168
      %p314 = pneg %p165
      %p315 = pneg %p189
      %p316 = pneg %p186
      %p317 = pneg %p215
      %p318 = pneg %p212
      %p319 = scmp.lt.s32.totalorder %s21, 1
      %s320 = scalar_select %p319, %s21, 1
      %s321 = smul.addr %s320, 72
      %s322 = smul.addr %s321, 8
      %s323 = scalar_lea.vmem %s8, %s322
      %p324 = pneg %p241
      %p325 = pneg %p238
      %p326 = scmp.lt.s32.totalorder %s21, 1
      %s327 = scalar_select %p326, %s21, 1
      %s328 = smul.addr %s327, 72
      %s329 = smul.addr %s328, 8
      %s330 = scalar_lea.vmem %s9, %s329
      %p331 = scmp.lt.s32.totalorder %s21, 1
      %s332 = scalar_select %p331, %s21, 1
      %s333 = smul.addr %s332, 104
      %s334 = smul.addr %s333, 8
      %s335 = scalar_lea.vmem %s0, %s334
      %p336 = scmp.lt.s32.totalorder %s21, 1
      %s337 = scalar_select %p336, %s21, 1
      %s338 = smul.addr %s337, 72
      %s339 = smul.addr %s338, 8
      %s340 = scalar_lea.vmem %s8, %s339
      %p341 = scmp.lt.s32.totalorder %s21, 1
      %s342 = scalar_select %p341, %s21, 1
      %s343 = smul.addr %s342, 72
      %s344 = smul.addr %s343, 8
      %s345 = scalar_lea.vmem %s9, %s344
      %v346 = vld [vmem:[%s335] sm:$0xff]
      %v347 = vld [vmem:[%s335 + $0x8] sm:$0xff]
      %v348 = vld [vmem:[%s335 + $0x10] sm:$0xff]
      %v349 = vld [vmem:[%s335 + $0x18] sm:$0x3]
      %v350 = vld [vmem:[%s335 + $0x20] sm:$0xff]
      %v351 = vld [vmem:[%s335 + $0x28] sm:$0xff]
      %v352 = vld [vmem:[%s335 + $0x30] sm:$0xff]
      %v353 = vld [vmem:[%s335 + $0x38] sm:$0x3]
      %v354 = vld [vmem:[%s335 + $0x40] sm:$0xff]
      %v355 = vld [vmem:[%s335 + $0x48] sm:$0xff]
      %v356 = vld [vmem:[%s335 + $0x50] sm:$0xff]
      %v357 = vld [vmem:[%s335 + $0x58] sm:$0x3]
      %v358 = vld [vmem:[%s335 + $0x60] sm:$0xff]
      %v359 = vld [vmem:[%s335 + $0x68] sm:$0xff]
      %v360 = vld [vmem:[%s335 + $0x70] sm:$0xff]
      %v361 = vld [vmem:[%s335 + $0x78] sm:$0x3]
      %v362 = vld [vmem:[%s335 + $0x80] sm:$0xff]
      %v363 = vld [vmem:[%s335 + $0x88] sm:$0xff]
      %v364 = vld [vmem:[%s335 + $0x90] sm:$0xff]
      %v365 = vld [vmem:[%s335 + $0x98] sm:$0x3]
      %v366 = vld [vmem:[%s335 + $0xa0] sm:$0xff]
      %v367 = vld [vmem:[%s335 + $0xa8] sm:$0xff]
      %v368 = vld [vmem:[%s335 + $0xb0] sm:$0xff]
      %v369 = vld [vmem:[%s335 + $0xb8] sm:$0x3]
      %v370 = vld [vmem:[%s335 + $0xc0] sm:$0xff]
      %v371 = vld [vmem:[%s335 + $0xc8] sm:$0xff]
      %v372 = vld [vmem:[%s335 + $0xd0] sm:$0xff]
      %v373 = vld [vmem:[%s335 + $0xd8] sm:$0x3]
      %v374 = vld [vmem:[%s335 + $0xe0] sm:$0xff]
      %v375 = vld [vmem:[%s335 + $0xe8] sm:$0xff]
      %v376 = vld [vmem:[%s335 + $0xf0] sm:$0xff]
      %v377 = vld [vmem:[%s335 + $0xf8] sm:$0x3]
      %v378 = vld [vmem:[%s335 + $0x100] sm:$0xff]
      %v379 = vld [vmem:[%s335 + $0x108] sm:$0xff]
      %v380 = vld [vmem:[%s335 + $0x110] sm:$0xff]
      %v381 = vld [vmem:[%s335 + $0x118] sm:$0x3]
      %v382 = vld [vmem:[%s335 + $0x120] sm:$0xff]
      %v383 = vld [vmem:[%s335 + $0x128] sm:$0xff]
      %v384 = vld [vmem:[%s335 + $0x130] sm:$0xff]
      %v385 = vld [vmem:[%s335 + $0x138] sm:$0x3]
      %v386 = vld [vmem:[%s335 + $0x140] sm:$0xff]
      %v387 = vld [vmem:[%s335 + $0x148] sm:$0xff]
      %v388 = vld [vmem:[%s335 + $0x150] sm:$0xff]
      %v389 = vld [vmem:[%s335 + $0x158] sm:$0x3]
      %v390 = vld [vmem:[%s335 + $0x160] sm:$0xff]
      %v391 = vld [vmem:[%s335 + $0x168] sm:$0xff]
      %v392 = vld [vmem:[%s335 + $0x170] sm:$0xff]
      %v393 = vld [vmem:[%s335 + $0x178] sm:$0x3]
      %v394 = vld [vmem:[%s335 + $0x180] sm:$0xff]
      %v395 = vld [vmem:[%s335 + $0x188] sm:$0xff]
      %v396 = vld [vmem:[%s335 + $0x190] sm:$0xff]
      %v397 = vld [vmem:[%s335 + $0x198] sm:$0x3]
      %v398 = vld [vmem:[%s335 + $0x1a0] sm:$0xff]
      %v399 = vld [vmem:[%s335 + $0x1a8] sm:$0xff]
      %v400 = vld [vmem:[%s335 + $0x1b0] sm:$0xff]
      %v401 = vld [vmem:[%s335 + $0x1b8] sm:$0x3]
      %v402 = vld [vmem:[%s335 + $0x1c0] sm:$0xff]
      %v403 = vld [vmem:[%s335 + $0x1c8] sm:$0xff]
      %v404 = vld [vmem:[%s335 + $0x1d0] sm:$0xff]
      %v405 = vld [vmem:[%s335 + $0x1d8] sm:$0x3]
      %v406 = vld [vmem:[%s335 + $0x1e0] sm:$0xff]
      %v407 = vld [vmem:[%s335 + $0x1e8] sm:$0xff]
      %v408 = vld [vmem:[%s335 + $0x1f0] sm:$0xff]
      %v409 = vld [vmem:[%s335 + $0x1f8] sm:$0x3]
      %v410 = vld [vmem:[%s335 + $0x200] sm:$0xff]
      %v411 = vld [vmem:[%s335 + $0x208] sm:$0xff]
      %v412 = vld [vmem:[%s335 + $0x210] sm:$0xff]
      %v413 = vld [vmem:[%s335 + $0x218] sm:$0x3]
      %v414 = vld [vmem:[%s335 + $0x220] sm:$0xff]
      %v415 = vld [vmem:[%s335 + $0x228] sm:$0xff]
      %v416 = vld [vmem:[%s335 + $0x230] sm:$0xff]
      %v417 = vld [vmem:[%s335 + $0x238] sm:$0x3]
      %v418 = vld [vmem:[%s335 + $0x240] sm:$0xff]
      %v419 = vld [vmem:[%s335 + $0x248] sm:$0xff]
      %v420 = vld [vmem:[%s335 + $0x250] sm:$0xff]
      %v421 = vld [vmem:[%s335 + $0x258] sm:$0x3]
      %v422 = vld [vmem:[%s335 + $0x260] sm:$0xff]
      %v423 = vld [vmem:[%s335 + $0x268] sm:$0xff]
      %v424 = vld [vmem:[%s335 + $0x270] sm:$0xff]
      %v425 = vld [vmem:[%s335 + $0x278] sm:$0x3]
      %v426 = vld [vmem:[%s335 + $0x280] sm:$0xff]
      %v427 = vld [vmem:[%s335 + $0x288] sm:$0xff]
      %v428 = vld [vmem:[%s335 + $0x290] sm:$0xff]
      %v429 = vld [vmem:[%s335 + $0x298] sm:$0x3]
      %v430 = vld [vmem:[%s335 + $0x2a0] sm:$0xff]
      %v431 = vld [vmem:[%s335 + $0x2a8] sm:$0xff]
      %v432 = vld [vmem:[%s335 + $0x2b0] sm:$0xff]
      %v433 = vld [vmem:[%s335 + $0x2b8] sm:$0x3]
      %v434 = vld [vmem:[%s335 + $0x2c0] sm:$0xff]
      %v435 = vld [vmem:[%s335 + $0x2c8] sm:$0xff]
      %v436 = vld [vmem:[%s335 + $0x2d0] sm:$0xff]
      %v437 = vld [vmem:[%s335 + $0x2d8] sm:$0x3]
      %v438 = vld [vmem:[%s335 + $0x2e0] sm:$0xff]
      %v439 = vld [vmem:[%s335 + $0x2e8] sm:$0xff]
      %v440 = vld [vmem:[%s335 + $0x2f0] sm:$0xff]
      %v441 = vld [vmem:[%s335 + $0x2f8] sm:$0x3]
      %v442 = vld [vmem:[%s335 + $0x300] sm:$0xff]
      %v443 = vld [vmem:[%s335 + $0x308] sm:$0xff]
      %v444 = vld [vmem:[%s335 + $0x310] sm:$0xff]
      %v445 = vld [vmem:[%s335 + $0x318] sm:$0x3]
      %v446 = vld [vmem:[%s335 + $0x320] sm:$0xff]
      %v447 = vld [vmem:[%s335 + $0x328] sm:$0xff]
      %v448 = vld [vmem:[%s335 + $0x330] sm:$0xff]
      %v449 = vld [vmem:[%s335 + $0x338] sm:$0x3]
      %v450 = vld [vmem:[%s1] sm:$0x7]
      %v451 = vld [vmem:[%s1 + $0x4] sm:$0x7]
      %v452 = vld [vmem:[%s1 + $0x8] sm:$0x7]
      %v453 = vlaneseq
      %v454 = vshrl.u32 %v453, 7
      %v455 = vsub.s32 0, %v454
      %v456 = vrot.slane %v450, %v455
      %v457 = vmul.f32 %v346, %v456
      %v458 = vmul.f32 %v347, %v456
      %v459 = vmul.f32 %v348, %v456
      %v460 = vmul.f32 %v350, %v456
      %v461 = vmul.f32 %v351, %v456
      %v462 = vmul.f32 %v352, %v456
      %v463 = vmul.f32 %v354, %v456
      %v464 = vmul.f32 %v355, %v456
      %v465 = vmul.f32 %v356, %v456
      %v466 = vmul.f32 %v358, %v456
      %v467 = vmul.f32 %v359, %v456
      %v468 = vmul.f32 %v360, %v456
      %v469 = vmul.f32 %v362, %v456
      %v470 = vmul.f32 %v363, %v456
      %v471 = vmul.f32 %v364, %v456
      %v472 = vmul.f32 %v366, %v456
      %v473 = vmul.f32 %v367, %v456
      %v474 = vmul.f32 %v368, %v456
      %v475 = vmul.f32 %v370, %v456
      %v476 = vmul.f32 %v371, %v456
      %v477 = vmul.f32 %v372, %v456
      %v478 = vmul.f32 %v374, %v456
      %v479 = vmul.f32 %v375, %v456
      %v480 = vmul.f32 %v376, %v456
      %v481 = vmul.f32 %v378, %v456
      %v482 = vmul.f32 %v379, %v456
      %v483 = vmul.f32 %v380, %v456
      %v484 = vmul.f32 %v382, %v456
      %v485 = vmul.f32 %v383, %v456
      %v486 = vmul.f32 %v384, %v456
      %v487 = vmul.f32 %v386, %v456
      %v488 = vmul.f32 %v387, %v456
      %v489 = vmul.f32 %v388, %v456
      %v490 = vmul.f32 %v390, %v456
      %v491 = vmul.f32 %v391, %v456
      %v492 = vmul.f32 %v392, %v456
      %v493 = vmul.f32 %v394, %v456
      %v494 = vmul.f32 %v395, %v456
      %v495 = vmul.f32 %v396, %v456
      %v496 = vmul.f32 %v398, %v456
      %v497 = vmul.f32 %v399, %v456
      %v498 = vmul.f32 %v400, %v456
      %v499 = vmul.f32 %v402, %v456
      %v500 = vmul.f32 %v403, %v456
      %v501 = vmul.f32 %v404, %v456
      %v502 = vmul.f32 %v406, %v456
      %v503 = vmul.f32 %v407, %v456
      %v504 = vmul.f32 %v408, %v456
      %v505 = vmul.f32 %v410, %v456
      %v506 = vmul.f32 %v411, %v456
      %v507 = vmul.f32 %v412, %v456
      %v508 = vmul.f32 %v414, %v456
      %v509 = vmul.f32 %v415, %v456
      %v510 = vmul.f32 %v416, %v456
      %v511 = vmul.f32 %v418, %v456
      %v512 = vmul.f32 %v419, %v456
      %v513 = vmul.f32 %v420, %v456
      %v514 = vmul.f32 %v422, %v456
      %v515 = vmul.f32 %v423, %v456
      %v516 = vmul.f32 %v424, %v456
      %v517 = vmul.f32 %v426, %v456
      %v518 = vmul.f32 %v427, %v456
      %v519 = vmul.f32 %v428, %v456
      %v520 = vmul.f32 %v430, %v456
      %v521 = vmul.f32 %v431, %v456
      %v522 = vmul.f32 %v432, %v456
      %v523 = vmul.f32 %v434, %v456
      %v524 = vmul.f32 %v435, %v456
      %v525 = vmul.f32 %v436, %v456
      %v526 = vmul.f32 %v438, %v456
      %v527 = vmul.f32 %v439, %v456
      %v528 = vmul.f32 %v440, %v456
      %v529 = vadd.f32 %v457, 0.0
      %v530 = vadd.f32 %v458, 0.0
      %v531 = vadd.f32 %v459, 0.0
      %v532 = vadd.f32 %v460, 0.0
      %v533 = vadd.f32 %v461, 0.0
      %v534 = vadd.f32 %v462, 0.0
      %v535 = vadd.f32 %v463, 0.0
      %v536 = vadd.f32 %v464, 0.0
      %v537 = vadd.f32 %v465, 0.0
      %v538 = vadd.f32 %v466, 0.0
      %v539 = vadd.f32 %v467, 0.0
      %v540 = vadd.f32 %v468, 0.0
      %v541 = vadd.f32 %v469, 0.0
      %v542 = vadd.f32 %v470, 0.0
      %v543 = vadd.f32 %v471, 0.0
      %v544 = vadd.f32 %v472, 0.0
      %v545 = vadd.f32 %v473, 0.0
      %v546 = vadd.f32 %v474, 0.0
      %v547 = vadd.f32 %v475, 0.0
      %v548 = vadd.f32 %v476, 0.0
      %v549 = vadd.f32 %v477, 0.0
      %v550 = vadd.f32 %v478, 0.0
      %v551 = vadd.f32 %v479, 0.0
      %v552 = vadd.f32 %v480, 0.0
      %v553 = vadd.f32 %v481, 0.0
      %v554 = vadd.f32 %v482, 0.0
      %v555 = vadd.f32 %v483, 0.0
      %v556 = vadd.f32 %v484, 0.0
      %v557 = vadd.f32 %v485, 0.0
      %v558 = vadd.f32 %v486, 0.0
      %v559 = vadd.f32 %v487, 0.0
      %v560 = vadd.f32 %v488, 0.0
      %v561 = vadd.f32 %v489, 0.0
      %v562 = vadd.f32 %v490, 0.0
      %v563 = vadd.f32 %v491, 0.0
      %v564 = vadd.f32 %v492, 0.0
      %v565 = vadd.f32 %v493, 0.0
      %v566 = vadd.f32 %v494, 0.0
      %v567 = vadd.f32 %v495, 0.0
      %v568 = vadd.f32 %v496, 0.0
      %v569 = vadd.f32 %v497, 0.0
      %v570 = vadd.f32 %v498, 0.0
      %v571 = vadd.f32 %v499, 0.0
      %v572 = vadd.f32 %v500, 0.0
      %v573 = vadd.f32 %v501, 0.0
      %v574 = vadd.f32 %v502, 0.0
      %v575 = vadd.f32 %v503, 0.0
      %v576 = vadd.f32 %v504, 0.0
      %v577 = vadd.f32 %v505, 0.0
      %v578 = vadd.f32 %v506, 0.0
      %v579 = vadd.f32 %v507, 0.0
      %v580 = vadd.f32 %v508, 0.0
      %v581 = vadd.f32 %v509, 0.0
      %v582 = vadd.f32 %v510, 0.0
      %v583 = vadd.f32 %v511, 0.0
      %v584 = vadd.f32 %v512, 0.0
      %v585 = vadd.f32 %v513, 0.0
      %v586 = vadd.f32 %v514, 0.0
      %v587 = vadd.f32 %v515, 0.0
      %v588 = vadd.f32 %v516, 0.0
      %v589 = vadd.f32 %v517, 0.0
      %v590 = vadd.f32 %v518, 0.0
      %v591 = vadd.f32 %v519, 0.0
      %v592 = vadd.f32 %v520, 0.0
      %v593 = vadd.f32 %v521, 0.0
      %v594 = vadd.f32 %v522, 0.0
      %v595 = vadd.f32 %v523, 0.0
      %v596 = vadd.f32 %v524, 0.0
      %v597 = vadd.f32 %v525, 0.0
      %v598 = vadd.f32 %v526, 0.0
      %v599 = vadd.f32 %v527, 0.0
      %v600 = vadd.f32 %v528, 0.0
      %v601 = vlaneseq
      %v602 = vshrl.u32 %v601, 7
      %v603 = vsub.s32 1, %v602
      %v604 = vrot.slane %v450, %v603
      %v605 = vmul.f32 %v346, %v604
      %v606 = vmul.f32 %v347, %v604
      %v607 = vmul.f32 %v348, %v604
      %v608 = vmul.f32 %v349, %v604
      %v609 = vmul.f32 %v350, %v604
      %v610 = vmul.f32 %v351, %v604
      %v611 = vmul.f32 %v352, %v604
      %v612 = vmul.f32 %v353, %v604
      %v613 = vmul.f32 %v354, %v604
      %v614 = vmul.f32 %v355, %v604
      %v615 = vmul.f32 %v356, %v604
      %v616 = vmul.f32 %v357, %v604
      %v617 = vmul.f32 %v358, %v604
      %v618 = vmul.f32 %v359, %v604
      %v619 = vmul.f32 %v360, %v604
      %v620 = vmul.f32 %v361, %v604
      %v621 = vmul.f32 %v362, %v604
      %v622 = vmul.f32 %v363, %v604
      %v623 = vmul.f32 %v364, %v604
      %v624 = vmul.f32 %v365, %v604
      %v625 = vmul.f32 %v366, %v604
      %v626 = vmul.f32 %v367, %v604
      %v627 = vmul.f32 %v368, %v604
      %v628 = vmul.f32 %v369, %v604
      %v629 = vmul.f32 %v370, %v604
      %v630 = vmul.f32 %v371, %v604
      %v631 = vmul.f32 %v372, %v604
      %v632 = vmul.f32 %v373, %v604
      %v633 = vmul.f32 %v374, %v604
      %v634 = vmul.f32 %v375, %v604
      %v635 = vmul.f32 %v376, %v604
      %v636 = vmul.f32 %v377, %v604
      %v637 = vmul.f32 %v378, %v604
      %v638 = vmul.f32 %v379, %v604
      %v639 = vmul.f32 %v380, %v604
      %v640 = vmul.f32 %v381, %v604
      %v641 = vmul.f32 %v382, %v604
      %v642 = vmul.f32 %v383, %v604
      %v643 = vmul.f32 %v384, %v604
      %v644 = vmul.f32 %v385, %v604
      %v645 = vmul.f32 %v386, %v604
      %v646 = vmul.f32 %v387, %v604
      %v647 = vmul.f32 %v388, %v604
      %v648 = vmul.f32 %v389, %v604
      %v649 = vmul.f32 %v390, %v604
      %v650 = vmul.f32 %v391, %v604
      %v651 = vmul.f32 %v392, %v604
      %v652 = vmul.f32 %v393, %v604
      %v653 = vmul.f32 %v394, %v604
      %v654 = vmul.f32 %v395, %v604
      %v655 = vmul.f32 %v396, %v604
      %v656 = vmul.f32 %v397, %v604
      %v657 = vmul.f32 %v398, %v604
      %v658 = vmul.f32 %v399, %v604
      %v659 = vmul.f32 %v400, %v604
      %v660 = vmul.f32 %v401, %v604
      %v661 = vmul.f32 %v402, %v604
      %v662 = vmul.f32 %v403, %v604
      %v663 = vmul.f32 %v404, %v604
      %v664 = vmul.f32 %v405, %v604
      %v665 = vmul.f32 %v406, %v604
      %v666 = vmul.f32 %v407, %v604
      %v667 = vmul.f32 %v408, %v604
      %v668 = vmul.f32 %v409, %v604
      %v669 = vmul.f32 %v410, %v604
      %v670 = vmul.f32 %v411, %v604
      %v671 = vmul.f32 %v412, %v604
      %v672 = vmul.f32 %v413, %v604
      %v673 = vmul.f32 %v414, %v604
      %v674 = vmul.f32 %v415, %v604
      %v675 = vmul.f32 %v416, %v604
      %v676 = vmul.f32 %v417, %v604
      %v677 = vmul.f32 %v418, %v604
      %v678 = vmul.f32 %v419, %v604
      %v679 = vmul.f32 %v420, %v604
      %v680 = vmul.f32 %v421, %v604
      %v681 = vmul.f32 %v422, %v604
      %v682 = vmul.f32 %v423, %v604
      %v683 = vmul.f32 %v424, %v604
      %v684 = vmul.f32 %v425, %v604
      %v685 = vmul.f32 %v426, %v604
      %v686 = vmul.f32 %v427, %v604
      %v687 = vmul.f32 %v428, %v604
      %v688 = vmul.f32 %v429, %v604
      %v689 = vmul.f32 %v430, %v604
      %v690 = vmul.f32 %v431, %v604
      %v691 = vmul.f32 %v432, %v604
      %v692 = vmul.f32 %v433, %v604
      %v693 = vmul.f32 %v434, %v604
      %v694 = vmul.f32 %v435, %v604
      %v695 = vmul.f32 %v436, %v604
      %v696 = vmul.f32 %v437, %v604
      %v697 = vmul.f32 %v438, %v604
      %v698 = vmul.f32 %v439, %v604
      %v699 = vmul.f32 %v440, %v604
      %v700 = vmul.f32 %v441, %v604
      %vm797 = vcmask 1046528
      %v798 = vrot.slane %v605, 1
      %v799 = vrot.slane %v606, 1
      %v800 = vsel %vm797, %v798, %v799
      %v801 = vrot.slane %v607, 1
      %v802 = vsel %vm797, %v799, %v801
      %v803 = vrot.slane %v608, 1
      %v804 = vsel %vm797, %v801, %v803
      %v805 = vrot.slane %v609, 1
      %v806 = vrot.slane %v610, 1
      %v807 = vsel %vm797, %v805, %v806
      %v808 = vrot.slane %v611, 1
      %v809 = vsel %vm797, %v806, %v808
      %v810 = vrot.slane %v612, 1
      %v811 = vsel %vm797, %v808, %v810
      %v812 = vrot.slane %v613, 1
      %v813 = vrot.slane %v614, 1
      %v814 = vsel %vm797, %v812, %v813
      %v815 = vrot.slane %v615, 1
      %v816 = vsel %vm797, %v813, %v815
      %v817 = vrot.slane %v616, 1
      %v818 = vsel %vm797, %v815, %v817
      %v819 = vrot.slane %v617, 1
      %v820 = vrot.slane %v618, 1
      %v821 = vsel %vm797, %v819, %v820
      %v822 = vrot.slane %v619, 1
      %v823 = vsel %vm797, %v820, %v822
      %v824 = vrot.slane %v620, 1
      %v825 = vsel %vm797, %v822, %v824
      %v826 = vrot.slane %v621, 1
      %v827 = vrot.slane %v622, 1
      %v828 = vsel %vm797, %v826, %v827
      %v829 = vrot.slane %v623, 1
      %v830 = vsel %vm797, %v827, %v829
      %v831 = vrot.slane %v624, 1
      %v832 = vsel %vm797, %v829, %v831
      %v833 = vrot.slane %v625, 1
      %v834 = vrot.slane %v626, 1
      %v835 = vsel %vm797, %v833, %v834
      %v836 = vrot.slane %v627, 1
      %v837 = vsel %vm797, %v834, %v836
      %v838 = vrot.slane %v628, 1
      %v839 = vsel %vm797, %v836, %v838
      %v840 = vrot.slane %v629, 1
      %v841 = vrot.slane %v630, 1
      %v842 = vsel %vm797, %v840, %v841
      %v843 = vrot.slane %v631, 1
      %v844 = vsel %vm797, %v841, %v843
      %v845 = vrot.slane %v632, 1
      %v846 = vsel %vm797, %v843, %v845
      %v847 = vrot.slane %v633, 1
      %v848 = vrot.slane %v634, 1
      %v849 = vsel %vm797, %v847, %v848
      %v850 = vrot.slane %v635, 1
      %v851 = vsel %vm797, %v848, %v850
      %v852 = vrot.slane %v636, 1
      %v853 = vsel %vm797, %v850, %v852
      %v854 = vrot.slane %v637, 1
      %v855 = vrot.slane %v638, 1
      %v856 = vsel %vm797, %v854, %v855
      %v857 = vrot.slane %v639, 1
      %v858 = vsel %vm797, %v855, %v857
      %v859 = vrot.slane %v640, 1
      %v860 = vsel %vm797, %v857, %v859
      %v861 = vrot.slane %v641, 1
      %v862 = vrot.slane %v642, 1
      %v863 = vsel %vm797, %v861, %v862
      %v864 = vrot.slane %v643, 1
      %v865 = vsel %vm797, %v862, %v864
      %v866 = vrot.slane %v644, 1
      %v867 = vsel %vm797, %v864, %v866
      %v868 = vrot.slane %v645, 1
      %v869 = vrot.slane %v646, 1
      %v870 = vsel %vm797, %v868, %v869
      %v871 = vrot.slane %v647, 1
      %v872 = vsel %vm797, %v869, %v871
      %v873 = vrot.slane %v648, 1
      %v874 = vsel %vm797, %v871, %v873
      %v875 = vrot.slane %v649, 1
      %v876 = vrot.slane %v650, 1
      %v877 = vsel %vm797, %v875, %v876
      %v878 = vrot.slane %v651, 1
      %v879 = vsel %vm797, %v876, %v878
      %v880 = vrot.slane %v652, 1
      %v881 = vsel %vm797, %v878, %v880
      %v882 = vrot.slane %v653, 1
      %v883 = vrot.slane %v654, 1
      %v884 = vsel %vm797, %v882, %v883
      %v885 = vrot.slane %v655, 1
      %v886 = vsel %vm797, %v883, %v885
      %v887 = vrot.slane %v656, 1
      %v888 = vsel %vm797, %v885, %v887
      %v889 = vrot.slane %v657, 1
      %v890 = vrot.slane %v658, 1
      %v891 = vsel %vm797, %v889, %v890
      %v892 = vrot.slane %v659, 1
      %v893 = vsel %vm797, %v890, %v892
      %v894 = vrot.slane %v660, 1
      %v895 = vsel %vm797, %v892, %v894
      %v896 = vrot.slane %v661, 1
      %v897 = vrot.slane %v662, 1
      %v898 = vsel %vm797, %v896, %v897
      %v899 = vrot.slane %v663, 1
      %v900 = vsel %vm797, %v897, %v899
      %v901 = vrot.slane %v664, 1
      %v902 = vsel %vm797, %v899, %v901
      %v903 = vrot.slane %v665, 1
      %v904 = vrot.slane %v666, 1
      %v905 = vsel %vm797, %v903, %v904
      %v906 = vrot.slane %v667, 1
      %v907 = vsel %vm797, %v904, %v906
      %v908 = vrot.slane %v668, 1
      %v909 = vsel %vm797, %v906, %v908
      %v910 = vrot.slane %v669, 1
      %v911 = vrot.slane %v670, 1
      %v912 = vsel %vm797, %v910, %v911
      %v913 = vrot.slane %v671, 1
      %v914 = vsel %vm797, %v911, %v913
      %v915 = vrot.slane %v672, 1
      %v916 = vsel %vm797, %v913, %v915
      %v917 = vrot.slane %v673, 1
      %v918 = vrot.slane %v674, 1
      %v919 = vsel %vm797, %v917, %v918
      %v920 = vrot.slane %v675, 1
      %v921 = vsel %vm797, %v918, %v920
      %v922 = vrot.slane %v676, 1
      %v923 = vsel %vm797, %v920, %v922
      %v924 = vrot.slane %v677, 1
      %v925 = vrot.slane %v678, 1
      %v926 = vsel %vm797, %v924, %v925
      %v927 = vrot.slane %v679, 1
      %v928 = vsel %vm797, %v925, %v927
      %v929 = vrot.slane %v680, 1
      %v930 = vsel %vm797, %v927, %v929
      %v931 = vrot.slane %v681, 1
      %v932 = vrot.slane %v682, 1
      %v933 = vsel %vm797, %v931, %v932
      %v934 = vrot.slane %v683, 1
      %v935 = vsel %vm797, %v932, %v934
      %v936 = vrot.slane %v684, 1
      %v937 = vsel %vm797, %v934, %v936
      %v938 = vrot.slane %v685, 1
      %v939 = vrot.slane %v686, 1
      %v940 = vsel %vm797, %v938, %v939
      %v941 = vrot.slane %v687, 1
      %v942 = vsel %vm797, %v939, %v941
      %v943 = vrot.slane %v688, 1
      %v944 = vsel %vm797, %v941, %v943
      %v945 = vrot.slane %v689, 1
      %v946 = vrot.slane %v690, 1
      %v947 = vsel %vm797, %v945, %v946
      %v948 = vrot.slane %v691, 1
      %v949 = vsel %vm797, %v946, %v948
      %v950 = vrot.slane %v692, 1
      %v951 = vsel %vm797, %v948, %v950
      %v952 = vrot.slane %v693, 1
      %v953 = vrot.slane %v694, 1
      %v954 = vsel %vm797, %v952, %v953
      %v955 = vrot.slane %v695, 1
      %v956 = vsel %vm797, %v953, %v955
      %v957 = vrot.slane %v696, 1
      %v958 = vsel %vm797, %v955, %v957
      %v959 = vrot.slane %v697, 1
      %v960 = vrot.slane %v698, 1
      %v961 = vsel %vm797, %v959, %v960
      %v962 = vrot.slane %v699, 1
      %v963 = vsel %vm797, %v960, %v962
      %v964 = vrot.slane %v700, 1
      %v965 = vsel %vm797, %v962, %v964
      %v1038 = vadd.f32 %v529, %v800
      %v1039 = vadd.f32 %v530, %v802
      %v1040 = vadd.f32 %v531, %v804
      %v1041 = vadd.f32 %v532, %v807
      %v1042 = vadd.f32 %v533, %v809
      %v1043 = vadd.f32 %v534, %v811
      %v1044 = vadd.f32 %v535, %v814
      %v1045 = vadd.f32 %v536, %v816
      %v1046 = vadd.f32 %v537, %v818
      %v1047 = vadd.f32 %v538, %v821
      %v1048 = vadd.f32 %v539, %v823
      %v1049 = vadd.f32 %v540, %v825
      %v1050 = vadd.f32 %v541, %v828
      %v1051 = vadd.f32 %v542, %v830
      %v1052 = vadd.f32 %v543, %v832
      %v1053 = vadd.f32 %v544, %v835
      %v1054 = vadd.f32 %v545, %v837
      %v1055 = vadd.f32 %v546, %v839
      %v1056 = vadd.f32 %v547, %v842
      %v1057 = vadd.f32 %v548, %v844
      %v1058 = vadd.f32 %v549, %v846
      %v1059 = vadd.f32 %v550, %v849
      %v1060 = vadd.f32 %v551, %v851
      %v1061 = vadd.f32 %v552, %v853
      %v1062 = vadd.f32 %v553, %v856
      %v1063 = vadd.f32 %v554, %v858
      %v1064 = vadd.f32 %v555, %v860
      %v1065 = vadd.f32 %v556, %v863
      %v1066 = vadd.f32 %v557, %v865
      %v1067 = vadd.f32 %v558, %v867
      %v1068 = vadd.f32 %v559, %v870
      %v1069 = vadd.f32 %v560, %v872
      %v1070 = vadd.f32 %v561, %v874
      %v1071 = vadd.f32 %v562, %v877
      %v1072 = vadd.f32 %v563, %v879
      %v1073 = vadd.f32 %v564, %v881
      %v1074 = vadd.f32 %v565, %v884
      %v1075 = vadd.f32 %v566, %v886
      %v1076 = vadd.f32 %v567, %v888
      %v1077 = vadd.f32 %v568, %v891
      %v1078 = vadd.f32 %v569, %v893
      %v1079 = vadd.f32 %v570, %v895
      %v1080 = vadd.f32 %v571, %v898
      %v1081 = vadd.f32 %v572, %v900
      %v1082 = vadd.f32 %v573, %v902
      %v1083 = vadd.f32 %v574, %v905
      %v1084 = vadd.f32 %v575, %v907
      %v1085 = vadd.f32 %v576, %v909
      %v1086 = vadd.f32 %v577, %v912
      %v1087 = vadd.f32 %v578, %v914
      %v1088 = vadd.f32 %v579, %v916
      %v1089 = vadd.f32 %v580, %v919
      %v1090 = vadd.f32 %v581, %v921
      %v1091 = vadd.f32 %v582, %v923
      %v1092 = vadd.f32 %v583, %v926
      %v1093 = vadd.f32 %v584, %v928
      %v1094 = vadd.f32 %v585, %v930
      %v1095 = vadd.f32 %v586, %v933
      %v1096 = vadd.f32 %v587, %v935
      %v1097 = vadd.f32 %v588, %v937
      %v1098 = vadd.f32 %v589, %v940
      %v1099 = vadd.f32 %v590, %v942
      %v1100 = vadd.f32 %v591, %v944
      %v1101 = vadd.f32 %v592, %v947
      %v1102 = vadd.f32 %v593, %v949
      %v1103 = vadd.f32 %v594, %v951
      %v1104 = vadd.f32 %v595, %v954
      %v1105 = vadd.f32 %v596, %v956
      %v1106 = vadd.f32 %v597, %v958
      %v1107 = vadd.f32 %v598, %v961
      %v1108 = vadd.f32 %v599, %v963
      %v1109 = vadd.f32 %v600, %v965
      %v1110 = vlaneseq
      %v1111 = vshrl.u32 %v1110, 7
      %v1112 = vsub.s32 2, %v1111
      %v1113 = vrot.slane %v450, %v1112
      %v1114 = vmul.f32 %v346, %v1113
      %v1115 = vmul.f32 %v347, %v1113
      %v1116 = vmul.f32 %v348, %v1113
      %v1117 = vmul.f32 %v349, %v1113
      %v1118 = vmul.f32 %v350, %v1113
      %v1119 = vmul.f32 %v351, %v1113
      %v1120 = vmul.f32 %v352, %v1113
      %v1121 = vmul.f32 %v353, %v1113
      %v1122 = vmul.f32 %v354, %v1113
      %v1123 = vmul.f32 %v355, %v1113
      %v1124 = vmul.f32 %v356, %v1113
      %v1125 = vmul.f32 %v357, %v1113
      %v1126 = vmul.f32 %v358, %v1113
      %v1127 = vmul.f32 %v359, %v1113
      %v1128 = vmul.f32 %v360, %v1113
      %v1129 = vmul.f32 %v361, %v1113
      %v1130 = vmul.f32 %v362, %v1113
      %v1131 = vmul.f32 %v363, %v1113
      %v1132 = vmul.f32 %v364, %v1113
      %v1133 = vmul.f32 %v365, %v1113
      %v1134 = vmul.f32 %v366, %v1113
      %v1135 = vmul.f32 %v367, %v1113
      %v1136 = vmul.f32 %v368, %v1113
      %v1137 = vmul.f32 %v369, %v1113
      %v1138 = vmul.f32 %v370, %v1113
      %v1139 = vmul.f32 %v371, %v1113
      %v1140 = vmul.f32 %v372, %v1113
      %v1141 = vmul.f32 %v373, %v1113
      %v1142 = vmul.f32 %v374, %v1113
      %v1143 = vmul.f32 %v375, %v1113
      %v1144 = vmul.f32 %v376, %v1113
      %v1145 = vmul.f32 %v377, %v1113
      %v1146 = vmul.f32 %v378, %v1113
      %v1147 = vmul.f32 %v379, %v1113
      %v1148 = vmul.f32 %v380, %v1113
      %v1149 = vmul.f32 %v381, %v1113
      %v1150 = vmul.f32 %v382, %v1113
      %v1151 = vmul.f32 %v383, %v1113
      %v1152 = vmul.f32 %v384, %v1113
      %v1153 = vmul.f32 %v385, %v1113
      %v1154 = vmul.f32 %v386, %v1113
      %v1155 = vmul.f32 %v387, %v1113
      %v1156 = vmul.f32 %v388, %v1113
      %v1157 = vmul.f32 %v389, %v1113
      %v1158 = vmul.f32 %v390, %v1113
      %v1159 = vmul.f32 %v391, %v1113
      %v1160 = vmul.f32 %v392, %v1113
      %v1161 = vmul.f32 %v393, %v1113
      %v1162 = vmul.f32 %v394, %v1113
      %v1163 = vmul.f32 %v395, %v1113
      %v1164 = vmul.f32 %v396, %v1113
      %v1165 = vmul.f32 %v397, %v1113
      %v1166 = vmul.f32 %v398, %v1113
      %v1167 = vmul.f32 %v399, %v1113
      %v1168 = vmul.f32 %v400, %v1113
      %v1169 = vmul.f32 %v401, %v1113
      %v1170 = vmul.f32 %v402, %v1113
      %v1171 = vmul.f32 %v403, %v1113
      %v1172 = vmul.f32 %v404, %v1113
      %v1173 = vmul.f32 %v405, %v1113
      %v1174 = vmul.f32 %v406, %v1113
      %v1175 = vmul.f32 %v407, %v1113
      %v1176 = vmul.f32 %v408, %v1113
      %v1177 = vmul.f32 %v409, %v1113
      %v1178 = vmul.f32 %v410, %v1113
      %v1179 = vmul.f32 %v411, %v1113
      %v1180 = vmul.f32 %v412, %v1113
      %v1181 = vmul.f32 %v413, %v1113
      %v1182 = vmul.f32 %v414, %v1113
      %v1183 = vmul.f32 %v415, %v1113
      %v1184 = vmul.f32 %v416, %v1113
      %v1185 = vmul.f32 %v417, %v1113
      %v1186 = vmul.f32 %v418, %v1113
      %v1187 = vmul.f32 %v419, %v1113
      %v1188 = vmul.f32 %v420, %v1113
      %v1189 = vmul.f32 %v421, %v1113
      %v1190 = vmul.f32 %v422, %v1113
      %v1191 = vmul.f32 %v423, %v1113
      %v1192 = vmul.f32 %v424, %v1113
      %v1193 = vmul.f32 %v425, %v1113
      %v1194 = vmul.f32 %v426, %v1113
      %v1195 = vmul.f32 %v427, %v1113
      %v1196 = vmul.f32 %v428, %v1113
      %v1197 = vmul.f32 %v429, %v1113
      %v1198 = vmul.f32 %v430, %v1113
      %v1199 = vmul.f32 %v431, %v1113
      %v1200 = vmul.f32 %v432, %v1113
      %v1201 = vmul.f32 %v433, %v1113
      %v1202 = vmul.f32 %v434, %v1113
      %v1203 = vmul.f32 %v435, %v1113
      %v1204 = vmul.f32 %v436, %v1113
      %v1205 = vmul.f32 %v437, %v1113
      %v1206 = vmul.f32 %v438, %v1113
      %v1207 = vmul.f32 %v439, %v1113
      %v1208 = vmul.f32 %v440, %v1113
      %v1209 = vmul.f32 %v441, %v1113
      %vm1306 = vcmask 1045504
      %v1307 = vrot.slane %v1114, 2
      %v1308 = vrot.slane %v1115, 2
      %v1309 = vsel %vm1306, %v1307, %v1308
      %v1310 = vrot.slane %v1116, 2
      %v1311 = vsel %vm1306, %v1308, %v1310
      %v1312 = vrot.slane %v1117, 2
      %v1313 = vsel %vm1306, %v1310, %v1312
      %v1314 = vrot.slane %v1118, 2
      %v1315 = vrot.slane %v1119, 2
      %v1316 = vsel %vm1306, %v1314, %v1315
      %v1317 = vrot.slane %v1120, 2
      %v1318 = vsel %vm1306, %v1315, %v1317
      %v1319 = vrot.slane %v1121, 2
      %v1320 = vsel %vm1306, %v1317, %v1319
      %v1321 = vrot.slane %v1122, 2
      %v1322 = vrot.slane %v1123, 2
      %v1323 = vsel %vm1306, %v1321, %v1322
      %v1324 = vrot.slane %v1124, 2
      %v1325 = vsel %vm1306, %v1322, %v1324
      %v1326 = vrot.slane %v1125, 2
      %v1327 = vsel %vm1306, %v1324, %v1326
      %v1328 = vrot.slane %v1126, 2
      %v1329 = vrot.slane %v1127, 2
      %v1330 = vsel %vm1306, %v1328, %v1329
      %v1331 = vrot.slane %v1128, 2
      %v1332 = vsel %vm1306, %v1329, %v1331
      %v1333 = vrot.slane %v1129, 2
      %v1334 = vsel %vm1306, %v1331, %v1333
      %v1335 = vrot.slane %v1130, 2
      %v1336 = vrot.slane %v1131, 2
      %v1337 = vsel %vm1306, %v1335, %v1336
      %v1338 = vrot.slane %v1132, 2
      %v1339 = vsel %vm1306, %v1336, %v1338
      %v1340 = vrot.slane %v1133, 2
      %v1341 = vsel %vm1306, %v1338, %v1340
      %v1342 = vrot.slane %v1134, 2
      %v1343 = vrot.slane %v1135, 2
      %v1344 = vsel %vm1306, %v1342, %v1343
      %v1345 = vrot.slane %v1136, 2
      %v1346 = vsel %vm1306, %v1343, %v1345
      %v1347 = vrot.slane %v1137, 2
      %v1348 = vsel %vm1306, %v1345, %v1347
      %v1349 = vrot.slane %v1138, 2
      %v1350 = vrot.slane %v1139, 2
      %v1351 = vsel %vm1306, %v1349, %v1350
      %v1352 = vrot.slane %v1140, 2
      %v1353 = vsel %vm1306, %v1350, %v1352
      %v1354 = vrot.slane %v1141, 2
      %v1355 = vsel %vm1306, %v1352, %v1354
      %v1356 = vrot.slane %v1142, 2
      %v1357 = vrot.slane %v1143, 2
      %v1358 = vsel %vm1306, %v1356, %v1357
      %v1359 = vrot.slane %v1144, 2
      %v1360 = vsel %vm1306, %v1357, %v1359
      %v1361 = vrot.slane %v1145, 2
      %v1362 = vsel %vm1306, %v1359, %v1361
      %v1363 = vrot.slane %v1146, 2
      %v1364 = vrot.slane %v1147, 2
      %v1365 = vsel %vm1306, %v1363, %v1364
      %v1366 = vrot.slane %v1148, 2
      %v1367 = vsel %vm1306, %v1364, %v1366
      %v1368 = vrot.slane %v1149, 2
      %v1369 = vsel %vm1306, %v1366, %v1368
      %v1370 = vrot.slane %v1150, 2
      %v1371 = vrot.slane %v1151, 2
      %v1372 = vsel %vm1306, %v1370, %v1371
      %v1373 = vrot.slane %v1152, 2
      %v1374 = vsel %vm1306, %v1371, %v1373
      %v1375 = vrot.slane %v1153, 2
      %v1376 = vsel %vm1306, %v1373, %v1375
      %v1377 = vrot.slane %v1154, 2
      %v1378 = vrot.slane %v1155, 2
      %v1379 = vsel %vm1306, %v1377, %v1378
      %v1380 = vrot.slane %v1156, 2
      %v1381 = vsel %vm1306, %v1378, %v1380
      %v1382 = vrot.slane %v1157, 2
      %v1383 = vsel %vm1306, %v1380, %v1382
      %v1384 = vrot.slane %v1158, 2
      %v1385 = vrot.slane %v1159, 2
      %v1386 = vsel %vm1306, %v1384, %v1385
      %v1387 = vrot.slane %v1160, 2
      %v1388 = vsel %vm1306, %v1385, %v1387
      %v1389 = vrot.slane %v1161, 2
      %v1390 = vsel %vm1306, %v1387, %v1389
      %v1391 = vrot.slane %v1162, 2
      %v1392 = vrot.slane %v1163, 2
      %v1393 = vsel %vm1306, %v1391, %v1392
      %v1394 = vrot.slane %v1164, 2
      %v1395 = vsel %vm1306, %v1392, %v1394
      %v1396 = vrot.slane %v1165, 2
      %v1397 = vsel %vm1306, %v1394, %v1396
      %v1398 = vrot.slane %v1166, 2
      %v1399 = vrot.slane %v1167, 2
      %v1400 = vsel %vm1306, %v1398, %v1399
      %v1401 = vrot.slane %v1168, 2
      %v1402 = vsel %vm1306, %v1399, %v1401
      %v1403 = vrot.slane %v1169, 2
      %v1404 = vsel %vm1306, %v1401, %v1403
      %v1405 = vrot.slane %v1170, 2
      %v1406 = vrot.slane %v1171, 2
      %v1407 = vsel %vm1306, %v1405, %v1406
      %v1408 = vrot.slane %v1172, 2
      %v1409 = vsel %vm1306, %v1406, %v1408
      %v1410 = vrot.slane %v1173, 2
      %v1411 = vsel %vm1306, %v1408, %v1410
      %v1412 = vrot.slane %v1174, 2
      %v1413 = vrot.slane %v1175, 2
      %v1414 = vsel %vm1306, %v1412, %v1413
      %v1415 = vrot.slane %v1176, 2
      %v1416 = vsel %vm1306, %v1413, %v1415
      %v1417 = vrot.slane %v1177, 2
      %v1418 = vsel %vm1306, %v1415, %v1417
      %v1419 = vrot.slane %v1178, 2
      %v1420 = vrot.slane %v1179, 2
      %v1421 = vsel %vm1306, %v1419, %v1420
      %v1422 = vrot.slane %v1180, 2
      %v1423 = vsel %vm1306, %v1420, %v1422
      %v1424 = vrot.slane %v1181, 2
      %v1425 = vsel %vm1306, %v1422, %v1424
      %v1426 = vrot.slane %v1182, 2
      %v1427 = vrot.slane %v1183, 2
      %v1428 = vsel %vm1306, %v1426, %v1427
      %v1429 = vrot.slane %v1184, 2
      %v1430 = vsel %vm1306, %v1427, %v1429
      %v1431 = vrot.slane %v1185, 2
      %v1432 = vsel %vm1306, %v1429, %v1431
      %v1433 = vrot.slane %v1186, 2
      %v1434 = vrot.slane %v1187, 2
      %v1435 = vsel %vm1306, %v1433, %v1434
      %v1436 = vrot.slane %v1188, 2
      %v1437 = vsel %vm1306, %v1434, %v1436
      %v1438 = vrot.slane %v1189, 2
      %v1439 = vsel %vm1306, %v1436, %v1438
      %v1440 = vrot.slane %v1190, 2
      %v1441 = vrot.slane %v1191, 2
      %v1442 = vsel %vm1306, %v1440, %v1441
      %v1443 = vrot.slane %v1192, 2
      %v1444 = vsel %vm1306, %v1441, %v1443
      %v1445 = vrot.slane %v1193, 2
      %v1446 = vsel %vm1306, %v1443, %v1445
      %v1447 = vrot.slane %v1194, 2
      %v1448 = vrot.slane %v1195, 2
      %v1449 = vsel %vm1306, %v1447, %v1448
      %v1450 = vrot.slane %v1196, 2
      %v1451 = vsel %vm1306, %v1448, %v1450
      %v1452 = vrot.slane %v1197, 2
      %v1453 = vsel %vm1306, %v1450, %v1452
      %v1454 = vrot.slane %v1198, 2
      %v1455 = vrot.slane %v1199, 2
      %v1456 = vsel %vm1306, %v1454, %v1455
      %v1457 = vrot.slane %v1200, 2
      %v1458 = vsel %vm1306, %v1455, %v1457
      %v1459 = vrot.slane %v1201, 2
      %v1460 = vsel %vm1306, %v1457, %v1459
      %v1461 = vrot.slane %v1202, 2
      %v1462 = vrot.slane %v1203, 2
      %v1463 = vsel %vm1306, %v1461, %v1462
      %v1464 = vrot.slane %v1204, 2
      %v1465 = vsel %vm1306, %v1462, %v1464
      %v1466 = vrot.slane %v1205, 2
      %v1467 = vsel %vm1306, %v1464, %v1466
      %v1468 = vrot.slane %v1206, 2
      %v1469 = vrot.slane %v1207, 2
      %v1470 = vsel %vm1306, %v1468, %v1469
      %v1471 = vrot.slane %v1208, 2
      %v1472 = vsel %vm1306, %v1469, %v1471
      %v1473 = vrot.slane %v1209, 2
      %v1474 = vsel %vm1306, %v1471, %v1473
      %v1547 = vadd.f32 %v1038, %v1309
      %v1548 = vadd.f32 %v1039, %v1311
      %v1549 = vadd.f32 %v1040, %v1313
      %v1550 = vadd.f32 %v1041, %v1316
      %v1551 = vadd.f32 %v1042, %v1318
      %v1552 = vadd.f32 %v1043, %v1320
      %v1553 = vadd.f32 %v1044, %v1323
      %v1554 = vadd.f32 %v1045, %v1325
      %v1555 = vadd.f32 %v1046, %v1327
      %v1556 = vadd.f32 %v1047, %v1330
      %v1557 = vadd.f32 %v1048, %v1332
      %v1558 = vadd.f32 %v1049, %v1334
      %v1559 = vadd.f32 %v1050, %v1337
      %v1560 = vadd.f32 %v1051, %v1339
      %v1561 = vadd.f32 %v1052, %v1341
      %v1562 = vadd.f32 %v1053, %v1344
      %v1563 = vadd.f32 %v1054, %v1346
      %v1564 = vadd.f32 %v1055, %v1348
      %v1565 = vadd.f32 %v1056, %v1351
      %v1566 = vadd.f32 %v1057, %v1353
      %v1567 = vadd.f32 %v1058, %v1355
      %v1568 = vadd.f32 %v1059, %v1358
      %v1569 = vadd.f32 %v1060, %v1360
      %v1570 = vadd.f32 %v1061, %v1362
      %v1571 = vadd.f32 %v1062, %v1365
      %v1572 = vadd.f32 %v1063, %v1367
      %v1573 = vadd.f32 %v1064, %v1369
      %v1574 = vadd.f32 %v1065, %v1372
      %v1575 = vadd.f32 %v1066, %v1374
      %v1576 = vadd.f32 %v1067, %v1376
      %v1577 = vadd.f32 %v1068, %v1379
      %v1578 = vadd.f32 %v1069, %v1381
      %v1579 = vadd.f32 %v1070, %v1383
      %v1580 = vadd.f32 %v1071, %v1386
      %v1581 = vadd.f32 %v1072, %v1388
      %v1582 = vadd.f32 %v1073, %v1390
      %v1583 = vadd.f32 %v1074, %v1393
      %v1584 = vadd.f32 %v1075, %v1395
      %v1585 = vadd.f32 %v1076, %v1397
      %v1586 = vadd.f32 %v1077, %v1400
      %v1587 = vadd.f32 %v1078, %v1402
      %v1588 = vadd.f32 %v1079, %v1404
      %v1589 = vadd.f32 %v1080, %v1407
      %v1590 = vadd.f32 %v1081, %v1409
      %v1591 = vadd.f32 %v1082, %v1411
      %v1592 = vadd.f32 %v1083, %v1414
      %v1593 = vadd.f32 %v1084, %v1416
      %v1594 = vadd.f32 %v1085, %v1418
      %v1595 = vadd.f32 %v1086, %v1421
      %v1596 = vadd.f32 %v1087, %v1423
      %v1597 = vadd.f32 %v1088, %v1425
      %v1598 = vadd.f32 %v1089, %v1428
      %v1599 = vadd.f32 %v1090, %v1430
      %v1600 = vadd.f32 %v1091, %v1432
      %v1601 = vadd.f32 %v1092, %v1435
      %v1602 = vadd.f32 %v1093, %v1437
      %v1603 = vadd.f32 %v1094, %v1439
      %v1604 = vadd.f32 %v1095, %v1442
      %v1605 = vadd.f32 %v1096, %v1444
      %v1606 = vadd.f32 %v1097, %v1446
      %v1607 = vadd.f32 %v1098, %v1449
      %v1608 = vadd.f32 %v1099, %v1451
      %v1609 = vadd.f32 %v1100, %v1453
      %v1610 = vadd.f32 %v1101, %v1456
      %v1611 = vadd.f32 %v1102, %v1458
      %v1612 = vadd.f32 %v1103, %v1460
      %v1613 = vadd.f32 %v1104, %v1463
      %v1614 = vadd.f32 %v1105, %v1465
      %v1615 = vadd.f32 %v1106, %v1467
      %v1616 = vadd.f32 %v1107, %v1470
      %v1617 = vadd.f32 %v1108, %v1472
      %v1618 = vadd.f32 %v1109, %v1474
      %v1619 = vlaneseq
      %v1620 = vshrl.u32 %v1619, 7
      %v1621 = vsub.s32 0, %v1620
      %v1622 = vrot.slane %v451, %v1621
      %v1623 = vmul.f32 %v350, %v1622
      %v1624 = vmul.f32 %v351, %v1622
      %v1625 = vmul.f32 %v352, %v1622
      %v1626 = vmul.f32 %v354, %v1622
      %v1627 = vmul.f32 %v355, %v1622
      %v1628 = vmul.f32 %v356, %v1622
      %v1629 = vmul.f32 %v358, %v1622
      %v1630 = vmul.f32 %v359, %v1622
      %v1631 = vmul.f32 %v360, %v1622
      %v1632 = vmul.f32 %v362, %v1622
      %v1633 = vmul.f32 %v363, %v1622
      %v1634 = vmul.f32 %v364, %v1622
      %v1635 = vmul.f32 %v366, %v1622
      %v1636 = vmul.f32 %v367, %v1622
      %v1637 = vmul.f32 %v368, %v1622
      %v1638 = vmul.f32 %v370, %v1622
      %v1639 = vmul.f32 %v371, %v1622
      %v1640 = vmul.f32 %v372, %v1622
      %v1641 = vmul.f32 %v374, %v1622
      %v1642 = vmul.f32 %v375, %v1622
      %v1643 = vmul.f32 %v376, %v1622
      %v1644 = vmul.f32 %v378, %v1622
      %v1645 = vmul.f32 %v379, %v1622
      %v1646 = vmul.f32 %v380, %v1622
      %v1647 = vmul.f32 %v382, %v1622
      %v1648 = vmul.f32 %v383, %v1622
      %v1649 = vmul.f32 %v384, %v1622
      %v1650 = vmul.f32 %v386, %v1622
      %v1651 = vmul.f32 %v387, %v1622
      %v1652 = vmul.f32 %v388, %v1622
      %v1653 = vmul.f32 %v390, %v1622
      %v1654 = vmul.f32 %v391, %v1622
      %v1655 = vmul.f32 %v392, %v1622
      %v1656 = vmul.f32 %v394, %v1622
      %v1657 = vmul.f32 %v395, %v1622
      %v1658 = vmul.f32 %v396, %v1622
      %v1659 = vmul.f32 %v398, %v1622
      %v1660 = vmul.f32 %v399, %v1622
      %v1661 = vmul.f32 %v400, %v1622
      %v1662 = vmul.f32 %v402, %v1622
      %v1663 = vmul.f32 %v403, %v1622
      %v1664 = vmul.f32 %v404, %v1622
      %v1665 = vmul.f32 %v406, %v1622
      %v1666 = vmul.f32 %v407, %v1622
      %v1667 = vmul.f32 %v408, %v1622
      %v1668 = vmul.f32 %v410, %v1622
      %v1669 = vmul.f32 %v411, %v1622
      %v1670 = vmul.f32 %v412, %v1622
      %v1671 = vmul.f32 %v414, %v1622
      %v1672 = vmul.f32 %v415, %v1622
      %v1673 = vmul.f32 %v416, %v1622
      %v1674 = vmul.f32 %v418, %v1622
      %v1675 = vmul.f32 %v419, %v1622
      %v1676 = vmul.f32 %v420, %v1622
      %v1677 = vmul.f32 %v422, %v1622
      %v1678 = vmul.f32 %v423, %v1622
      %v1679 = vmul.f32 %v424, %v1622
      %v1680 = vmul.f32 %v426, %v1622
      %v1681 = vmul.f32 %v427, %v1622
      %v1682 = vmul.f32 %v428, %v1622
      %v1683 = vmul.f32 %v430, %v1622
      %v1684 = vmul.f32 %v431, %v1622
      %v1685 = vmul.f32 %v432, %v1622
      %v1686 = vmul.f32 %v434, %v1622
      %v1687 = vmul.f32 %v435, %v1622
      %v1688 = vmul.f32 %v436, %v1622
      %v1689 = vmul.f32 %v438, %v1622
      %v1690 = vmul.f32 %v439, %v1622
      %v1691 = vmul.f32 %v440, %v1622
      %v1692 = vmul.f32 %v442, %v1622
      %v1693 = vmul.f32 %v443, %v1622
      %v1694 = vmul.f32 %v444, %v1622
      %v1695 = vadd.f32 %v1547, %v1623
      %v1696 = vadd.f32 %v1548, %v1624
      %v1697 = vadd.f32 %v1549, %v1625
      %v1698 = vadd.f32 %v1550, %v1626
      %v1699 = vadd.f32 %v1551, %v1627
      %v1700 = vadd.f32 %v1552, %v1628
      %v1701 = vadd.f32 %v1553, %v1629
      %v1702 = vadd.f32 %v1554, %v1630
      %v1703 = vadd.f32 %v1555, %v1631
      %v1704 = vadd.f32 %v1556, %v1632
      %v1705 = vadd.f32 %v1557, %v1633
      %v1706 = vadd.f32 %v1558, %v1634
      %v1707 = vadd.f32 %v1559, %v1635
      %v1708 = vadd.f32 %v1560, %v1636
      %v1709 = vadd.f32 %v1561, %v1637
      %v1710 = vadd.f32 %v1562, %v1638
      %v1711 = vadd.f32 %v1563, %v1639
      %v1712 = vadd.f32 %v1564, %v1640
      %v1713 = vadd.f32 %v1565, %v1641
      %v1714 = vadd.f32 %v1566, %v1642
      %v1715 = vadd.f32 %v1567, %v1643
      %v1716 = vadd.f32 %v1568, %v1644
      %v1717 = vadd.f32 %v1569, %v1645
      %v1718 = vadd.f32 %v1570, %v1646
      %v1719 = vadd.f32 %v1571, %v1647
      %v1720 = vadd.f32 %v1572, %v1648
      %v1721 = vadd.f32 %v1573, %v1649
      %v1722 = vadd.f32 %v1574, %v1650
      %v1723 = vadd.f32 %v1575, %v1651
      %v1724 = vadd.f32 %v1576, %v1652
      %v1725 = vadd.f32 %v1577, %v1653
      %v1726 = vadd.f32 %v1578, %v1654
      %v1727 = vadd.f32 %v1579, %v1655
      %v1728 = vadd.f32 %v1580, %v1656
      %v1729 = vadd.f32 %v1581, %v1657
      %v1730 = vadd.f32 %v1582, %v1658
      %v1731 = vadd.f32 %v1583, %v1659
      %v1732 = vadd.f32 %v1584, %v1660
      %v1733 = vadd.f32 %v1585, %v1661
      %v1734 = vadd.f32 %v1586, %v1662
      %v1735 = vadd.f32 %v1587, %v1663
      %v1736 = vadd.f32 %v1588, %v1664
      %v1737 = vadd.f32 %v1589, %v1665
      %v1738 = vadd.f32 %v1590, %v1666
      %v1739 = vadd.f32 %v1591, %v1667
      %v1740 = vadd.f32 %v1592, %v1668
      %v1741 = vadd.f32 %v1593, %v1669
      %v1742 = vadd.f32 %v1594, %v1670
      %v1743 = vadd.f32 %v1595, %v1671
      %v1744 = vadd.f32 %v1596, %v1672
      %v1745 = vadd.f32 %v1597, %v1673
      %v1746 = vadd.f32 %v1598, %v1674
      %v1747 = vadd.f32 %v1599, %v1675
      %v1748 = vadd.f32 %v1600, %v1676
      %v1749 = vadd.f32 %v1601, %v1677
      %v1750 = vadd.f32 %v1602, %v1678
      %v1751 = vadd.f32 %v1603, %v1679
      %v1752 = vadd.f32 %v1604, %v1680
      %v1753 = vadd.f32 %v1605, %v1681
      %v1754 = vadd.f32 %v1606, %v1682
      %v1755 = vadd.f32 %v1607, %v1683
      %v1756 = vadd.f32 %v1608, %v1684
      %v1757 = vadd.f32 %v1609, %v1685
      %v1758 = vadd.f32 %v1610, %v1686
      %v1759 = vadd.f32 %v1611, %v1687
      %v1760 = vadd.f32 %v1612, %v1688
      %v1761 = vadd.f32 %v1613, %v1689
      %v1762 = vadd.f32 %v1614, %v1690
      %v1763 = vadd.f32 %v1615, %v1691
      %v1764 = vadd.f32 %v1616, %v1692
      %v1765 = vadd.f32 %v1617, %v1693
      %v1766 = vadd.f32 %v1618, %v1694
      %v1767 = vlaneseq
      %v1768 = vshrl.u32 %v1767, 7
      %v1769 = vsub.s32 1, %v1768
      %v1770 = vrot.slane %v451, %v1769
      %v1771 = vmul.f32 %v350, %v1770
      %v1772 = vmul.f32 %v351, %v1770
      %v1773 = vmul.f32 %v352, %v1770
      %v1774 = vmul.f32 %v353, %v1770
      %v1775 = vmul.f32 %v354, %v1770
      %v1776 = vmul.f32 %v355, %v1770
      %v1777 = vmul.f32 %v356, %v1770
      %v1778 = vmul.f32 %v357, %v1770
      %v1779 = vmul.f32 %v358, %v1770
      %v1780 = vmul.f32 %v359, %v1770
      %v1781 = vmul.f32 %v360, %v1770
      %v1782 = vmul.f32 %v361, %v1770
      %v1783 = vmul.f32 %v362, %v1770
      %v1784 = vmul.f32 %v363, %v1770
      %v1785 = vmul.f32 %v364, %v1770
      %v1786 = vmul.f32 %v365, %v1770
      %v1787 = vmul.f32 %v366, %v1770
      %v1788 = vmul.f32 %v367, %v1770
      %v1789 = vmul.f32 %v368, %v1770
      %v1790 = vmul.f32 %v369, %v1770
      %v1791 = vmul.f32 %v370, %v1770
      %v1792 = vmul.f32 %v371, %v1770
      %v1793 = vmul.f32 %v372, %v1770
      %v1794 = vmul.f32 %v373, %v1770
      %v1795 = vmul.f32 %v374, %v1770
      %v1796 = vmul.f32 %v375, %v1770
      %v1797 = vmul.f32 %v376, %v1770
      %v1798 = vmul.f32 %v377, %v1770
      %v1799 = vmul.f32 %v378, %v1770
      %v1800 = vmul.f32 %v379, %v1770
      %v1801 = vmul.f32 %v380, %v1770
      %v1802 = vmul.f32 %v381, %v1770
      %v1803 = vmul.f32 %v382, %v1770
      %v1804 = vmul.f32 %v383, %v1770
      %v1805 = vmul.f32 %v384, %v1770
      %v1806 = vmul.f32 %v385, %v1770
      %v1807 = vmul.f32 %v386, %v1770
      %v1808 = vmul.f32 %v387, %v1770
      %v1809 = vmul.f32 %v388, %v1770
      %v1810 = vmul.f32 %v389, %v1770
      %v1811 = vmul.f32 %v390, %v1770
      %v1812 = vmul.f32 %v391, %v1770
      %v1813 = vmul.f32 %v392, %v1770
      %v1814 = vmul.f32 %v393, %v1770
      %v1815 = vmul.f32 %v394, %v1770
      %v1816 = vmul.f32 %v395, %v1770
      %v1817 = vmul.f32 %v396, %v1770
      %v1818 = vmul.f32 %v397, %v1770
      %v1819 = vmul.f32 %v398, %v1770
      %v1820 = vmul.f32 %v399, %v1770
      %v1821 = vmul.f32 %v400, %v1770
      %v1822 = vmul.f32 %v401, %v1770
      %v1823 = vmul.f32 %v402, %v1770
      %v1824 = vmul.f32 %v403, %v1770
      %v1825 = vmul.f32 %v404, %v1770
      %v1826 = vmul.f32 %v405, %v1770
      %v1827 = vmul.f32 %v406, %v1770
      %v1828 = vmul.f32 %v407, %v1770
      %v1829 = vmul.f32 %v408, %v1770
      %v1830 = vmul.f32 %v409, %v1770
      %v1831 = vmul.f32 %v410, %v1770
      %v1832 = vmul.f32 %v411, %v1770
      %v1833 = vmul.f32 %v412, %v1770
      %v1834 = vmul.f32 %v413, %v1770
      %v1835 = vmul.f32 %v414, %v1770
      %v1836 = vmul.f32 %v415, %v1770
      %v1837 = vmul.f32 %v416, %v1770
      %v1838 = vmul.f32 %v417, %v1770
      %v1839 = vmul.f32 %v418, %v1770
      %v1840 = vmul.f32 %v419, %v1770
      %v1841 = vmul.f32 %v420, %v1770
      %v1842 = vmul.f32 %v421, %v1770
      %v1843 = vmul.f32 %v422, %v1770
      %v1844 = vmul.f32 %v423, %v1770
      %v1845 = vmul.f32 %v424, %v1770
      %v1846 = vmul.f32 %v425, %v1770
      %v1847 = vmul.f32 %v426, %v1770
      %v1848 = vmul.f32 %v427, %v1770
      %v1849 = vmul.f32 %v428, %v1770
      %v1850 = vmul.f32 %v429, %v1770
      %v1851 = vmul.f32 %v430, %v1770
      %v1852 = vmul.f32 %v431, %v1770
      %v1853 = vmul.f32 %v432, %v1770
      %v1854 = vmul.f32 %v433, %v1770
      %v1855 = vmul.f32 %v434, %v1770
      %v1856 = vmul.f32 %v435, %v1770
      %v1857 = vmul.f32 %v436, %v1770
      %v1858 = vmul.f32 %v437, %v1770
      %v1859 = vmul.f32 %v438, %v1770
      %v1860 = vmul.f32 %v439, %v1770
      %v1861 = vmul.f32 %v440, %v1770
      %v1862 = vmul.f32 %v441, %v1770
      %v1863 = vmul.f32 %v442, %v1770
      %v1864 = vmul.f32 %v443, %v1770
      %v1865 = vmul.f32 %v444, %v1770
      %v1866 = vmul.f32 %v445, %v1770
      %v1963 = vrot.slane %v1771, 1
      %v1964 = vrot.slane %v1772, 1
      %v1965 = vsel %vm797, %v1963, %v1964
      %v1966 = vrot.slane %v1773, 1
      %v1967 = vsel %vm797, %v1964, %v1966
      %v1968 = vrot.slane %v1774, 1
      %v1969 = vsel %vm797, %v1966, %v1968
      %v1970 = vrot.slane %v1775, 1
      %v1971 = vrot.slane %v1776, 1
      %v1972 = vsel %vm797, %v1970, %v1971
      %v1973 = vrot.slane %v1777, 1
      %v1974 = vsel %vm797, %v1971, %v1973
      %v1975 = vrot.slane %v1778, 1
      %v1976 = vsel %vm797, %v1973, %v1975
      %v1977 = vrot.slane %v1779, 1
      %v1978 = vrot.slane %v1780, 1
      %v1979 = vsel %vm797, %v1977, %v1978
      %v1980 = vrot.slane %v1781, 1
      %v1981 = vsel %vm797, %v1978, %v1980
      %v1982 = vrot.slane %v1782, 1
      %v1983 = vsel %vm797, %v1980, %v1982
      %v1984 = vrot.slane %v1783, 1
      %v1985 = vrot.slane %v1784, 1
      %v1986 = vsel %vm797, %v1984, %v1985
      %v1987 = vrot.slane %v1785, 1
      %v1988 = vsel %vm797, %v1985, %v1987
      %v1989 = vrot.slane %v1786, 1
      %v1990 = vsel %vm797, %v1987, %v1989
      %v1991 = vrot.slane %v1787, 1
      %v1992 = vrot.slane %v1788, 1
      %v1993 = vsel %vm797, %v1991, %v1992
      %v1994 = vrot.slane %v1789, 1
      %v1995 = vsel %vm797, %v1992, %v1994
      %v1996 = vrot.slane %v1790, 1
      %v1997 = vsel %vm797, %v1994, %v1996
      %v1998 = vrot.slane %v1791, 1
      %v1999 = vrot.slane %v1792, 1
      %v2000 = vsel %vm797, %v1998, %v1999
      %v2001 = vrot.slane %v1793, 1
      %v2002 = vsel %vm797, %v1999, %v2001
      %v2003 = vrot.slane %v1794, 1
      %v2004 = vsel %vm797, %v2001, %v2003
      %v2005 = vrot.slane %v1795, 1
      %v2006 = vrot.slane %v1796, 1
      %v2007 = vsel %vm797, %v2005, %v2006
      %v2008 = vrot.slane %v1797, 1
      %v2009 = vsel %vm797, %v2006, %v2008
      %v2010 = vrot.slane %v1798, 1
      %v2011 = vsel %vm797, %v2008, %v2010
      %v2012 = vrot.slane %v1799, 1
      %v2013 = vrot.slane %v1800, 1
      %v2014 = vsel %vm797, %v2012, %v2013
      %v2015 = vrot.slane %v1801, 1
      %v2016 = vsel %vm797, %v2013, %v2015
      %v2017 = vrot.slane %v1802, 1
      %v2018 = vsel %vm797, %v2015, %v2017
      %v2019 = vrot.slane %v1803, 1
      %v2020 = vrot.slane %v1804, 1
      %v2021 = vsel %vm797, %v2019, %v2020
      %v2022 = vrot.slane %v1805, 1
      %v2023 = vsel %vm797, %v2020, %v2022
      %v2024 = vrot.slane %v1806, 1
      %v2025 = vsel %vm797, %v2022, %v2024
      %v2026 = vrot.slane %v1807, 1
      %v2027 = vrot.slane %v1808, 1
      %v2028 = vsel %vm797, %v2026, %v2027
      %v2029 = vrot.slane %v1809, 1
      %v2030 = vsel %vm797, %v2027, %v2029
      %v2031 = vrot.slane %v1810, 1
      %v2032 = vsel %vm797, %v2029, %v2031
      %v2033 = vrot.slane %v1811, 1
      %v2034 = vrot.slane %v1812, 1
      %v2035 = vsel %vm797, %v2033, %v2034
      %v2036 = vrot.slane %v1813, 1
      %v2037 = vsel %vm797, %v2034, %v2036
      %v2038 = vrot.slane %v1814, 1
      %v2039 = vsel %vm797, %v2036, %v2038
      %v2040 = vrot.slane %v1815, 1
      %v2041 = vrot.slane %v1816, 1
      %v2042 = vsel %vm797, %v2040, %v2041
      %v2043 = vrot.slane %v1817, 1
      %v2044 = vsel %vm797, %v2041, %v2043
      %v2045 = vrot.slane %v1818, 1
      %v2046 = vsel %vm797, %v2043, %v2045
      %v2047 = vrot.slane %v1819, 1
      %v2048 = vrot.slane %v1820, 1
      %v2049 = vsel %vm797, %v2047, %v2048
      %v2050 = vrot.slane %v1821, 1
      %v2051 = vsel %vm797, %v2048, %v2050
      %v2052 = vrot.slane %v1822, 1
      %v2053 = vsel %vm797, %v2050, %v2052
      %v2054 = vrot.slane %v1823, 1
      %v2055 = vrot.slane %v1824, 1
      %v2056 = vsel %vm797, %v2054, %v2055
      %v2057 = vrot.slane %v1825, 1
      %v2058 = vsel %vm797, %v2055, %v2057
      %v2059 = vrot.slane %v1826, 1
      %v2060 = vsel %vm797, %v2057, %v2059
      %v2061 = vrot.slane %v1827, 1
      %v2062 = vrot.slane %v1828, 1
      %v2063 = vsel %vm797, %v2061, %v2062
      %v2064 = vrot.slane %v1829, 1
      %v2065 = vsel %vm797, %v2062, %v2064
      %v2066 = vrot.slane %v1830, 1
      %v2067 = vsel %vm797, %v2064, %v2066
      %v2068 = vrot.slane %v1831, 1
      %v2069 = vrot.slane %v1832, 1
      %v2070 = vsel %vm797, %v2068, %v2069
      %v2071 = vrot.slane %v1833, 1
      %v2072 = vsel %vm797, %v2069, %v2071
      %v2073 = vrot.slane %v1834, 1
      %v2074 = vsel %vm797, %v2071, %v2073
      %v2075 = vrot.slane %v1835, 1
      %v2076 = vrot.slane %v1836, 1
      %v2077 = vsel %vm797, %v2075, %v2076
      %v2078 = vrot.slane %v1837, 1
      %v2079 = vsel %vm797, %v2076, %v2078
      %v2080 = vrot.slane %v1838, 1
      %v2081 = vsel %vm797, %v2078, %v2080
      %v2082 = vrot.slane %v1839, 1
      %v2083 = vrot.slane %v1840, 1
      %v2084 = vsel %vm797, %v2082, %v2083
      %v2085 = vrot.slane %v1841, 1
      %v2086 = vsel %vm797, %v2083, %v2085
      %v2087 = vrot.slane %v1842, 1
      %v2088 = vsel %vm797, %v2085, %v2087
      %v2089 = vrot.slane %v1843, 1
      %v2090 = vrot.slane %v1844, 1
      %v2091 = vsel %vm797, %v2089, %v2090
      %v2092 = vrot.slane %v1845, 1
      %v2093 = vsel %vm797, %v2090, %v2092
      %v2094 = vrot.slane %v1846, 1
      %v2095 = vsel %vm797, %v2092, %v2094
      %v2096 = vrot.slane %v1847, 1
      %v2097 = vrot.slane %v1848, 1
      %v2098 = vsel %vm797, %v2096, %v2097
      %v2099 = vrot.slane %v1849, 1
      %v2100 = vsel %vm797, %v2097, %v2099
      %v2101 = vrot.slane %v1850, 1
      %v2102 = vsel %vm797, %v2099, %v2101
      %v2103 = vrot.slane %v1851, 1
      %v2104 = vrot.slane %v1852, 1
      %v2105 = vsel %vm797, %v2103, %v2104
      %v2106 = vrot.slane %v1853, 1
      %v2107 = vsel %vm797, %v2104, %v2106
      %v2108 = vrot.slane %v1854, 1
      %v2109 = vsel %vm797, %v2106, %v2108
      %v2110 = vrot.slane %v1855, 1
      %v2111 = vrot.slane %v1856, 1
      %v2112 = vsel %vm797, %v2110, %v2111
      %v2113 = vrot.slane %v1857, 1
      %v2114 = vsel %vm797, %v2111, %v2113
      %v2115 = vrot.slane %v1858, 1
      %v2116 = vsel %vm797, %v2113, %v2115
      %v2117 = vrot.slane %v1859, 1
      %v2118 = vrot.slane %v1860, 1
      %v2119 = vsel %vm797, %v2117, %v2118
      %v2120 = vrot.slane %v1861, 1
      %v2121 = vsel %vm797, %v2118, %v2120
      %v2122 = vrot.slane %v1862, 1
      %v2123 = vsel %vm797, %v2120, %v2122
      %v2124 = vrot.slane %v1863, 1
      %v2125 = vrot.slane %v1864, 1
      %v2126 = vsel %vm797, %v2124, %v2125
      %v2127 = vrot.slane %v1865, 1
      %v2128 = vsel %vm797, %v2125, %v2127
      %v2129 = vrot.slane %v1866, 1
      %v2130 = vsel %vm797, %v2127, %v2129
      %v2203 = vadd.f32 %v1695, %v1965
      %v2204 = vadd.f32 %v1696, %v1967
      %v2205 = vadd.f32 %v1697, %v1969
      %v2206 = vadd.f32 %v1698, %v1972
      %v2207 = vadd.f32 %v1699, %v1974
      %v2208 = vadd.f32 %v1700, %v1976
      %v2209 = vadd.f32 %v1701, %v1979
      %v2210 = vadd.f32 %v1702, %v1981
      %v2211 = vadd.f32 %v1703, %v1983
      %v2212 = vadd.f32 %v1704, %v1986
      %v2213 = vadd.f32 %v1705, %v1988
      %v2214 = vadd.f32 %v1706, %v1990
      %v2215 = vadd.f32 %v1707, %v1993
      %v2216 = vadd.f32 %v1708, %v1995
      %v2217 = vadd.f32 %v1709, %v1997
      %v2218 = vadd.f32 %v1710, %v2000
      %v2219 = vadd.f32 %v1711, %v2002
      %v2220 = vadd.f32 %v1712, %v2004
      %v2221 = vadd.f32 %v1713, %v2007
      %v2222 = vadd.f32 %v1714, %v2009
      %v2223 = vadd.f32 %v1715, %v2011
      %v2224 = vadd.f32 %v1716, %v2014
      %v2225 = vadd.f32 %v1717, %v2016
      %v2226 = vadd.f32 %v1718, %v2018
      %v2227 = vadd.f32 %v1719, %v2021
      %v2228 = vadd.f32 %v1720, %v2023
      %v2229 = vadd.f32 %v1721, %v2025
      %v2230 = vadd.f32 %v1722, %v2028
      %v2231 = vadd.f32 %v1723, %v2030
      %v2232 = vadd.f32 %v1724, %v2032
      %v2233 = vadd.f32 %v1725, %v2035
      %v2234 = vadd.f32 %v1726, %v2037
      %v2235 = vadd.f32 %v1727, %v2039
      %v2236 = vadd.f32 %v1728, %v2042
      %v2237 = vadd.f32 %v1729, %v2044
      %v2238 = vadd.f32 %v1730, %v2046
      %v2239 = vadd.f32 %v1731, %v2049
      %v2240 = vadd.f32 %v1732, %v2051
      %v2241 = vadd.f32 %v1733, %v2053
      %v2242 = vadd.f32 %v1734, %v2056
      %v2243 = vadd.f32 %v1735, %v2058
      %v2244 = vadd.f32 %v1736, %v2060
      %v2245 = vadd.f32 %v1737, %v2063
      %v2246 = vadd.f32 %v1738, %v2065
      %v2247 = vadd.f32 %v1739, %v2067
      %v2248 = vadd.f32 %v1740, %v2070
      %v2249 = vadd.f32 %v1741, %v2072
      %v2250 = vadd.f32 %v1742, %v2074
      %v2251 = vadd.f32 %v1743, %v2077
      %v2252 = vadd.f32 %v1744, %v2079
      %v2253 = vadd.f32 %v1745, %v2081
      %v2254 = vadd.f32 %v1746, %v2084
      %v2255 = vadd.f32 %v1747, %v2086
      %v2256 = vadd.f32 %v1748, %v2088
      %v2257 = vadd.f32 %v1749, %v2091
      %v2258 = vadd.f32 %v1750, %v2093
      %v2259 = vadd.f32 %v1751, %v2095
      %v2260 = vadd.f32 %v1752, %v2098
      %v2261 = vadd.f32 %v1753, %v2100
      %v2262 = vadd.f32 %v1754, %v2102
      %v2263 = vadd.f32 %v1755, %v2105
      %v2264 = vadd.f32 %v1756, %v2107
      %v2265 = vadd.f32 %v1757, %v2109
      %v2266 = vadd.f32 %v1758, %v2112
      %v2267 = vadd.f32 %v1759, %v2114
      %v2268 = vadd.f32 %v1760, %v2116
      %v2269 = vadd.f32 %v1761, %v2119
      %v2270 = vadd.f32 %v1762, %v2121
      %v2271 = vadd.f32 %v1763, %v2123
      %v2272 = vadd.f32 %v1764, %v2126
      %v2273 = vadd.f32 %v1765, %v2128
      %v2274 = vadd.f32 %v1766, %v2130
      %v2275 = vlaneseq
      %v2276 = vshrl.u32 %v2275, 7
      %v2277 = vsub.s32 2, %v2276
      %v2278 = vrot.slane %v451, %v2277
      %v2279 = vmul.f32 %v350, %v2278
      %v2280 = vmul.f32 %v351, %v2278
      %v2281 = vmul.f32 %v352, %v2278
      %v2282 = vmul.f32 %v353, %v2278
      %v2283 = vmul.f32 %v354, %v2278
      %v2284 = vmul.f32 %v355, %v2278
      %v2285 = vmul.f32 %v356, %v2278
      %v2286 = vmul.f32 %v357, %v2278
      %v2287 = vmul.f32 %v358, %v2278
      %v2288 = vmul.f32 %v359, %v2278
      %v2289 = vmul.f32 %v360, %v2278
      %v2290 = vmul.f32 %v361, %v2278
      %v2291 = vmul.f32 %v362, %v2278
      %v2292 = vmul.f32 %v363, %v2278
      %v2293 = vmul.f32 %v364, %v2278
      %v2294 = vmul.f32 %v365, %v2278
      %v2295 = vmul.f32 %v366, %v2278
      %v2296 = vmul.f32 %v367, %v2278
      %v2297 = vmul.f32 %v368, %v2278
      %v2298 = vmul.f32 %v369, %v2278
      %v2299 = vmul.f32 %v370, %v2278
      %v2300 = vmul.f32 %v371, %v2278
      %v2301 = vmul.f32 %v372, %v2278
      %v2302 = vmul.f32 %v373, %v2278
      %v2303 = vmul.f32 %v374, %v2278
      %v2304 = vmul.f32 %v375, %v2278
      %v2305 = vmul.f32 %v376, %v2278
      %v2306 = vmul.f32 %v377, %v2278
      %v2307 = vmul.f32 %v378, %v2278
      %v2308 = vmul.f32 %v379, %v2278
      %v2309 = vmul.f32 %v380, %v2278
      %v2310 = vmul.f32 %v381, %v2278
      %v2311 = vmul.f32 %v382, %v2278
      %v2312 = vmul.f32 %v383, %v2278
      %v2313 = vmul.f32 %v384, %v2278
      %v2314 = vmul.f32 %v385, %v2278
      %v2315 = vmul.f32 %v386, %v2278
      %v2316 = vmul.f32 %v387, %v2278
      %v2317 = vmul.f32 %v388, %v2278
      %v2318 = vmul.f32 %v389, %v2278
      %v2319 = vmul.f32 %v390, %v2278
      %v2320 = vmul.f32 %v391, %v2278
      %v2321 = vmul.f32 %v392, %v2278
      %v2322 = vmul.f32 %v393, %v2278
      %v2323 = vmul.f32 %v394, %v2278
      %v2324 = vmul.f32 %v395, %v2278
      %v2325 = vmul.f32 %v396, %v2278
      %v2326 = vmul.f32 %v397, %v2278
      %v2327 = vmul.f32 %v398, %v2278
      %v2328 = vmul.f32 %v399, %v2278
      %v2329 = vmul.f32 %v400, %v2278
      %v2330 = vmul.f32 %v401, %v2278
      %v2331 = vmul.f32 %v402, %v2278
      %v2332 = vmul.f32 %v403, %v2278
      %v2333 = vmul.f32 %v404, %v2278
      %v2334 = vmul.f32 %v405, %v2278
      %v2335 = vmul.f32 %v406, %v2278
      %v2336 = vmul.f32 %v407, %v2278
      %v2337 = vmul.f32 %v408, %v2278
      %v2338 = vmul.f32 %v409, %v2278
      %v2339 = vmul.f32 %v410, %v2278
      %v2340 = vmul.f32 %v411, %v2278
      %v2341 = vmul.f32 %v412, %v2278
      %v2342 = vmul.f32 %v413, %v2278
      %v2343 = vmul.f32 %v414, %v2278
      %v2344 = vmul.f32 %v415, %v2278
      %v2345 = vmul.f32 %v416, %v2278
      %v2346 = vmul.f32 %v417, %v2278
      %v2347 = vmul.f32 %v418, %v2278
      %v2348 = vmul.f32 %v419, %v2278
      %v2349 = vmul.f32 %v420, %v2278
      %v2350 = vmul.f32 %v421, %v2278
      %v2351 = vmul.f32 %v422, %v2278
      %v2352 = vmul.f32 %v423, %v2278
      %v2353 = vmul.f32 %v424, %v2278
      %v2354 = vmul.f32 %v425, %v2278
      %v2355 = vmul.f32 %v426, %v2278
      %v2356 = vmul.f32 %v427, %v2278
      %v2357 = vmul.f32 %v428, %v2278
      %v2358 = vmul.f32 %v429, %v2278
      %v2359 = vmul.f32 %v430, %v2278
      %v2360 = vmul.f32 %v431, %v2278
      %v2361 = vmul.f32 %v432, %v2278
      %v2362 = vmul.f32 %v433, %v2278
      %v2363 = vmul.f32 %v434, %v2278
      %v2364 = vmul.f32 %v435, %v2278
      %v2365 = vmul.f32 %v436, %v2278
      %v2366 = vmul.f32 %v437, %v2278
      %v2367 = vmul.f32 %v438, %v2278
      %v2368 = vmul.f32 %v439, %v2278
      %v2369 = vmul.f32 %v440, %v2278
      %v2370 = vmul.f32 %v441, %v2278
      %v2371 = vmul.f32 %v442, %v2278
      %v2372 = vmul.f32 %v443, %v2278
      %v2373 = vmul.f32 %v444, %v2278
      %v2374 = vmul.f32 %v445, %v2278
      %v2471 = vrot.slane %v2279, 2
      %v2472 = vrot.slane %v2280, 2
      %v2473 = vsel %vm1306, %v2471, %v2472
      %v2474 = vrot.slane %v2281, 2
      %v2475 = vsel %vm1306, %v2472, %v2474
      %v2476 = vrot.slane %v2282, 2
      %v2477 = vsel %vm1306, %v2474, %v2476
      %v2478 = vrot.slane %v2283, 2
      %v2479 = vrot.slane %v2284, 2
      %v2480 = vsel %vm1306, %v2478, %v2479
      %v2481 = vrot.slane %v2285, 2
      %v2482 = vsel %vm1306, %v2479, %v2481
      %v2483 = vrot.slane %v2286, 2
      %v2484 = vsel %vm1306, %v2481, %v2483
      %v2485 = vrot.slane %v2287, 2
      %v2486 = vrot.slane %v2288, 2
      %v2487 = vsel %vm1306, %v2485, %v2486
      %v2488 = vrot.slane %v2289, 2
      %v2489 = vsel %vm1306, %v2486, %v2488
      %v2490 = vrot.slane %v2290, 2
      %v2491 = vsel %vm1306, %v2488, %v2490
      %v2492 = vrot.slane %v2291, 2
      %v2493 = vrot.slane %v2292, 2
      %v2494 = vsel %vm1306, %v2492, %v2493
      %v2495 = vrot.slane %v2293, 2
      %v2496 = vsel %vm1306, %v2493, %v2495
      %v2497 = vrot.slane %v2294, 2
      %v2498 = vsel %vm1306, %v2495, %v2497
      %v2499 = vrot.slane %v2295, 2
      %v2500 = vrot.slane %v2296, 2
      %v2501 = vsel %vm1306, %v2499, %v2500
      %v2502 = vrot.slane %v2297, 2
      %v2503 = vsel %vm1306, %v2500, %v2502
      %v2504 = vrot.slane %v2298, 2
      %v2505 = vsel %vm1306, %v2502, %v2504
      %v2506 = vrot.slane %v2299, 2
      %v2507 = vrot.slane %v2300, 2
      %v2508 = vsel %vm1306, %v2506, %v2507
      %v2509 = vrot.slane %v2301, 2
      %v2510 = vsel %vm1306, %v2507, %v2509
      %v2511 = vrot.slane %v2302, 2
      %v2512 = vsel %vm1306, %v2509, %v2511
      %v2513 = vrot.slane %v2303, 2
      %v2514 = vrot.slane %v2304, 2
      %v2515 = vsel %vm1306, %v2513, %v2514
      %v2516 = vrot.slane %v2305, 2
      %v2517 = vsel %vm1306, %v2514, %v2516
      %v2518 = vrot.slane %v2306, 2
      %v2519 = vsel %vm1306, %v2516, %v2518
      %v2520 = vrot.slane %v2307, 2
      %v2521 = vrot.slane %v2308, 2
      %v2522 = vsel %vm1306, %v2520, %v2521
      %v2523 = vrot.slane %v2309, 2
      %v2524 = vsel %vm1306, %v2521, %v2523
      %v2525 = vrot.slane %v2310, 2
      %v2526 = vsel %vm1306, %v2523, %v2525
      %v2527 = vrot.slane %v2311, 2
      %v2528 = vrot.slane %v2312, 2
      %v2529 = vsel %vm1306, %v2527, %v2528
      %v2530 = vrot.slane %v2313, 2
      %v2531 = vsel %vm1306, %v2528, %v2530
      %v2532 = vrot.slane %v2314, 2
      %v2533 = vsel %vm1306, %v2530, %v2532
      %v2534 = vrot.slane %v2315, 2
      %v2535 = vrot.slane %v2316, 2
      %v2536 = vsel %vm1306, %v2534, %v2535
      %v2537 = vrot.slane %v2317, 2
      %v2538 = vsel %vm1306, %v2535, %v2537
      %v2539 = vrot.slane %v2318, 2
      %v2540 = vsel %vm1306, %v2537, %v2539
      %v2541 = vrot.slane %v2319, 2
      %v2542 = vrot.slane %v2320, 2
      %v2543 = vsel %vm1306, %v2541, %v2542
      %v2544 = vrot.slane %v2321, 2
      %v2545 = vsel %vm1306, %v2542, %v2544
      %v2546 = vrot.slane %v2322, 2
      %v2547 = vsel %vm1306, %v2544, %v2546
      %v2548 = vrot.slane %v2323, 2
      %v2549 = vrot.slane %v2324, 2
      %v2550 = vsel %vm1306, %v2548, %v2549
      %v2551 = vrot.slane %v2325, 2
      %v2552 = vsel %vm1306, %v2549, %v2551
      %v2553 = vrot.slane %v2326, 2
      %v2554 = vsel %vm1306, %v2551, %v2553
      %v2555 = vrot.slane %v2327, 2
      %v2556 = vrot.slane %v2328, 2
      %v2557 = vsel %vm1306, %v2555, %v2556
      %v2558 = vrot.slane %v2329, 2
      %v2559 = vsel %vm1306, %v2556, %v2558
      %v2560 = vrot.slane %v2330, 2
      %v2561 = vsel %vm1306, %v2558, %v2560
      %v2562 = vrot.slane %v2331, 2
      %v2563 = vrot.slane %v2332, 2
      %v2564 = vsel %vm1306, %v2562, %v2563
      %v2565 = vrot.slane %v2333, 2
      %v2566 = vsel %vm1306, %v2563, %v2565
      %v2567 = vrot.slane %v2334, 2
      %v2568 = vsel %vm1306, %v2565, %v2567
      %v2569 = vrot.slane %v2335, 2
      %v2570 = vrot.slane %v2336, 2
      %v2571 = vsel %vm1306, %v2569, %v2570
      %v2572 = vrot.slane %v2337, 2
      %v2573 = vsel %vm1306, %v2570, %v2572
      %v2574 = vrot.slane %v2338, 2
      %v2575 = vsel %vm1306, %v2572, %v2574
      %v2576 = vrot.slane %v2339, 2
      %v2577 = vrot.slane %v2340, 2
      %v2578 = vsel %vm1306, %v2576, %v2577
      %v2579 = vrot.slane %v2341, 2
      %v2580 = vsel %vm1306, %v2577, %v2579
      %v2581 = vrot.slane %v2342, 2
      %v2582 = vsel %vm1306, %v2579, %v2581
      %v2583 = vrot.slane %v2343, 2
      %v2584 = vrot.slane %v2344, 2
      %v2585 = vsel %vm1306, %v2583, %v2584
      %v2586 = vrot.slane %v2345, 2
      %v2587 = vsel %vm1306, %v2584, %v2586
      %v2588 = vrot.slane %v2346, 2
      %v2589 = vsel %vm1306, %v2586, %v2588
      %v2590 = vrot.slane %v2347, 2
      %v2591 = vrot.slane %v2348, 2
      %v2592 = vsel %vm1306, %v2590, %v2591
      %v2593 = vrot.slane %v2349, 2
      %v2594 = vsel %vm1306, %v2591, %v2593
      %v2595 = vrot.slane %v2350, 2
      %v2596 = vsel %vm1306, %v2593, %v2595
      %v2597 = vrot.slane %v2351, 2
      %v2598 = vrot.slane %v2352, 2
      %v2599 = vsel %vm1306, %v2597, %v2598
      %v2600 = vrot.slane %v2353, 2
      %v2601 = vsel %vm1306, %v2598, %v2600
      %v2602 = vrot.slane %v2354, 2
      %v2603 = vsel %vm1306, %v2600, %v2602
      %v2604 = vrot.slane %v2355, 2
      %v2605 = vrot.slane %v2356, 2
      %v2606 = vsel %vm1306, %v2604, %v2605
      %v2607 = vrot.slane %v2357, 2
      %v2608 = vsel %vm1306, %v2605, %v2607
      %v2609 = vrot.slane %v2358, 2
      %v2610 = vsel %vm1306, %v2607, %v2609
      %v2611 = vrot.slane %v2359, 2
      %v2612 = vrot.slane %v2360, 2
      %v2613 = vsel %vm1306, %v2611, %v2612
      %v2614 = vrot.slane %v2361, 2
      %v2615 = vsel %vm1306, %v2612, %v2614
      %v2616 = vrot.slane %v2362, 2
      %v2617 = vsel %vm1306, %v2614, %v2616
      %v2618 = vrot.slane %v2363, 2
      %v2619 = vrot.slane %v2364, 2
      %v2620 = vsel %vm1306, %v2618, %v2619
      %v2621 = vrot.slane %v2365, 2
      %v2622 = vsel %vm1306, %v2619, %v2621
      %v2623 = vrot.slane %v2366, 2
      %v2624 = vsel %vm1306, %v2621, %v2623
      %v2625 = vrot.slane %v2367, 2
      %v2626 = vrot.slane %v2368, 2
      %v2627 = vsel %vm1306, %v2625, %v2626
      %v2628 = vrot.slane %v2369, 2
      %v2629 = vsel %vm1306, %v2626, %v2628
      %v2630 = vrot.slane %v2370, 2
      %v2631 = vsel %vm1306, %v2628, %v2630
      %v2632 = vrot.slane %v2371, 2
      %v2633 = vrot.slane %v2372, 2
      %v2634 = vsel %vm1306, %v2632, %v2633
      %v2635 = vrot.slane %v2373, 2
      %v2636 = vsel %vm1306, %v2633, %v2635
      %v2637 = vrot.slane %v2374, 2
      %v2638 = vsel %vm1306, %v2635, %v2637
      %v2711 = vadd.f32 %v2203, %v2473
      %v2712 = vadd.f32 %v2204, %v2475
      %v2713 = vadd.f32 %v2205, %v2477
      %v2714 = vadd.f32 %v2206, %v2480
      %v2715 = vadd.f32 %v2207, %v2482
      %v2716 = vadd.f32 %v2208, %v2484
      %v2717 = vadd.f32 %v2209, %v2487
      %v2718 = vadd.f32 %v2210, %v2489
      %v2719 = vadd.f32 %v2211, %v2491
      %v2720 = vadd.f32 %v2212, %v2494
      %v2721 = vadd.f32 %v2213, %v2496
      %v2722 = vadd.f32 %v2214, %v2498
      %v2723 = vadd.f32 %v2215, %v2501
      %v2724 = vadd.f32 %v2216, %v2503
      %v2725 = vadd.f32 %v2217, %v2505
      %v2726 = vadd.f32 %v2218, %v2508
      %v2727 = vadd.f32 %v2219, %v2510
      %v2728 = vadd.f32 %v2220, %v2512
      %v2729 = vadd.f32 %v2221, %v2515
      %v2730 = vadd.f32 %v2222, %v2517
      %v2731 = vadd.f32 %v2223, %v2519
      %v2732 = vadd.f32 %v2224, %v2522
      %v2733 = vadd.f32 %v2225, %v2524
      %v2734 = vadd.f32 %v2226, %v2526
      %v2735 = vadd.f32 %v2227, %v2529
      %v2736 = vadd.f32 %v2228, %v2531
      %v2737 = vadd.f32 %v2229, %v2533
      %v2738 = vadd.f32 %v2230, %v2536
      %v2739 = vadd.f32 %v2231, %v2538
      %v2740 = vadd.f32 %v2232, %v2540
      %v2741 = vadd.f32 %v2233, %v2543
      %v2742 = vadd.f32 %v2234, %v2545
      %v2743 = vadd.f32 %v2235, %v2547
      %v2744 = vadd.f32 %v2236, %v2550
      %v2745 = vadd.f32 %v2237, %v2552
      %v2746 = vadd.f32 %v2238, %v2554
      %v2747 = vadd.f32 %v2239, %v2557
      %v2748 = vadd.f32 %v2240, %v2559
      %v2749 = vadd.f32 %v2241, %v2561
      %v2750 = vadd.f32 %v2242, %v2564
      %v2751 = vadd.f32 %v2243, %v2566
      %v2752 = vadd.f32 %v2244, %v2568
      %v2753 = vadd.f32 %v2245, %v2571
      %v2754 = vadd.f32 %v2246, %v2573
      %v2755 = vadd.f32 %v2247, %v2575
      %v2756 = vadd.f32 %v2248, %v2578
      %v2757 = vadd.f32 %v2249, %v2580
      %v2758 = vadd.f32 %v2250, %v2582
      %v2759 = vadd.f32 %v2251, %v2585
      %v2760 = vadd.f32 %v2252, %v2587
      %v2761 = vadd.f32 %v2253, %v2589
      %v2762 = vadd.f32 %v2254, %v2592
      %v2763 = vadd.f32 %v2255, %v2594
      %v2764 = vadd.f32 %v2256, %v2596
      %v2765 = vadd.f32 %v2257, %v2599
      %v2766 = vadd.f32 %v2258, %v2601
      %v2767 = vadd.f32 %v2259, %v2603
      %v2768 = vadd.f32 %v2260, %v2606
      %v2769 = vadd.f32 %v2261, %v2608
      %v2770 = vadd.f32 %v2262, %v2610
      %v2771 = vadd.f32 %v2263, %v2613
      %v2772 = vadd.f32 %v2264, %v2615
      %v2773 = vadd.f32 %v2265, %v2617
      %v2774 = vadd.f32 %v2266, %v2620
      %v2775 = vadd.f32 %v2267, %v2622
      %v2776 = vadd.f32 %v2268, %v2624
      %v2777 = vadd.f32 %v2269, %v2627
      %v2778 = vadd.f32 %v2270, %v2629
      %v2779 = vadd.f32 %v2271, %v2631
      %v2780 = vadd.f32 %v2272, %v2634
      %v2781 = vadd.f32 %v2273, %v2636
      %v2782 = vadd.f32 %v2274, %v2638
      %v2783 = vlaneseq
      %v2784 = vshrl.u32 %v2783, 7
      %v2785 = vsub.s32 0, %v2784
      %v2786 = vrot.slane %v452, %v2785
      %v2787 = vmul.f32 %v354, %v2786
      %v2788 = vmul.f32 %v355, %v2786
      %v2789 = vmul.f32 %v356, %v2786
      %v2790 = vmul.f32 %v358, %v2786
      %v2791 = vmul.f32 %v359, %v2786
      %v2792 = vmul.f32 %v360, %v2786
      %v2793 = vmul.f32 %v362, %v2786
      %v2794 = vmul.f32 %v363, %v2786
      %v2795 = vmul.f32 %v364, %v2786
      %v2796 = vmul.f32 %v366, %v2786
      %v2797 = vmul.f32 %v367, %v2786
      %v2798 = vmul.f32 %v368, %v2786
      %v2799 = vmul.f32 %v370, %v2786
      %v2800 = vmul.f32 %v371, %v2786
      %v2801 = vmul.f32 %v372, %v2786
      %v2802 = vmul.f32 %v374, %v2786
      %v2803 = vmul.f32 %v375, %v2786
      %v2804 = vmul.f32 %v376, %v2786
      %v2805 = vmul.f32 %v378, %v2786
      %v2806 = vmul.f32 %v379, %v2786
      %v2807 = vmul.f32 %v380, %v2786
      %v2808 = vmul.f32 %v382, %v2786
      %v2809 = vmul.f32 %v383, %v2786
      %v2810 = vmul.f32 %v384, %v2786
      %v2811 = vmul.f32 %v386, %v2786
      %v2812 = vmul.f32 %v387, %v2786
      %v2813 = vmul.f32 %v388, %v2786
      %v2814 = vmul.f32 %v390, %v2786
      %v2815 = vmul.f32 %v391, %v2786
      %v2816 = vmul.f32 %v392, %v2786
      %v2817 = vmul.f32 %v394, %v2786
      %v2818 = vmul.f32 %v395, %v2786
      %v2819 = vmul.f32 %v396, %v2786
      %v2820 = vmul.f32 %v398, %v2786
      %v2821 = vmul.f32 %v399, %v2786
      %v2822 = vmul.f32 %v400, %v2786
      %v2823 = vmul.f32 %v402, %v2786
      %v2824 = vmul.f32 %v403, %v2786
      %v2825 = vmul.f32 %v404, %v2786
      %v2826 = vmul.f32 %v406, %v2786
      %v2827 = vmul.f32 %v407, %v2786
      %v2828 = vmul.f32 %v408, %v2786
      %v2829 = vmul.f32 %v410, %v2786
      %v2830 = vmul.f32 %v411, %v2786
      %v2831 = vmul.f32 %v412, %v2786
      %v2832 = vmul.f32 %v414, %v2786
      %v2833 = vmul.f32 %v415, %v2786
      %v2834 = vmul.f32 %v416, %v2786
      %v2835 = vmul.f32 %v418, %v2786
      %v2836 = vmul.f32 %v419, %v2786
      %v2837 = vmul.f32 %v420, %v2786
      %v2838 = vmul.f32 %v422, %v2786
      %v2839 = vmul.f32 %v423, %v2786
      %v2840 = vmul.f32 %v424, %v2786
      %v2841 = vmul.f32 %v426, %v2786
      %v2842 = vmul.f32 %v427, %v2786
      %v2843 = vmul.f32 %v428, %v2786
      %v2844 = vmul.f32 %v430, %v2786
      %v2845 = vmul.f32 %v431, %v2786
      %v2846 = vmul.f32 %v432, %v2786
      %v2847 = vmul.f32 %v434, %v2786
      %v2848 = vmul.f32 %v435, %v2786
      %v2849 = vmul.f32 %v436, %v2786
      %v2850 = vmul.f32 %v438, %v2786
      %v2851 = vmul.f32 %v439, %v2786
      %v2852 = vmul.f32 %v440, %v2786
      %v2853 = vmul.f32 %v442, %v2786
      %v2854 = vmul.f32 %v443, %v2786
      %v2855 = vmul.f32 %v444, %v2786
      %v2856 = vmul.f32 %v446, %v2786
      %v2857 = vmul.f32 %v447, %v2786
      %v2858 = vmul.f32 %v448, %v2786
      %v2859 = vadd.f32 %v2711, %v2787
      %v2860 = vadd.f32 %v2712, %v2788
      %v2861 = vadd.f32 %v2713, %v2789
      %v2862 = vadd.f32 %v2714, %v2790
      %v2863 = vadd.f32 %v2715, %v2791
      %v2864 = vadd.f32 %v2716, %v2792
      %v2865 = vadd.f32 %v2717, %v2793
      %v2866 = vadd.f32 %v2718, %v2794
      %v2867 = vadd.f32 %v2719, %v2795
      %v2868 = vadd.f32 %v2720, %v2796
      %v2869 = vadd.f32 %v2721, %v2797
      %v2870 = vadd.f32 %v2722, %v2798
      %v2871 = vadd.f32 %v2723, %v2799
      %v2872 = vadd.f32 %v2724, %v2800
      %v2873 = vadd.f32 %v2725, %v2801
      %v2874 = vadd.f32 %v2726, %v2802
      %v2875 = vadd.f32 %v2727, %v2803
      %v2876 = vadd.f32 %v2728, %v2804
      %v2877 = vadd.f32 %v2729, %v2805
      %v2878 = vadd.f32 %v2730, %v2806
      %v2879 = vadd.f32 %v2731, %v2807
      %v2880 = vadd.f32 %v2732, %v2808
      %v2881 = vadd.f32 %v2733, %v2809
      %v2882 = vadd.f32 %v2734, %v2810
      %v2883 = vadd.f32 %v2735, %v2811
      %v2884 = vadd.f32 %v2736, %v2812
      %v2885 = vadd.f32 %v2737, %v2813
      %v2886 = vadd.f32 %v2738, %v2814
      %v2887 = vadd.f32 %v2739, %v2815
      %v2888 = vadd.f32 %v2740, %v2816
      %v2889 = vadd.f32 %v2741, %v2817
      %v2890 = vadd.f32 %v2742, %v2818
      %v2891 = vadd.f32 %v2743, %v2819
      %v2892 = vadd.f32 %v2744, %v2820
      %v2893 = vadd.f32 %v2745, %v2821
      %v2894 = vadd.f32 %v2746, %v2822
      %v2895 = vadd.f32 %v2747, %v2823
      %v2896 = vadd.f32 %v2748, %v2824
      %v2897 = vadd.f32 %v2749, %v2825
      %v2898 = vadd.f32 %v2750, %v2826
      %v2899 = vadd.f32 %v2751, %v2827
      %v2900 = vadd.f32 %v2752, %v2828
      %v2901 = vadd.f32 %v2753, %v2829
      %v2902 = vadd.f32 %v2754, %v2830
      %v2903 = vadd.f32 %v2755, %v2831
      %v2904 = vadd.f32 %v2756, %v2832
      %v2905 = vadd.f32 %v2757, %v2833
      %v2906 = vadd.f32 %v2758, %v2834
      %v2907 = vadd.f32 %v2759, %v2835
      %v2908 = vadd.f32 %v2760, %v2836
      %v2909 = vadd.f32 %v2761, %v2837
      %v2910 = vadd.f32 %v2762, %v2838
      %v2911 = vadd.f32 %v2763, %v2839
      %v2912 = vadd.f32 %v2764, %v2840
      %v2913 = vadd.f32 %v2765, %v2841
      %v2914 = vadd.f32 %v2766, %v2842
      %v2915 = vadd.f32 %v2767, %v2843
      %v2916 = vadd.f32 %v2768, %v2844
      %v2917 = vadd.f32 %v2769, %v2845
      %v2918 = vadd.f32 %v2770, %v2846
      %v2919 = vadd.f32 %v2771, %v2847
      %v2920 = vadd.f32 %v2772, %v2848
      %v2921 = vadd.f32 %v2773, %v2849
      %v2922 = vadd.f32 %v2774, %v2850
      %v2923 = vadd.f32 %v2775, %v2851
      %v2924 = vadd.f32 %v2776, %v2852
      %v2925 = vadd.f32 %v2777, %v2853
      %v2926 = vadd.f32 %v2778, %v2854
      %v2927 = vadd.f32 %v2779, %v2855
      %v2928 = vadd.f32 %v2780, %v2856
      %v2929 = vadd.f32 %v2781, %v2857
      %v2930 = vadd.f32 %v2782, %v2858
      %v2931 = vlaneseq
      %v2932 = vshrl.u32 %v2931, 7
      %v2933 = vsub.s32 1, %v2932
      %v2934 = vrot.slane %v452, %v2933
      %v2935 = vmul.f32 %v354, %v2934
      %v2936 = vmul.f32 %v355, %v2934
      %v2937 = vmul.f32 %v356, %v2934
      %v2938 = vmul.f32 %v357, %v2934
      %v2939 = vmul.f32 %v358, %v2934
      %v2940 = vmul.f32 %v359, %v2934
      %v2941 = vmul.f32 %v360, %v2934
      %v2942 = vmul.f32 %v361, %v2934
      %v2943 = vmul.f32 %v362, %v2934
      %v2944 = vmul.f32 %v363, %v2934
      %v2945 = vmul.f32 %v364, %v2934
      %v2946 = vmul.f32 %v365, %v2934
      %v2947 = vmul.f32 %v366, %v2934
      %v2948 = vmul.f32 %v367, %v2934
      %v2949 = vmul.f32 %v368, %v2934
      %v2950 = vmul.f32 %v369, %v2934
      %v2951 = vmul.f32 %v370, %v2934
      %v2952 = vmul.f32 %v371, %v2934
      %v2953 = vmul.f32 %v372, %v2934
      %v2954 = vmul.f32 %v373, %v2934
      %v2955 = vmul.f32 %v374, %v2934
      %v2956 = vmul.f32 %v375, %v2934
      %v2957 = vmul.f32 %v376, %v2934
      %v2958 = vmul.f32 %v377, %v2934
      %v2959 = vmul.f32 %v378, %v2934
      %v2960 = vmul.f32 %v379, %v2934
      %v2961 = vmul.f32 %v380, %v2934
      %v2962 = vmul.f32 %v381, %v2934
      %v2963 = vmul.f32 %v382, %v2934
      %v2964 = vmul.f32 %v383, %v2934
      %v2965 = vmul.f32 %v384, %v2934
      %v2966 = vmul.f32 %v385, %v2934
      %v2967 = vmul.f32 %v386, %v2934
      %v2968 = vmul.f32 %v387, %v2934
      %v2969 = vmul.f32 %v388, %v2934
      %v2970 = vmul.f32 %v389, %v2934
      %v2971 = vmul.f32 %v390, %v2934
      %v2972 = vmul.f32 %v391, %v2934
      %v2973 = vmul.f32 %v392, %v2934
      %v2974 = vmul.f32 %v393, %v2934
      %v2975 = vmul.f32 %v394, %v2934
      %v2976 = vmul.f32 %v395, %v2934
      %v2977 = vmul.f32 %v396, %v2934
      %v2978 = vmul.f32 %v397, %v2934
      %v2979 = vmul.f32 %v398, %v2934
      %v2980 = vmul.f32 %v399, %v2934
      %v2981 = vmul.f32 %v400, %v2934
      %v2982 = vmul.f32 %v401, %v2934
      %v2983 = vmul.f32 %v402, %v2934
      %v2984 = vmul.f32 %v403, %v2934
      %v2985 = vmul.f32 %v404, %v2934
      %v2986 = vmul.f32 %v405, %v2934
      %v2987 = vmul.f32 %v406, %v2934
      %v2988 = vmul.f32 %v407, %v2934
      %v2989 = vmul.f32 %v408, %v2934
      %v2990 = vmul.f32 %v409, %v2934
      %v2991 = vmul.f32 %v410, %v2934
      %v2992 = vmul.f32 %v411, %v2934
      %v2993 = vmul.f32 %v412, %v2934
      %v2994 = vmul.f32 %v413, %v2934
      %v2995 = vmul.f32 %v414, %v2934
      %v2996 = vmul.f32 %v415, %v2934
      %v2997 = vmul.f32 %v416, %v2934
      %v2998 = vmul.f32 %v417, %v2934
      %v2999 = vmul.f32 %v418, %v2934
      %v3000 = vmul.f32 %v419, %v2934
      %v3001 = vmul.f32 %v420, %v2934
      %v3002 = vmul.f32 %v421, %v2934
      %v3003 = vmul.f32 %v422, %v2934
      %v3004 = vmul.f32 %v423, %v2934
      %v3005 = vmul.f32 %v424, %v2934
      %v3006 = vmul.f32 %v425, %v2934
      %v3007 = vmul.f32 %v426, %v2934
      %v3008 = vmul.f32 %v427, %v2934
      %v3009 = vmul.f32 %v428, %v2934
      %v3010 = vmul.f32 %v429, %v2934
      %v3011 = vmul.f32 %v430, %v2934
      %v3012 = vmul.f32 %v431, %v2934
      %v3013 = vmul.f32 %v432, %v2934
      %v3014 = vmul.f32 %v433, %v2934
      %v3015 = vmul.f32 %v434, %v2934
      %v3016 = vmul.f32 %v435, %v2934
      %v3017 = vmul.f32 %v436, %v2934
      %v3018 = vmul.f32 %v437, %v2934
      %v3019 = vmul.f32 %v438, %v2934
      %v3020 = vmul.f32 %v439, %v2934
      %v3021 = vmul.f32 %v440, %v2934
      %v3022 = vmul.f32 %v441, %v2934
      %v3023 = vmul.f32 %v442, %v2934
      %v3024 = vmul.f32 %v443, %v2934
      %v3025 = vmul.f32 %v444, %v2934
      %v3026 = vmul.f32 %v445, %v2934
      %v3027 = vmul.f32 %v446, %v2934
      %v3028 = vmul.f32 %v447, %v2934
      %v3029 = vmul.f32 %v448, %v2934
      %v3030 = vmul.f32 %v449, %v2934
      %v3127 = vrot.slane %v2935, 1
      %v3128 = vrot.slane %v2936, 1
      %v3129 = vsel %vm797, %v3127, %v3128
      %v3130 = vrot.slane %v2937, 1
      %v3131 = vsel %vm797, %v3128, %v3130
      %v3132 = vrot.slane %v2938, 1
      %v3133 = vsel %vm797, %v3130, %v3132
      %v3134 = vrot.slane %v2939, 1
      %v3135 = vrot.slane %v2940, 1
      %v3136 = vsel %vm797, %v3134, %v3135
      %v3137 = vrot.slane %v2941, 1
      %v3138 = vsel %vm797, %v3135, %v3137
      %v3139 = vrot.slane %v2942, 1
      %v3140 = vsel %vm797, %v3137, %v3139
      %v3141 = vrot.slane %v2943, 1
      %v3142 = vrot.slane %v2944, 1
      %v3143 = vsel %vm797, %v3141, %v3142
      %v3144 = vrot.slane %v2945, 1
      %v3145 = vsel %vm797, %v3142, %v3144
      %v3146 = vrot.slane %v2946, 1
      %v3147 = vsel %vm797, %v3144, %v3146
      %v3148 = vrot.slane %v2947, 1
      %v3149 = vrot.slane %v2948, 1
      %v3150 = vsel %vm797, %v3148, %v3149
      %v3151 = vrot.slane %v2949, 1
      %v3152 = vsel %vm797, %v3149, %v3151
      %v3153 = vrot.slane %v2950, 1
      %v3154 = vsel %vm797, %v3151, %v3153
      %v3155 = vrot.slane %v2951, 1
      %v3156 = vrot.slane %v2952, 1
      %v3157 = vsel %vm797, %v3155, %v3156
      %v3158 = vrot.slane %v2953, 1
      %v3159 = vsel %vm797, %v3156, %v3158
      %v3160 = vrot.slane %v2954, 1
      %v3161 = vsel %vm797, %v3158, %v3160
      %v3162 = vrot.slane %v2955, 1
      %v3163 = vrot.slane %v2956, 1
      %v3164 = vsel %vm797, %v3162, %v3163
      %v3165 = vrot.slane %v2957, 1
      %v3166 = vsel %vm797, %v3163, %v3165
      %v3167 = vrot.slane %v2958, 1
      %v3168 = vsel %vm797, %v3165, %v3167
      %v3169 = vrot.slane %v2959, 1
      %v3170 = vrot.slane %v2960, 1
      %v3171 = vsel %vm797, %v3169, %v3170
      %v3172 = vrot.slane %v2961, 1
      %v3173 = vsel %vm797, %v3170, %v3172
      %v3174 = vrot.slane %v2962, 1
      %v3175 = vsel %vm797, %v3172, %v3174
      %v3176 = vrot.slane %v2963, 1
      %v3177 = vrot.slane %v2964, 1
      %v3178 = vsel %vm797, %v3176, %v3177
      %v3179 = vrot.slane %v2965, 1
      %v3180 = vsel %vm797, %v3177, %v3179
      %v3181 = vrot.slane %v2966, 1
      %v3182 = vsel %vm797, %v3179, %v3181
      %v3183 = vrot.slane %v2967, 1
      %v3184 = vrot.slane %v2968, 1
      %v3185 = vsel %vm797, %v3183, %v3184
      %v3186 = vrot.slane %v2969, 1
      %v3187 = vsel %vm797, %v3184, %v3186
      %v3188 = vrot.slane %v2970, 1
      %v3189 = vsel %vm797, %v3186, %v3188
      %v3190 = vrot.slane %v2971, 1
      %v3191 = vrot.slane %v2972, 1
      %v3192 = vsel %vm797, %v3190, %v3191
      %v3193 = vrot.slane %v2973, 1
      %v3194 = vsel %vm797, %v3191, %v3193
      %v3195 = vrot.slane %v2974, 1
      %v3196 = vsel %vm797, %v3193, %v3195
      %v3197 = vrot.slane %v2975, 1
      %v3198 = vrot.slane %v2976, 1
      %v3199 = vsel %vm797, %v3197, %v3198
      %v3200 = vrot.slane %v2977, 1
      %v3201 = vsel %vm797, %v3198, %v3200
      %v3202 = vrot.slane %v2978, 1
      %v3203 = vsel %vm797, %v3200, %v3202
      %v3204 = vrot.slane %v2979, 1
      %v3205 = vrot.slane %v2980, 1
      %v3206 = vsel %vm797, %v3204, %v3205
      %v3207 = vrot.slane %v2981, 1
      %v3208 = vsel %vm797, %v3205, %v3207
      %v3209 = vrot.slane %v2982, 1
      %v3210 = vsel %vm797, %v3207, %v3209
      %v3211 = vrot.slane %v2983, 1
      %v3212 = vrot.slane %v2984, 1
      %v3213 = vsel %vm797, %v3211, %v3212
      %v3214 = vrot.slane %v2985, 1
      %v3215 = vsel %vm797, %v3212, %v3214
      %v3216 = vrot.slane %v2986, 1
      %v3217 = vsel %vm797, %v3214, %v3216
      %v3218 = vrot.slane %v2987, 1
      %v3219 = vrot.slane %v2988, 1
      %v3220 = vsel %vm797, %v3218, %v3219
      %v3221 = vrot.slane %v2989, 1
      %v3222 = vsel %vm797, %v3219, %v3221
      %v3223 = vrot.slane %v2990, 1
      %v3224 = vsel %vm797, %v3221, %v3223
      %v3225 = vrot.slane %v2991, 1
      %v3226 = vrot.slane %v2992, 1
      %v3227 = vsel %vm797, %v3225, %v3226
      %v3228 = vrot.slane %v2993, 1
      %v3229 = vsel %vm797, %v3226, %v3228
      %v3230 = vrot.slane %v2994, 1
      %v3231 = vsel %vm797, %v3228, %v3230
      %v3232 = vrot.slane %v2995, 1
      %v3233 = vrot.slane %v2996, 1
      %v3234 = vsel %vm797, %v3232, %v3233
      %v3235 = vrot.slane %v2997, 1
      %v3236 = vsel %vm797, %v3233, %v3235
      %v3237 = vrot.slane %v2998, 1
      %v3238 = vsel %vm797, %v3235, %v3237
      %v3239 = vrot.slane %v2999, 1
      %v3240 = vrot.slane %v3000, 1
      %v3241 = vsel %vm797, %v3239, %v3240
      %v3242 = vrot.slane %v3001, 1
      %v3243 = vsel %vm797, %v3240, %v3242
      %v3244 = vrot.slane %v3002, 1
      %v3245 = vsel %vm797, %v3242, %v3244
      %v3246 = vrot.slane %v3003, 1
      %v3247 = vrot.slane %v3004, 1
      %v3248 = vsel %vm797, %v3246, %v3247
      %v3249 = vrot.slane %v3005, 1
      %v3250 = vsel %vm797, %v3247, %v3249
      %v3251 = vrot.slane %v3006, 1
      %v3252 = vsel %vm797, %v3249, %v3251
      %v3253 = vrot.slane %v3007, 1
      %v3254 = vrot.slane %v3008, 1
      %v3255 = vsel %vm797, %v3253, %v3254
      %v3256 = vrot.slane %v3009, 1
      %v3257 = vsel %vm797, %v3254, %v3256
      %v3258 = vrot.slane %v3010, 1
      %v3259 = vsel %vm797, %v3256, %v3258
      %v3260 = vrot.slane %v3011, 1
      %v3261 = vrot.slane %v3012, 1
      %v3262 = vsel %vm797, %v3260, %v3261
      %v3263 = vrot.slane %v3013, 1
      %v3264 = vsel %vm797, %v3261, %v3263
      %v3265 = vrot.slane %v3014, 1
      %v3266 = vsel %vm797, %v3263, %v3265
      %v3267 = vrot.slane %v3015, 1
      %v3268 = vrot.slane %v3016, 1
      %v3269 = vsel %vm797, %v3267, %v3268
      %v3270 = vrot.slane %v3017, 1
      %v3271 = vsel %vm797, %v3268, %v3270
      %v3272 = vrot.slane %v3018, 1
      %v3273 = vsel %vm797, %v3270, %v3272
      %v3274 = vrot.slane %v3019, 1
      %v3275 = vrot.slane %v3020, 1
      %v3276 = vsel %vm797, %v3274, %v3275
      %v3277 = vrot.slane %v3021, 1
      %v3278 = vsel %vm797, %v3275, %v3277
      %v3279 = vrot.slane %v3022, 1
      %v3280 = vsel %vm797, %v3277, %v3279
      %v3281 = vrot.slane %v3023, 1
      %v3282 = vrot.slane %v3024, 1
      %v3283 = vsel %vm797, %v3281, %v3282
      %v3284 = vrot.slane %v3025, 1
      %v3285 = vsel %vm797, %v3282, %v3284
      %v3286 = vrot.slane %v3026, 1
      %v3287 = vsel %vm797, %v3284, %v3286
      %v3288 = vrot.slane %v3027, 1
      %v3289 = vrot.slane %v3028, 1
      %v3290 = vsel %vm797, %v3288, %v3289
      %v3291 = vrot.slane %v3029, 1
      %v3292 = vsel %vm797, %v3289, %v3291
      %v3293 = vrot.slane %v3030, 1
      %v3294 = vsel %vm797, %v3291, %v3293
      %v3367 = vadd.f32 %v2859, %v3129
      %v3368 = vadd.f32 %v2860, %v3131
      %v3369 = vadd.f32 %v2861, %v3133
      %v3370 = vadd.f32 %v2862, %v3136
      %v3371 = vadd.f32 %v2863, %v3138
      %v3372 = vadd.f32 %v2864, %v3140
      %v3373 = vadd.f32 %v2865, %v3143
      %v3374 = vadd.f32 %v2866, %v3145
      %v3375 = vadd.f32 %v2867, %v3147
      %v3376 = vadd.f32 %v2868, %v3150
      %v3377 = vadd.f32 %v2869, %v3152
      %v3378 = vadd.f32 %v2870, %v3154
      %v3379 = vadd.f32 %v2871, %v3157
      %v3380 = vadd.f32 %v2872, %v3159
      %v3381 = vadd.f32 %v2873, %v3161
      %v3382 = vadd.f32 %v2874, %v3164
      %v3383 = vadd.f32 %v2875, %v3166
      %v3384 = vadd.f32 %v2876, %v3168
      %v3385 = vadd.f32 %v2877, %v3171
      %v3386 = vadd.f32 %v2878, %v3173
      %v3387 = vadd.f32 %v2879, %v3175
      %v3388 = vadd.f32 %v2880, %v3178
      %v3389 = vadd.f32 %v2881, %v3180
      %v3390 = vadd.f32 %v2882, %v3182
      %v3391 = vadd.f32 %v2883, %v3185
      %v3392 = vadd.f32 %v2884, %v3187
      %v3393 = vadd.f32 %v2885, %v3189
      %v3394 = vadd.f32 %v2886, %v3192
      %v3395 = vadd.f32 %v2887, %v3194
      %v3396 = vadd.f32 %v2888, %v3196
      %v3397 = vadd.f32 %v2889, %v3199
      %v3398 = vadd.f32 %v2890, %v3201
      %v3399 = vadd.f32 %v2891, %v3203
      %v3400 = vadd.f32 %v2892, %v3206
      %v3401 = vadd.f32 %v2893, %v3208
      %v3402 = vadd.f32 %v2894, %v3210
      %v3403 = vadd.f32 %v2895, %v3213
      %v3404 = vadd.f32 %v2896, %v3215
      %v3405 = vadd.f32 %v2897, %v3217
      %v3406 = vadd.f32 %v2898, %v3220
      %v3407 = vadd.f32 %v2899, %v3222
      %v3408 = vadd.f32 %v2900, %v3224
      %v3409 = vadd.f32 %v2901, %v3227
      %v3410 = vadd.f32 %v2902, %v3229
      %v3411 = vadd.f32 %v2903, %v3231
      %v3412 = vadd.f32 %v2904, %v3234
      %v3413 = vadd.f32 %v2905, %v3236
      %v3414 = vadd.f32 %v2906, %v3238
      %v3415 = vadd.f32 %v2907, %v3241
      %v3416 = vadd.f32 %v2908, %v3243
      %v3417 = vadd.f32 %v2909, %v3245
      %v3418 = vadd.f32 %v2910, %v3248
      %v3419 = vadd.f32 %v2911, %v3250
      %v3420 = vadd.f32 %v2912, %v3252
      %v3421 = vadd.f32 %v2913, %v3255
      %v3422 = vadd.f32 %v2914, %v3257
      %v3423 = vadd.f32 %v2915, %v3259
      %v3424 = vadd.f32 %v2916, %v3262
      %v3425 = vadd.f32 %v2917, %v3264
      %v3426 = vadd.f32 %v2918, %v3266
      %v3427 = vadd.f32 %v2919, %v3269
      %v3428 = vadd.f32 %v2920, %v3271
      %v3429 = vadd.f32 %v2921, %v3273
      %v3430 = vadd.f32 %v2922, %v3276
      %v3431 = vadd.f32 %v2923, %v3278
      %v3432 = vadd.f32 %v2924, %v3280
      %v3433 = vadd.f32 %v2925, %v3283
      %v3434 = vadd.f32 %v2926, %v3285
      %v3435 = vadd.f32 %v2927, %v3287
      %v3436 = vadd.f32 %v2928, %v3290
      %v3437 = vadd.f32 %v2929, %v3292
      %v3438 = vadd.f32 %v2930, %v3294
      %v3439 = vlaneseq
      %v3440 = vshrl.u32 %v3439, 7
      %v3441 = vsub.s32 2, %v3440
      %v3442 = vrot.slane %v452, %v3441
      %v3443 = vmul.f32 %v354, %v3442
      %v3444 = vmul.f32 %v355, %v3442
      %v3445 = vmul.f32 %v356, %v3442
      %v3446 = vmul.f32 %v357, %v3442
      %v3447 = vmul.f32 %v358, %v3442
      %v3448 = vmul.f32 %v359, %v3442
      %v3449 = vmul.f32 %v360, %v3442
      %v3450 = vmul.f32 %v361, %v3442
      %v3451 = vmul.f32 %v362, %v3442
      %v3452 = vmul.f32 %v363, %v3442
      %v3453 = vmul.f32 %v364, %v3442
      %v3454 = vmul.f32 %v365, %v3442
      %v3455 = vmul.f32 %v366, %v3442
      %v3456 = vmul.f32 %v367, %v3442
      %v3457 = vmul.f32 %v368, %v3442
      %v3458 = vmul.f32 %v369, %v3442
      %v3459 = vmul.f32 %v370, %v3442
      %v3460 = vmul.f32 %v371, %v3442
      %v3461 = vmul.f32 %v372, %v3442
      %v3462 = vmul.f32 %v373, %v3442
      %v3463 = vmul.f32 %v374, %v3442
      %v3464 = vmul.f32 %v375, %v3442
      %v3465 = vmul.f32 %v376, %v3442
      %v3466 = vmul.f32 %v377, %v3442
      %v3467 = vmul.f32 %v378, %v3442
      %v3468 = vmul.f32 %v379, %v3442
      %v3469 = vmul.f32 %v380, %v3442
      %v3470 = vmul.f32 %v381, %v3442
      %v3471 = vmul.f32 %v382, %v3442
      %v3472 = vmul.f32 %v383, %v3442
      %v3473 = vmul.f32 %v384, %v3442
      %v3474 = vmul.f32 %v385, %v3442
      %v3475 = vmul.f32 %v386, %v3442
      %v3476 = vmul.f32 %v387, %v3442
      %v3477 = vmul.f32 %v388, %v3442
      %v3478 = vmul.f32 %v389, %v3442
      %v3479 = vmul.f32 %v390, %v3442
      %v3480 = vmul.f32 %v391, %v3442
      %v3481 = vmul.f32 %v392, %v3442
      %v3482 = vmul.f32 %v393, %v3442
      %v3483 = vmul.f32 %v394, %v3442
      %v3484 = vmul.f32 %v395, %v3442
      %v3485 = vmul.f32 %v396, %v3442
      %v3486 = vmul.f32 %v397, %v3442
      %v3487 = vmul.f32 %v398, %v3442
      %v3488 = vmul.f32 %v399, %v3442
      %v3489 = vmul.f32 %v400, %v3442
      %v3490 = vmul.f32 %v401, %v3442
      %v3491 = vmul.f32 %v402, %v3442
      %v3492 = vmul.f32 %v403, %v3442
      %v3493 = vmul.f32 %v404, %v3442
      %v3494 = vmul.f32 %v405, %v3442
      %v3495 = vmul.f32 %v406, %v3442
      %v3496 = vmul.f32 %v407, %v3442
      %v3497 = vmul.f32 %v408, %v3442
      %v3498 = vmul.f32 %v409, %v3442
      %v3499 = vmul.f32 %v410, %v3442
      %v3500 = vmul.f32 %v411, %v3442
      %v3501 = vmul.f32 %v412, %v3442
      %v3502 = vmul.f32 %v413, %v3442
      %v3503 = vmul.f32 %v414, %v3442
      %v3504 = vmul.f32 %v415, %v3442
      %v3505 = vmul.f32 %v416, %v3442
      %v3506 = vmul.f32 %v417, %v3442
      %v3507 = vmul.f32 %v418, %v3442
      %v3508 = vmul.f32 %v419, %v3442
      %v3509 = vmul.f32 %v420, %v3442
      %v3510 = vmul.f32 %v421, %v3442
      %v3511 = vmul.f32 %v422, %v3442
      %v3512 = vmul.f32 %v423, %v3442
      %v3513 = vmul.f32 %v424, %v3442
      %v3514 = vmul.f32 %v425, %v3442
      %v3515 = vmul.f32 %v426, %v3442
      %v3516 = vmul.f32 %v427, %v3442
      %v3517 = vmul.f32 %v428, %v3442
      %v3518 = vmul.f32 %v429, %v3442
      %v3519 = vmul.f32 %v430, %v3442
      %v3520 = vmul.f32 %v431, %v3442
      %v3521 = vmul.f32 %v432, %v3442
      %v3522 = vmul.f32 %v433, %v3442
      %v3523 = vmul.f32 %v434, %v3442
      %v3524 = vmul.f32 %v435, %v3442
      %v3525 = vmul.f32 %v436, %v3442
      %v3526 = vmul.f32 %v437, %v3442
      %v3527 = vmul.f32 %v438, %v3442
      %v3528 = vmul.f32 %v439, %v3442
      %v3529 = vmul.f32 %v440, %v3442
      %v3530 = vmul.f32 %v441, %v3442
      %v3531 = vmul.f32 %v442, %v3442
      %v3532 = vmul.f32 %v443, %v3442
      %v3533 = vmul.f32 %v444, %v3442
      %v3534 = vmul.f32 %v445, %v3442
      %v3535 = vmul.f32 %v446, %v3442
      %v3536 = vmul.f32 %v447, %v3442
      %v3537 = vmul.f32 %v448, %v3442
      %v3538 = vmul.f32 %v449, %v3442
      %v3635 = vrot.slane %v3443, 2
      %v3636 = vrot.slane %v3444, 2
      %v3637 = vsel %vm1306, %v3635, %v3636
      %v3638 = vrot.slane %v3445, 2
      %v3639 = vsel %vm1306, %v3636, %v3638
      %v3640 = vrot.slane %v3446, 2
      %v3641 = vsel %vm1306, %v3638, %v3640
      %v3642 = vrot.slane %v3447, 2
      %v3643 = vrot.slane %v3448, 2
      %v3644 = vsel %vm1306, %v3642, %v3643
      %v3645 = vrot.slane %v3449, 2
      %v3646 = vsel %vm1306, %v3643, %v3645
      %v3647 = vrot.slane %v3450, 2
      %v3648 = vsel %vm1306, %v3645, %v3647
      %v3649 = vrot.slane %v3451, 2
      %v3650 = vrot.slane %v3452, 2
      %v3651 = vsel %vm1306, %v3649, %v3650
      %v3652 = vrot.slane %v3453, 2
      %v3653 = vsel %vm1306, %v3650, %v3652
      %v3654 = vrot.slane %v3454, 2
      %v3655 = vsel %vm1306, %v3652, %v3654
      %v3656 = vrot.slane %v3455, 2
      %v3657 = vrot.slane %v3456, 2
      %v3658 = vsel %vm1306, %v3656, %v3657
      %v3659 = vrot.slane %v3457, 2
      %v3660 = vsel %vm1306, %v3657, %v3659
      %v3661 = vrot.slane %v3458, 2
      %v3662 = vsel %vm1306, %v3659, %v3661
      %v3663 = vrot.slane %v3459, 2
      %v3664 = vrot.slane %v3460, 2
      %v3665 = vsel %vm1306, %v3663, %v3664
      %v3666 = vrot.slane %v3461, 2
      %v3667 = vsel %vm1306, %v3664, %v3666
      %v3668 = vrot.slane %v3462, 2
      %v3669 = vsel %vm1306, %v3666, %v3668
      %v3670 = vrot.slane %v3463, 2
      %v3671 = vrot.slane %v3464, 2
      %v3672 = vsel %vm1306, %v3670, %v3671
      %v3673 = vrot.slane %v3465, 2
      %v3674 = vsel %vm1306, %v3671, %v3673
      %v3675 = vrot.slane %v3466, 2
      %v3676 = vsel %vm1306, %v3673, %v3675
      %v3677 = vrot.slane %v3467, 2
      %v3678 = vrot.slane %v3468, 2
      %v3679 = vsel %vm1306, %v3677, %v3678
      %v3680 = vrot.slane %v3469, 2
      %v3681 = vsel %vm1306, %v3678, %v3680
      %v3682 = vrot.slane %v3470, 2
      %v3683 = vsel %vm1306, %v3680, %v3682
      %v3684 = vrot.slane %v3471, 2
      %v3685 = vrot.slane %v3472, 2
      %v3686 = vsel %vm1306, %v3684, %v3685
      %v3687 = vrot.slane %v3473, 2
      %v3688 = vsel %vm1306, %v3685, %v3687
      %v3689 = vrot.slane %v3474, 2
      %v3690 = vsel %vm1306, %v3687, %v3689
      %v3691 = vrot.slane %v3475, 2
      %v3692 = vrot.slane %v3476, 2
      %v3693 = vsel %vm1306, %v3691, %v3692
      %v3694 = vrot.slane %v3477, 2
      %v3695 = vsel %vm1306, %v3692, %v3694
      %v3696 = vrot.slane %v3478, 2
      %v3697 = vsel %vm1306, %v3694, %v3696
      %v3698 = vrot.slane %v3479, 2
      %v3699 = vrot.slane %v3480, 2
      %v3700 = vsel %vm1306, %v3698, %v3699
      %v3701 = vrot.slane %v3481, 2
      %v3702 = vsel %vm1306, %v3699, %v3701
      %v3703 = vrot.slane %v3482, 2
      %v3704 = vsel %vm1306, %v3701, %v3703
      %v3705 = vrot.slane %v3483, 2
      %v3706 = vrot.slane %v3484, 2
      %v3707 = vsel %vm1306, %v3705, %v3706
      %v3708 = vrot.slane %v3485, 2
      %v3709 = vsel %vm1306, %v3706, %v3708
      %v3710 = vrot.slane %v3486, 2
      %v3711 = vsel %vm1306, %v3708, %v3710
      %v3712 = vrot.slane %v3487, 2
      %v3713 = vrot.slane %v3488, 2
      %v3714 = vsel %vm1306, %v3712, %v3713
      %v3715 = vrot.slane %v3489, 2
      %v3716 = vsel %vm1306, %v3713, %v3715
      %v3717 = vrot.slane %v3490, 2
      %v3718 = vsel %vm1306, %v3715, %v3717
      %v3719 = vrot.slane %v3491, 2
      %v3720 = vrot.slane %v3492, 2
      %v3721 = vsel %vm1306, %v3719, %v3720
      %v3722 = vrot.slane %v3493, 2
      %v3723 = vsel %vm1306, %v3720, %v3722
      %v3724 = vrot.slane %v3494, 2
      %v3725 = vsel %vm1306, %v3722, %v3724
      %v3726 = vrot.slane %v3495, 2
      %v3727 = vrot.slane %v3496, 2
      %v3728 = vsel %vm1306, %v3726, %v3727
      %v3729 = vrot.slane %v3497, 2
      %v3730 = vsel %vm1306, %v3727, %v3729
      %v3731 = vrot.slane %v3498, 2
      %v3732 = vsel %vm1306, %v3729, %v3731
      %v3733 = vrot.slane %v3499, 2
      %v3734 = vrot.slane %v3500, 2
      %v3735 = vsel %vm1306, %v3733, %v3734
      %v3736 = vrot.slane %v3501, 2
      %v3737 = vsel %vm1306, %v3734, %v3736
      %v3738 = vrot.slane %v3502, 2
      %v3739 = vsel %vm1306, %v3736, %v3738
      %v3740 = vrot.slane %v3503, 2
      %v3741 = vrot.slane %v3504, 2
      %v3742 = vsel %vm1306, %v3740, %v3741
      %v3743 = vrot.slane %v3505, 2
      %v3744 = vsel %vm1306, %v3741, %v3743
      %v3745 = vrot.slane %v3506, 2
      %v3746 = vsel %vm1306, %v3743, %v3745
      %v3747 = vrot.slane %v3507, 2
      %v3748 = vrot.slane %v3508, 2
      %v3749 = vsel %vm1306, %v3747, %v3748
      %v3750 = vrot.slane %v3509, 2
      %v3751 = vsel %vm1306, %v3748, %v3750
      %v3752 = vrot.slane %v3510, 2
      %v3753 = vsel %vm1306, %v3750, %v3752
      %v3754 = vrot.slane %v3511, 2
      %v3755 = vrot.slane %v3512, 2
      %v3756 = vsel %vm1306, %v3754, %v3755
      %v3757 = vrot.slane %v3513, 2
      %v3758 = vsel %vm1306, %v3755, %v3757
      %v3759 = vrot.slane %v3514, 2
      %v3760 = vsel %vm1306, %v3757, %v3759
      %v3761 = vrot.slane %v3515, 2
      %v3762 = vrot.slane %v3516, 2
      %v3763 = vsel %vm1306, %v3761, %v3762
      %v3764 = vrot.slane %v3517, 2
      %v3765 = vsel %vm1306, %v3762, %v3764
      %v3766 = vrot.slane %v3518, 2
      %v3767 = vsel %vm1306, %v3764, %v3766
      %v3768 = vrot.slane %v3519, 2
      %v3769 = vrot.slane %v3520, 2
      %v3770 = vsel %vm1306, %v3768, %v3769
      %v3771 = vrot.slane %v3521, 2
      %v3772 = vsel %vm1306, %v3769, %v3771
      %v3773 = vrot.slane %v3522, 2
      %v3774 = vsel %vm1306, %v3771, %v3773
      %v3775 = vrot.slane %v3523, 2
      %v3776 = vrot.slane %v3524, 2
      %v3777 = vsel %vm1306, %v3775, %v3776
      %v3778 = vrot.slane %v3525, 2
      %v3779 = vsel %vm1306, %v3776, %v3778
      %v3780 = vrot.slane %v3526, 2
      %v3781 = vsel %vm1306, %v3778, %v3780
      %v3782 = vrot.slane %v3527, 2
      %v3783 = vrot.slane %v3528, 2
      %v3784 = vsel %vm1306, %v3782, %v3783
      %v3785 = vrot.slane %v3529, 2
      %v3786 = vsel %vm1306, %v3783, %v3785
      %v3787 = vrot.slane %v3530, 2
      %v3788 = vsel %vm1306, %v3785, %v3787
      %v3789 = vrot.slane %v3531, 2
      %v3790 = vrot.slane %v3532, 2
      %v3791 = vsel %vm1306, %v3789, %v3790
      %v3792 = vrot.slane %v3533, 2
      %v3793 = vsel %vm1306, %v3790, %v3792
      %v3794 = vrot.slane %v3534, 2
      %v3795 = vsel %vm1306, %v3792, %v3794
      %v3796 = vrot.slane %v3535, 2
      %v3797 = vrot.slane %v3536, 2
      %v3798 = vsel %vm1306, %v3796, %v3797
      %v3799 = vrot.slane %v3537, 2
      %v3800 = vsel %vm1306, %v3797, %v3799
      %v3801 = vrot.slane %v3538, 2
      %v3802 = vsel %vm1306, %v3799, %v3801
      %v3875 = vadd.f32 %v3367, %v3637
      %v3876 = vadd.f32 %v3368, %v3639
      %v3877 = vadd.f32 %v3369, %v3641
      %v3878 = vadd.f32 %v3370, %v3644
      %v3879 = vadd.f32 %v3371, %v3646
      %v3880 = vadd.f32 %v3372, %v3648
      %v3881 = vadd.f32 %v3373, %v3651
      %v3882 = vadd.f32 %v3374, %v3653
      %v3883 = vadd.f32 %v3375, %v3655
      %v3884 = vadd.f32 %v3376, %v3658
      %v3885 = vadd.f32 %v3377, %v3660
      %v3886 = vadd.f32 %v3378, %v3662
      %v3887 = vadd.f32 %v3379, %v3665
      %v3888 = vadd.f32 %v3380, %v3667
      %v3889 = vadd.f32 %v3381, %v3669
      %v3890 = vadd.f32 %v3382, %v3672
      %v3891 = vadd.f32 %v3383, %v3674
      %v3892 = vadd.f32 %v3384, %v3676
      %v3893 = vadd.f32 %v3385, %v3679
      %v3894 = vadd.f32 %v3386, %v3681
      %v3895 = vadd.f32 %v3387, %v3683
      %v3896 = vadd.f32 %v3388, %v3686
      %v3897 = vadd.f32 %v3389, %v3688
      %v3898 = vadd.f32 %v3390, %v3690
      %v3899 = vadd.f32 %v3391, %v3693
      %v3900 = vadd.f32 %v3392, %v3695
      %v3901 = vadd.f32 %v3393, %v3697
      %v3902 = vadd.f32 %v3394, %v3700
      %v3903 = vadd.f32 %v3395, %v3702
      %v3904 = vadd.f32 %v3396, %v3704
      %v3905 = vadd.f32 %v3397, %v3707
      %v3906 = vadd.f32 %v3398, %v3709
      %v3907 = vadd.f32 %v3399, %v3711
      %v3908 = vadd.f32 %v3400, %v3714
      %v3909 = vadd.f32 %v3401, %v3716
      %v3910 = vadd.f32 %v3402, %v3718
      %v3911 = vadd.f32 %v3403, %v3721
      %v3912 = vadd.f32 %v3404, %v3723
      %v3913 = vadd.f32 %v3405, %v3725
      %v3914 = vadd.f32 %v3406, %v3728
      %v3915 = vadd.f32 %v3407, %v3730
      %v3916 = vadd.f32 %v3408, %v3732
      %v3917 = vadd.f32 %v3409, %v3735
      %v3918 = vadd.f32 %v3410, %v3737
      %v3919 = vadd.f32 %v3411, %v3739
      %v3920 = vadd.f32 %v3412, %v3742
      %v3921 = vadd.f32 %v3413, %v3744
      %v3922 = vadd.f32 %v3414, %v3746
      %v3923 = vadd.f32 %v3415, %v3749
      %v3924 = vadd.f32 %v3416, %v3751
      %v3925 = vadd.f32 %v3417, %v3753
      %v3926 = vadd.f32 %v3418, %v3756
      %v3927 = vadd.f32 %v3419, %v3758
      %v3928 = vadd.f32 %v3420, %v3760
      %v3929 = vadd.f32 %v3421, %v3763
      %v3930 = vadd.f32 %v3422, %v3765
      %v3931 = vadd.f32 %v3423, %v3767
      %v3932 = vadd.f32 %v3424, %v3770
      %v3933 = vadd.f32 %v3425, %v3772
      %v3934 = vadd.f32 %v3426, %v3774
      %v3935 = vadd.f32 %v3427, %v3777
      %v3936 = vadd.f32 %v3428, %v3779
      %v3937 = vadd.f32 %v3429, %v3781
      %v3938 = vadd.f32 %v3430, %v3784
      %v3939 = vadd.f32 %v3431, %v3786
      %v3940 = vadd.f32 %v3432, %v3788
      %v3941 = vadd.f32 %v3433, %v3791
      %v3942 = vadd.f32 %v3434, %v3793
      %v3943 = vadd.f32 %v3435, %v3795
      %v3944 = vadd.f32 %v3436, %v3798
      %v3945 = vadd.f32 %v3437, %v3800
      %v3946 = vadd.f32 %v3438, %v3802
      %v3947 = vld [vmem:[%s2] sm:$0x1]
      %v3949 = vlaneseq
      %v3950 = vshrl.u32 %v3949, 7
      %v3951 = vsub.s32 0, %v3950
      %v3952 = vrot.slane %v3947, %v3951
      %v3954 = vmul.f32 %v3875, %v3952
      %v3955 = vmul.f32 %v3876, %v3952
      %v3956 = vmul.f32 %v3877, %v3952
      %v3957 = vmul.f32 %v3878, %v3952
      %v3958 = vmul.f32 %v3879, %v3952
      %v3959 = vmul.f32 %v3880, %v3952
      %v3960 = vmul.f32 %v3881, %v3952
      %v3961 = vmul.f32 %v3882, %v3952
      %v3962 = vmul.f32 %v3883, %v3952
      %v3963 = vmul.f32 %v3884, %v3952
      %v3964 = vmul.f32 %v3885, %v3952
      %v3965 = vmul.f32 %v3886, %v3952
      %v3966 = vmul.f32 %v3887, %v3952
      %v3967 = vmul.f32 %v3888, %v3952
      %v3968 = vmul.f32 %v3889, %v3952
      %v3969 = vmul.f32 %v3890, %v3952
      %v3970 = vmul.f32 %v3891, %v3952
      %v3971 = vmul.f32 %v3892, %v3952
      %v3972 = vmul.f32 %v3893, %v3952
      %v3973 = vmul.f32 %v3894, %v3952
      %v3974 = vmul.f32 %v3895, %v3952
      %v3975 = vmul.f32 %v3896, %v3952
      %v3976 = vmul.f32 %v3897, %v3952
      %v3977 = vmul.f32 %v3898, %v3952
      %v3978 = vmul.f32 %v3899, %v3952
      %v3979 = vmul.f32 %v3900, %v3952
      %v3980 = vmul.f32 %v3901, %v3952
      %v3981 = vmul.f32 %v3902, %v3952
      %v3982 = vmul.f32 %v3903, %v3952
      %v3983 = vmul.f32 %v3904, %v3952
      %v3984 = vmul.f32 %v3905, %v3952
      %v3985 = vmul.f32 %v3906, %v3952
      %v3986 = vmul.f32 %v3907, %v3952
      %v3987 = vmul.f32 %v3908, %v3952
      %v3988 = vmul.f32 %v3909, %v3952
      %v3989 = vmul.f32 %v3910, %v3952
      %v3990 = vmul.f32 %v3911, %v3952
      %v3991 = vmul.f32 %v3912, %v3952
      %v3992 = vmul.f32 %v3913, %v3952
      %v3993 = vmul.f32 %v3914, %v3952
      %v3994 = vmul.f32 %v3915, %v3952
      %v3995 = vmul.f32 %v3916, %v3952
      %v3996 = vmul.f32 %v3917, %v3952
      %v3997 = vmul.f32 %v3918, %v3952
      %v3998 = vmul.f32 %v3919, %v3952
      %v3999 = vmul.f32 %v3920, %v3952
      %v4000 = vmul.f32 %v3921, %v3952
      %v4001 = vmul.f32 %v3922, %v3952
      %v4002 = vmul.f32 %v3923, %v3952
      %v4003 = vmul.f32 %v3924, %v3952
      %v4004 = vmul.f32 %v3925, %v3952
      %v4005 = vmul.f32 %v3926, %v3952
      %v4006 = vmul.f32 %v3927, %v3952
      %v4007 = vmul.f32 %v3928, %v3952
      %v4008 = vmul.f32 %v3929, %v3952
      %v4009 = vmul.f32 %v3930, %v3952
      %v4010 = vmul.f32 %v3931, %v3952
      %v4011 = vmul.f32 %v3932, %v3952
      %v4012 = vmul.f32 %v3933, %v3952
      %v4013 = vmul.f32 %v3934, %v3952
      %v4014 = vmul.f32 %v3935, %v3952
      %v4015 = vmul.f32 %v3936, %v3952
      %v4016 = vmul.f32 %v3937, %v3952
      %v4017 = vmul.f32 %v3938, %v3952
      %v4018 = vmul.f32 %v3939, %v3952
      %v4019 = vmul.f32 %v3940, %v3952
      %v4020 = vmul.f32 %v3941, %v3952
      %v4021 = vmul.f32 %v3942, %v3952
      %v4022 = vmul.f32 %v3943, %v3952
      %v4023 = vmul.f32 %v3944, %v3952
      %v4024 = vmul.f32 %v3945, %v3952
      %v4025 = vmul.f32 %v3946, %v3952
      %v4026 = vld [vmem:[%s3] sm:$0x1]
      %v4028 = vlaneseq
      %v4029 = vshrl.u32 %v4028, 7
      %v4030 = vsub.s32 0, %v4029
      %v4031 = vrot.slane %v4026, %v4030
      %v4033 = vadd.f32 %v3954, %v4031
      %v4034 = vadd.f32 %v3955, %v4031
      %v4035 = vadd.f32 %v3956, %v4031
      %v4036 = vadd.f32 %v3957, %v4031
      %v4037 = vadd.f32 %v3958, %v4031
      %v4038 = vadd.f32 %v3959, %v4031
      %v4039 = vadd.f32 %v3960, %v4031
      %v4040 = vadd.f32 %v3961, %v4031
      %v4041 = vadd.f32 %v3962, %v4031
      %v4042 = vadd.f32 %v3963, %v4031
      %v4043 = vadd.f32 %v3964, %v4031
      %v4044 = vadd.f32 %v3965, %v4031
      %v4045 = vadd.f32 %v3966, %v4031
      %v4046 = vadd.f32 %v3967, %v4031
      %v4047 = vadd.f32 %v3968, %v4031
      %v4048 = vadd.f32 %v3969, %v4031
      %v4049 = vadd.f32 %v3970, %v4031
      %v4050 = vadd.f32 %v3971, %v4031
      %v4051 = vadd.f32 %v3972, %v4031
      %v4052 = vadd.f32 %v3973, %v4031
      %v4053 = vadd.f32 %v3974, %v4031
      %v4054 = vadd.f32 %v3975, %v4031
      %v4055 = vadd.f32 %v3976, %v4031
      %v4056 = vadd.f32 %v3977, %v4031
      %v4057 = vadd.f32 %v3978, %v4031
      %v4058 = vadd.f32 %v3979, %v4031
      %v4059 = vadd.f32 %v3980, %v4031
      %v4060 = vadd.f32 %v3981, %v4031
      %v4061 = vadd.f32 %v3982, %v4031
      %v4062 = vadd.f32 %v3983, %v4031
      %v4063 = vadd.f32 %v3984, %v4031
      %v4064 = vadd.f32 %v3985, %v4031
      %v4065 = vadd.f32 %v3986, %v4031
      %v4066 = vadd.f32 %v3987, %v4031
      %v4067 = vadd.f32 %v3988, %v4031
      %v4068 = vadd.f32 %v3989, %v4031
      %v4069 = vadd.f32 %v3990, %v4031
      %v4070 = vadd.f32 %v3991, %v4031
      %v4071 = vadd.f32 %v3992, %v4031
      %v4072 = vadd.f32 %v3993, %v4031
      %v4073 = vadd.f32 %v3994, %v4031
      %v4074 = vadd.f32 %v3995, %v4031
      %v4075 = vadd.f32 %v3996, %v4031
      %v4076 = vadd.f32 %v3997, %v4031
      %v4077 = vadd.f32 %v3998, %v4031
      %v4078 = vadd.f32 %v3999, %v4031
      %v4079 = vadd.f32 %v4000, %v4031
      %v4080 = vadd.f32 %v4001, %v4031
      %v4081 = vadd.f32 %v4002, %v4031
      %v4082 = vadd.f32 %v4003, %v4031
      %v4083 = vadd.f32 %v4004, %v4031
      %v4084 = vadd.f32 %v4005, %v4031
      %v4085 = vadd.f32 %v4006, %v4031
      %v4086 = vadd.f32 %v4007, %v4031
      %v4087 = vadd.f32 %v4008, %v4031
      %v4088 = vadd.f32 %v4009, %v4031
      %v4089 = vadd.f32 %v4010, %v4031
      %v4090 = vadd.f32 %v4011, %v4031
      %v4091 = vadd.f32 %v4012, %v4031
      %v4092 = vadd.f32 %v4013, %v4031
      %v4093 = vadd.f32 %v4014, %v4031
      %v4094 = vadd.f32 %v4015, %v4031
      %v4095 = vadd.f32 %v4016, %v4031
      %v4096 = vadd.f32 %v4017, %v4031
      %v4097 = vadd.f32 %v4018, %v4031
      %v4098 = vadd.f32 %v4019, %v4031
      %v4099 = vadd.f32 %v4020, %v4031
      %v4100 = vadd.f32 %v4021, %v4031
      %v4101 = vadd.f32 %v4022, %v4031
      %v4102 = vadd.f32 %v4023, %v4031
      %v4103 = vadd.f32 %v4024, %v4031
      %v4104 = vadd.f32 %v4025, %v4031
      %v4105 = vxor.u32 %v4033, 2147483648
      %v4106 = vxor.u32 %v4034, 2147483648
      %v4107 = vxor.u32 %v4035, 2147483648
      %v4108 = vxor.u32 %v4036, 2147483648
      %v4109 = vxor.u32 %v4037, 2147483648
      %v4110 = vxor.u32 %v4038, 2147483648
      %v4111 = vxor.u32 %v4039, 2147483648
      %v4112 = vxor.u32 %v4040, 2147483648
      %v4113 = vxor.u32 %v4041, 2147483648
      %v4114 = vxor.u32 %v4042, 2147483648
      %v4115 = vxor.u32 %v4043, 2147483648
      %v4116 = vxor.u32 %v4044, 2147483648
      %v4117 = vxor.u32 %v4045, 2147483648
      %v4118 = vxor.u32 %v4046, 2147483648
      %v4119 = vxor.u32 %v4047, 2147483648
      %v4120 = vxor.u32 %v4048, 2147483648
      %v4121 = vxor.u32 %v4049, 2147483648
      %v4122 = vxor.u32 %v4050, 2147483648
      %v4123 = vxor.u32 %v4051, 2147483648
      %v4124 = vxor.u32 %v4052, 2147483648
      %v4125 = vxor.u32 %v4053, 2147483648
      %v4126 = vxor.u32 %v4054, 2147483648
      %v4127 = vxor.u32 %v4055, 2147483648
      %v4128 = vxor.u32 %v4056, 2147483648
      %v4129 = vxor.u32 %v4057, 2147483648
      %v4130 = vxor.u32 %v4058, 2147483648
      %v4131 = vxor.u32 %v4059, 2147483648
      %v4132 = vxor.u32 %v4060, 2147483648
      %v4133 = vxor.u32 %v4061, 2147483648
      %v4134 = vxor.u32 %v4062, 2147483648
      %v4135 = vxor.u32 %v4063, 2147483648
      %v4136 = vxor.u32 %v4064, 2147483648
      %v4137 = vxor.u32 %v4065, 2147483648
      %v4138 = vxor.u32 %v4066, 2147483648
      %v4139 = vxor.u32 %v4067, 2147483648
      %v4140 = vxor.u32 %v4068, 2147483648
      %v4141 = vxor.u32 %v4069, 2147483648
      %v4142 = vxor.u32 %v4070, 2147483648
      %v4143 = vxor.u32 %v4071, 2147483648
      %v4144 = vxor.u32 %v4072, 2147483648
      %v4145 = vxor.u32 %v4073, 2147483648
      %v4146 = vxor.u32 %v4074, 2147483648
      %v4147 = vxor.u32 %v4075, 2147483648
      %v4148 = vxor.u32 %v4076, 2147483648
      %v4149 = vxor.u32 %v4077, 2147483648
      %v4150 = vxor.u32 %v4078, 2147483648
      %v4151 = vxor.u32 %v4079, 2147483648
      %v4152 = vxor.u32 %v4080, 2147483648
      %v4153 = vxor.u32 %v4081, 2147483648
      %v4154 = vxor.u32 %v4082, 2147483648
      %v4155 = vxor.u32 %v4083, 2147483648
      %v4156 = vxor.u32 %v4084, 2147483648
      %v4157 = vxor.u32 %v4085, 2147483648
      %v4158 = vxor.u32 %v4086, 2147483648
      %v4159 = vxor.u32 %v4087, 2147483648
      %v4160 = vxor.u32 %v4088, 2147483648
      %v4161 = vxor.u32 %v4089, 2147483648
      %v4162 = vxor.u32 %v4090, 2147483648
      %v4163 = vxor.u32 %v4091, 2147483648
      %v4164 = vxor.u32 %v4092, 2147483648
      %v4165 = vxor.u32 %v4093, 2147483648
      %v4166 = vxor.u32 %v4094, 2147483648
      %v4167 = vxor.u32 %v4095, 2147483648
      %v4168 = vxor.u32 %v4096, 2147483648
      %v4169 = vxor.u32 %v4097, 2147483648
      %v4170 = vxor.u32 %v4098, 2147483648
      %v4171 = vxor.u32 %v4099, 2147483648
      %v4172 = vxor.u32 %v4100, 2147483648
      %v4173 = vxor.u32 %v4101, 2147483648
      %v4174 = vxor.u32 %v4102, 2147483648
      %v4175 = vxor.u32 %v4103, 2147483648
      %v4176 = vxor.u32 %v4104, 2147483648
      %v4177 = vmul.f32 %v4105, 1.442695
      %v4178 = vpow.pop %v4177
      %v4179 = vmul.f32 %v4106, 1.442695
      %v4180 = vpow.pop %v4179
      %v4181 = vmul.f32 %v4107, 1.442695
      %v4182 = vpow.pop %v4181
      %v4183 = vmul.f32 %v4108, 1.442695
      %v4184 = vpow.pop %v4183
      %v4185 = vmul.f32 %v4109, 1.442695
      %v4186 = vpow.pop %v4185
      %v4187 = vmul.f32 %v4110, 1.442695
      %v4188 = vpow.pop %v4187
      %v4189 = vmul.f32 %v4111, 1.442695
      %v4190 = vpow.pop %v4189
      %v4191 = vmul.f32 %v4112, 1.442695
      %v4192 = vpow.pop %v4191
      %v4193 = vmul.f32 %v4113, 1.442695
      %v4194 = vpow.pop %v4193
      %v4195 = vmul.f32 %v4114, 1.442695
      %v4196 = vpow.pop %v4195
      %v4197 = vmul.f32 %v4115, 1.442695
      %v4198 = vpow.pop %v4197
      %v4199 = vmul.f32 %v4116, 1.442695
      %v4200 = vpow.pop %v4199
      %v4201 = vmul.f32 %v4117, 1.442695
      %v4202 = vpow.pop %v4201
      %v4203 = vmul.f32 %v4118, 1.442695
      %v4204 = vpow.pop %v4203
      %v4205 = vmul.f32 %v4119, 1.442695
      %v4206 = vpow.pop %v4205
      %v4207 = vmul.f32 %v4120, 1.442695
      %v4208 = vpow.pop %v4207
      %v4209 = vmul.f32 %v4121, 1.442695
      %v4210 = vpow.pop %v4209
      %v4211 = vmul.f32 %v4122, 1.442695
      %v4212 = vpow.pop %v4211
      %v4213 = vmul.f32 %v4123, 1.442695
      %v4214 = vpow.pop %v4213
      %v4215 = vmul.f32 %v4124, 1.442695
      %v4216 = vpow.pop %v4215
      %v4217 = vmul.f32 %v4125, 1.442695
      %v4218 = vpow.pop %v4217
      %v4219 = vmul.f32 %v4126, 1.442695
      %v4220 = vpow.pop %v4219
      %v4221 = vmul.f32 %v4127, 1.442695
      %v4222 = vpow.pop %v4221
      %v4223 = vmul.f32 %v4128, 1.442695
      %v4224 = vpow.pop %v4223
      %v4225 = vmul.f32 %v4129, 1.442695
      %v4226 = vpow.pop %v4225
      %v4227 = vmul.f32 %v4130, 1.442695
      %v4228 = vpow.pop %v4227
      %v4229 = vmul.f32 %v4131, 1.442695
      %v4230 = vpow.pop %v4229
      %v4231 = vmul.f32 %v4132, 1.442695
      %v4232 = vpow.pop %v4231
      %v4233 = vmul.f32 %v4133, 1.442695
      %v4234 = vpow.pop %v4233
      %v4235 = vmul.f32 %v4134, 1.442695
      %v4236 = vpow.pop %v4235
      %v4237 = vmul.f32 %v4135, 1.442695
      %v4238 = vpow.pop %v4237
      %v4239 = vmul.f32 %v4136, 1.442695
      %v4240 = vpow.pop %v4239
      %v4241 = vmul.f32 %v4137, 1.442695
      %v4242 = vpow.pop %v4241
      %v4243 = vmul.f32 %v4138, 1.442695
      %v4244 = vpow.pop %v4243
      %v4245 = vmul.f32 %v4139, 1.442695
      %v4246 = vpow.pop %v4245
      %v4247 = vmul.f32 %v4140, 1.442695
      %v4248 = vpow.pop %v4247
      %v4249 = vmul.f32 %v4141, 1.442695
      %v4250 = vpow.pop %v4249
      %v4251 = vmul.f32 %v4142, 1.442695
      %v4252 = vpow.pop %v4251
      %v4253 = vmul.f32 %v4143, 1.442695
      %v4254 = vpow.pop %v4253
      %v4255 = vmul.f32 %v4144, 1.442695
      %v4256 = vpow.pop %v4255
      %v4257 = vmul.f32 %v4145, 1.442695
      %v4258 = vpow.pop %v4257
      %v4259 = vmul.f32 %v4146, 1.442695
      %v4260 = vpow.pop %v4259
      %v4261 = vmul.f32 %v4147, 1.442695
      %v4262 = vpow.pop %v4261
      %v4263 = vmul.f32 %v4148, 1.442695
      %v4264 = vpow.pop %v4263
      %v4265 = vmul.f32 %v4149, 1.442695
      %v4266 = vpow.pop %v4265
      %v4267 = vmul.f32 %v4150, 1.442695
      %v4268 = vpow.pop %v4267
      %v4269 = vmul.f32 %v4151, 1.442695
      %v4270 = vpow.pop %v4269
      %v4271 = vmul.f32 %v4152, 1.442695
      %v4272 = vpow.pop %v4271
      %v4273 = vmul.f32 %v4153, 1.442695
      %v4274 = vpow.pop %v4273
      %v4275 = vmul.f32 %v4154, 1.442695
      %v4276 = vpow.pop %v4275
      %v4277 = vmul.f32 %v4155, 1.442695
      %v4278 = vpow.pop %v4277
      %v4279 = vmul.f32 %v4156, 1.442695
      %v4280 = vpow.pop %v4279
      %v4281 = vmul.f32 %v4157, 1.442695
      %v4282 = vpow.pop %v4281
      %v4283 = vmul.f32 %v4158, 1.442695
      %v4284 = vpow.pop %v4283
      %v4285 = vmul.f32 %v4159, 1.442695
      %v4286 = vpow.pop %v4285
      %v4287 = vmul.f32 %v4160, 1.442695
      %v4288 = vpow.pop %v4287
      %v4289 = vmul.f32 %v4161, 1.442695
      %v4290 = vpow.pop %v4289
      %v4291 = vmul.f32 %v4162, 1.442695
      %v4292 = vpow.pop %v4291
      %v4293 = vmul.f32 %v4163, 1.442695
      %v4294 = vpow.pop %v4293
      %v4295 = vmul.f32 %v4164, 1.442695
      %v4296 = vpow.pop %v4295
      %v4297 = vmul.f32 %v4165, 1.442695
      %v4298 = vpow.pop %v4297
      %v4299 = vmul.f32 %v4166, 1.442695
      %v4300 = vpow.pop %v4299
      %v4301 = vmul.f32 %v4167, 1.442695
      %v4302 = vpow.pop %v4301
      %v4303 = vmul.f32 %v4168, 1.442695
      %v4304 = vpow.pop %v4303
      %v4305 = vmul.f32 %v4169, 1.442695
      %v4306 = vpow.pop %v4305
      %v4307 = vmul.f32 %v4170, 1.442695
      %v4308 = vpow.pop %v4307
      %v4309 = vmul.f32 %v4171, 1.442695
      %v4310 = vpow.pop %v4309
      %v4311 = vmul.f32 %v4172, 1.442695
      %v4312 = vpow.pop %v4311
      %v4313 = vmul.f32 %v4173, 1.442695
      %v4314 = vpow.pop %v4313
      %v4315 = vmul.f32 %v4174, 1.442695
      %v4316 = vpow.pop %v4315
      %v4317 = vmul.f32 %v4175, 1.442695
      %v4318 = vpow.pop %v4317
      %v4319 = vmul.f32 %v4176, 1.442695
      %v4320 = vpow.pop %v4319
      %v4321 = vadd.f32 %v4178, 1.0
      %v4322 = vadd.f32 %v4180, 1.0
      %v4323 = vadd.f32 %v4182, 1.0
      %v4324 = vadd.f32 %v4184, 1.0
      %v4325 = vadd.f32 %v4186, 1.0
      %v4326 = vadd.f32 %v4188, 1.0
      %v4327 = vadd.f32 %v4190, 1.0
      %v4328 = vadd.f32 %v4192, 1.0
      %v4329 = vadd.f32 %v4194, 1.0
      %v4330 = vadd.f32 %v4196, 1.0
      %v4331 = vadd.f32 %v4198, 1.0
      %v4332 = vadd.f32 %v4200, 1.0
      %v4333 = vadd.f32 %v4202, 1.0
      %v4334 = vadd.f32 %v4204, 1.0
      %v4335 = vadd.f32 %v4206, 1.0
      %v4336 = vadd.f32 %v4208, 1.0
      %v4337 = vadd.f32 %v4210, 1.0
      %v4338 = vadd.f32 %v4212, 1.0
      %v4339 = vadd.f32 %v4214, 1.0
      %v4340 = vadd.f32 %v4216, 1.0
      %v4341 = vadd.f32 %v4218, 1.0
      %v4342 = vadd.f32 %v4220, 1.0
      %v4343 = vadd.f32 %v4222, 1.0
      %v4344 = vadd.f32 %v4224, 1.0
      %v4345 = vadd.f32 %v4226, 1.0
      %v4346 = vadd.f32 %v4228, 1.0
      %v4347 = vadd.f32 %v4230, 1.0
      %v4348 = vadd.f32 %v4232, 1.0
      %v4349 = vadd.f32 %v4234, 1.0
      %v4350 = vadd.f32 %v4236, 1.0
      %v4351 = vadd.f32 %v4238, 1.0
      %v4352 = vadd.f32 %v4240, 1.0
      %v4353 = vadd.f32 %v4242, 1.0
      %v4354 = vadd.f32 %v4244, 1.0
      %v4355 = vadd.f32 %v4246, 1.0
      %v4356 = vadd.f32 %v4248, 1.0
      %v4357 = vadd.f32 %v4250, 1.0
      %v4358 = vadd.f32 %v4252, 1.0
      %v4359 = vadd.f32 %v4254, 1.0
      %v4360 = vadd.f32 %v4256, 1.0
      %v4361 = vadd.f32 %v4258, 1.0
      %v4362 = vadd.f32 %v4260, 1.0
      %v4363 = vadd.f32 %v4262, 1.0
      %v4364 = vadd.f32 %v4264, 1.0
      %v4365 = vadd.f32 %v4266, 1.0
      %v4366 = vadd.f32 %v4268, 1.0
      %v4367 = vadd.f32 %v4270, 1.0
      %v4368 = vadd.f32 %v4272, 1.0
      %v4369 = vadd.f32 %v4274, 1.0
      %v4370 = vadd.f32 %v4276, 1.0
      %v4371 = vadd.f32 %v4278, 1.0
      %v4372 = vadd.f32 %v4280, 1.0
      %v4373 = vadd.f32 %v4282, 1.0
      %v4374 = vadd.f32 %v4284, 1.0
      %v4375 = vadd.f32 %v4286, 1.0
      %v4376 = vadd.f32 %v4288, 1.0
      %v4377 = vadd.f32 %v4290, 1.0
      %v4378 = vadd.f32 %v4292, 1.0
      %v4379 = vadd.f32 %v4294, 1.0
      %v4380 = vadd.f32 %v4296, 1.0
      %v4381 = vadd.f32 %v4298, 1.0
      %v4382 = vadd.f32 %v4300, 1.0
      %v4383 = vadd.f32 %v4302, 1.0
      %v4384 = vadd.f32 %v4304, 1.0
      %v4385 = vadd.f32 %v4306, 1.0
      %v4386 = vadd.f32 %v4308, 1.0
      %v4387 = vadd.f32 %v4310, 1.0
      %v4388 = vadd.f32 %v4312, 1.0
      %v4389 = vadd.f32 %v4314, 1.0
      %v4390 = vadd.f32 %v4316, 1.0
      %v4391 = vadd.f32 %v4318, 1.0
      %v4392 = vadd.f32 %v4320, 1.0
      %v4393 = vrcp.pop %v4321
      %v4394 = vmul.f32 1.0, %v4393
      %v4395 = vrcp.pop %v4322
      %v4396 = vmul.f32 1.0, %v4395
      %v4397 = vrcp.pop %v4323
      %v4398 = vmul.f32 1.0, %v4397
      %v4399 = vrcp.pop %v4324
      %v4400 = vmul.f32 1.0, %v4399
      %v4401 = vrcp.pop %v4325
      %v4402 = vmul.f32 1.0, %v4401
      %v4403 = vrcp.pop %v4326
      %v4404 = vmul.f32 1.0, %v4403
      %v4405 = vrcp.pop %v4327
      %v4406 = vmul.f32 1.0, %v4405
      %v4407 = vrcp.pop %v4328
      %v4408 = vmul.f32 1.0, %v4407
      %v4409 = vrcp.pop %v4329
      %v4410 = vmul.f32 1.0, %v4409
      %v4411 = vrcp.pop %v4330
      %v4412 = vmul.f32 1.0, %v4411
      %v4413 = vrcp.pop %v4331
      %v4414 = vmul.f32 1.0, %v4413
      %v4415 = vrcp.pop %v4332
      %v4416 = vmul.f32 1.0, %v4415
      %v4417 = vrcp.pop %v4333
      %v4418 = vmul.f32 1.0, %v4417
      %v4419 = vrcp.pop %v4334
      %v4420 = vmul.f32 1.0, %v4419
      %v4421 = vrcp.pop %v4335
      %v4422 = vmul.f32 1.0, %v4421
      %v4423 = vrcp.pop %v4336
      %v4424 = vmul.f32 1.0, %v4423
      %v4425 = vrcp.pop %v4337
      %v4426 = vmul.f32 1.0, %v4425
      %v4427 = vrcp.pop %v4338
      %v4428 = vmul.f32 1.0, %v4427
      %v4429 = vrcp.pop %v4339
      %v4430 = vmul.f32 1.0, %v4429
      %v4431 = vrcp.pop %v4340
      %v4432 = vmul.f32 1.0, %v4431
      %v4433 = vrcp.pop %v4341
      %v4434 = vmul.f32 1.0, %v4433
      %v4435 = vrcp.pop %v4342
      %v4436 = vmul.f32 1.0, %v4435
      %v4437 = vrcp.pop %v4343
      %v4438 = vmul.f32 1.0, %v4437
      %v4439 = vrcp.pop %v4344
      %v4440 = vmul.f32 1.0, %v4439
      %v4441 = vrcp.pop %v4345
      %v4442 = vmul.f32 1.0, %v4441
      %v4443 = vrcp.pop %v4346
      %v4444 = vmul.f32 1.0, %v4443
      %v4445 = vrcp.pop %v4347
      %v4446 = vmul.f32 1.0, %v4445
      %v4447 = vrcp.pop %v4348
      %v4448 = vmul.f32 1.0, %v4447
      %v4449 = vrcp.pop %v4349
      %v4450 = vmul.f32 1.0, %v4449
      %v4451 = vrcp.pop %v4350
      %v4452 = vmul.f32 1.0, %v4451
      %v4453 = vrcp.pop %v4351
      %v4454 = vmul.f32 1.0, %v4453
      %v4455 = vrcp.pop %v4352
      %v4456 = vmul.f32 1.0, %v4455
      %v4457 = vrcp.pop %v4353
      %v4458 = vmul.f32 1.0, %v4457
      %v4459 = vrcp.pop %v4354
      %v4460 = vmul.f32 1.0, %v4459
      %v4461 = vrcp.pop %v4355
      %v4462 = vmul.f32 1.0, %v4461
      %v4463 = vrcp.pop %v4356
      %v4464 = vmul.f32 1.0, %v4463
      %v4465 = vrcp.pop %v4357
      %v4466 = vmul.f32 1.0, %v4465
      %v4467 = vrcp.pop %v4358
      %v4468 = vmul.f32 1.0, %v4467
      %v4469 = vrcp.pop %v4359
      %v4470 = vmul.f32 1.0, %v4469
      %v4471 = vrcp.pop %v4360
      %v4472 = vmul.f32 1.0, %v4471
      %v4473 = vrcp.pop %v4361
      %v4474 = vmul.f32 1.0, %v4473
      %v4475 = vrcp.pop %v4362
      %v4476 = vmul.f32 1.0, %v4475
      %v4477 = vrcp.pop %v4363
      %v4478 = vmul.f32 1.0, %v4477
      %v4479 = vrcp.pop %v4364
      %v4480 = vmul.f32 1.0, %v4479
      %v4481 = vrcp.pop %v4365
      %v4482 = vmul.f32 1.0, %v4481
      %v4483 = vrcp.pop %v4366
      %v4484 = vmul.f32 1.0, %v4483
      %v4485 = vrcp.pop %v4367
      %v4486 = vmul.f32 1.0, %v4485
      %v4487 = vrcp.pop %v4368
      %v4488 = vmul.f32 1.0, %v4487
      %v4489 = vrcp.pop %v4369
      %v4490 = vmul.f32 1.0, %v4489
      %v4491 = vrcp.pop %v4370
      %v4492 = vmul.f32 1.0, %v4491
      %v4493 = vrcp.pop %v4371
      %v4494 = vmul.f32 1.0, %v4493
      %v4495 = vrcp.pop %v4372
      %v4496 = vmul.f32 1.0, %v4495
      %v4497 = vrcp.pop %v4373
      %v4498 = vmul.f32 1.0, %v4497
      %v4499 = vrcp.pop %v4374
      %v4500 = vmul.f32 1.0, %v4499
      %v4501 = vrcp.pop %v4375
      %v4502 = vmul.f32 1.0, %v4501
      %v4503 = vrcp.pop %v4376
      %v4504 = vmul.f32 1.0, %v4503
      %v4505 = vrcp.pop %v4377
      %v4506 = vmul.f32 1.0, %v4505
      %v4507 = vrcp.pop %v4378
      %v4508 = vmul.f32 1.0, %v4507
      %v4509 = vrcp.pop %v4379
      %v4510 = vmul.f32 1.0, %v4509
      %v4511 = vrcp.pop %v4380
      %v4512 = vmul.f32 1.0, %v4511
      %v4513 = vrcp.pop %v4381
      %v4514 = vmul.f32 1.0, %v4513
      %v4515 = vrcp.pop %v4382
      %v4516 = vmul.f32 1.0, %v4515
      %v4517 = vrcp.pop %v4383
      %v4518 = vmul.f32 1.0, %v4517
      %v4519 = vrcp.pop %v4384
      %v4520 = vmul.f32 1.0, %v4519
      %v4521 = vrcp.pop %v4385
      %v4522 = vmul.f32 1.0, %v4521
      %v4523 = vrcp.pop %v4386
      %v4524 = vmul.f32 1.0, %v4523
      %v4525 = vrcp.pop %v4387
      %v4526 = vmul.f32 1.0, %v4525
      %v4527 = vrcp.pop %v4388
      %v4528 = vmul.f32 1.0, %v4527
      %v4529 = vrcp.pop %v4389
      %v4530 = vmul.f32 1.0, %v4529
      %v4531 = vrcp.pop %v4390
      %v4532 = vmul.f32 1.0, %v4531
      %v4533 = vrcp.pop %v4391
      %v4534 = vmul.f32 1.0, %v4533
      %v4535 = vrcp.pop %v4392
      %v4536 = vmul.f32 1.0, %v4535
      %v4537 = vmul.f32 %v4033, %v4394
      %v4538 = vmul.f32 %v4034, %v4396
      %v4539 = vmul.f32 %v4035, %v4398
      %v4540 = vmul.f32 %v4036, %v4400
      %v4541 = vmul.f32 %v4037, %v4402
      %v4542 = vmul.f32 %v4038, %v4404
      %v4543 = vmul.f32 %v4039, %v4406
      %v4544 = vmul.f32 %v4040, %v4408
      %v4545 = vmul.f32 %v4041, %v4410
      %v4546 = vmul.f32 %v4042, %v4412
      %v4547 = vmul.f32 %v4043, %v4414
      %v4548 = vmul.f32 %v4044, %v4416
      %v4549 = vmul.f32 %v4045, %v4418
      %v4550 = vmul.f32 %v4046, %v4420
      %v4551 = vmul.f32 %v4047, %v4422
      %v4552 = vmul.f32 %v4048, %v4424
      %v4553 = vmul.f32 %v4049, %v4426
      %v4554 = vmul.f32 %v4050, %v4428
      %v4555 = vmul.f32 %v4051, %v4430
      %v4556 = vmul.f32 %v4052, %v4432
      %v4557 = vmul.f32 %v4053, %v4434
      %v4558 = vmul.f32 %v4054, %v4436
      %v4559 = vmul.f32 %v4055, %v4438
      %v4560 = vmul.f32 %v4056, %v4440
      %v4561 = vmul.f32 %v4057, %v4442
      %v4562 = vmul.f32 %v4058, %v4444
      %v4563 = vmul.f32 %v4059, %v4446
      %v4564 = vmul.f32 %v4060, %v4448
      %v4565 = vmul.f32 %v4061, %v4450
      %v4566 = vmul.f32 %v4062, %v4452
      %v4567 = vmul.f32 %v4063, %v4454
      %v4568 = vmul.f32 %v4064, %v4456
      %v4569 = vmul.f32 %v4065, %v4458
      %v4570 = vmul.f32 %v4066, %v4460
      %v4571 = vmul.f32 %v4067, %v4462
      %v4572 = vmul.f32 %v4068, %v4464
      %v4573 = vmul.f32 %v4069, %v4466
      %v4574 = vmul.f32 %v4070, %v4468
      %v4575 = vmul.f32 %v4071, %v4470
      %v4576 = vmul.f32 %v4072, %v4472
      %v4577 = vmul.f32 %v4073, %v4474
      %v4578 = vmul.f32 %v4074, %v4476
      %v4579 = vmul.f32 %v4075, %v4478
      %v4580 = vmul.f32 %v4076, %v4480
      %v4581 = vmul.f32 %v4077, %v4482
      %v4582 = vmul.f32 %v4078, %v4484
      %v4583 = vmul.f32 %v4079, %v4486
      %v4584 = vmul.f32 %v4080, %v4488
      %v4585 = vmul.f32 %v4081, %v4490
      %v4586 = vmul.f32 %v4082, %v4492
      %v4587 = vmul.f32 %v4083, %v4494
      %v4588 = vmul.f32 %v4084, %v4496
      %v4589 = vmul.f32 %v4085, %v4498
      %v4590 = vmul.f32 %v4086, %v4500
      %v4591 = vmul.f32 %v4087, %v4502
      %v4592 = vmul.f32 %v4088, %v4504
      %v4593 = vmul.f32 %v4089, %v4506
      %v4594 = vmul.f32 %v4090, %v4508
      %v4595 = vmul.f32 %v4091, %v4510
      %v4596 = vmul.f32 %v4092, %v4512
      %v4597 = vmul.f32 %v4093, %v4514
      %v4598 = vmul.f32 %v4094, %v4516
      %v4599 = vmul.f32 %v4095, %v4518
      %v4600 = vmul.f32 %v4096, %v4520
      %v4601 = vmul.f32 %v4097, %v4522
      %v4602 = vmul.f32 %v4098, %v4524
      %v4603 = vmul.f32 %v4099, %v4526
      %v4604 = vmul.f32 %v4100, %v4528
      %v4605 = vmul.f32 %v4101, %v4530
      %v4606 = vmul.f32 %v4102, %v4532
      %v4607 = vmul.f32 %v4103, %v4534
      %v4608 = vmul.f32 %v4104, %v4536
      %v4609 = vld [vmem:[%s4] sm:$0xf]
      %v4610 = vld [vmem:[%s5] sm:$0x1]
      %v4612 = vlaneseq
      %v4613 = vshrl.u32 %v4612, 7
      %v4614 = vsub.s32 0, %v4613
      %v4615 = vrot.slane %v4610, %v4614
      %vm4617 = vcmask 31744
      %v4619 = vsel %vm4617, %v4537, 0
      %v4622 = vsel %vm4617, %v4538, 0
      %v4625 = vsel %vm4617, %v4539, 0
      %v4628 = vsel %vm4617, %v4540, 0
      %v4631 = vsel %vm4617, %v4541, 0
      %v4634 = vsel %vm4617, %v4542, 0
      %v4637 = vsel %vm4617, %v4543, 0
      %v4640 = vsel %vm4617, %v4544, 0
      %v4643 = vsel %vm4617, %v4545, 0
      %v4646 = vsel %vm4617, %v4546, 0
      %v4649 = vsel %vm4617, %v4547, 0
      %v4652 = vsel %vm4617, %v4548, 0
      %v4655 = vsel %vm4617, %v4549, 0
      %v4658 = vsel %vm4617, %v4550, 0
      %v4661 = vsel %vm4617, %v4551, 0
      %v4664 = vsel %vm4617, %v4552, 0
      %v4667 = vsel %vm4617, %v4553, 0
      %v4670 = vsel %vm4617, %v4554, 0
      %v4673 = vsel %vm4617, %v4555, 0
      %v4676 = vsel %vm4617, %v4556, 0
      %v4679 = vsel %vm4617, %v4557, 0
      %v4682 = vsel %vm4617, %v4558, 0
      %v4685 = vsel %vm4617, %v4559, 0
      %v4688 = vsel %vm4617, %v4560, 0
      %v4691 = vsel %vm4617, %v4561, 0
      %v4694 = vsel %vm4617, %v4562, 0
      %v4697 = vsel %vm4617, %v4563, 0
      %v4700 = vsel %vm4617, %v4564, 0
      %v4703 = vsel %vm4617, %v4565, 0
      %v4706 = vsel %vm4617, %v4566, 0
      %v4709 = vsel %vm4617, %v4567, 0
      %v4712 = vsel %vm4617, %v4568, 0
      %v4715 = vsel %vm4617, %v4569, 0
      %v4718 = vsel %vm4617, %v4570, 0
      %v4721 = vsel %vm4617, %v4571, 0
      %v4724 = vsel %vm4617, %v4572, 0
      %v4727 = vsel %vm4617, %v4573, 0
      %v4730 = vsel %vm4617, %v4574, 0
      %v4733 = vsel %vm4617, %v4575, 0
      %v4736 = vsel %vm4617, %v4576, 0
      %v4739 = vsel %vm4617, %v4577, 0
      %v4742 = vsel %vm4617, %v4578, 0
      %v4745 = vsel %vm4617, %v4579, 0
      %v4748 = vsel %vm4617, %v4580, 0
      %v4751 = vsel %vm4617, %v4581, 0
      %v4754 = vsel %vm4617, %v4582, 0
      %v4757 = vsel %vm4617, %v4583, 0
      %v4760 = vsel %vm4617, %v4584, 0
      %v4763 = vsel %vm4617, %v4585, 0
      %v4766 = vsel %vm4617, %v4586, 0
      %v4769 = vsel %vm4617, %v4587, 0
      %v4772 = vsel %vm4617, %v4588, 0
      %v4775 = vsel %vm4617, %v4589, 0
      %v4778 = vsel %vm4617, %v4590, 0
      %v4781 = vsel %vm4617, %v4591, 0
      %v4784 = vsel %vm4617, %v4592, 0
      %v4787 = vsel %vm4617, %v4593, 0
      %v4790 = vsel %vm4617, %v4594, 0
      %v4793 = vsel %vm4617, %v4595, 0
      %v4796 = vsel %vm4617, %v4596, 0
      %v4799 = vsel %vm4617, %v4597, 0
      %v4802 = vsel %vm4617, %v4598, 0
      %v4805 = vsel %vm4617, %v4599, 0
      %v4808 = vsel %vm4617, %v4600, 0
      %v4811 = vsel %vm4617, %v4601, 0
      %v4814 = vsel %vm4617, %v4602, 0
      %v4817 = vsel %vm4617, %v4603, 0
      %v4820 = vsel %vm4617, %v4604, 0
      %v4823 = vsel %vm4617, %v4605, 0
      %v4826 = vsel %vm4617, %v4606, 0
      %v4829 = vsel %vm4617, %v4607, 0
      %v4832 = vsel %vm4617, %v4608, 0
      %vm4834 = vcmask 1043456
      %v4836 = vsel %vm4834, %v4609, 0
      %4838 = vmatprep.subr.mxu0 0.0
      %4839 = vmatpush1.msra.mxu0 %v4836
      %4840 = vmatprep.subr.mxu0 0.0
      %4841 = vmatpush1.msra.mxu0 0.0
      %4842 = vmatprep.subr.mxu0 0.0
      %4843 = vmatpush1.msra.mxu0 0.0
      %4844 = vmatprep.subr.mxu0 0.0
      %4845 = vmatpush1.msra.mxu0 0.0
      %4846 = vmatprep.subr.mxu0 0.0
      %4847 = vmatpush1.msra.mxu0 0.0
      %4848 = vmatprep.subr.mxu0 0.0
      %4849 = vmatpush1.msra.mxu0 0.0
      %4850 = vmatprep.subr.mxu0 0.0
      %4851 = vmatpush1.msra.mxu0 0.0
      %4852 = vmatprep.subr.mxu0 0.0
      %4853 = vmatpush1.msra.mxu0 0.0
      %4854 = vmatprep.subr.mxu0 0.0
      %4855 = vmatpush1.msra.mxu0 0.0
      %4856 = vmatprep.subr.mxu0 0.0
      %4857 = vmatpush1.msra.mxu0 0.0
      %4858 = vmatprep.subr.mxu0 0.0
      %4859 = vmatpush1.msra.mxu0 0.0
      %4860 = vmatprep.subr.mxu0 0.0
      %4861 = vmatpush1.msra.mxu0 0.0
      %4862 = vmatprep.subr.mxu0 0.0
      %4863 = vmatpush1.msra.mxu0 0.0
      %4864 = vmatprep.subr.mxu0 0.0
      %4865 = vmatpush1.msra.mxu0 0.0
      %4866 = vmatprep.subr.mxu0 0.0
      %4867 = vmatpush1.msra.mxu0 0.0
      %4868 = vmatprep.subr.mxu0 0.0
      %4869 = vmatpush1.msra.mxu0 0.0
      %4870 = vmatprep.subr.mxu0 0.0
      %4871 = vmatpush1.msra.mxu0 0.0
      %4872 = vmatprep.subr.mxu0 0.0
      %4873 = vmatpush1.msra.mxu0 0.0
      %4874 = vmatprep.subr.mxu0 0.0
      %4875 = vmatpush1.msra.mxu0 0.0
      %4876 = vmatprep.subr.mxu0 0.0
      %4877 = vmatpush1.msra.mxu0 0.0
      %4878 = vmatprep.subr.mxu0 0.0
      %4879 = vmatpush1.msra.mxu0 0.0
      %4880 = vmatprep.subr.mxu0 0.0
      %4881 = vmatpush1.msra.mxu0 0.0
      %4882 = vmatprep.subr.mxu0 0.0
      %4883 = vmatpush1.msra.mxu0 0.0
      %4884 = vmatprep.subr.mxu0 0.0
      %4885 = vmatpush1.msra.mxu0 0.0
      %4886 = vmatprep.subr.mxu0 0.0
      %4887 = vmatpush1.msra.mxu0 0.0
      %4888 = vmatprep.subr.mxu0 0.0
      %4889 = vmatpush1.msra.mxu0 0.0
      %4890 = vmatprep.subr.mxu0 0.0
      %4891 = vmatpush1.msra.mxu0 0.0
      %4892 = vmatprep.subr.mxu0 0.0
      %4893 = vmatpush1.msra.mxu0 0.0
      %4894 = vmatprep.subr.mxu0 0.0
      %4895 = vmatpush1.msra.mxu0 0.0
      %4896 = vmatprep.subr.mxu0 0.0
      %4897 = vmatpush1.msra.mxu0 0.0
      %4898 = vmatprep.subr.mxu0 0.0
      %4899 = vmatpush1.msra.mxu0 0.0
      %4900 = vmatprep.subr.mxu0 0.0
      %4901 = vmatpush1.msra.mxu0 0.0
      %4902 = vmatprep.mubr.f32.mxu0 0.0
      %4903 = vmatmul.mubr.f32.gmra.mrb[0].mxu0 %v4619
      %v4904 = vpop.f32.mrb[0].mxu0
      %v4905 = vadd.f32 %v4615, %v4904
      %v4906 = vpop.f32.mrb[0].mxu0
      %4907 = vmatprep.mubr.f32.mxu0 0.0
      %4908 = vmatmul.mubr.f32.gmra.mrb[0].mxu0 %v4622
      %v4909 = vpop.f32.mrb[0].mxu0
      %v4910 = vadd.f32 %v4615, %v4909
      %v4911 = vpop.f32.mrb[0].mxu0
      %4912 = vmatprep.mubr.f32.mxu0 0.0
      %4913 = vmatmul.mubr.f32.gmra.mrb[0].mxu0 %v4625
      %v4914 = vpop.f32.mrb[0].mxu0
      %v4915 = vadd.f32 %v4615, %v4914
      %v4916 = vpop.f32.mrb[0].mxu0
      %4917 = vmatprep.mubr.f32.mxu0 0.0
      %4918 = vmatmul.mubr.f32.gmra.mrb[0].mxu0 %v4628
      %v4919 = vpop.f32.mrb[0].mxu0
      %v4920 = vadd.f32 %v4615, %v4919
      %v4921 = vpop.f32.mrb[0].mxu0
      %4922 = vmatprep.mubr.f32.mxu0 0.0
      %4923 = vmatmul.mubr.f32.gmra.mrb[0].mxu0 %v4631
      %v4924 = vpop.f32.mrb[0].mxu0
      %v4925 = vadd.f32 %v4615, %v4924
      %v4926 = vpop.f32.mrb[0].mxu0
      %4927 = vmatprep.mubr.f32.mxu0 0.0
      %4928 = vmatmul.mubr.f32.gmra.mrb[0].mxu0 %v4634
      %v4929 = vpop.f32.mrb[0].mxu0
      %v4930 = vadd.f32 %v4615, %v4929
      %v4931 = vpop.f32.mrb[0].mxu0
      %4932 = vmatprep.mubr.f32.mxu0 0.0
      %4933 = vmatmul.mubr.f32.gmra.mrb[0].mxu0 %v4637
      %v4934 = vpop.f32.mrb[0].mxu0
      %v4935 = vadd.f32 %v4615, %v4934
      %v4936 = vpop.f32.mrb[0].mxu0
      %4937 = vmatprep.mubr.f32.mxu0 0.0
      %4938 = vmatmul.mubr.f32.gmra.mrb[0].mxu0 %v4640
      %v4939 = vpop.f32.mrb[0].mxu0
      %v4940 = vadd.f32 %v4615, %v4939
      %v4941 = vpop.f32.mrb[0].mxu0
      %4942 = vmatprep.mubr.f32.mxu0 0.0
      %4943 = vmatmul.mubr.f32.gmra.mrb[0].mxu0 %v4643
      %v4944 = vpop.f32.mrb[0].mxu0
      %v4945 = vadd.f32 %v4615, %v4944
      %v4946 = vpop.f32.mrb[0].mxu0
      %4947 = vmatprep.mubr.f32.mxu0 0.0
      %4948 = vmatmul.mubr.f32.gmra.mrb[0].mxu0 %v4646
      %v4949 = vpop.f32.mrb[0].mxu0
      %v4950 = vadd.f32 %v4615, %v4949
      %v4951 = vpop.f32.mrb[0].mxu0
      %4952 = vmatprep.mubr.f32.mxu0 0.0
      %4953 = vmatmul.mubr.f32.gmra.mrb[0].mxu0 %v4649
      %v4954 = vpop.f32.mrb[0].mxu0
      %v4955 = vadd.f32 %v4615, %v4954
      %v4956 = vpop.f32.mrb[0].mxu0
      %4957 = vmatprep.mubr.f32.mxu0 0.0
      %4958 = vmatmul.mubr.f32.gmra.mrb[0].mxu0 %v4652
      %v4959 = vpop.f32.mrb[0].mxu0
      %v4960 = vadd.f32 %v4615, %v4959
      %v4961 = vpop.f32.mrb[0].mxu0
      %4962 = vmatprep.mubr.f32.mxu0 0.0
      %4963 = vmatmul.mubr.f32.gmra.mrb[0].mxu0 %v4655
      %v4964 = vpop.f32.mrb[0].mxu0
      %v4965 = vadd.f32 %v4615, %v4964
      %v4966 = vpop.f32.mrb[0].mxu0
      %4967 = vmatprep.mubr.f32.mxu0 0.0
      %4968 = vmatmul.mubr.f32.gmra.mrb[0].mxu0 %v4658
      %v4969 = vpop.f32.mrb[0].mxu0
      %v4970 = vadd.f32 %v4615, %v4969
      %v4971 = vpop.f32.mrb[0].mxu0
      %4972 = vmatprep.mubr.f32.mxu0 0.0
      %4973 = vmatmul.mubr.f32.gmra.mrb[0].mxu0 %v4661
      %v4974 = vpop.f32.mrb[0].mxu0
      %v4975 = vadd.f32 %v4615, %v4974
      %v4976 = vpop.f32.mrb[0].mxu0
      %4977 = vmatprep.mubr.f32.mxu0 0.0
      %4978 = vmatmul.mubr.f32.gmra.mrb[0].mxu0 %v4664
      %v4979 = vpop.f32.mrb[0].mxu0
      %v4980 = vadd.f32 %v4615, %v4979
      %v4981 = vpop.f32.mrb[0].mxu0
      %4982 = vmatprep.mubr.f32.mxu0 0.0
      %4983 = vmatmul.mubr.f32.gmra.mrb[0].mxu0 %v4667
      %v4984 = vpop.f32.mrb[0].mxu0
      %v4985 = vadd.f32 %v4615, %v4984
      %v4986 = vpop.f32.mrb[0].mxu0
      %4987 = vmatprep.mubr.f32.mxu0 0.0
      %4988 = vmatmul.mubr.f32.gmra.mrb[0].mxu0 %v4670
      %v4989 = vpop.f32.mrb[0].mxu0
      %v4990 = vadd.f32 %v4615, %v4989
      %v4991 = vpop.f32.mrb[0].mxu0
      %4992 = vmatprep.mubr.f32.mxu0 0.0
      %4993 = vmatmul.mubr.f32.gmra.mrb[0].mxu0 %v4673
      %v4994 = vpop.f32.mrb[0].mxu0
      %v4995 = vadd.f32 %v4615, %v4994
      %v4996 = vpop.f32.mrb[0].mxu0
      %4997 = vmatprep.mubr.f32.mxu0 0.0
      %4998 = vmatmul.mubr.f32.gmra.mrb[0].mxu0 %v4676
      %v4999 = vpop.f32.mrb[0].mxu0
      %v5000 = vadd.f32 %v4615, %v4999
      %v5001 = vpop.f32.mrb[0].mxu0
      %5002 = vmatprep.mubr.f32.mxu0 0.0
      %5003 = vmatmul.mubr.f32.gmra.mrb[0].mxu0 %v4679
      %v5004 = vpop.f32.mrb[0].mxu0
      %v5005 = vadd.f32 %v4615, %v5004
      %v5006 = vpop.f32.mrb[0].mxu0
      %5007 = vmatprep.mubr.f32.mxu0 0.0
      %5008 = vmatmul.mubr.f32.gmra.mrb[0].mxu0 %v4682
      %v5009 = vpop.f32.mrb[0].mxu0
      %v5010 = vadd.f32 %v4615, %v5009
      %v5011 = vpop.f32.mrb[0].mxu0
      %5012 = vmatprep.mubr.f32.mxu0 0.0
      %5013 = vmatmul.mubr.f32.gmra.mrb[0].mxu0 %v4685
      %v5014 = vpop.f32.mrb[0].mxu0
      %v5015 = vadd.f32 %v4615, %v5014
      %v5016 = vpop.f32.mrb[0].mxu0
      %5017 = vmatprep.mubr.f32.mxu0 0.0
      %5018 = vmatmul.mubr.f32.gmra.mrb[0].mxu0 %v4688
      %v5019 = vpop.f32.mrb[0].mxu0
      %v5020 = vadd.f32 %v4615, %v5019
      %v5021 = vpop.f32.mrb[0].mxu0
      %5022 = vmatprep.mubr.f32.mxu0 0.0
      %5023 = vmatmul.mubr.f32.gmra.mrb[0].mxu0 %v4691
      %v5024 = vpop.f32.mrb[0].mxu0
      %v5025 = vadd.f32 %v4615, %v5024
      %v5026 = vpop.f32.mrb[0].mxu0
      %5027 = vmatprep.mubr.f32.mxu0 0.0
      %5028 = vmatmul.mubr.f32.gmra.mrb[0].mxu0 %v4694
      %v5029 = vpop.f32.mrb[0].mxu0
      %v5030 = vadd.f32 %v4615, %v5029
      %v5031 = vpop.f32.mrb[0].mxu0
      %5032 = vmatprep.mubr.f32.mxu0 0.0
      %5033 = vmatmul.mubr.f32.gmra.mrb[0].mxu0 %v4697
      %v5034 = vpop.f32.mrb[0].mxu0
      %v5035 = vadd.f32 %v4615, %v5034
      %v5036 = vpop.f32.mrb[0].mxu0
      %5037 = vmatprep.mubr.f32.mxu0 0.0
      %5038 = vmatmul.mubr.f32.gmra.mrb[0].mxu0 %v4700
      %v5039 = vpop.f32.mrb[0].mxu0
      %v5040 = vadd.f32 %v4615, %v5039
      %v5041 = vpop.f32.mrb[0].mxu0
      %5042 = vmatprep.mubr.f32.mxu0 0.0
      %5043 = vmatmul.mubr.f32.gmra.mrb[0].mxu0 %v4703
      %v5044 = vpop.f32.mrb[0].mxu0
      %v5045 = vadd.f32 %v4615, %v5044
      %v5046 = vpop.f32.mrb[0].mxu0
      %5047 = vmatprep.mubr.f32.mxu0 0.0
      %5048 = vmatmul.mubr.f32.gmra.mrb[0].mxu0 %v4706
      %v5049 = vpop.f32.mrb[0].mxu0
      %v5050 = vadd.f32 %v4615, %v5049
      %v5051 = vpop.f32.mrb[0].mxu0
      %5052 = vmatprep.mubr.f32.mxu0 0.0
      %5053 = vmatmul.mubr.f32.gmra.mrb[0].mxu0 %v4709
      %v5054 = vpop.f32.mrb[0].mxu0
      %v5055 = vadd.f32 %v4615, %v5054
      %v5056 = vpop.f32.mrb[0].mxu0
      %5057 = vmatprep.mubr.f32.mxu0 0.0
      %5058 = vmatmul.mubr.f32.gmra.mrb[0].mxu0 %v4712
      %v5059 = vpop.f32.mrb[0].mxu0
      %v5060 = vadd.f32 %v4615, %v5059
      %v5061 = vpop.f32.mrb[0].mxu0
      %5062 = vmatprep.mubr.f32.mxu0 0.0
      %5063 = vmatmul.mubr.f32.gmra.mrb[0].mxu0 %v4715
      %v5064 = vpop.f32.mrb[0].mxu0
      %v5065 = vadd.f32 %v4615, %v5064
      %v5066 = vpop.f32.mrb[0].mxu0
      %5067 = vmatprep.mubr.f32.mxu0 0.0
      %5068 = vmatmul.mubr.f32.gmra.mrb[0].mxu0 %v4718
      %v5069 = vpop.f32.mrb[0].mxu0
      %v5070 = vadd.f32 %v4615, %v5069
      %v5071 = vpop.f32.mrb[0].mxu0
      %5072 = vmatprep.mubr.f32.mxu0 0.0
      %5073 = vmatmul.mubr.f32.gmra.mrb[0].mxu0 %v4721
      %v5074 = vpop.f32.mrb[0].mxu0
      %v5075 = vadd.f32 %v4615, %v5074
      %v5076 = vpop.f32.mrb[0].mxu0
      %5077 = vmatprep.mubr.f32.mxu0 0.0
      %5078 = vmatmul.mubr.f32.gmra.mrb[0].mxu0 %v4724
      %v5079 = vpop.f32.mrb[0].mxu0
      %v5080 = vadd.f32 %v4615, %v5079
      %v5081 = vpop.f32.mrb[0].mxu0
      %5082 = vmatprep.mubr.f32.mxu0 0.0
      %5083 = vmatmul.mubr.f32.gmra.mrb[0].mxu0 %v4727
      %v5084 = vpop.f32.mrb[0].mxu0
      %v5085 = vadd.f32 %v4615, %v5084
      %v5086 = vpop.f32.mrb[0].mxu0
      %5087 = vmatprep.mubr.f32.mxu0 0.0
      %5088 = vmatmul.mubr.f32.gmra.mrb[0].mxu0 %v4730
      %v5089 = vpop.f32.mrb[0].mxu0
      %v5090 = vadd.f32 %v4615, %v5089
      %v5091 = vpop.f32.mrb[0].mxu0
      %5092 = vmatprep.mubr.f32.mxu0 0.0
      %5093 = vmatmul.mubr.f32.gmra.mrb[0].mxu0 %v4733
      %v5094 = vpop.f32.mrb[0].mxu0
      %v5095 = vadd.f32 %v4615, %v5094
      %v5096 = vpop.f32.mrb[0].mxu0
      %5097 = vmatprep.mubr.f32.mxu0 0.0
      %5098 = vmatmul.mubr.f32.gmra.mrb[0].mxu0 %v4736
      %v5099 = vpop.f32.mrb[0].mxu0
      %v5100 = vadd.f32 %v4615, %v5099
      %v5101 = vpop.f32.mrb[0].mxu0
      %5102 = vmatprep.mubr.f32.mxu0 0.0
      %5103 = vmatmul.mubr.f32.gmra.mrb[0].mxu0 %v4739
      %v5104 = vpop.f32.mrb[0].mxu0
      %v5105 = vadd.f32 %v4615, %v5104
      %v5106 = vpop.f32.mrb[0].mxu0
      %5107 = vmatprep.mubr.f32.mxu0 0.0
      %5108 = vmatmul.mubr.f32.gmra.mrb[0].mxu0 %v4742
      %v5109 = vpop.f32.mrb[0].mxu0
      %v5110 = vadd.f32 %v4615, %v5109
      %v5111 = vpop.f32.mrb[0].mxu0
      %5112 = vmatprep.mubr.f32.mxu0 0.0
      %5113 = vmatmul.mubr.f32.gmra.mrb[0].mxu0 %v4745
      %v5114 = vpop.f32.mrb[0].mxu0
      %v5115 = vadd.f32 %v4615, %v5114
      %v5116 = vpop.f32.mrb[0].mxu0
      %5117 = vmatprep.mubr.f32.mxu0 0.0
      %5118 = vmatmul.mubr.f32.gmra.mrb[0].mxu0 %v4748
      %v5119 = vpop.f32.mrb[0].mxu0
      %v5120 = vadd.f32 %v4615, %v5119
      %v5121 = vpop.f32.mrb[0].mxu0
      %5122 = vmatprep.mubr.f32.mxu0 0.0
      %5123 = vmatmul.mubr.f32.gmra.mrb[0].mxu0 %v4751
      %v5124 = vpop.f32.mrb[0].mxu0
      %v5125 = vadd.f32 %v4615, %v5124
      %v5126 = vpop.f32.mrb[0].mxu0
      %5127 = vmatprep.mubr.f32.mxu0 0.0
      %5128 = vmatmul.mubr.f32.gmra.mrb[0].mxu0 %v4754
      %v5129 = vpop.f32.mrb[0].mxu0
      %v5130 = vadd.f32 %v4615, %v5129
      %v5131 = vpop.f32.mrb[0].mxu0
      %5132 = vmatprep.mubr.f32.mxu0 0.0
      %5133 = vmatmul.mubr.f32.gmra.mrb[0].mxu0 %v4757
      %v5134 = vpop.f32.mrb[0].mxu0
      %v5135 = vadd.f32 %v4615, %v5134
      %v5136 = vpop.f32.mrb[0].mxu0
      %5137 = vmatprep.mubr.f32.mxu0 0.0
      %5138 = vmatmul.mubr.f32.gmra.mrb[0].mxu0 %v4760
      %v5139 = vpop.f32.mrb[0].mxu0
      %v5140 = vadd.f32 %v4615, %v5139
      %v5141 = vpop.f32.mrb[0].mxu0
      %5142 = vmatprep.mubr.f32.mxu0 0.0
      %5143 = vmatmul.mubr.f32.gmra.mrb[0].mxu0 %v4763
      %v5144 = vpop.f32.mrb[0].mxu0
      %v5145 = vadd.f32 %v4615, %v5144
      %v5146 = vpop.f32.mrb[0].mxu0
      %5147 = vmatprep.mubr.f32.mxu0 0.0
      %5148 = vmatmul.mubr.f32.gmra.mrb[0].mxu0 %v4766
      %v5149 = vpop.f32.mrb[0].mxu0
      %v5150 = vadd.f32 %v4615, %v5149
      %v5151 = vpop.f32.mrb[0].mxu0
      %5152 = vmatprep.mubr.f32.mxu0 0.0
      %5153 = vmatmul.mubr.f32.gmra.mrb[0].mxu0 %v4769
      %v5154 = vpop.f32.mrb[0].mxu0
      %v5155 = vadd.f32 %v4615, %v5154
      %v5156 = vpop.f32.mrb[0].mxu0
      %5157 = vmatprep.mubr.f32.mxu0 0.0
      %5158 = vmatmul.mubr.f32.gmra.mrb[0].mxu0 %v4772
      %v5159 = vpop.f32.mrb[0].mxu0
      %v5160 = vadd.f32 %v4615, %v5159
      %v5161 = vpop.f32.mrb[0].mxu0
      %5162 = vmatprep.mubr.f32.mxu0 0.0
      %5163 = vmatmul.mubr.f32.gmra.mrb[0].mxu0 %v4775
      %v5164 = vpop.f32.mrb[0].mxu0
      %v5165 = vadd.f32 %v4615, %v5164
      %v5166 = vpop.f32.mrb[0].mxu0
      %5167 = vmatprep.mubr.f32.mxu0 0.0
      %5168 = vmatmul.mubr.f32.gmra.mrb[0].mxu0 %v4778
      %v5169 = vpop.f32.mrb[0].mxu0
      %v5170 = vadd.f32 %v4615, %v5169
      %v5171 = vpop.f32.mrb[0].mxu0
      %5172 = vmatprep.mubr.f32.mxu0 0.0
      %5173 = vmatmul.mubr.f32.gmra.mrb[0].mxu0 %v4781
      %v5174 = vpop.f32.mrb[0].mxu0
      %v5175 = vadd.f32 %v4615, %v5174
      %v5176 = vpop.f32.mrb[0].mxu0
      %5177 = vmatprep.mubr.f32.mxu0 0.0
      %5178 = vmatmul.mubr.f32.gmra.mrb[0].mxu0 %v4784
      %v5179 = vpop.f32.mrb[0].mxu0
      %v5180 = vadd.f32 %v4615, %v5179
      %v5181 = vpop.f32.mrb[0].mxu0
      %5182 = vmatprep.mubr.f32.mxu0 0.0
      %5183 = vmatmul.mubr.f32.gmra.mrb[0].mxu0 %v4787
      %v5184 = vpop.f32.mrb[0].mxu0
      %v5185 = vadd.f32 %v4615, %v5184
      %v5186 = vpop.f32.mrb[0].mxu0
      %5187 = vmatprep.mubr.f32.mxu0 0.0
      %5188 = vmatmul.mubr.f32.gmra.mrb[0].mxu0 %v4790
      %v5189 = vpop.f32.mrb[0].mxu0
      %v5190 = vadd.f32 %v4615, %v5189
      %v5191 = vpop.f32.mrb[0].mxu0
      %5192 = vmatprep.mubr.f32.mxu0 0.0
      %5193 = vmatmul.mubr.f32.gmra.mrb[0].mxu0 %v4793
      %v5194 = vpop.f32.mrb[0].mxu0
      %v5195 = vadd.f32 %v4615, %v5194
      %v5196 = vpop.f32.mrb[0].mxu0
      %5197 = vmatprep.mubr.f32.mxu0 0.0
      %5198 = vmatmul.mubr.f32.gmra.mrb[0].mxu0 %v4796
      %v5199 = vpop.f32.mrb[0].mxu0
      %v5200 = vadd.f32 %v4615, %v5199
      %v5201 = vpop.f32.mrb[0].mxu0
      %5202 = vmatprep.mubr.f32.mxu0 0.0
      %5203 = vmatmul.mubr.f32.gmra.mrb[0].mxu0 %v4799
      %v5204 = vpop.f32.mrb[0].mxu0
      %v5205 = vadd.f32 %v4615, %v5204
      %v5206 = vpop.f32.mrb[0].mxu0
      %5207 = vmatprep.mubr.f32.mxu0 0.0
      %5208 = vmatmul.mubr.f32.gmra.mrb[0].mxu0 %v4802
      %v5209 = vpop.f32.mrb[0].mxu0
      %v5210 = vadd.f32 %v4615, %v5209
      %v5211 = vpop.f32.mrb[0].mxu0
      %5212 = vmatprep.mubr.f32.mxu0 0.0
      %5213 = vmatmul.mubr.f32.gmra.mrb[0].mxu0 %v4805
      %v5214 = vpop.f32.mrb[0].mxu0
      %v5215 = vadd.f32 %v4615, %v5214
      %v5216 = vpop.f32.mrb[0].mxu0
      %5217 = vmatprep.mubr.f32.mxu0 0.0
      %5218 = vmatmul.mubr.f32.gmra.mrb[0].mxu0 %v4808
      %v5219 = vpop.f32.mrb[0].mxu0
      %v5220 = vadd.f32 %v4615, %v5219
      %v5221 = vpop.f32.mrb[0].mxu0
      %5222 = vmatprep.mubr.f32.mxu0 0.0
      %5223 = vmatmul.mubr.f32.gmra.mrb[0].mxu0 %v4811
      %v5224 = vpop.f32.mrb[0].mxu0
      %v5225 = vadd.f32 %v4615, %v5224
      %v5226 = vpop.f32.mrb[0].mxu0
      %5227 = vmatprep.mubr.f32.mxu0 0.0
      %5228 = vmatmul.mubr.f32.gmra.mrb[0].mxu0 %v4814
      %v5229 = vpop.f32.mrb[0].mxu0
      %v5230 = vadd.f32 %v4615, %v5229
      %v5231 = vpop.f32.mrb[0].mxu0
      %5232 = vmatprep.mubr.f32.mxu0 0.0
      %5233 = vmatmul.mubr.f32.gmra.mrb[0].mxu0 %v4817
      %v5234 = vpop.f32.mrb[0].mxu0
      %v5235 = vadd.f32 %v4615, %v5234
      %v5236 = vpop.f32.mrb[0].mxu0
      %5237 = vmatprep.mubr.f32.mxu0 0.0
      %5238 = vmatmul.mubr.f32.gmra.mrb[0].mxu0 %v4820
      %v5239 = vpop.f32.mrb[0].mxu0
      %v5240 = vadd.f32 %v4615, %v5239
      %v5241 = vpop.f32.mrb[0].mxu0
      %5242 = vmatprep.mubr.f32.mxu0 0.0
      %5243 = vmatmul.mubr.f32.gmra.mrb[0].mxu0 %v4823
      %v5244 = vpop.f32.mrb[0].mxu0
      %v5245 = vadd.f32 %v4615, %v5244
      %v5246 = vpop.f32.mrb[0].mxu0
      %5247 = vmatprep.mubr.f32.mxu0 0.0
      %5248 = vmatmul.mubr.f32.gmra.mrb[0].mxu0 %v4826
      %v5249 = vpop.f32.mrb[0].mxu0
      %v5250 = vadd.f32 %v4615, %v5249
      %v5251 = vpop.f32.mrb[0].mxu0
      %5252 = vmatprep.mubr.f32.mxu0 0.0
      %5253 = vmatmul.mubr.f32.gmra.mrb[0].mxu0 %v4829
      %v5254 = vpop.f32.mrb[0].mxu0
      %v5255 = vadd.f32 %v4615, %v5254
      %v5256 = vpop.f32.mrb[0].mxu0
      %5257 = vmatprep.mubr.f32.mxu0 0.0
      %5258 = vmatmul.mubr.f32.gmra.mrb[0].mxu0 %v4832
      %v5259 = vpop.f32.mrb[0].mxu0
      %v5260 = vadd.f32 %v4615, %v5259
      %v5261 = vpop.f32.mrb[0].mxu0
      %5262 = vdwg.mxu0
      %vm5263 = vcmask 130048
      %5264 = vst.msk [vmem:[%s340] sm:$0xff] %vm5263, %v4905
      %5265 = vst.msk [vmem:[%s340 + $0x8] sm:$0xff] %vm5263, %v4910
      %5266 = vst.msk [vmem:[%s340 + $0x10] sm:$0xff] %vm5263, %v4915
      %5267 = vst.msk [vmem:[%s340 + $0x18] sm:$0xff] %vm5263, %v4920
      %5268 = vst.msk [vmem:[%s340 + $0x20] sm:$0xff] %vm5263, %v4925
      %5269 = vst.msk [vmem:[%s340 + $0x28] sm:$0xff] %vm5263, %v4930
      %5270 = vst.msk [vmem:[%s340 + $0x30] sm:$0xff] %vm5263, %v4935
      %5271 = vst.msk [vmem:[%s340 + $0x38] sm:$0xff] %vm5263, %v4940
      %5272 = vst.msk [vmem:[%s340 + $0x40] sm:$0xff] %vm5263, %v4945
      %5273 = vst.msk [vmem:[%s340 + $0x48] sm:$0xff] %vm5263, %v4950
      %5274 = vst.msk [vmem:[%s340 + $0x50] sm:$0xff] %vm5263, %v4955
      %5275 = vst.msk [vmem:[%s340 + $0x58] sm:$0xff] %vm5263, %v4960
      %5276 = vst.msk [vmem:[%s340 + $0x60] sm:$0xff] %vm5263, %v4965
      %5277 = vst.msk [vmem:[%s340 + $0x68] sm:$0xff] %vm5263, %v4970
      %5278 = vst.msk [vmem:[%s340 + $0x70] sm:$0xff] %vm5263, %v4975
      %5279 = vst.msk [vmem:[%s340 + $0x78] sm:$0xff] %vm5263, %v4980
      %5280 = vst.msk [vmem:[%s340 + $0x80] sm:$0xff] %vm5263, %v4985
      %5281 = vst.msk [vmem:[%s340 + $0x88] sm:$0xff] %vm5263, %v4990
      %5282 = vst.msk [vmem:[%s340 + $0x90] sm:$0xff] %vm5263, %v4995
      %5283 = vst.msk [vmem:[%s340 + $0x98] sm:$0xff] %vm5263, %v5000
      %5284 = vst.msk [vmem:[%s340 + $0xa0] sm:$0xff] %vm5263, %v5005
      %5285 = vst.msk [vmem:[%s340 + $0xa8] sm:$0xff] %vm5263, %v5010
      %5286 = vst.msk [vmem:[%s340 + $0xb0] sm:$0xff] %vm5263, %v5015
      %5287 = vst.msk [vmem:[%s340 + $0xb8] sm:$0xff] %vm5263, %v5020
      %5288 = vst.msk [vmem:[%s340 + $0xc0] sm:$0xff] %vm5263, %v5025
      %5289 = vst.msk [vmem:[%s340 + $0xc8] sm:$0xff] %vm5263, %v5030
      %5290 = vst.msk [vmem:[%s340 + $0xd0] sm:$0xff] %vm5263, %v5035
      %5291 = vst.msk [vmem:[%s340 + $0xd8] sm:$0xff] %vm5263, %v5040
      %5292 = vst.msk [vmem:[%s340 + $0xe0] sm:$0xff] %vm5263, %v5045
      %5293 = vst.msk [vmem:[%s340 + $0xe8] sm:$0xff] %vm5263, %v5050
      %5294 = vst.msk [vmem:[%s340 + $0xf0] sm:$0xff] %vm5263, %v5055
      %5295 = vst.msk [vmem:[%s340 + $0xf8] sm:$0xff] %vm5263, %v5060
      %5296 = vst.msk [vmem:[%s340 + $0x100] sm:$0xff] %vm5263, %v5065
      %5297 = vst.msk [vmem:[%s340 + $0x108] sm:$0xff] %vm5263, %v5070
      %5298 = vst.msk [vmem:[%s340 + $0x110] sm:$0xff] %vm5263, %v5075
      %5299 = vst.msk [vmem:[%s340 + $0x118] sm:$0xff] %vm5263, %v5080
      %5300 = vst.msk [vmem:[%s340 + $0x120] sm:$0xff] %vm5263, %v5085
      %5301 = vst.msk [vmem:[%s340 + $0x128] sm:$0xff] %vm5263, %v5090
      %5302 = vst.msk [vmem:[%s340 + $0x130] sm:$0xff] %vm5263, %v5095
      %5303 = vst.msk [vmem:[%s340 + $0x138] sm:$0xff] %vm5263, %v5100
      %5304 = vst.msk [vmem:[%s340 + $0x140] sm:$0xff] %vm5263, %v5105
      %5305 = vst.msk [vmem:[%s340 + $0x148] sm:$0xff] %vm5263, %v5110
      %5306 = vst.msk [vmem:[%s340 + $0x150] sm:$0xff] %vm5263, %v5115
      %5307 = vst.msk [vmem:[%s340 + $0x158] sm:$0xff] %vm5263, %v5120
      %5308 = vst.msk [vmem:[%s340 + $0x160] sm:$0xff] %vm5263, %v5125
      %5309 = vst.msk [vmem:[%s340 + $0x168] sm:$0xff] %vm5263, %v5130
      %5310 = vst.msk [vmem:[%s340 + $0x170] sm:$0xff] %vm5263, %v5135
      %5311 = vst.msk [vmem:[%s340 + $0x178] sm:$0xff] %vm5263, %v5140
      %5312 = vst.msk [vmem:[%s340 + $0x180] sm:$0xff] %vm5263, %v5145
      %5313 = vst.msk [vmem:[%s340 + $0x188] sm:$0xff] %vm5263, %v5150
      %5314 = vst.msk [vmem:[%s340 + $0x190] sm:$0xff] %vm5263, %v5155
      %5315 = vst.msk [vmem:[%s340 + $0x198] sm:$0xff] %vm5263, %v5160
      %5316 = vst.msk [vmem:[%s340 + $0x1a0] sm:$0xff] %vm5263, %v5165
      %5317 = vst.msk [vmem:[%s340 + $0x1a8] sm:$0xff] %vm5263, %v5170
      %5318 = vst.msk [vmem:[%s340 + $0x1b0] sm:$0xff] %vm5263, %v5175
      %5319 = vst.msk [vmem:[%s340 + $0x1b8] sm:$0xff] %vm5263, %v5180
      %5320 = vst.msk [vmem:[%s340 + $0x1c0] sm:$0xff] %vm5263, %v5185
      %5321 = vst.msk [vmem:[%s340 + $0x1c8] sm:$0xff] %vm5263, %v5190
      %5322 = vst.msk [vmem:[%s340 + $0x1d0] sm:$0xff] %vm5263, %v5195
      %5323 = vst.msk [vmem:[%s340 + $0x1d8] sm:$0xff] %vm5263, %v5200
      %5324 = vst.msk [vmem:[%s340 + $0x1e0] sm:$0xff] %vm5263, %v5205
      %5325 = vst.msk [vmem:[%s340 + $0x1e8] sm:$0xff] %vm5263, %v5210
      %5326 = vst.msk [vmem:[%s340 + $0x1f0] sm:$0xff] %vm5263, %v5215
      %5327 = vst.msk [vmem:[%s340 + $0x1f8] sm:$0xff] %vm5263, %v5220
      %5328 = vst.msk [vmem:[%s340 + $0x200] sm:$0xff] %vm5263, %v5225
      %5329 = vst.msk [vmem:[%s340 + $0x208] sm:$0xff] %vm5263, %v5230
      %5330 = vst.msk [vmem:[%s340 + $0x210] sm:$0xff] %vm5263, %v5235
      %5331 = vst.msk [vmem:[%s340 + $0x218] sm:$0xff] %vm5263, %v5240
      %5332 = vst.msk [vmem:[%s340 + $0x220] sm:$0xff] %vm5263, %v5245
      %5333 = vst.msk [vmem:[%s340 + $0x228] sm:$0xff] %vm5263, %v5250
      %5334 = vst.msk [vmem:[%s340 + $0x230] sm:$0xff] %vm5263, %v5255
      %5335 = vst.msk [vmem:[%s340 + $0x238] sm:$0xff] %vm5263, %v5260
      %5336 = vst.msk [vmem:[#allocation2] sm:$0xff] %vm5263, 0.0
      %5337 = vst.msk [vmem:[#allocation2 + $0x8] sm:$0xff] %vm5263, 0.0
      %5338 = vst.msk [vmem:[#allocation2 + $0x10] sm:$0xff] %vm5263, 0.0
      %vm5339 = vcmask 123904
      %5340 = vst.msk [vmem:[#allocation2 + $0x18] sm:$0x3] %vm5339, 0.0
      %5341 = vst.msk [vmem:[#allocation2 + $0x20] sm:$0xff] %vm5263, 0.0
      %5342 = vst.msk [vmem:[#allocation2 + $0x28] sm:$0xff] %vm5263, 0.0
      %5343 = vst.msk [vmem:[#allocation2 + $0x30] sm:$0xff] %vm5263, 0.0
      %5344 = vst.msk [vmem:[#allocation2 + $0x38] sm:$0x3] %vm5339, 0.0
      %5345 = vst.msk [vmem:[#allocation2 + $0x40] sm:$0xff] %vm5263, 0.0
      %5346 = vst.msk [vmem:[#allocation2 + $0x48] sm:$0xff] %vm5263, 0.0
      %5347 = vst.msk [vmem:[#allocation2 + $0x50] sm:$0xff] %vm5263, 0.0
      %5348 = vst.msk [vmem:[#allocation2 + $0x58] sm:$0x3] %vm5339, 0.0
      %5349 = vst.msk [vmem:[#allocation2 + $0x60] sm:$0xff] %vm5263, 0.0
      %5350 = vst.msk [vmem:[#allocation2 + $0x68] sm:$0xff] %vm5263, 0.0
      %5351 = vst.msk [vmem:[#allocation2 + $0x70] sm:$0xff] %vm5263, 0.0
      %5352 = vst.msk [vmem:[#allocation2 + $0x78] sm:$0x3] %vm5339, 0.0
      %5353 = vst.msk [vmem:[#allocation2 + $0x80] sm:$0xff] %vm5263, 0.0
      %5354 = vst.msk [vmem:[#allocation2 + $0x88] sm:$0xff] %vm5263, 0.0
      %5355 = vst.msk [vmem:[#allocation2 + $0x90] sm:$0xff] %vm5263, 0.0
      %5356 = vst.msk [vmem:[#allocation2 + $0x98] sm:$0x3] %vm5339, 0.0
      %5357 = vst.msk [vmem:[#allocation2 + $0xa0] sm:$0xff] %vm5263, 0.0
      %5358 = vst.msk [vmem:[#allocation2 + $0xa8] sm:$0xff] %vm5263, 0.0
      %5359 = vst.msk [vmem:[#allocation2 + $0xb0] sm:$0xff] %vm5263, 0.0
      %5360 = vst.msk [vmem:[#allocation2 + $0xb8] sm:$0x3] %vm5339, 0.0
      %5361 = vst.msk [vmem:[#allocation2 + $0xc0] sm:$0xff] %vm5263, 0.0
      %5362 = vst.msk [vmem:[#allocation2 + $0xc8] sm:$0xff] %vm5263, 0.0
      %5363 = vst.msk [vmem:[#allocation2 + $0xd0] sm:$0xff] %vm5263, 0.0
      %5364 = vst.msk [vmem:[#allocation2 + $0xd8] sm:$0x3] %vm5339, 0.0
      %5365 = vst.msk [vmem:[#allocation2 + $0xe0] sm:$0xff] %vm5263, 0.0
      %5366 = vst.msk [vmem:[#allocation2 + $0xe8] sm:$0xff] %vm5263, 0.0
      %5367 = vst.msk [vmem:[#allocation2 + $0xf0] sm:$0xff] %vm5263, 0.0
      %5368 = vst.msk [vmem:[#allocation2 + $0xf8] sm:$0x3] %vm5339, 0.0
      %5369 = vst.msk [vmem:[#allocation2 + $0x100] sm:$0xff] %vm5263, 0.0
      %5370 = vst.msk [vmem:[#allocation2 + $0x108] sm:$0xff] %vm5263, 0.0
      %5371 = vst.msk [vmem:[#allocation2 + $0x110] sm:$0xff] %vm5263, 0.0
      %5372 = vst.msk [vmem:[#allocation2 + $0x118] sm:$0x3] %vm5339, 0.0
      %5373 = vst.msk [vmem:[#allocation2 + $0x120] sm:$0xff] %vm5263, 0.0
      %5374 = vst.msk [vmem:[#allocation2 + $0x128] sm:$0xff] %vm5263, 0.0
      %5375 = vst.msk [vmem:[#allocation2 + $0x130] sm:$0xff] %vm5263, 0.0
      %5376 = vst.msk [vmem:[#allocation2 + $0x138] sm:$0x3] %vm5339, 0.0
      %5377 = vst.msk [vmem:[#allocation2 + $0x140] sm:$0xff] %vm5263, 0.0
      %5378 = vst.msk [vmem:[#allocation2 + $0x148] sm:$0xff] %vm5263, 0.0
      %5379 = vst.msk [vmem:[#allocation2 + $0x150] sm:$0xff] %vm5263, 0.0
      %5380 = vst.msk [vmem:[#allocation2 + $0x158] sm:$0x3] %vm5339, 0.0
      %5381 = vst.msk [vmem:[#allocation2 + $0x160] sm:$0xff] %vm5263, 0.0
      %5382 = vst.msk [vmem:[#allocation2 + $0x168] sm:$0xff] %vm5263, 0.0
      %5383 = vst.msk [vmem:[#allocation2 + $0x170] sm:$0xff] %vm5263, 0.0
      %5384 = vst.msk [vmem:[#allocation2 + $0x178] sm:$0x3] %vm5339, 0.0
      %5385 = vst.msk [vmem:[#allocation2 + $0x180] sm:$0xff] %vm5263, 0.0
      %5386 = vst.msk [vmem:[#allocation2 + $0x188] sm:$0xff] %vm5263, 0.0
      %5387 = vst.msk [vmem:[#allocation2 + $0x190] sm:$0xff] %vm5263, 0.0
      %5388 = vst.msk [vmem:[#allocation2 + $0x198] sm:$0x3] %vm5339, 0.0
      %5389 = vst.msk [vmem:[#allocation2 + $0x1a0] sm:$0xff] %vm5263, 0.0
      %5390 = vst.msk [vmem:[#allocation2 + $0x1a8] sm:$0xff] %vm5263, 0.0
      %5391 = vst.msk [vmem:[#allocation2 + $0x1b0] sm:$0xff] %vm5263, 0.0
      %5392 = vst.msk [vmem:[#allocation2 + $0x1b8] sm:$0x3] %vm5339, 0.0
      %5393 = vst.msk [vmem:[#allocation2 + $0x1c0] sm:$0xff] %vm5263, 0.0
      %5394 = vst.msk [vmem:[#allocation2 + $0x1c8] sm:$0xff] %vm5263, 0.0
      %5395 = vst.msk [vmem:[#allocation2 + $0x1d0] sm:$0xff] %vm5263, 0.0
      %5396 = vst.msk [vmem:[#allocation2 + $0x1d8] sm:$0x3] %vm5339, 0.0
      %5397 = vst.msk [vmem:[#allocation2 + $0x1e0] sm:$0xff] %vm5263, 0.0
      %5398 = vst.msk [vmem:[#allocation2 + $0x1e8] sm:$0xff] %vm5263, 0.0
      %5399 = vst.msk [vmem:[#allocation2 + $0x1f0] sm:$0xff] %vm5263, 0.0
      %5400 = vst.msk [vmem:[#allocation2 + $0x1f8] sm:$0x3] %vm5339, 0.0
      %5401 = vst.msk [vmem:[#allocation2 + $0x200] sm:$0xff] %vm5263, 0.0
      %5402 = vst.msk [vmem:[#allocation2 + $0x208] sm:$0xff] %vm5263, 0.0
      %5403 = vst.msk [vmem:[#allocation2 + $0x210] sm:$0xff] %vm5263, 0.0
      %5404 = vst.msk [vmem:[#allocation2 + $0x218] sm:$0x3] %vm5339, 0.0
      %5405 = vst.msk [vmem:[#allocation2 + $0x220] sm:$0xff] %vm5263, 0.0
      %5406 = vst.msk [vmem:[#allocation2 + $0x228] sm:$0xff] %vm5263, 0.0
      %5407 = vst.msk [vmem:[#allocation2 + $0x230] sm:$0xff] %vm5263, 0.0
      %5408 = vst.msk [vmem:[#allocation2 + $0x238] sm:$0x3] %vm5339, 0.0
      %5409 = vst.msk [vmem:[#allocation2 + $0x240] sm:$0xff] %vm5263, 0.0
      %5410 = vst.msk [vmem:[#allocation2 + $0x248] sm:$0xff] %vm5263, 0.0
      %5411 = vst.msk [vmem:[#allocation2 + $0x250] sm:$0xff] %vm5263, 0.0
      %5412 = vst.msk [vmem:[#allocation2 + $0x258] sm:$0x3] %vm5339, 0.0
      %5413 = vst.msk [vmem:[#allocation2 + $0x260] sm:$0xff] %vm5263, 0.0
      %5414 = vst.msk [vmem:[#allocation2 + $0x268] sm:$0xff] %vm5263, 0.0
      %5415 = vst.msk [vmem:[#allocation2 + $0x270] sm:$0xff] %vm5263, 0.0
      %5416 = vst.msk [vmem:[#allocation2 + $0x278] sm:$0x3] %vm5339, 0.0
      %5417 = vst.msk [vmem:[#allocation2 + $0x280] sm:$0xff] %vm5263, 0.0
      %5418 = vst.msk [vmem:[#allocation2 + $0x288] sm:$0xff] %vm5263, 0.0
      %5419 = vst.msk [vmem:[#allocation2 + $0x290] sm:$0xff] %vm5263, 0.0
      %5420 = vst.msk [vmem:[#allocation2 + $0x298] sm:$0x3] %vm5339, 0.0
      %5421 = vst.msk [vmem:[#allocation2 + $0x2a0] sm:$0xff] %vm5263, 0.0
      %5422 = vst.msk [vmem:[#allocation2 + $0x2a8] sm:$0xff] %vm5263, 0.0
      %5423 = vst.msk [vmem:[#allocation2 + $0x2b0] sm:$0xff] %vm5263, 0.0
      %5424 = vst.msk [vmem:[#allocation2 + $0x2b8] sm:$0x3] %vm5339, 0.0
      %5425 = vst.msk [vmem:[#allocation2 + $0x2c0] sm:$0xff] %vm5263, 0.0
      %5426 = vst.msk [vmem:[#allocation2 + $0x2c8] sm:$0xff] %vm5263, 0.0
      %5427 = vst.msk [vmem:[#allocation2 + $0x2d0] sm:$0xff] %vm5263, 0.0
      %5428 = vst.msk [vmem:[#allocation2 + $0x2d8] sm:$0x3] %vm5339, 0.0
      %5429 = vst.msk [vmem:[#allocation2 + $0x2e0] sm:$0xff] %vm5263, 0.0
      %5430 = vst.msk [vmem:[#allocation2 + $0x2e8] sm:$0xff] %vm5263, 0.0
      %5431 = vst.msk [vmem:[#allocation2 + $0x2f0] sm:$0xff] %vm5263, 0.0
      %5432 = vst.msk [vmem:[#allocation2 + $0x2f8] sm:$0x3] %vm5339, 0.0
      %5433 = vst.msk [vmem:[#allocation2 + $0x300] sm:$0xff] %vm5263, 0.0
      %5434 = vst.msk [vmem:[#allocation2 + $0x308] sm:$0xff] %vm5263, 0.0
      %5435 = vst.msk [vmem:[#allocation2 + $0x310] sm:$0xff] %vm5263, 0.0
      %5436 = vst.msk [vmem:[#allocation2 + $0x318] sm:$0x3] %vm5339, 0.0
      %5437 = vst.msk [vmem:[#allocation2 + $0x320] sm:$0xff] %vm5263, 0.0
      %5438 = vst.msk [vmem:[#allocation2 + $0x328] sm:$0xff] %vm5263, 0.0
      %5439 = vst.msk [vmem:[#allocation2 + $0x330] sm:$0xff] %vm5263, 0.0
      %5440 = vst.msk [vmem:[#allocation2 + $0x338] sm:$0x3] %vm5339, 0.0
      %s5441 = scalar_lea.vmem [#allocation2], 32
      %5442 = vst.msk [vmem:[%s5441 + $0x1] sm:$0xff] %vm5263, %v4905
      %5443 = vst.msk [vmem:[%s5441 + $0x9] sm:$0xff] %vm5263, %v4910
      %5444 = vst.msk [vmem:[%s5441 + $0x11] sm:$0xff] %vm5263, %v4915
      %5445 = vst.msk [vmem:[%s5441 + $0x21] sm:$0xff] %vm5263, %v4920
      %5446 = vst.msk [vmem:[%s5441 + $0x29] sm:$0xff] %vm5263, %v4925
      %5447 = vst.msk [vmem:[%s5441 + $0x31] sm:$0xff] %vm5263, %v4930
      %5448 = vst.msk [vmem:[%s5441 + $0x41] sm:$0xff] %vm5263, %v4935
      %5449 = vst.msk [vmem:[%s5441 + $0x49] sm:$0xff] %vm5263, %v4940
      %5450 = vst.msk [vmem:[%s5441 + $0x51] sm:$0xff] %vm5263, %v4945
      %5451 = vst.msk [vmem:[%s5441 + $0x61] sm:$0xff] %vm5263, %v4950
      %5452 = vst.msk [vmem:[%s5441 + $0x69] sm:$0xff] %vm5263, %v4955
      %5453 = vst.msk [vmem:[%s5441 + $0x71] sm:$0xff] %vm5263, %v4960
      %5454 = vst.msk [vmem:[%s5441 + $0x81] sm:$0xff] %vm5263, %v4965
      %5455 = vst.msk [vmem:[%s5441 + $0x89] sm:$0xff] %vm5263, %v4970
      %5456 = vst.msk [vmem:[%s5441 + $0x91] sm:$0xff] %vm5263, %v4975
      %5457 = vst.msk [vmem:[%s5441 + $0xa1] sm:$0xff] %vm5263, %v4980
      %5458 = vst.msk [vmem:[%s5441 + $0xa9] sm:$0xff] %vm5263, %v4985
      %5459 = vst.msk [vmem:[%s5441 + $0xb1] sm:$0xff] %vm5263, %v4990
      %5460 = vst.msk [vmem:[%s5441 + $0xc1] sm:$0xff] %vm5263, %v4995
      %5461 = vst.msk [vmem:[%s5441 + $0xc9] sm:$0xff] %vm5263, %v5000
      %5462 = vst.msk [vmem:[%s5441 + $0xd1] sm:$0xff] %vm5263, %v5005
      %5463 = vst.msk [vmem:[%s5441 + $0xe1] sm:$0xff] %vm5263, %v5010
      %5464 = vst.msk [vmem:[%s5441 + $0xe9] sm:$0xff] %vm5263, %v5015
      %5465 = vst.msk [vmem:[%s5441 + $0xf1] sm:$0xff] %vm5263, %v5020
      %5466 = vst.msk [vmem:[%s5441 + $0x101] sm:$0xff] %vm5263, %v5025
      %5467 = vst.msk [vmem:[%s5441 + $0x109] sm:$0xff] %vm5263, %v5030
      %5468 = vst.msk [vmem:[%s5441 + $0x111] sm:$0xff] %vm5263, %v5035
      %5469 = vst.msk [vmem:[%s5441 + $0x121] sm:$0xff] %vm5263, %v5040
      %5470 = vst.msk [vmem:[%s5441 + $0x129] sm:$0xff] %vm5263, %v5045
      %5471 = vst.msk [vmem:[%s5441 + $0x131] sm:$0xff] %vm5263, %v5050
      %5472 = vst.msk [vmem:[%s5441 + $0x141] sm:$0xff] %vm5263, %v5055
      %5473 = vst.msk [vmem:[%s5441 + $0x149] sm:$0xff] %vm5263, %v5060
      %5474 = vst.msk [vmem:[%s5441 + $0x151] sm:$0xff] %vm5263, %v5065
      %5475 = vst.msk [vmem:[%s5441 + $0x161] sm:$0xff] %vm5263, %v5070
      %5476 = vst.msk [vmem:[%s5441 + $0x169] sm:$0xff] %vm5263, %v5075
      %5477 = vst.msk [vmem:[%s5441 + $0x171] sm:$0xff] %vm5263, %v5080
      %5478 = vst.msk [vmem:[%s5441 + $0x181] sm:$0xff] %vm5263, %v5085
      %5479 = vst.msk [vmem:[%s5441 + $0x189] sm:$0xff] %vm5263, %v5090
      %5480 = vst.msk [vmem:[%s5441 + $0x191] sm:$0xff] %vm5263, %v5095
      %5481 = vst.msk [vmem:[%s5441 + $0x1a1] sm:$0xff] %vm5263, %v5100
      %5482 = vst.msk [vmem:[%s5441 + $0x1a9] sm:$0xff] %vm5263, %v5105
      %5483 = vst.msk [vmem:[%s5441 + $0x1b1] sm:$0xff] %vm5263, %v5110
      %5484 = vst.msk [vmem:[%s5441 + $0x1c1] sm:$0xff] %vm5263, %v5115
      %5485 = vst.msk [vmem:[%s5441 + $0x1c9] sm:$0xff] %vm5263, %v5120
      %5486 = vst.msk [vmem:[%s5441 + $0x1d1] sm:$0xff] %vm5263, %v5125
      %5487 = vst.msk [vmem:[%s5441 + $0x1e1] sm:$0xff] %vm5263, %v5130
      %5488 = vst.msk [vmem:[%s5441 + $0x1e9] sm:$0xff] %vm5263, %v5135
      %5489 = vst.msk [vmem:[%s5441 + $0x1f1] sm:$0xff] %vm5263, %v5140
      %5490 = vst.msk [vmem:[%s5441 + $0x201] sm:$0xff] %vm5263, %v5145
      %5491 = vst.msk [vmem:[%s5441 + $0x209] sm:$0xff] %vm5263, %v5150
      %5492 = vst.msk [vmem:[%s5441 + $0x211] sm:$0xff] %vm5263, %v5155
      %5493 = vst.msk [vmem:[%s5441 + $0x221] sm:$0xff] %vm5263, %v5160
      %5494 = vst.msk [vmem:[%s5441 + $0x229] sm:$0xff] %vm5263, %v5165
      %5495 = vst.msk [vmem:[%s5441 + $0x231] sm:$0xff] %vm5263, %v5170
      %5496 = vst.msk [vmem:[%s5441 + $0x241] sm:$0xff] %vm5263, %v5175
      %5497 = vst.msk [vmem:[%s5441 + $0x249] sm:$0xff] %vm5263, %v5180
      %5498 = vst.msk [vmem:[%s5441 + $0x251] sm:$0xff] %vm5263, %v5185
      %5499 = vst.msk [vmem:[%s5441 + $0x261] sm:$0xff] %vm5263, %v5190
      %5500 = vst.msk [vmem:[%s5441 + $0x269] sm:$0xff] %vm5263, %v5195
      %5501 = vst.msk [vmem:[%s5441 + $0x271] sm:$0xff] %vm5263, %v5200
      %5502 = vst.msk [vmem:[%s5441 + $0x281] sm:$0xff] %vm5263, %v5205
      %5503 = vst.msk [vmem:[%s5441 + $0x289] sm:$0xff] %vm5263, %v5210
      %5504 = vst.msk [vmem:[%s5441 + $0x291] sm:$0xff] %vm5263, %v5215
      %5505 = vst.msk [vmem:[%s5441 + $0x2a1] sm:$0xff] %vm5263, %v5220
      %5506 = vst.msk [vmem:[%s5441 + $0x2a9] sm:$0xff] %vm5263, %v5225
      %5507 = vst.msk [vmem:[%s5441 + $0x2b1] sm:$0xff] %vm5263, %v5230
      %5508 = vst.msk [vmem:[%s5441 + $0x2c1] sm:$0xff] %vm5263, %v5235
      %5509 = vst.msk [vmem:[%s5441 + $0x2c9] sm:$0xff] %vm5263, %v5240
      %5510 = vst.msk [vmem:[%s5441 + $0x2d1] sm:$0xff] %vm5263, %v5245
      %5511 = vst.msk [vmem:[%s5441 + $0x2e1] sm:$0xff] %vm5263, %v5250
      %5512 = vst.msk [vmem:[%s5441 + $0x2e9] sm:$0xff] %vm5263, %v5255
      %5513 = vst.msk [vmem:[%s5441 + $0x2f1] sm:$0xff] %vm5263, %v5260
      %v5514 = vld [vmem:[%s6] sm:$0x7]
      %v5515 = vld [vmem:[%s6 + $0x4] sm:$0x7]
      %v5516 = vld [vmem:[%s6 + $0x8] sm:$0x7]
      %v5517 = vld [vmem:[#allocation2] sm:$0xff]
      %v5518 = vld [vmem:[#allocation2 + $0x8] sm:$0xff]
      %v5519 = vld [vmem:[#allocation2 + $0x10] sm:$0xff]
      %v5520 = vld [vmem:[#allocation2 + $0x20] sm:$0xff]
      %v5521 = vld [vmem:[#allocation2 + $0x28] sm:$0xff]
      %v5522 = vld [vmem:[#allocation2 + $0x30] sm:$0xff]
      %v5523 = vld [vmem:[#allocation2 + $0x40] sm:$0xff]
      %v5524 = vld [vmem:[#allocation2 + $0x48] sm:$0xff]
      %v5525 = vld [vmem:[#allocation2 + $0x50] sm:$0xff]
      %v5526 = vld [vmem:[#allocation2 + $0x60] sm:$0xff]
      %v5527 = vld [vmem:[#allocation2 + $0x68] sm:$0xff]
      %v5528 = vld [vmem:[#allocation2 + $0x70] sm:$0xff]
      %v5529 = vld [vmem:[#allocation2 + $0x80] sm:$0xff]
      %v5530 = vld [vmem:[#allocation2 + $0x88] sm:$0xff]
      %v5531 = vld [vmem:[#allocation2 + $0x90] sm:$0xff]
      %v5532 = vld [vmem:[#allocation2 + $0xa0] sm:$0xff]
      %v5533 = vld [vmem:[#allocation2 + $0xa8] sm:$0xff]
      %v5534 = vld [vmem:[#allocation2 + $0xb0] sm:$0xff]
      %v5535 = vld [vmem:[#allocation2 + $0xc0] sm:$0xff]
      %v5536 = vld [vmem:[#allocation2 + $0xc8] sm:$0xff]
      %v5537 = vld [vmem:[#allocation2 + $0xd0] sm:$0xff]
      %v5538 = vld [vmem:[#allocation2 + $0xe0] sm:$0xff]
      %v5539 = vld [vmem:[#allocation2 + $0xe8] sm:$0xff]
      %v5540 = vld [vmem:[#allocation2 + $0xf0] sm:$0xff]
      %v5541 = vld [vmem:[#allocation2 + $0x100] sm:$0xff]
      %v5542 = vld [vmem:[#allocation2 + $0x108] sm:$0xff]
      %v5543 = vld [vmem:[#allocation2 + $0x110] sm:$0xff]
      %v5544 = vld [vmem:[#allocation2 + $0x120] sm:$0xff]
      %v5545 = vld [vmem:[#allocation2 + $0x128] sm:$0xff]
      %v5546 = vld [vmem:[#allocation2 + $0x130] sm:$0xff]
      %v5547 = vld [vmem:[#allocation2 + $0x140] sm:$0xff]
      %v5548 = vld [vmem:[#allocation2 + $0x148] sm:$0xff]
      %v5549 = vld [vmem:[#allocation2 + $0x150] sm:$0xff]
      %v5550 = vld [vmem:[#allocation2 + $0x160] sm:$0xff]
      %v5551 = vld [vmem:[#allocation2 + $0x168] sm:$0xff]
      %v5552 = vld [vmem:[#allocation2 + $0x170] sm:$0xff]
      %v5553 = vld [vmem:[#allocation2 + $0x180] sm:$0xff]
      %v5554 = vld [vmem:[#allocation2 + $0x188] sm:$0xff]
      %v5555 = vld [vmem:[#allocation2 + $0x190] sm:$0xff]
      %v5556 = vld [vmem:[#allocation2 + $0x1a0] sm:$0xff]
      %v5557 = vld [vmem:[#allocation2 + $0x1a8] sm:$0xff]
      %v5558 = vld [vmem:[#allocation2 + $0x1b0] sm:$0xff]
      %v5559 = vld [vmem:[#allocation2 + $0x1c0] sm:$0xff]
      %v5560 = vld [vmem:[#allocation2 + $0x1c8] sm:$0xff]
      %v5561 = vld [vmem:[#allocation2 + $0x1d0] sm:$0xff]
      %v5562 = vld [vmem:[#allocation2 + $0x1e0] sm:$0xff]
      %v5563 = vld [vmem:[#allocation2 + $0x1e8] sm:$0xff]
      %v5564 = vld [vmem:[#allocation2 + $0x1f0] sm:$0xff]
      %v5565 = vld [vmem:[#allocation2 + $0x200] sm:$0xff]
      %v5566 = vld [vmem:[#allocation2 + $0x208] sm:$0xff]
      %v5567 = vld [vmem:[#allocation2 + $0x210] sm:$0xff]
      %v5568 = vld [vmem:[#allocation2 + $0x220] sm:$0xff]
      %v5569 = vld [vmem:[#allocation2 + $0x228] sm:$0xff]
      %v5570 = vld [vmem:[#allocation2 + $0x230] sm:$0xff]
      %v5571 = vld [vmem:[#allocation2 + $0x240] sm:$0xff]
      %v5572 = vld [vmem:[#allocation2 + $0x248] sm:$0xff]
      %v5573 = vld [vmem:[#allocation2 + $0x250] sm:$0xff]
      %v5574 = vld [vmem:[#allocation2 + $0x260] sm:$0xff]
      %v5575 = vld [vmem:[#allocation2 + $0x268] sm:$0xff]
      %v5576 = vld [vmem:[#allocation2 + $0x270] sm:$0xff]
      %v5577 = vld [vmem:[#allocation2 + $0x280] sm:$0xff]
      %v5578 = vld [vmem:[#allocation2 + $0x288] sm:$0xff]
      %v5579 = vld [vmem:[#allocation2 + $0x290] sm:$0xff]
      %v5580 = vld [vmem:[#allocation2 + $0x2a0] sm:$0xff]
      %v5581 = vld [vmem:[#allocation2 + $0x2a8] sm:$0xff]
      %v5582 = vld [vmem:[#allocation2 + $0x2b0] sm:$0xff]
      %v5583 = vld [vmem:[#allocation2 + $0x2c0] sm:$0xff]
      %v5584 = vld [vmem:[#allocation2 + $0x2c8] sm:$0xff]
      %v5585 = vld [vmem:[#allocation2 + $0x2d0] sm:$0xff]
      %v5586 = vld [vmem:[#allocation2 + $0x2e0] sm:$0xff]
      %v5587 = vld [vmem:[#allocation2 + $0x2e8] sm:$0xff]
      %v5588 = vld [vmem:[#allocation2 + $0x2f0] sm:$0xff]
      %v5589 = vlaneseq
      %v5590 = vshrl.u32 %v5589, 7
      %v5591 = vsub.s32 0, %v5590
      %v5592 = vrot.slane %v5514, %v5591
      %v5593 = vmul.f32 %v5517, %v5592
      %v5594 = vmul.f32 %v5518, %v5592
      %v5595 = vmul.f32 %v5519, %v5592
      %v5596 = vmul.f32 %v5520, %v5592
      %v5597 = vmul.f32 %v5521, %v5592
      %v5598 = vmul.f32 %v5522, %v5592
      %v5599 = vmul.f32 %v5523, %v5592
      %v5600 = vmul.f32 %v5524, %v5592
      %v5601 = vmul.f32 %v5525, %v5592
      %v5602 = vmul.f32 %v5526, %v5592
      %v5603 = vmul.f32 %v5527, %v5592
      %v5604 = vmul.f32 %v5528, %v5592
      %v5605 = vmul.f32 %v5529, %v5592
      %v5606 = vmul.f32 %v5530, %v5592
      %v5607 = vmul.f32 %v5531, %v5592
      %v5608 = vmul.f32 %v5532, %v5592
      %v5609 = vmul.f32 %v5533, %v5592
      %v5610 = vmul.f32 %v5534, %v5592
      %v5611 = vmul.f32 %v5535, %v5592
      %v5612 = vmul.f32 %v5536, %v5592
      %v5613 = vmul.f32 %v5537, %v5592
      %v5614 = vmul.f32 %v5538, %v5592
      %v5615 = vmul.f32 %v5539, %v5592
      %v5616 = vmul.f32 %v5540, %v5592
      %v5617 = vmul.f32 %v5541, %v5592
      %v5618 = vmul.f32 %v5542, %v5592
      %v5619 = vmul.f32 %v5543, %v5592
      %v5620 = vmul.f32 %v5544, %v5592
      %v5621 = vmul.f32 %v5545, %v5592
      %v5622 = vmul.f32 %v5546, %v5592
      %v5623 = vmul.f32 %v5547, %v5592
      %v5624 = vmul.f32 %v5548, %v5592
      %v5625 = vmul.f32 %v5549, %v5592
      %v5626 = vmul.f32 %v5550, %v5592
      %v5627 = vmul.f32 %v5551, %v5592
      %v5628 = vmul.f32 %v5552, %v5592
      %v5629 = vmul.f32 %v5553, %v5592
      %v5630 = vmul.f32 %v5554, %v5592
      %v5631 = vmul.f32 %v5555, %v5592
      %v5632 = vmul.f32 %v5556, %v5592
      %v5633 = vmul.f32 %v5557, %v5592
      %v5634 = vmul.f32 %v5558, %v5592
      %v5635 = vmul.f32 %v5559, %v5592
      %v5636 = vmul.f32 %v5560, %v5592
      %v5637 = vmul.f32 %v5561, %v5592
      %v5638 = vmul.f32 %v5562, %v5592
      %v5639 = vmul.f32 %v5563, %v5592
      %v5640 = vmul.f32 %v5564, %v5592
      %v5641 = vmul.f32 %v5565, %v5592
      %v5642 = vmul.f32 %v5566, %v5592
      %v5643 = vmul.f32 %v5567, %v5592
      %v5644 = vmul.f32 %v5568, %v5592
      %v5645 = vmul.f32 %v5569, %v5592
      %v5646 = vmul.f32 %v5570, %v5592
      %v5647 = vmul.f32 %v5571, %v5592
      %v5648 = vmul.f32 %v5572, %v5592
      %v5649 = vmul.f32 %v5573, %v5592
      %v5650 = vmul.f32 %v5574, %v5592
      %v5651 = vmul.f32 %v5575, %v5592
      %v5652 = vmul.f32 %v5576, %v5592
      %v5653 = vmul.f32 %v5577, %v5592
      %v5654 = vmul.f32 %v5578, %v5592
      %v5655 = vmul.f32 %v5579, %v5592
      %v5656 = vmul.f32 %v5580, %v5592
      %v5657 = vmul.f32 %v5581, %v5592
      %v5658 = vmul.f32 %v5582, %v5592
      %v5659 = vmul.f32 %v5583, %v5592
      %v5660 = vmul.f32 %v5584, %v5592
      %v5661 = vmul.f32 %v5585, %v5592
      %v5662 = vmul.f32 %v5586, %v5592
      %v5663 = vmul.f32 %v5587, %v5592
      %v5664 = vmul.f32 %v5588, %v5592
      %v5665 = vadd.f32 %v5593, 0.0
      %v5666 = vadd.f32 %v5594, 0.0
      %v5667 = vadd.f32 %v5595, 0.0
      %v5668 = vadd.f32 %v5596, 0.0
      %v5669 = vadd.f32 %v5597, 0.0
      %v5670 = vadd.f32 %v5598, 0.0
      %v5671 = vadd.f32 %v5599, 0.0
      %v5672 = vadd.f32 %v5600, 0.0
      %v5673 = vadd.f32 %v5601, 0.0
      %v5674 = vadd.f32 %v5602, 0.0
      %v5675 = vadd.f32 %v5603, 0.0
      %v5676 = vadd.f32 %v5604, 0.0
      %v5677 = vadd.f32 %v5605, 0.0
      %v5678 = vadd.f32 %v5606, 0.0
      %v5679 = vadd.f32 %v5607, 0.0
      %v5680 = vadd.f32 %v5608, 0.0
      %v5681 = vadd.f32 %v5609, 0.0
      %v5682 = vadd.f32 %v5610, 0.0
      %v5683 = vadd.f32 %v5611, 0.0
      %v5684 = vadd.f32 %v5612, 0.0
      %v5685 = vadd.f32 %v5613, 0.0
      %v5686 = vadd.f32 %v5614, 0.0
      %v5687 = vadd.f32 %v5615, 0.0
      %v5688 = vadd.f32 %v5616, 0.0
      %v5689 = vadd.f32 %v5617, 0.0
      %v5690 = vadd.f32 %v5618, 0.0
      %v5691 = vadd.f32 %v5619, 0.0
      %v5692 = vadd.f32 %v5620, 0.0
      %v5693 = vadd.f32 %v5621, 0.0
      %v5694 = vadd.f32 %v5622, 0.0
      %v5695 = vadd.f32 %v5623, 0.0
      %v5696 = vadd.f32 %v5624, 0.0
      %v5697 = vadd.f32 %v5625, 0.0
      %v5698 = vadd.f32 %v5626, 0.0
      %v5699 = vadd.f32 %v5627, 0.0
      %v5700 = vadd.f32 %v5628, 0.0
      %v5701 = vadd.f32 %v5629, 0.0
      %v5702 = vadd.f32 %v5630, 0.0
      %v5703 = vadd.f32 %v5631, 0.0
      %v5704 = vadd.f32 %v5632, 0.0
      %v5705 = vadd.f32 %v5633, 0.0
      %v5706 = vadd.f32 %v5634, 0.0
      %v5707 = vadd.f32 %v5635, 0.0
      %v5708 = vadd.f32 %v5636, 0.0
      %v5709 = vadd.f32 %v5637, 0.0
      %v5710 = vadd.f32 %v5638, 0.0
      %v5711 = vadd.f32 %v5639, 0.0
      %v5712 = vadd.f32 %v5640, 0.0
      %v5713 = vadd.f32 %v5641, 0.0
      %v5714 = vadd.f32 %v5642, 0.0
      %v5715 = vadd.f32 %v5643, 0.0
      %v5716 = vadd.f32 %v5644, 0.0
      %v5717 = vadd.f32 %v5645, 0.0
      %v5718 = vadd.f32 %v5646, 0.0
      %v5719 = vadd.f32 %v5647, 0.0
      %v5720 = vadd.f32 %v5648, 0.0
      %v5721 = vadd.f32 %v5649, 0.0
      %v5722 = vadd.f32 %v5650, 0.0
      %v5723 = vadd.f32 %v5651, 0.0
      %v5724 = vadd.f32 %v5652, 0.0
      %v5725 = vadd.f32 %v5653, 0.0
      %v5726 = vadd.f32 %v5654, 0.0
      %v5727 = vadd.f32 %v5655, 0.0
      %v5728 = vadd.f32 %v5656, 0.0
      %v5729 = vadd.f32 %v5657, 0.0
      %v5730 = vadd.f32 %v5658, 0.0
      %v5731 = vadd.f32 %v5659, 0.0
      %v5732 = vadd.f32 %v5660, 0.0
      %v5733 = vadd.f32 %v5661, 0.0
      %v5734 = vadd.f32 %v5662, 0.0
      %v5735 = vadd.f32 %v5663, 0.0
      %v5736 = vadd.f32 %v5664, 0.0
      %v5737 = vld [vmem:[#allocation2 + $0x1] sm:$0xff]
      %v5738 = vld [vmem:[#allocation2 + $0x9] sm:$0xff]
      %v5739 = vld [vmem:[#allocation2 + $0x11] sm:$0xff]
      %v5740 = vld [vmem:[#allocation2 + $0x21] sm:$0xff]
      %v5741 = vld [vmem:[#allocation2 + $0x29] sm:$0xff]
      %v5742 = vld [vmem:[#allocation2 + $0x31] sm:$0xff]
      %v5743 = vld [vmem:[#allocation2 + $0x41] sm:$0xff]
      %v5744 = vld [vmem:[#allocation2 + $0x49] sm:$0xff]
      %v5745 = vld [vmem:[#allocation2 + $0x51] sm:$0xff]
      %v5746 = vld [vmem:[#allocation2 + $0x61] sm:$0xff]
      %v5747 = vld [vmem:[#allocation2 + $0x69] sm:$0xff]
      %v5748 = vld [vmem:[#allocation2 + $0x71] sm:$0xff]
      %v5749 = vld [vmem:[#allocation2 + $0x81] sm:$0xff]
      %v5750 = vld [vmem:[#allocation2 + $0x89] sm:$0xff]
      %v5751 = vld [vmem:[#allocation2 + $0x91] sm:$0xff]
      %v5752 = vld [vmem:[#allocation2 + $0xa1] sm:$0xff]
      %v5753 = vld [vmem:[#allocation2 + $0xa9] sm:$0xff]
      %v5754 = vld [vmem:[#allocation2 + $0xb1] sm:$0xff]
      %v5755 = vld [vmem:[#allocation2 + $0xc1] sm:$0xff]
      %v5756 = vld [vmem:[#allocation2 + $0xc9] sm:$0xff]
      %v5757 = vld [vmem:[#allocation2 + $0xd1] sm:$0xff]
      %v5758 = vld [vmem:[#allocation2 + $0xe1] sm:$0xff]
      %v5759 = vld [vmem:[#allocation2 + $0xe9] sm:$0xff]
      %v5760 = vld [vmem:[#allocation2 + $0xf1] sm:$0xff]
      %v5761 = vld [vmem:[#allocation2 + $0x101] sm:$0xff]
      %v5762 = vld [vmem:[#allocation2 + $0x109] sm:$0xff]
      %v5763 = vld [vmem:[#allocation2 + $0x111] sm:$0xff]
      %v5764 = vld [vmem:[#allocation2 + $0x121] sm:$0xff]
      %v5765 = vld [vmem:[#allocation2 + $0x129] sm:$0xff]
      %v5766 = vld [vmem:[#allocation2 + $0x131] sm:$0xff]
      %v5767 = vld [vmem:[#allocation2 + $0x141] sm:$0xff]
      %v5768 = vld [vmem:[#allocation2 + $0x149] sm:$0xff]
      %v5769 = vld [vmem:[#allocation2 + $0x151] sm:$0xff]
      %v5770 = vld [vmem:[#allocation2 + $0x161] sm:$0xff]
      %v5771 = vld [vmem:[#allocation2 + $0x169] sm:$0xff]
      %v5772 = vld [vmem:[#allocation2 + $0x171] sm:$0xff]
      %v5773 = vld [vmem:[#allocation2 + $0x181] sm:$0xff]
      %v5774 = vld [vmem:[#allocation2 + $0x189] sm:$0xff]
      %v5775 = vld [vmem:[#allocation2 + $0x191] sm:$0xff]
      %v5776 = vld [vmem:[#allocation2 + $0x1a1] sm:$0xff]
      %v5777 = vld [vmem:[#allocation2 + $0x1a9] sm:$0xff]
      %v5778 = vld [vmem:[#allocation2 + $0x1b1] sm:$0xff]
      %v5779 = vld [vmem:[#allocation2 + $0x1c1] sm:$0xff]
      %v5780 = vld [vmem:[#allocation2 + $0x1c9] sm:$0xff]
      %v5781 = vld [vmem:[#allocation2 + $0x1d1] sm:$0xff]
      %v5782 = vld [vmem:[#allocation2 + $0x1e1] sm:$0xff]
      %v5783 = vld [vmem:[#allocation2 + $0x1e9] sm:$0xff]
      %v5784 = vld [vmem:[#allocation2 + $0x1f1] sm:$0xff]
      %v5785 = vld [vmem:[#allocation2 + $0x201] sm:$0xff]
      %v5786 = vld [vmem:[#allocation2 + $0x209] sm:$0xff]
      %v5787 = vld [vmem:[#allocation2 + $0x211] sm:$0xff]
      %v5788 = vld [vmem:[#allocation2 + $0x221] sm:$0xff]
      %v5789 = vld [vmem:[#allocation2 + $0x229] sm:$0xff]
      %v5790 = vld [vmem:[#allocation2 + $0x231] sm:$0xff]
      %v5791 = vld [vmem:[#allocation2 + $0x241] sm:$0xff]
      %v5792 = vld [vmem:[#allocation2 + $0x249] sm:$0xff]
      %v5793 = vld [vmem:[#allocation2 + $0x251] sm:$0xff]
      %v5794 = vld [vmem:[#allocation2 + $0x261] sm:$0xff]
      %v5795 = vld [vmem:[#allocation2 + $0x269] sm:$0xff]
      %v5796 = vld [vmem:[#allocation2 + $0x271] sm:$0xff]
      %v5797 = vld [vmem:[#allocation2 + $0x281] sm:$0xff]
      %v5798 = vld [vmem:[#allocation2 + $0x289] sm:$0xff]
      %v5799 = vld [vmem:[#allocation2 + $0x291] sm:$0xff]
      %v5800 = vld [vmem:[#allocation2 + $0x2a1] sm:$0xff]
      %v5801 = vld [vmem:[#allocation2 + $0x2a9] sm:$0xff]
      %v5802 = vld [vmem:[#allocation2 + $0x2b1] sm:$0xff]
      %v5803 = vld [vmem:[#allocation2 + $0x2c1] sm:$0xff]
      %v5804 = vld [vmem:[#allocation2 + $0x2c9] sm:$0xff]
      %v5805 = vld [vmem:[#allocation2 + $0x2d1] sm:$0xff]
      %v5806 = vld [vmem:[#allocation2 + $0x2e1] sm:$0xff]
      %v5807 = vld [vmem:[#allocation2 + $0x2e9] sm:$0xff]
      %v5808 = vld [vmem:[#allocation2 + $0x2f1] sm:$0xff]
      %v5809 = vlaneseq
      %v5810 = vshrl.u32 %v5809, 7
      %v5811 = vsub.s32 1, %v5810
      %v5812 = vrot.slane %v5514, %v5811
      %v5813 = vmul.f32 %v5737, %v5812
      %v5814 = vmul.f32 %v5738, %v5812
      %v5815 = vmul.f32 %v5739, %v5812
      %v5816 = vmul.f32 %v5740, %v5812
      %v5817 = vmul.f32 %v5741, %v5812
      %v5818 = vmul.f32 %v5742, %v5812
      %v5819 = vmul.f32 %v5743, %v5812
      %v5820 = vmul.f32 %v5744, %v5812
      %v5821 = vmul.f32 %v5745, %v5812
      %v5822 = vmul.f32 %v5746, %v5812
      %v5823 = vmul.f32 %v5747, %v5812
      %v5824 = vmul.f32 %v5748, %v5812
      %v5825 = vmul.f32 %v5749, %v5812
      %v5826 = vmul.f32 %v5750, %v5812
      %v5827 = vmul.f32 %v5751, %v5812
      %v5828 = vmul.f32 %v5752, %v5812
      %v5829 = vmul.f32 %v5753, %v5812
      %v5830 = vmul.f32 %v5754, %v5812
      %v5831 = vmul.f32 %v5755, %v5812
      %v5832 = vmul.f32 %v5756, %v5812
      %v5833 = vmul.f32 %v5757, %v5812
      %v5834 = vmul.f32 %v5758, %v5812
      %v5835 = vmul.f32 %v5759, %v5812
      %v5836 = vmul.f32 %v5760, %v5812
      %v5837 = vmul.f32 %v5761, %v5812
      %v5838 = vmul.f32 %v5762, %v5812
      %v5839 = vmul.f32 %v5763, %v5812
      %v5840 = vmul.f32 %v5764, %v5812
      %v5841 = vmul.f32 %v5765, %v5812
      %v5842 = vmul.f32 %v5766, %v5812
      %v5843 = vmul.f32 %v5767, %v5812
      %v5844 = vmul.f32 %v5768, %v5812
      %v5845 = vmul.f32 %v5769, %v5812
      %v5846 = vmul.f32 %v5770, %v5812
      %v5847 = vmul.f32 %v5771, %v5812
      %v5848 = vmul.f32 %v5772, %v5812
      %v5849 = vmul.f32 %v5773, %v5812
      %v5850 = vmul.f32 %v5774, %v5812
      %v5851 = vmul.f32 %v5775, %v5812
      %v5852 = vmul.f32 %v5776, %v5812
      %v5853 = vmul.f32 %v5777, %v5812
      %v5854 = vmul.f32 %v5778, %v5812
      %v5855 = vmul.f32 %v5779, %v5812
      %v5856 = vmul.f32 %v5780, %v5812
      %v5857 = vmul.f32 %v5781, %v5812
      %v5858 = vmul.f32 %v5782, %v5812
      %v5859 = vmul.f32 %v5783, %v5812
      %v5860 = vmul.f32 %v5784, %v5812
      %v5861 = vmul.f32 %v5785, %v5812
      %v5862 = vmul.f32 %v5786, %v5812
      %v5863 = vmul.f32 %v5787, %v5812
      %v5864 = vmul.f32 %v5788, %v5812
      %v5865 = vmul.f32 %v5789, %v5812
      %v5866 = vmul.f32 %v5790, %v5812
      %v5867 = vmul.f32 %v5791, %v5812
      %v5868 = vmul.f32 %v5792, %v5812
      %v5869 = vmul.f32 %v5793, %v5812
      %v5870 = vmul.f32 %v5794, %v5812
      %v5871 = vmul.f32 %v5795, %v5812
      %v5872 = vmul.f32 %v5796, %v5812
      %v5873 = vmul.f32 %v5797, %v5812
      %v5874 = vmul.f32 %v5798, %v5812
      %v5875 = vmul.f32 %v5799, %v5812
      %v5876 = vmul.f32 %v5800, %v5812
      %v5877 = vmul.f32 %v5801, %v5812
      %v5878 = vmul.f32 %v5802, %v5812
      %v5879 = vmul.f32 %v5803, %v5812
      %v5880 = vmul.f32 %v5804, %v5812
      %v5881 = vmul.f32 %v5805, %v5812
      %v5882 = vmul.f32 %v5806, %v5812
      %v5883 = vmul.f32 %v5807, %v5812
      %v5884 = vmul.f32 %v5808, %v5812
      %v5885 = vadd.f32 %v5665, %v5813
      %v5886 = vadd.f32 %v5666, %v5814
      %v5887 = vadd.f32 %v5667, %v5815
      %v5888 = vadd.f32 %v5668, %v5816
      %v5889 = vadd.f32 %v5669, %v5817
      %v5890 = vadd.f32 %v5670, %v5818
      %v5891 = vadd.f32 %v5671, %v5819
      %v5892 = vadd.f32 %v5672, %v5820
      %v5893 = vadd.f32 %v5673, %v5821
      %v5894 = vadd.f32 %v5674, %v5822
      %v5895 = vadd.f32 %v5675, %v5823
      %v5896 = vadd.f32 %v5676, %v5824
      %v5897 = vadd.f32 %v5677, %v5825
      %v5898 = vadd.f32 %v5678, %v5826
      %v5899 = vadd.f32 %v5679, %v5827
      %v5900 = vadd.f32 %v5680, %v5828
      %v5901 = vadd.f32 %v5681, %v5829
      %v5902 = vadd.f32 %v5682, %v5830
      %v5903 = vadd.f32 %v5683, %v5831
      %v5904 = vadd.f32 %v5684, %v5832
      %v5905 = vadd.f32 %v5685, %v5833
      %v5906 = vadd.f32 %v5686, %v5834
      %v5907 = vadd.f32 %v5687, %v5835
      %v5908 = vadd.f32 %v5688, %v5836
      %v5909 = vadd.f32 %v5689, %v5837
      %v5910 = vadd.f32 %v5690, %v5838
      %v5911 = vadd.f32 %v5691, %v5839
      %v5912 = vadd.f32 %v5692, %v5840
      %v5913 = vadd.f32 %v5693, %v5841
      %v5914 = vadd.f32 %v5694, %v5842
      %v5915 = vadd.f32 %v5695, %v5843
      %v5916 = vadd.f32 %v5696, %v5844
      %v5917 = vadd.f32 %v5697, %v5845
      %v5918 = vadd.f32 %v5698, %v5846
      %v5919 = vadd.f32 %v5699, %v5847
      %v5920 = vadd.f32 %v5700, %v5848
      %v5921 = vadd.f32 %v5701, %v5849
      %v5922 = vadd.f32 %v5702, %v5850
      %v5923 = vadd.f32 %v5703, %v5851
      %v5924 = vadd.f32 %v5704, %v5852
      %v5925 = vadd.f32 %v5705, %v5853
      %v5926 = vadd.f32 %v5706, %v5854
      %v5927 = vadd.f32 %v5707, %v5855
      %v5928 = vadd.f32 %v5708, %v5856
      %v5929 = vadd.f32 %v5709, %v5857
      %v5930 = vadd.f32 %v5710, %v5858
      %v5931 = vadd.f32 %v5711, %v5859
      %v5932 = vadd.f32 %v5712, %v5860
      %v5933 = vadd.f32 %v5713, %v5861
      %v5934 = vadd.f32 %v5714, %v5862
      %v5935 = vadd.f32 %v5715, %v5863
      %v5936 = vadd.f32 %v5716, %v5864
      %v5937 = vadd.f32 %v5717, %v5865
      %v5938 = vadd.f32 %v5718, %v5866
      %v5939 = vadd.f32 %v5719, %v5867
      %v5940 = vadd.f32 %v5720, %v5868
      %v5941 = vadd.f32 %v5721, %v5869
      %v5942 = vadd.f32 %v5722, %v5870
      %v5943 = vadd.f32 %v5723, %v5871
      %v5944 = vadd.f32 %v5724, %v5872
      %v5945 = vadd.f32 %v5725, %v5873
      %v5946 = vadd.f32 %v5726, %v5874
      %v5947 = vadd.f32 %v5727, %v5875
      %v5948 = vadd.f32 %v5728, %v5876
      %v5949 = vadd.f32 %v5729, %v5877
      %v5950 = vadd.f32 %v5730, %v5878
      %v5951 = vadd.f32 %v5731, %v5879
      %v5952 = vadd.f32 %v5732, %v5880
      %v5953 = vadd.f32 %v5733, %v5881
      %v5954 = vadd.f32 %v5734, %v5882
      %v5955 = vadd.f32 %v5735, %v5883
      %v5956 = vadd.f32 %v5736, %v5884
      %v5957 = vld [vmem:[#allocation2 + $0x2] sm:$0xff]
      %v5958 = vld [vmem:[#allocation2 + $0xa] sm:$0xff]
      %v5959 = vld [vmem:[#allocation2 + $0x12] sm:$0xff]
      %v5960 = vld [vmem:[#allocation2 + $0x22] sm:$0xff]
      %v5961 = vld [vmem:[#allocation2 + $0x2a] sm:$0xff]
      %v5962 = vld [vmem:[#allocation2 + $0x32] sm:$0xff]
      %v5963 = vld [vmem:[#allocation2 + $0x42] sm:$0xff]
      %v5964 = vld [vmem:[#allocation2 + $0x4a] sm:$0xff]
      %v5965 = vld [vmem:[#allocation2 + $0x52] sm:$0xff]
      %v5966 = vld [vmem:[#allocation2 + $0x62] sm:$0xff]
      %v5967 = vld [vmem:[#allocation2 + $0x6a] sm:$0xff]
      %v5968 = vld [vmem:[#allocation2 + $0x72] sm:$0xff]
      %v5969 = vld [vmem:[#allocation2 + $0x82] sm:$0xff]
      %v5970 = vld [vmem:[#allocation2 + $0x8a] sm:$0xff]
      %v5971 = vld [vmem:[#allocation2 + $0x92] sm:$0xff]
      %v5972 = vld [vmem:[#allocation2 + $0xa2] sm:$0xff]
      %v5973 = vld [vmem:[#allocation2 + $0xaa] sm:$0xff]
      %v5974 = vld [vmem:[#allocation2 + $0xb2] sm:$0xff]
      %v5975 = vld [vmem:[#allocation2 + $0xc2] sm:$0xff]
      %v5976 = vld [vmem:[#allocation2 + $0xca] sm:$0xff]
      %v5977 = vld [vmem:[#allocation2 + $0xd2] sm:$0xff]
      %v5978 = vld [vmem:[#allocation2 + $0xe2] sm:$0xff]
      %v5979 = vld [vmem:[#allocation2 + $0xea] sm:$0xff]
      %v5980 = vld [vmem:[#allocation2 + $0xf2] sm:$0xff]
      %v5981 = vld [vmem:[#allocation2 + $0x102] sm:$0xff]
      %v5982 = vld [vmem:[#allocation2 + $0x10a] sm:$0xff]
      %v5983 = vld [vmem:[#allocation2 + $0x112] sm:$0xff]
      %v5984 = vld [vmem:[#allocation2 + $0x122] sm:$0xff]
      %v5985 = vld [vmem:[#allocation2 + $0x12a] sm:$0xff]
      %v5986 = vld [vmem:[#allocation2 + $0x132] sm:$0xff]
      %v5987 = vld [vmem:[#allocation2 + $0x142] sm:$0xff]
      %v5988 = vld [vmem:[#allocation2 + $0x14a] sm:$0xff]
      %v5989 = vld [vmem:[#allocation2 + $0x152] sm:$0xff]
      %v5990 = vld [vmem:[#allocation2 + $0x162] sm:$0xff]
      %v5991 = vld [vmem:[#allocation2 + $0x16a] sm:$0xff]
      %v5992 = vld [vmem:[#allocation2 + $0x172] sm:$0xff]
      %v5993 = vld [vmem:[#allocation2 + $0x182] sm:$0xff]
      %v5994 = vld [vmem:[#allocation2 + $0x18a] sm:$0xff]
      %v5995 = vld [vmem:[#allocation2 + $0x192] sm:$0xff]
      %v5996 = vld [vmem:[#allocation2 + $0x1a2] sm:$0xff]
      %v5997 = vld [vmem:[#allocation2 + $0x1aa] sm:$0xff]
      %v5998 = vld [vmem:[#allocation2 + $0x1b2] sm:$0xff]
      %v5999 = vld [vmem:[#allocation2 + $0x1c2] sm:$0xff]
      %v6000 = vld [vmem:[#allocation2 + $0x1ca] sm:$0xff]
      %v6001 = vld [vmem:[#allocation2 + $0x1d2] sm:$0xff]
      %v6002 = vld [vmem:[#allocation2 + $0x1e2] sm:$0xff]
      %v6003 = vld [vmem:[#allocation2 + $0x1ea] sm:$0xff]
      %v6004 = vld [vmem:[#allocation2 + $0x1f2] sm:$0xff]
      %v6005 = vld [vmem:[#allocation2 + $0x202] sm:$0xff]
      %v6006 = vld [vmem:[#allocation2 + $0x20a] sm:$0xff]
      %v6007 = vld [vmem:[#allocation2 + $0x212] sm:$0xff]
      %v6008 = vld [vmem:[#allocation2 + $0x222] sm:$0xff]
      %v6009 = vld [vmem:[#allocation2 + $0x22a] sm:$0xff]
      %v6010 = vld [vmem:[#allocation2 + $0x232] sm:$0xff]
      %v6011 = vld [vmem:[#allocation2 + $0x242] sm:$0xff]
      %v6012 = vld [vmem:[#allocation2 + $0x24a] sm:$0xff]
      %v6013 = vld [vmem:[#allocation2 + $0x252] sm:$0xff]
      %v6014 = vld [vmem:[#allocation2 + $0x262] sm:$0xff]
      %v6015 = vld [vmem:[#allocation2 + $0x26a] sm:$0xff]
      %v6016 = vld [vmem:[#allocation2 + $0x272] sm:$0xff]
      %v6017 = vld [vmem:[#allocation2 + $0x282] sm:$0xff]
      %v6018 = vld [vmem:[#allocation2 + $0x28a] sm:$0xff]
      %v6019 = vld [vmem:[#allocation2 + $0x292] sm:$0xff]
      %v6020 = vld [vmem:[#allocation2 + $0x2a2] sm:$0xff]
      %v6021 = vld [vmem:[#allocation2 + $0x2aa] sm:$0xff]
      %v6022 = vld [vmem:[#allocation2 + $0x2b2] sm:$0xff]
      %v6023 = vld [vmem:[#allocation2 + $0x2c2] sm:$0xff]
      %v6024 = vld [vmem:[#allocation2 + $0x2ca] sm:$0xff]
      %v6025 = vld [vmem:[#allocation2 + $0x2d2] sm:$0xff]
      %v6026 = vld [vmem:[#allocation2 + $0x2e2] sm:$0xff]
      %v6027 = vld [vmem:[#allocation2 + $0x2ea] sm:$0xff]
      %v6028 = vld [vmem:[#allocation2 + $0x2f2] sm:$0xff]
      %v6029 = vlaneseq
      %v6030 = vshrl.u32 %v6029, 7
      %v6031 = vsub.s32 2, %v6030
      %v6032 = vrot.slane %v5514, %v6031
      %v6033 = vmul.f32 %v5957, %v6032
      %v6034 = vmul.f32 %v5958, %v6032
      %v6035 = vmul.f32 %v5959, %v6032
      %v6036 = vmul.f32 %v5960, %v6032
      %v6037 = vmul.f32 %v5961, %v6032
      %v6038 = vmul.f32 %v5962, %v6032
      %v6039 = vmul.f32 %v5963, %v6032
      %v6040 = vmul.f32 %v5964, %v6032
      %v6041 = vmul.f32 %v5965, %v6032
      %v6042 = vmul.f32 %v5966, %v6032
      %v6043 = vmul.f32 %v5967, %v6032
      %v6044 = vmul.f32 %v5968, %v6032
      %v6045 = vmul.f32 %v5969, %v6032
      %v6046 = vmul.f32 %v5970, %v6032
      %v6047 = vmul.f32 %v5971, %v6032
      %v6048 = vmul.f32 %v5972, %v6032
      %v6049 = vmul.f32 %v5973, %v6032
      %v6050 = vmul.f32 %v5974, %v6032
      %v6051 = vmul.f32 %v5975, %v6032
      %v6052 = vmul.f32 %v5976, %v6032
      %v6053 = vmul.f32 %v5977, %v6032
      %v6054 = vmul.f32 %v5978, %v6032
      %v6055 = vmul.f32 %v5979, %v6032
      %v6056 = vmul.f32 %v5980, %v6032
      %v6057 = vmul.f32 %v5981, %v6032
      %v6058 = vmul.f32 %v5982, %v6032
      %v6059 = vmul.f32 %v5983, %v6032
      %v6060 = vmul.f32 %v5984, %v6032
      %v6061 = vmul.f32 %v5985, %v6032
      %v6062 = vmul.f32 %v5986, %v6032
      %v6063 = vmul.f32 %v5987, %v6032
      %v6064 = vmul.f32 %v5988, %v6032
      %v6065 = vmul.f32 %v5989, %v6032
      %v6066 = vmul.f32 %v5990, %v6032
      %v6067 = vmul.f32 %v5991, %v6032
      %v6068 = vmul.f32 %v5992, %v6032
      %v6069 = vmul.f32 %v5993, %v6032
      %v6070 = vmul.f32 %v5994, %v6032
      %v6071 = vmul.f32 %v5995, %v6032
      %v6072 = vmul.f32 %v5996, %v6032
      %v6073 = vmul.f32 %v5997, %v6032
      %v6074 = vmul.f32 %v5998, %v6032
      %v6075 = vmul.f32 %v5999, %v6032
      %v6076 = vmul.f32 %v6000, %v6032
      %v6077 = vmul.f32 %v6001, %v6032
      %v6078 = vmul.f32 %v6002, %v6032
      %v6079 = vmul.f32 %v6003, %v6032
      %v6080 = vmul.f32 %v6004, %v6032
      %v6081 = vmul.f32 %v6005, %v6032
      %v6082 = vmul.f32 %v6006, %v6032
      %v6083 = vmul.f32 %v6007, %v6032
      %v6084 = vmul.f32 %v6008, %v6032
      %v6085 = vmul.f32 %v6009, %v6032
      %v6086 = vmul.f32 %v6010, %v6032
      %v6087 = vmul.f32 %v6011, %v6032
      %v6088 = vmul.f32 %v6012, %v6032
      %v6089 = vmul.f32 %v6013, %v6032
      %v6090 = vmul.f32 %v6014, %v6032
      %v6091 = vmul.f32 %v6015, %v6032
      %v6092 = vmul.f32 %v6016, %v6032
      %v6093 = vmul.f32 %v6017, %v6032
      %v6094 = vmul.f32 %v6018, %v6032
      %v6095 = vmul.f32 %v6019, %v6032
      %v6096 = vmul.f32 %v6020, %v6032
      %v6097 = vmul.f32 %v6021, %v6032
      %v6098 = vmul.f32 %v6022, %v6032
      %v6099 = vmul.f32 %v6023, %v6032
      %v6100 = vmul.f32 %v6024, %v6032
      %v6101 = vmul.f32 %v6025, %v6032
      %v6102 = vmul.f32 %v6026, %v6032
      %v6103 = vmul.f32 %v6027, %v6032
      %v6104 = vmul.f32 %v6028, %v6032
      %v6105 = vadd.f32 %v5885, %v6033
      %v6106 = vadd.f32 %v5886, %v6034
      %v6107 = vadd.f32 %v5887, %v6035
      %v6108 = vadd.f32 %v5888, %v6036
      %v6109 = vadd.f32 %v5889, %v6037
      %v6110 = vadd.f32 %v5890, %v6038
      %v6111 = vadd.f32 %v5891, %v6039
      %v6112 = vadd.f32 %v5892, %v6040
      %v6113 = vadd.f32 %v5893, %v6041
      %v6114 = vadd.f32 %v5894, %v6042
      %v6115 = vadd.f32 %v5895, %v6043
      %v6116 = vadd.f32 %v5896, %v6044
      %v6117 = vadd.f32 %v5897, %v6045
      %v6118 = vadd.f32 %v5898, %v6046
      %v6119 = vadd.f32 %v5899, %v6047
      %v6120 = vadd.f32 %v5900, %v6048
      %v6121 = vadd.f32 %v5901, %v6049
      %v6122 = vadd.f32 %v5902, %v6050
      %v6123 = vadd.f32 %v5903, %v6051
      %v6124 = vadd.f32 %v5904, %v6052
      %v6125 = vadd.f32 %v5905, %v6053
      %v6126 = vadd.f32 %v5906, %v6054
      %v6127 = vadd.f32 %v5907, %v6055
      %v6128 = vadd.f32 %v5908, %v6056
      %v6129 = vadd.f32 %v5909, %v6057
      %v6130 = vadd.f32 %v5910, %v6058
      %v6131 = vadd.f32 %v5911, %v6059
      %v6132 = vadd.f32 %v5912, %v6060
      %v6133 = vadd.f32 %v5913, %v6061
      %v6134 = vadd.f32 %v5914, %v6062
      %v6135 = vadd.f32 %v5915, %v6063
      %v6136 = vadd.f32 %v5916, %v6064
      %v6137 = vadd.f32 %v5917, %v6065
      %v6138 = vadd.f32 %v5918, %v6066
      %v6139 = vadd.f32 %v5919, %v6067
      %v6140 = vadd.f32 %v5920, %v6068
      %v6141 = vadd.f32 %v5921, %v6069
      %v6142 = vadd.f32 %v5922, %v6070
      %v6143 = vadd.f32 %v5923, %v6071
      %v6144 = vadd.f32 %v5924, %v6072
      %v6145 = vadd.f32 %v5925, %v6073
      %v6146 = vadd.f32 %v5926, %v6074
      %v6147 = vadd.f32 %v5927, %v6075
      %v6148 = vadd.f32 %v5928, %v6076
      %v6149 = vadd.f32 %v5929, %v6077
      %v6150 = vadd.f32 %v5930, %v6078
      %v6151 = vadd.f32 %v5931, %v6079
      %v6152 = vadd.f32 %v5932, %v6080
      %v6153 = vadd.f32 %v5933, %v6081
      %v6154 = vadd.f32 %v5934, %v6082
      %v6155 = vadd.f32 %v5935, %v6083
      %v6156 = vadd.f32 %v5936, %v6084
      %v6157 = vadd.f32 %v5937, %v6085
      %v6158 = vadd.f32 %v5938, %v6086
      %v6159 = vadd.f32 %v5939, %v6087
      %v6160 = vadd.f32 %v5940, %v6088
      %v6161 = vadd.f32 %v5941, %v6089
      %v6162 = vadd.f32 %v5942, %v6090
      %v6163 = vadd.f32 %v5943, %v6091
      %v6164 = vadd.f32 %v5944, %v6092
      %v6165 = vadd.f32 %v5945, %v6093
      %v6166 = vadd.f32 %v5946, %v6094
      %v6167 = vadd.f32 %v5947, %v6095
      %v6168 = vadd.f32 %v5948, %v6096
      %v6169 = vadd.f32 %v5949, %v6097
      %v6170 = vadd.f32 %v5950, %v6098
      %v6171 = vadd.f32 %v5951, %v6099
      %v6172 = vadd.f32 %v5952, %v6100
      %v6173 = vadd.f32 %v5953, %v6101
      %v6174 = vadd.f32 %v5954, %v6102
      %v6175 = vadd.f32 %v5955, %v6103
      %v6176 = vadd.f32 %v5956, %v6104
      %v6177 = vld [vmem:[%s5441] sm:$0xff]
      %v6178 = vld [vmem:[%s5441 + $0x8] sm:$0xff]
      %v6179 = vld [vmem:[%s5441 + $0x10] sm:$0xff]
      %v6180 = vld [vmem:[%s5441 + $0x20] sm:$0xff]
      %v6181 = vld [vmem:[%s5441 + $0x28] sm:$0xff]
      %v6182 = vld [vmem:[%s5441 + $0x30] sm:$0xff]
      %v6183 = vld [vmem:[%s5441 + $0x40] sm:$0xff]
      %v6184 = vld [vmem:[%s5441 + $0x48] sm:$0xff]
      %v6185 = vld [vmem:[%s5441 + $0x50] sm:$0xff]
      %v6186 = vld [vmem:[%s5441 + $0x60] sm:$0xff]
      %v6187 = vld [vmem:[%s5441 + $0x68] sm:$0xff]
      %v6188 = vld [vmem:[%s5441 + $0x70] sm:$0xff]
      %v6189 = vld [vmem:[%s5441 + $0x80] sm:$0xff]
      %v6190 = vld [vmem:[%s5441 + $0x88] sm:$0xff]
      %v6191 = vld [vmem:[%s5441 + $0x90] sm:$0xff]
      %v6192 = vld [vmem:[%s5441 + $0xa0] sm:$0xff]
      %v6193 = vld [vmem:[%s5441 + $0xa8] sm:$0xff]
      %v6194 = vld [vmem:[%s5441 + $0xb0] sm:$0xff]
      %v6195 = vld [vmem:[%s5441 + $0xc0] sm:$0xff]
      %v6196 = vld [vmem:[%s5441 + $0xc8] sm:$0xff]
      %v6197 = vld [vmem:[%s5441 + $0xd0] sm:$0xff]
      %v6198 = vld [vmem:[%s5441 + $0xe0] sm:$0xff]
      %v6199 = vld [vmem:[%s5441 + $0xe8] sm:$0xff]
      %v6200 = vld [vmem:[%s5441 + $0xf0] sm:$0xff]
      %v6201 = vld [vmem:[%s5441 + $0x100] sm:$0xff]
      %v6202 = vld [vmem:[%s5441 + $0x108] sm:$0xff]
      %v6203 = vld [vmem:[%s5441 + $0x110] sm:$0xff]
      %v6204 = vld [vmem:[%s5441 + $0x120] sm:$0xff]
      %v6205 = vld [vmem:[%s5441 + $0x128] sm:$0xff]
      %v6206 = vld [vmem:[%s5441 + $0x130] sm:$0xff]
      %v6207 = vld [vmem:[%s5441 + $0x140] sm:$0xff]
      %v6208 = vld [vmem:[%s5441 + $0x148] sm:$0xff]
      %v6209 = vld [vmem:[%s5441 + $0x150] sm:$0xff]
      %v6210 = vld [vmem:[%s5441 + $0x160] sm:$0xff]
      %v6211 = vld [vmem:[%s5441 + $0x168] sm:$0xff]
      %v6212 = vld [vmem:[%s5441 + $0x170] sm:$0xff]
      %v6213 = vld [vmem:[%s5441 + $0x180] sm:$0xff]
      %v6214 = vld [vmem:[%s5441 + $0x188] sm:$0xff]
      %v6215 = vld [vmem:[%s5441 + $0x190] sm:$0xff]
      %v6216 = vld [vmem:[%s5441 + $0x1a0] sm:$0xff]
      %v6217 = vld [vmem:[%s5441 + $0x1a8] sm:$0xff]
      %v6218 = vld [vmem:[%s5441 + $0x1b0] sm:$0xff]
      %v6219 = vld [vmem:[%s5441 + $0x1c0] sm:$0xff]
      %v6220 = vld [vmem:[%s5441 + $0x1c8] sm:$0xff]
      %v6221 = vld [vmem:[%s5441 + $0x1d0] sm:$0xff]
      %v6222 = vld [vmem:[%s5441 + $0x1e0] sm:$0xff]
      %v6223 = vld [vmem:[%s5441 + $0x1e8] sm:$0xff]
      %v6224 = vld [vmem:[%s5441 + $0x1f0] sm:$0xff]
      %v6225 = vld [vmem:[%s5441 + $0x200] sm:$0xff]
      %v6226 = vld [vmem:[%s5441 + $0x208] sm:$0xff]
      %v6227 = vld [vmem:[%s5441 + $0x210] sm:$0xff]
      %v6228 = vld [vmem:[%s5441 + $0x220] sm:$0xff]
      %v6229 = vld [vmem:[%s5441 + $0x228] sm:$0xff]
      %v6230 = vld [vmem:[%s5441 + $0x230] sm:$0xff]
      %v6231 = vld [vmem:[%s5441 + $0x240] sm:$0xff]
      %v6232 = vld [vmem:[%s5441 + $0x248] sm:$0xff]
      %v6233 = vld [vmem:[%s5441 + $0x250] sm:$0xff]
      %v6234 = vld [vmem:[%s5441 + $0x260] sm:$0xff]
      %v6235 = vld [vmem:[%s5441 + $0x268] sm:$0xff]
      %v6236 = vld [vmem:[%s5441 + $0x270] sm:$0xff]
      %v6237 = vld [vmem:[%s5441 + $0x280] sm:$0xff]
      %v6238 = vld [vmem:[%s5441 + $0x288] sm:$0xff]
      %v6239 = vld [vmem:[%s5441 + $0x290] sm:$0xff]
      %v6240 = vld [vmem:[%s5441 + $0x2a0] sm:$0xff]
      %v6241 = vld [vmem:[%s5441 + $0x2a8] sm:$0xff]
      %v6242 = vld [vmem:[%s5441 + $0x2b0] sm:$0xff]
      %v6243 = vld [vmem:[%s5441 + $0x2c0] sm:$0xff]
      %v6244 = vld [vmem:[%s5441 + $0x2c8] sm:$0xff]
      %v6245 = vld [vmem:[%s5441 + $0x2d0] sm:$0xff]
      %v6246 = vld [vmem:[%s5441 + $0x2e0] sm:$0xff]
      %v6247 = vld [vmem:[%s5441 + $0x2e8] sm:$0xff]
      %v6248 = vld [vmem:[%s5441 + $0x2f0] sm:$0xff]
      %v6249 = vlaneseq
      %v6250 = vshrl.u32 %v6249, 7
      %v6251 = vsub.s32 0, %v6250
      %v6252 = vrot.slane %v5515, %v6251
      %v6253 = vmul.f32 %v6177, %v6252
      %v6254 = vmul.f32 %v6178, %v6252
      %v6255 = vmul.f32 %v6179, %v6252
      %v6256 = vmul.f32 %v6180, %v6252
      %v6257 = vmul.f32 %v6181, %v6252
      %v6258 = vmul.f32 %v6182, %v6252
      %v6259 = vmul.f32 %v6183, %v6252
      %v6260 = vmul.f32 %v6184, %v6252
      %v6261 = vmul.f32 %v6185, %v6252
      %v6262 = vmul.f32 %v6186, %v6252
      %v6263 = vmul.f32 %v6187, %v6252
      %v6264 = vmul.f32 %v6188, %v6252
      %v6265 = vmul.f32 %v6189, %v6252
      %v6266 = vmul.f32 %v6190, %v6252
      %v6267 = vmul.f32 %v6191, %v6252
      %v6268 = vmul.f32 %v6192, %v6252
      %v6269 = vmul.f32 %v6193, %v6252
      %v6270 = vmul.f32 %v6194, %v6252
      %v6271 = vmul.f32 %v6195, %v6252
      %v6272 = vmul.f32 %v6196, %v6252
      %v6273 = vmul.f32 %v6197, %v6252
      %v6274 = vmul.f32 %v6198, %v6252
      %v6275 = vmul.f32 %v6199, %v6252
      %v6276 = vmul.f32 %v6200, %v6252
      %v6277 = vmul.f32 %v6201, %v6252
      %v6278 = vmul.f32 %v6202, %v6252
      %v6279 = vmul.f32 %v6203, %v6252
      %v6280 = vmul.f32 %v6204, %v6252
      %v6281 = vmul.f32 %v6205, %v6252
      %v6282 = vmul.f32 %v6206, %v6252
      %v6283 = vmul.f32 %v6207, %v6252
      %v6284 = vmul.f32 %v6208, %v6252
      %v6285 = vmul.f32 %v6209, %v6252
      %v6286 = vmul.f32 %v6210, %v6252
      %v6287 = vmul.f32 %v6211, %v6252
      %v6288 = vmul.f32 %v6212, %v6252
      %v6289 = vmul.f32 %v6213, %v6252
      %v6290 = vmul.f32 %v6214, %v6252
      %v6291 = vmul.f32 %v6215, %v6252
      %v6292 = vmul.f32 %v6216, %v6252
      %v6293 = vmul.f32 %v6217, %v6252
      %v6294 = vmul.f32 %v6218, %v6252
      %v6295 = vmul.f32 %v6219, %v6252
      %v6296 = vmul.f32 %v6220, %v6252
      %v6297 = vmul.f32 %v6221, %v6252
      %v6298 = vmul.f32 %v6222, %v6252
      %v6299 = vmul.f32 %v6223, %v6252
      %v6300 = vmul.f32 %v6224, %v6252
      %v6301 = vmul.f32 %v6225, %v6252
      %v6302 = vmul.f32 %v6226, %v6252
      %v6303 = vmul.f32 %v6227, %v6252
      %v6304 = vmul.f32 %v6228, %v6252
      %v6305 = vmul.f32 %v6229, %v6252
      %v6306 = vmul.f32 %v6230, %v6252
      %v6307 = vmul.f32 %v6231, %v6252
      %v6308 = vmul.f32 %v6232, %v6252
      %v6309 = vmul.f32 %v6233, %v6252
      %v6310 = vmul.f32 %v6234, %v6252
      %v6311 = vmul.f32 %v6235, %v6252
      %v6312 = vmul.f32 %v6236, %v6252
      %v6313 = vmul.f32 %v6237, %v6252
      %v6314 = vmul.f32 %v6238, %v6252
      %v6315 = vmul.f32 %v6239, %v6252
      %v6316 = vmul.f32 %v6240, %v6252
      %v6317 = vmul.f32 %v6241, %v6252
      %v6318 = vmul.f32 %v6242, %v6252
      %v6319 = vmul.f32 %v6243, %v6252
      %v6320 = vmul.f32 %v6244, %v6252
      %v6321 = vmul.f32 %v6245, %v6252
      %v6322 = vmul.f32 %v6246, %v6252
      %v6323 = vmul.f32 %v6247, %v6252
      %v6324 = vmul.f32 %v6248, %v6252
      %v6325 = vadd.f32 %v6105, %v6253
      %v6326 = vadd.f32 %v6106, %v6254
      %v6327 = vadd.f32 %v6107, %v6255
      %v6328 = vadd.f32 %v6108, %v6256
      %v6329 = vadd.f32 %v6109, %v6257
      %v6330 = vadd.f32 %v6110, %v6258
      %v6331 = vadd.f32 %v6111, %v6259
      %v6332 = vadd.f32 %v6112, %v6260
      %v6333 = vadd.f32 %v6113, %v6261
      %v6334 = vadd.f32 %v6114, %v6262
      %v6335 = vadd.f32 %v6115, %v6263
      %v6336 = vadd.f32 %v6116, %v6264
      %v6337 = vadd.f32 %v6117, %v6265
      %v6338 = vadd.f32 %v6118, %v6266
      %v6339 = vadd.f32 %v6119, %v6267
      %v6340 = vadd.f32 %v6120, %v6268
      %v6341 = vadd.f32 %v6121, %v6269
      %v6342 = vadd.f32 %v6122, %v6270
      %v6343 = vadd.f32 %v6123, %v6271
      %v6344 = vadd.f32 %v6124, %v6272
      %v6345 = vadd.f32 %v6125, %v6273
      %v6346 = vadd.f32 %v6126, %v6274
      %v6347 = vadd.f32 %v6127, %v6275
      %v6348 = vadd.f32 %v6128, %v6276
      %v6349 = vadd.f32 %v6129, %v6277
      %v6350 = vadd.f32 %v6130, %v6278
      %v6351 = vadd.f32 %v6131, %v6279
      %v6352 = vadd.f32 %v6132, %v6280
      %v6353 = vadd.f32 %v6133, %v6281
      %v6354 = vadd.f32 %v6134, %v6282
      %v6355 = vadd.f32 %v6135, %v6283
      %v6356 = vadd.f32 %v6136, %v6284
      %v6357 = vadd.f32 %v6137, %v6285
      %v6358 = vadd.f32 %v6138, %v6286
      %v6359 = vadd.f32 %v6139, %v6287
      %v6360 = vadd.f32 %v6140, %v6288
      %v6361 = vadd.f32 %v6141, %v6289
      %v6362 = vadd.f32 %v6142, %v6290
      %v6363 = vadd.f32 %v6143, %v6291
      %v6364 = vadd.f32 %v6144, %v6292
      %v6365 = vadd.f32 %v6145, %v6293
      %v6366 = vadd.f32 %v6146, %v6294
      %v6367 = vadd.f32 %v6147, %v6295
      %v6368 = vadd.f32 %v6148, %v6296
      %v6369 = vadd.f32 %v6149, %v6297
      %v6370 = vadd.f32 %v6150, %v6298
      %v6371 = vadd.f32 %v6151, %v6299
      %v6372 = vadd.f32 %v6152, %v6300
      %v6373 = vadd.f32 %v6153, %v6301
      %v6374 = vadd.f32 %v6154, %v6302
      %v6375 = vadd.f32 %v6155, %v6303
      %v6376 = vadd.f32 %v6156, %v6304
      %v6377 = vadd.f32 %v6157, %v6305
      %v6378 = vadd.f32 %v6158, %v6306
      %v6379 = vadd.f32 %v6159, %v6307
      %v6380 = vadd.f32 %v6160, %v6308
      %v6381 = vadd.f32 %v6161, %v6309
      %v6382 = vadd.f32 %v6162, %v6310
      %v6383 = vadd.f32 %v6163, %v6311
      %v6384 = vadd.f32 %v6164, %v6312
      %v6385 = vadd.f32 %v6165, %v6313
      %v6386 = vadd.f32 %v6166, %v6314
      %v6387 = vadd.f32 %v6167, %v6315
      %v6388 = vadd.f32 %v6168, %v6316
      %v6389 = vadd.f32 %v6169, %v6317
      %v6390 = vadd.f32 %v6170, %v6318
      %v6391 = vadd.f32 %v6171, %v6319
      %v6392 = vadd.f32 %v6172, %v6320
      %v6393 = vadd.f32 %v6173, %v6321
      %v6394 = vadd.f32 %v6174, %v6322
      %v6395 = vadd.f32 %v6175, %v6323
      %v6396 = vadd.f32 %v6176, %v6324
      %v6397 = vld [vmem:[%s5441 + $0x1] sm:$0xff]
      %v6398 = vld [vmem:[%s5441 + $0x9] sm:$0xff]
      %v6399 = vld [vmem:[%s5441 + $0x11] sm:$0xff]
      %v6400 = vld [vmem:[%s5441 + $0x21] sm:$0xff]
      %v6401 = vld [vmem:[%s5441 + $0x29] sm:$0xff]
      %v6402 = vld [vmem:[%s5441 + $0x31] sm:$0xff]
      %v6403 = vld [vmem:[%s5441 + $0x41] sm:$0xff]
      %v6404 = vld [vmem:[%s5441 + $0x49] sm:$0xff]
      %v6405 = vld [vmem:[%s5441 + $0x51] sm:$0xff]
      %v6406 = vld [vmem:[%s5441 + $0x61] sm:$0xff]
      %v6407 = vld [vmem:[%s5441 + $0x69] sm:$0xff]
      %v6408 = vld [vmem:[%s5441 + $0x71] sm:$0xff]
      %v6409 = vld [vmem:[%s5441 + $0x81] sm:$0xff]
      %v6410 = vld [vmem:[%s5441 + $0x89] sm:$0xff]
      %v6411 = vld [vmem:[%s5441 + $0x91] sm:$0xff]
      %v6412 = vld [vmem:[%s5441 + $0xa1] sm:$0xff]
      %v6413 = vld [vmem:[%s5441 + $0xa9] sm:$0xff]
      %v6414 = vld [vmem:[%s5441 + $0xb1] sm:$0xff]
      %v6415 = vld [vmem:[%s5441 + $0xc1] sm:$0xff]
      %v6416 = vld [vmem:[%s5441 + $0xc9] sm:$0xff]
      %v6417 = vld [vmem:[%s5441 + $0xd1] sm:$0xff]
      %v6418 = vld [vmem:[%s5441 + $0xe1] sm:$0xff]
      %v6419 = vld [vmem:[%s5441 + $0xe9] sm:$0xff]
      %v6420 = vld [vmem:[%s5441 + $0xf1] sm:$0xff]
      %v6421 = vld [vmem:[%s5441 + $0x101] sm:$0xff]
      %v6422 = vld [vmem:[%s5441 + $0x109] sm:$0xff]
      %v6423 = vld [vmem:[%s5441 + $0x111] sm:$0xff]
      %v6424 = vld [vmem:[%s5441 + $0x121] sm:$0xff]
      %v6425 = vld [vmem:[%s5441 + $0x129] sm:$0xff]
      %v6426 = vld [vmem:[%s5441 + $0x131] sm:$0xff]
      %v6427 = vld [vmem:[%s5441 + $0x141] sm:$0xff]
      %v6428 = vld [vmem:[%s5441 + $0x149] sm:$0xff]
      %v6429 = vld [vmem:[%s5441 + $0x151] sm:$0xff]
      %v6430 = vld [vmem:[%s5441 + $0x161] sm:$0xff]
      %v6431 = vld [vmem:[%s5441 + $0x169] sm:$0xff]
      %v6432 = vld [vmem:[%s5441 + $0x171] sm:$0xff]
      %v6433 = vld [vmem:[%s5441 + $0x181] sm:$0xff]
      %v6434 = vld [vmem:[%s5441 + $0x189] sm:$0xff]
      %v6435 = vld [vmem:[%s5441 + $0x191] sm:$0xff]
      %v6436 = vld [vmem:[%s5441 + $0x1a1] sm:$0xff]
      %v6437 = vld [vmem:[%s5441 + $0x1a9] sm:$0xff]
      %v6438 = vld [vmem:[%s5441 + $0x1b1] sm:$0xff]
      %v6439 = vld [vmem:[%s5441 + $0x1c1] sm:$0xff]
      %v6440 = vld [vmem:[%s5441 + $0x1c9] sm:$0xff]
      %v6441 = vld [vmem:[%s5441 + $0x1d1] sm:$0xff]
      %v6442 = vld [vmem:[%s5441 + $0x1e1] sm:$0xff]
      %v6443 = vld [vmem:[%s5441 + $0x1e9] sm:$0xff]
      %v6444 = vld [vmem:[%s5441 + $0x1f1] sm:$0xff]
      %v6445 = vld [vmem:[%s5441 + $0x201] sm:$0xff]
      %v6446 = vld [vmem:[%s5441 + $0x209] sm:$0xff]
      %v6447 = vld [vmem:[%s5441 + $0x211] sm:$0xff]
      %v6448 = vld [vmem:[%s5441 + $0x221] sm:$0xff]
      %v6449 = vld [vmem:[%s5441 + $0x229] sm:$0xff]
      %v6450 = vld [vmem:[%s5441 + $0x231] sm:$0xff]
      %v6451 = vld [vmem:[%s5441 + $0x241] sm:$0xff]
      %v6452 = vld [vmem:[%s5441 + $0x249] sm:$0xff]
      %v6453 = vld [vmem:[%s5441 + $0x251] sm:$0xff]
      %v6454 = vld [vmem:[%s5441 + $0x261] sm:$0xff]
      %v6455 = vld [vmem:[%s5441 + $0x269] sm:$0xff]
      %v6456 = vld [vmem:[%s5441 + $0x271] sm:$0xff]
      %v6457 = vld [vmem:[%s5441 + $0x281] sm:$0xff]
      %v6458 = vld [vmem:[%s5441 + $0x289] sm:$0xff]
      %v6459 = vld [vmem:[%s5441 + $0x291] sm:$0xff]
      %v6460 = vld [vmem:[%s5441 + $0x2a1] sm:$0xff]
      %v6461 = vld [vmem:[%s5441 + $0x2a9] sm:$0xff]
      %v6462 = vld [vmem:[%s5441 + $0x2b1] sm:$0xff]
      %v6463 = vld [vmem:[%s5441 + $0x2c1] sm:$0xff]
      %v6464 = vld [vmem:[%s5441 + $0x2c9] sm:$0xff]
      %v6465 = vld [vmem:[%s5441 + $0x2d1] sm:$0xff]
      %v6466 = vld [vmem:[%s5441 + $0x2e1] sm:$0xff]
      %v6467 = vld [vmem:[%s5441 + $0x2e9] sm:$0xff]
      %v6468 = vld [vmem:[%s5441 + $0x2f1] sm:$0xff]
      %v6469 = vlaneseq
      %v6470 = vshrl.u32 %v6469, 7
      %v6471 = vsub.s32 1, %v6470
      %v6472 = vrot.slane %v5515, %v6471
      %v6473 = vmul.f32 %v6397, %v6472
      %v6474 = vmul.f32 %v6398, %v6472
      %v6475 = vmul.f32 %v6399, %v6472
      %v6476 = vmul.f32 %v6400, %v6472
      %v6477 = vmul.f32 %v6401, %v6472
      %v6478 = vmul.f32 %v6402, %v6472
      %v6479 = vmul.f32 %v6403, %v6472
      %v6480 = vmul.f32 %v6404, %v6472
      %v6481 = vmul.f32 %v6405, %v6472
      %v6482 = vmul.f32 %v6406, %v6472
      %v6483 = vmul.f32 %v6407, %v6472
      %v6484 = vmul.f32 %v6408, %v6472
      %v6485 = vmul.f32 %v6409, %v6472
      %v6486 = vmul.f32 %v6410, %v6472
      %v6487 = vmul.f32 %v6411, %v6472
      %v6488 = vmul.f32 %v6412, %v6472
      %v6489 = vmul.f32 %v6413, %v6472
      %v6490 = vmul.f32 %v6414, %v6472
      %v6491 = vmul.f32 %v6415, %v6472
      %v6492 = vmul.f32 %v6416, %v6472
      %v6493 = vmul.f32 %v6417, %v6472
      %v6494 = vmul.f32 %v6418, %v6472
      %v6495 = vmul.f32 %v6419, %v6472
      %v6496 = vmul.f32 %v6420, %v6472
      %v6497 = vmul.f32 %v6421, %v6472
      %v6498 = vmul.f32 %v6422, %v6472
      %v6499 = vmul.f32 %v6423, %v6472
      %v6500 = vmul.f32 %v6424, %v6472
      %v6501 = vmul.f32 %v6425, %v6472
      %v6502 = vmul.f32 %v6426, %v6472
      %v6503 = vmul.f32 %v6427, %v6472
      %v6504 = vmul.f32 %v6428, %v6472
      %v6505 = vmul.f32 %v6429, %v6472
      %v6506 = vmul.f32 %v6430, %v6472
      %v6507 = vmul.f32 %v6431, %v6472
      %v6508 = vmul.f32 %v6432, %v6472
      %v6509 = vmul.f32 %v6433, %v6472
      %v6510 = vmul.f32 %v6434, %v6472
      %v6511 = vmul.f32 %v6435, %v6472
      %v6512 = vmul.f32 %v6436, %v6472
      %v6513 = vmul.f32 %v6437, %v6472
      %v6514 = vmul.f32 %v6438, %v6472
      %v6515 = vmul.f32 %v6439, %v6472
      %v6516 = vmul.f32 %v6440, %v6472
      %v6517 = vmul.f32 %v6441, %v6472
      %v6518 = vmul.f32 %v6442, %v6472
      %v6519 = vmul.f32 %v6443, %v6472
      %v6520 = vmul.f32 %v6444, %v6472
      %v6521 = vmul.f32 %v6445, %v6472
      %v6522 = vmul.f32 %v6446, %v6472
      %v6523 = vmul.f32 %v6447, %v6472
      %v6524 = vmul.f32 %v6448, %v6472
      %v6525 = vmul.f32 %v6449, %v6472
      %v6526 = vmul.f32 %v6450, %v6472
      %v6527 = vmul.f32 %v6451, %v6472
      %v6528 = vmul.f32 %v6452, %v6472
      %v6529 = vmul.f32 %v6453, %v6472
      %v6530 = vmul.f32 %v6454, %v6472
      %v6531 = vmul.f32 %v6455, %v6472
      %v6532 = vmul.f32 %v6456, %v6472
      %v6533 = vmul.f32 %v6457, %v6472
      %v6534 = vmul.f32 %v6458, %v6472
      %v6535 = vmul.f32 %v6459, %v6472
      %v6536 = vmul.f32 %v6460, %v6472
      %v6537 = vmul.f32 %v6461, %v6472
      %v6538 = vmul.f32 %v6462, %v6472
      %v6539 = vmul.f32 %v6463, %v6472
      %v6540 = vmul.f32 %v6464, %v6472
      %v6541 = vmul.f32 %v6465, %v6472
      %v6542 = vmul.f32 %v6466, %v6472
      %v6543 = vmul.f32 %v6467, %v6472
      %v6544 = vmul.f32 %v6468, %v6472
      %v6545 = vadd.f32 %v6325, %v6473
      %v6546 = vadd.f32 %v6326, %v6474
      %v6547 = vadd.f32 %v6327, %v6475
      %v6548 = vadd.f32 %v6328, %v6476
      %v6549 = vadd.f32 %v6329, %v6477
      %v6550 = vadd.f32 %v6330, %v6478
      %v6551 = vadd.f32 %v6331, %v6479
      %v6552 = vadd.f32 %v6332, %v6480
      %v6553 = vadd.f32 %v6333, %v6481
      %v6554 = vadd.f32 %v6334, %v6482
      %v6555 = vadd.f32 %v6335, %v6483
      %v6556 = vadd.f32 %v6336, %v6484
      %v6557 = vadd.f32 %v6337, %v6485
      %v6558 = vadd.f32 %v6338, %v6486
      %v6559 = vadd.f32 %v6339, %v6487
      %v6560 = vadd.f32 %v6340, %v6488
      %v6561 = vadd.f32 %v6341, %v6489
      %v6562 = vadd.f32 %v6342, %v6490
      %v6563 = vadd.f32 %v6343, %v6491
      %v6564 = vadd.f32 %v6344, %v6492
      %v6565 = vadd.f32 %v6345, %v6493
      %v6566 = vadd.f32 %v6346, %v6494
      %v6567 = vadd.f32 %v6347, %v6495
      %v6568 = vadd.f32 %v6348, %v6496
      %v6569 = vadd.f32 %v6349, %v6497
      %v6570 = vadd.f32 %v6350, %v6498
      %v6571 = vadd.f32 %v6351, %v6499
      %v6572 = vadd.f32 %v6352, %v6500
      %v6573 = vadd.f32 %v6353, %v6501
      %v6574 = vadd.f32 %v6354, %v6502
      %v6575 = vadd.f32 %v6355, %v6503
      %v6576 = vadd.f32 %v6356, %v6504
      %v6577 = vadd.f32 %v6357, %v6505
      %v6578 = vadd.f32 %v6358, %v6506
      %v6579 = vadd.f32 %v6359, %v6507
      %v6580 = vadd.f32 %v6360, %v6508
      %v6581 = vadd.f32 %v6361, %v6509
      %v6582 = vadd.f32 %v6362, %v6510
      %v6583 = vadd.f32 %v6363, %v6511
      %v6584 = vadd.f32 %v6364, %v6512
      %v6585 = vadd.f32 %v6365, %v6513
      %v6586 = vadd.f32 %v6366, %v6514
      %v6587 = vadd.f32 %v6367, %v6515
      %v6588 = vadd.f32 %v6368, %v6516
      %v6589 = vadd.f32 %v6369, %v6517
      %v6590 = vadd.f32 %v6370, %v6518
      %v6591 = vadd.f32 %v6371, %v6519
      %v6592 = vadd.f32 %v6372, %v6520
      %v6593 = vadd.f32 %v6373, %v6521
      %v6594 = vadd.f32 %v6374, %v6522
      %v6595 = vadd.f32 %v6375, %v6523
      %v6596 = vadd.f32 %v6376, %v6524
      %v6597 = vadd.f32 %v6377, %v6525
      %v6598 = vadd.f32 %v6378, %v6526
      %v6599 = vadd.f32 %v6379, %v6527
      %v6600 = vadd.f32 %v6380, %v6528
      %v6601 = vadd.f32 %v6381, %v6529
      %v6602 = vadd.f32 %v6382, %v6530
      %v6603 = vadd.f32 %v6383, %v6531
      %v6604 = vadd.f32 %v6384, %v6532
      %v6605 = vadd.f32 %v6385, %v6533
      %v6606 = vadd.f32 %v6386, %v6534
      %v6607 = vadd.f32 %v6387, %v6535
      %v6608 = vadd.f32 %v6388, %v6536
      %v6609 = vadd.f32 %v6389, %v6537
      %v6610 = vadd.f32 %v6390, %v6538
      %v6611 = vadd.f32 %v6391, %v6539
      %v6612 = vadd.f32 %v6392, %v6540
      %v6613 = vadd.f32 %v6393, %v6541
      %v6614 = vadd.f32 %v6394, %v6542
      %v6615 = vadd.f32 %v6395, %v6543
      %v6616 = vadd.f32 %v6396, %v6544
      %v6617 = vld [vmem:[%s5441 + $0x2] sm:$0xff]
      %v6618 = vld [vmem:[%s5441 + $0xa] sm:$0xff]
      %v6619 = vld [vmem:[%s5441 + $0x12] sm:$0xff]
      %v6620 = vld [vmem:[%s5441 + $0x22] sm:$0xff]
      %v6621 = vld [vmem:[%s5441 + $0x2a] sm:$0xff]
      %v6622 = vld [vmem:[%s5441 + $0x32] sm:$0xff]
      %v6623 = vld [vmem:[%s5441 + $0x42] sm:$0xff]
      %v6624 = vld [vmem:[%s5441 + $0x4a] sm:$0xff]
      %v6625 = vld [vmem:[%s5441 + $0x52] sm:$0xff]
      %v6626 = vld [vmem:[%s5441 + $0x62] sm:$0xff]
      %v6627 = vld [vmem:[%s5441 + $0x6a] sm:$0xff]
      %v6628 = vld [vmem:[%s5441 + $0x72] sm:$0xff]
      %v6629 = vld [vmem:[%s5441 + $0x82] sm:$0xff]
      %v6630 = vld [vmem:[%s5441 + $0x8a] sm:$0xff]
      %v6631 = vld [vmem:[%s5441 + $0x92] sm:$0xff]
      %v6632 = vld [vmem:[%s5441 + $0xa2] sm:$0xff]
      %v6633 = vld [vmem:[%s5441 + $0xaa] sm:$0xff]
      %v6634 = vld [vmem:[%s5441 + $0xb2] sm:$0xff]
      %v6635 = vld [vmem:[%s5441 + $0xc2] sm:$0xff]
      %v6636 = vld [vmem:[%s5441 + $0xca] sm:$0xff]
      %v6637 = vld [vmem:[%s5441 + $0xd2] sm:$0xff]
      %v6638 = vld [vmem:[%s5441 + $0xe2] sm:$0xff]
      %v6639 = vld [vmem:[%s5441 + $0xea] sm:$0xff]
      %v6640 = vld [vmem:[%s5441 + $0xf2] sm:$0xff]
      %v6641 = vld [vmem:[%s5441 + $0x102] sm:$0xff]
      %v6642 = vld [vmem:[%s5441 + $0x10a] sm:$0xff]
      %v6643 = vld [vmem:[%s5441 + $0x112] sm:$0xff]
      %v6644 = vld [vmem:[%s5441 + $0x122] sm:$0xff]
      %v6645 = vld [vmem:[%s5441 + $0x12a] sm:$0xff]
      %v6646 = vld [vmem:[%s5441 + $0x132] sm:$0xff]
      %v6647 = vld [vmem:[%s5441 + $0x142] sm:$0xff]
      %v6648 = vld [vmem:[%s5441 + $0x14a] sm:$0xff]
      %v6649 = vld [vmem:[%s5441 + $0x152] sm:$0xff]
      %v6650 = vld [vmem:[%s5441 + $0x162] sm:$0xff]
      %v6651 = vld [vmem:[%s5441 + $0x16a] sm:$0xff]
      %v6652 = vld [vmem:[%s5441 + $0x172] sm:$0xff]
      %v6653 = vld [vmem:[%s5441 + $0x182] sm:$0xff]
      %v6654 = vld [vmem:[%s5441 + $0x18a] sm:$0xff]
      %v6655 = vld [vmem:[%s5441 + $0x192] sm:$0xff]
      %v6656 = vld [vmem:[%s5441 + $0x1a2] sm:$0xff]
      %v6657 = vld [vmem:[%s5441 + $0x1aa] sm:$0xff]
      %v6658 = vld [vmem:[%s5441 + $0x1b2] sm:$0xff]
      %v6659 = vld [vmem:[%s5441 + $0x1c2] sm:$0xff]
      %v6660 = vld [vmem:[%s5441 + $0x1ca] sm:$0xff]
      %v6661 = vld [vmem:[%s5441 + $0x1d2] sm:$0xff]
      %v6662 = vld [vmem:[%s5441 + $0x1e2] sm:$0xff]
      %v6663 = vld [vmem:[%s5441 + $0x1ea] sm:$0xff]
      %v6664 = vld [vmem:[%s5441 + $0x1f2] sm:$0xff]
      %v6665 = vld [vmem:[%s5441 + $0x202] sm:$0xff]
      %v6666 = vld [vmem:[%s5441 + $0x20a] sm:$0xff]
      %v6667 = vld [vmem:[%s5441 + $0x212] sm:$0xff]
      %v6668 = vld [vmem:[%s5441 + $0x222] sm:$0xff]
      %v6669 = vld [vmem:[%s5441 + $0x22a] sm:$0xff]
      %v6670 = vld [vmem:[%s5441 + $0x232] sm:$0xff]
      %v6671 = vld [vmem:[%s5441 + $0x242] sm:$0xff]
      %v6672 = vld [vmem:[%s5441 + $0x24a] sm:$0xff]
      %v6673 = vld [vmem:[%s5441 + $0x252] sm:$0xff]
      %v6674 = vld [vmem:[%s5441 + $0x262] sm:$0xff]
      %v6675 = vld [vmem:[%s5441 + $0x26a] sm:$0xff]
      %v6676 = vld [vmem:[%s5441 + $0x272] sm:$0xff]
      %v6677 = vld [vmem:[%s5441 + $0x282] sm:$0xff]
      %v6678 = vld [vmem:[%s5441 + $0x28a] sm:$0xff]
      %v6679 = vld [vmem:[%s5441 + $0x292] sm:$0xff]
      %v6680 = vld [vmem:[%s5441 + $0x2a2] sm:$0xff]
      %v6681 = vld [vmem:[%s5441 + $0x2aa] sm:$0xff]
      %v6682 = vld [vmem:[%s5441 + $0x2b2] sm:$0xff]
      %v6683 = vld [vmem:[%s5441 + $0x2c2] sm:$0xff]
      %v6684 = vld [vmem:[%s5441 + $0x2ca] sm:$0xff]
      %v6685 = vld [vmem:[%s5441 + $0x2d2] sm:$0xff]
      %v6686 = vld [vmem:[%s5441 + $0x2e2] sm:$0xff]
      %v6687 = vld [vmem:[%s5441 + $0x2ea] sm:$0xff]
      %v6688 = vld [vmem:[%s5441 + $0x2f2] sm:$0xff]
      %v6689 = vlaneseq
      %v6690 = vshrl.u32 %v6689, 7
      %v6691 = vsub.s32 2, %v6690
      %v6692 = vrot.slane %v5515, %v6691
      %v6693 = vmul.f32 %v6617, %v6692
      %v6694 = vmul.f32 %v6618, %v6692
      %v6695 = vmul.f32 %v6619, %v6692
      %v6696 = vmul.f32 %v6620, %v6692
      %v6697 = vmul.f32 %v6621, %v6692
      %v6698 = vmul.f32 %v6622, %v6692
      %v6699 = vmul.f32 %v6623, %v6692
      %v6700 = vmul.f32 %v6624, %v6692
      %v6701 = vmul.f32 %v6625, %v6692
      %v6702 = vmul.f32 %v6626, %v6692
      %v6703 = vmul.f32 %v6627, %v6692
      %v6704 = vmul.f32 %v6628, %v6692
      %v6705 = vmul.f32 %v6629, %v6692
      %v6706 = vmul.f32 %v6630, %v6692
      %v6707 = vmul.f32 %v6631, %v6692
      %v6708 = vmul.f32 %v6632, %v6692
      %v6709 = vmul.f32 %v6633, %v6692
      %v6710 = vmul.f32 %v6634, %v6692
      %v6711 = vmul.f32 %v6635, %v6692
      %v6712 = vmul.f32 %v6636, %v6692
      %v6713 = vmul.f32 %v6637, %v6692
      %v6714 = vmul.f32 %v6638, %v6692
      %v6715 = vmul.f32 %v6639, %v6692
      %v6716 = vmul.f32 %v6640, %v6692
      %v6717 = vmul.f32 %v6641, %v6692
      %v6718 = vmul.f32 %v6642, %v6692
      %v6719 = vmul.f32 %v6643, %v6692
      %v6720 = vmul.f32 %v6644, %v6692
      %v6721 = vmul.f32 %v6645, %v6692
      %v6722 = vmul.f32 %v6646, %v6692
      %v6723 = vmul.f32 %v6647, %v6692
      %v6724 = vmul.f32 %v6648, %v6692
      %v6725 = vmul.f32 %v6649, %v6692
      %v6726 = vmul.f32 %v6650, %v6692
      %v6727 = vmul.f32 %v6651, %v6692
      %v6728 = vmul.f32 %v6652, %v6692
      %v6729 = vmul.f32 %v6653, %v6692
      %v6730 = vmul.f32 %v6654, %v6692
      %v6731 = vmul.f32 %v6655, %v6692
      %v6732 = vmul.f32 %v6656, %v6692
      %v6733 = vmul.f32 %v6657, %v6692
      %v6734 = vmul.f32 %v6658, %v6692
      %v6735 = vmul.f32 %v6659, %v6692
      %v6736 = vmul.f32 %v6660, %v6692
      %v6737 = vmul.f32 %v6661, %v6692
      %v6738 = vmul.f32 %v6662, %v6692
      %v6739 = vmul.f32 %v6663, %v6692
      %v6740 = vmul.f32 %v6664, %v6692
      %v6741 = vmul.f32 %v6665, %v6692
      %v6742 = vmul.f32 %v6666, %v6692
      %v6743 = vmul.f32 %v6667, %v6692
      %v6744 = vmul.f32 %v6668, %v6692
      %v6745 = vmul.f32 %v6669, %v6692
      %v6746 = vmul.f32 %v6670, %v6692
      %v6747 = vmul.f32 %v6671, %v6692
      %v6748 = vmul.f32 %v6672, %v6692
      %v6749 = vmul.f32 %v6673, %v6692
      %v6750 = vmul.f32 %v6674, %v6692
      %v6751 = vmul.f32 %v6675, %v6692
      %v6752 = vmul.f32 %v6676, %v6692
      %v6753 = vmul.f32 %v6677, %v6692
      %v6754 = vmul.f32 %v6678, %v6692
      %v6755 = vmul.f32 %v6679, %v6692
      %v6756 = vmul.f32 %v6680, %v6692
      %v6757 = vmul.f32 %v6681, %v6692
      %v6758 = vmul.f32 %v6682, %v6692
      %v6759 = vmul.f32 %v6683, %v6692
      %v6760 = vmul.f32 %v6684, %v6692
      %v6761 = vmul.f32 %v6685, %v6692
      %v6762 = vmul.f32 %v6686, %v6692
      %v6763 = vmul.f32 %v6687, %v6692
      %v6764 = vmul.f32 %v6688, %v6692
      %v6765 = vadd.f32 %v6545, %v6693
      %v6766 = vadd.f32 %v6546, %v6694
      %v6767 = vadd.f32 %v6547, %v6695
      %v6768 = vadd.f32 %v6548, %v6696
      %v6769 = vadd.f32 %v6549, %v6697
      %v6770 = vadd.f32 %v6550, %v6698
      %v6771 = vadd.f32 %v6551, %v6699
      %v6772 = vadd.f32 %v6552, %v6700
      %v6773 = vadd.f32 %v6553, %v6701
      %v6774 = vadd.f32 %v6554, %v6702
      %v6775 = vadd.f32 %v6555, %v6703
      %v6776 = vadd.f32 %v6556, %v6704
      %v6777 = vadd.f32 %v6557, %v6705
      %v6778 = vadd.f32 %v6558, %v6706
      %v6779 = vadd.f32 %v6559, %v6707
      %v6780 = vadd.f32 %v6560, %v6708
      %v6781 = vadd.f32 %v6561, %v6709
      %v6782 = vadd.f32 %v6562, %v6710
      %v6783 = vadd.f32 %v6563, %v6711
      %v6784 = vadd.f32 %v6564, %v6712
      %v6785 = vadd.f32 %v6565, %v6713
      %v6786 = vadd.f32 %v6566, %v6714
      %v6787 = vadd.f32 %v6567, %v6715
      %v6788 = vadd.f32 %v6568, %v6716
      %v6789 = vadd.f32 %v6569, %v6717
      %v6790 = vadd.f32 %v6570, %v6718
      %v6791 = vadd.f32 %v6571, %v6719
      %v6792 = vadd.f32 %v6572, %v6720
      %v6793 = vadd.f32 %v6573, %v6721
      %v6794 = vadd.f32 %v6574, %v6722
      %v6795 = vadd.f32 %v6575, %v6723
      %v6796 = vadd.f32 %v6576, %v6724
      %v6797 = vadd.f32 %v6577, %v6725
      %v6798 = vadd.f32 %v6578, %v6726
      %v6799 = vadd.f32 %v6579, %v6727
      %v6800 = vadd.f32 %v6580, %v6728
      %v6801 = vadd.f32 %v6581, %v6729
      %v6802 = vadd.f32 %v6582, %v6730
      %v6803 = vadd.f32 %v6583, %v6731
      %v6804 = vadd.f32 %v6584, %v6732
      %v6805 = vadd.f32 %v6585, %v6733
      %v6806 = vadd.f32 %v6586, %v6734
      %v6807 = vadd.f32 %v6587, %v6735
      %v6808 = vadd.f32 %v6588, %v6736
      %v6809 = vadd.f32 %v6589, %v6737
      %v6810 = vadd.f32 %v6590, %v6738
      %v6811 = vadd.f32 %v6591, %v6739
      %v6812 = vadd.f32 %v6592, %v6740
      %v6813 = vadd.f32 %v6593, %v6741
      %v6814 = vadd.f32 %v6594, %v6742
      %v6815 = vadd.f32 %v6595, %v6743
      %v6816 = vadd.f32 %v6596, %v6744
      %v6817 = vadd.f32 %v6597, %v6745
      %v6818 = vadd.f32 %v6598, %v6746
      %v6819 = vadd.f32 %v6599, %v6747
      %v6820 = vadd.f32 %v6600, %v6748
      %v6821 = vadd.f32 %v6601, %v6749
      %v6822 = vadd.f32 %v6602, %v6750
      %v6823 = vadd.f32 %v6603, %v6751
      %v6824 = vadd.f32 %v6604, %v6752
      %v6825 = vadd.f32 %v6605, %v6753
      %v6826 = vadd.f32 %v6606, %v6754
      %v6827 = vadd.f32 %v6607, %v6755
      %v6828 = vadd.f32 %v6608, %v6756
      %v6829 = vadd.f32 %v6609, %v6757
      %v6830 = vadd.f32 %v6610, %v6758
      %v6831 = vadd.f32 %v6611, %v6759
      %v6832 = vadd.f32 %v6612, %v6760
      %v6833 = vadd.f32 %v6613, %v6761
      %v6834 = vadd.f32 %v6614, %v6762
      %v6835 = vadd.f32 %v6615, %v6763
      %v6836 = vadd.f32 %v6616, %v6764
      %s6837 = scalar_lea.vmem [#allocation2], 64
      %v6838 = vld [vmem:[%s6837] sm:$0xff]
      %v6839 = vld [vmem:[%s6837 + $0x8] sm:$0xff]
      %v6840 = vld [vmem:[%s6837 + $0x10] sm:$0xff]
      %v6841 = vld [vmem:[%s6837 + $0x20] sm:$0xff]
      %v6842 = vld [vmem:[%s6837 + $0x28] sm:$0xff]
      %v6843 = vld [vmem:[%s6837 + $0x30] sm:$0xff]
      %v6844 = vld [vmem:[%s6837 + $0x40] sm:$0xff]
      %v6845 = vld [vmem:[%s6837 + $0x48] sm:$0xff]
      %v6846 = vld [vmem:[%s6837 + $0x50] sm:$0xff]
      %v6847 = vld [vmem:[%s6837 + $0x60] sm:$0xff]
      %v6848 = vld [vmem:[%s6837 + $0x68] sm:$0xff]
      %v6849 = vld [vmem:[%s6837 + $0x70] sm:$0xff]
      %v6850 = vld [vmem:[%s6837 + $0x80] sm:$0xff]
      %v6851 = vld [vmem:[%s6837 + $0x88] sm:$0xff]
      %v6852 = vld [vmem:[%s6837 + $0x90] sm:$0xff]
      %v6853 = vld [vmem:[%s6837 + $0xa0] sm:$0xff]
      %v6854 = vld [vmem:[%s6837 + $0xa8] sm:$0xff]
      %v6855 = vld [vmem:[%s6837 + $0xb0] sm:$0xff]
      %v6856 = vld [vmem:[%s6837 + $0xc0] sm:$0xff]
      %v6857 = vld [vmem:[%s6837 + $0xc8] sm:$0xff]
      %v6858 = vld [vmem:[%s6837 + $0xd0] sm:$0xff]
      %v6859 = vld [vmem:[%s6837 + $0xe0] sm:$0xff]
      %v6860 = vld [vmem:[%s6837 + $0xe8] sm:$0xff]
      %v6861 = vld [vmem:[%s6837 + $0xf0] sm:$0xff]
      %v6862 = vld [vmem:[%s6837 + $0x100] sm:$0xff]
      %v6863 = vld [vmem:[%s6837 + $0x108] sm:$0xff]
      %v6864 = vld [vmem:[%s6837 + $0x110] sm:$0xff]
      %v6865 = vld [vmem:[%s6837 + $0x120] sm:$0xff]
      %v6866 = vld [vmem:[%s6837 + $0x128] sm:$0xff]
      %v6867 = vld [vmem:[%s6837 + $0x130] sm:$0xff]
      %v6868 = vld [vmem:[%s6837 + $0x140] sm:$0xff]
      %v6869 = vld [vmem:[%s6837 + $0x148] sm:$0xff]
      %v6870 = vld [vmem:[%s6837 + $0x150] sm:$0xff]
      %v6871 = vld [vmem:[%s6837 + $0x160] sm:$0xff]
      %v6872 = vld [vmem:[%s6837 + $0x168] sm:$0xff]
      %v6873 = vld [vmem:[%s6837 + $0x170] sm:$0xff]
      %v6874 = vld [vmem:[%s6837 + $0x180] sm:$0xff]
      %v6875 = vld [vmem:[%s6837 + $0x188] sm:$0xff]
      %v6876 = vld [vmem:[%s6837 + $0x190] sm:$0xff]
      %v6877 = vld [vmem:[%s6837 + $0x1a0] sm:$0xff]
      %v6878 = vld [vmem:[%s6837 + $0x1a8] sm:$0xff]
      %v6879 = vld [vmem:[%s6837 + $0x1b0] sm:$0xff]
      %v6880 = vld [vmem:[%s6837 + $0x1c0] sm:$0xff]
      %v6881 = vld [vmem:[%s6837 + $0x1c8] sm:$0xff]
      %v6882 = vld [vmem:[%s6837 + $0x1d0] sm:$0xff]
      %v6883 = vld [vmem:[%s6837 + $0x1e0] sm:$0xff]
      %v6884 = vld [vmem:[%s6837 + $0x1e8] sm:$0xff]
      %v6885 = vld [vmem:[%s6837 + $0x1f0] sm:$0xff]
      %v6886 = vld [vmem:[%s6837 + $0x200] sm:$0xff]
      %v6887 = vld [vmem:[%s6837 + $0x208] sm:$0xff]
      %v6888 = vld [vmem:[%s6837 + $0x210] sm:$0xff]
      %v6889 = vld [vmem:[%s6837 + $0x220] sm:$0xff]
      %v6890 = vld [vmem:[%s6837 + $0x228] sm:$0xff]
      %v6891 = vld [vmem:[%s6837 + $0x230] sm:$0xff]
      %v6892 = vld [vmem:[%s6837 + $0x240] sm:$0xff]
      %v6893 = vld [vmem:[%s6837 + $0x248] sm:$0xff]
      %v6894 = vld [vmem:[%s6837 + $0x250] sm:$0xff]
      %v6895 = vld [vmem:[%s6837 + $0x260] sm:$0xff]
      %v6896 = vld [vmem:[%s6837 + $0x268] sm:$0xff]
      %v6897 = vld [vmem:[%s6837 + $0x270] sm:$0xff]
      %v6898 = vld [vmem:[%s6837 + $0x280] sm:$0xff]
      %v6899 = vld [vmem:[%s6837 + $0x288] sm:$0xff]
      %v6900 = vld [vmem:[%s6837 + $0x290] sm:$0xff]
      %v6901 = vld [vmem:[%s6837 + $0x2a0] sm:$0xff]
      %v6902 = vld [vmem:[%s6837 + $0x2a8] sm:$0xff]
      %v6903 = vld [vmem:[%s6837 + $0x2b0] sm:$0xff]
      %v6904 = vld [vmem:[%s6837 + $0x2c0] sm:$0xff]
      %v6905 = vld [vmem:[%s6837 + $0x2c8] sm:$0xff]
      %v6906 = vld [vmem:[%s6837 + $0x2d0] sm:$0xff]
      %v6907 = vld [vmem:[%s6837 + $0x2e0] sm:$0xff]
      %v6908 = vld [vmem:[%s6837 + $0x2e8] sm:$0xff]
      %v6909 = vld [vmem:[%s6837 + $0x2f0] sm:$0xff]
      %v6910 = vlaneseq
      %v6911 = vshrl.u32 %v6910, 7
      %v6912 = vsub.s32 0, %v6911
      %v6913 = vrot.slane %v5516, %v6912
      %v6914 = vmul.f32 %v6838, %v6913
      %v6915 = vmul.f32 %v6839, %v6913
      %v6916 = vmul.f32 %v6840, %v6913
      %v6917 = vmul.f32 %v6841, %v6913
      %v6918 = vmul.f32 %v6842, %v6913
      %v6919 = vmul.f32 %v6843, %v6913
      %v6920 = vmul.f32 %v6844, %v6913
      %v6921 = vmul.f32 %v6845, %v6913
      %v6922 = vmul.f32 %v6846, %v6913
      %v6923 = vmul.f32 %v6847, %v6913
      %v6924 = vmul.f32 %v6848, %v6913
      %v6925 = vmul.f32 %v6849, %v6913
      %v6926 = vmul.f32 %v6850, %v6913
      %v6927 = vmul.f32 %v6851, %v6913
      %v6928 = vmul.f32 %v6852, %v6913
      %v6929 = vmul.f32 %v6853, %v6913
      %v6930 = vmul.f32 %v6854, %v6913
      %v6931 = vmul.f32 %v6855, %v6913
      %v6932 = vmul.f32 %v6856, %v6913
      %v6933 = vmul.f32 %v6857, %v6913
      %v6934 = vmul.f32 %v6858, %v6913
      %v6935 = vmul.f32 %v6859, %v6913
      %v6936 = vmul.f32 %v6860, %v6913
      %v6937 = vmul.f32 %v6861, %v6913
      %v6938 = vmul.f32 %v6862, %v6913
      %v6939 = vmul.f32 %v6863, %v6913
      %v6940 = vmul.f32 %v6864, %v6913
      %v6941 = vmul.f32 %v6865, %v6913
      %v6942 = vmul.f32 %v6866, %v6913
      %v6943 = vmul.f32 %v6867, %v6913
      %v6944 = vmul.f32 %v6868, %v6913
      %v6945 = vmul.f32 %v6869, %v6913
      %v6946 = vmul.f32 %v6870, %v6913
      %v6947 = vmul.f32 %v6871, %v6913
      %v6948 = vmul.f32 %v6872, %v6913
      %v6949 = vmul.f32 %v6873, %v6913
      %v6950 = vmul.f32 %v6874, %v6913
      %v6951 = vmul.f32 %v6875, %v6913
      %v6952 = vmul.f32 %v6876, %v6913
      %v6953 = vmul.f32 %v6877, %v6913
      %v6954 = vmul.f32 %v6878, %v6913
      %v6955 = vmul.f32 %v6879, %v6913
      %v6956 = vmul.f32 %v6880, %v6913
      %v6957 = vmul.f32 %v6881, %v6913
      %v6958 = vmul.f32 %v6882, %v6913
      %v6959 = vmul.f32 %v6883, %v6913
      %v6960 = vmul.f32 %v6884, %v6913
      %v6961 = vmul.f32 %v6885, %v6913
      %v6962 = vmul.f32 %v6886, %v6913
      %v6963 = vmul.f32 %v6887, %v6913
      %v6964 = vmul.f32 %v6888, %v6913
      %v6965 = vmul.f32 %v6889, %v6913
      %v6966 = vmul.f32 %v6890, %v6913
      %v6967 = vmul.f32 %v6891, %v6913
      %v6968 = vmul.f32 %v6892, %v6913
      %v6969 = vmul.f32 %v6893, %v6913
      %v6970 = vmul.f32 %v6894, %v6913
      %v6971 = vmul.f32 %v6895, %v6913
      %v6972 = vmul.f32 %v6896, %v6913
      %v6973 = vmul.f32 %v6897, %v6913
      %v6974 = vmul.f32 %v6898, %v6913
      %v6975 = vmul.f32 %v6899, %v6913
      %v6976 = vmul.f32 %v6900, %v6913
      %v6977 = vmul.f32 %v6901, %v6913
      %v6978 = vmul.f32 %v6902, %v6913
      %v6979 = vmul.f32 %v6903, %v6913
      %v6980 = vmul.f32 %v6904, %v6913
      %v6981 = vmul.f32 %v6905, %v6913
      %v6982 = vmul.f32 %v6906, %v6913
      %v6983 = vmul.f32 %v6907, %v6913
      %v6984 = vmul.f32 %v6908, %v6913
      %v6985 = vmul.f32 %v6909, %v6913
      %v6986 = vadd.f32 %v6765, %v6914
      %v6987 = vadd.f32 %v6766, %v6915
      %v6988 = vadd.f32 %v6767, %v6916
      %v6989 = vadd.f32 %v6768, %v6917
      %v6990 = vadd.f32 %v6769, %v6918
      %v6991 = vadd.f32 %v6770, %v6919
      %v6992 = vadd.f32 %v6771, %v6920
      %v6993 = vadd.f32 %v6772, %v6921
      %v6994 = vadd.f32 %v6773, %v6922
      %v6995 = vadd.f32 %v6774, %v6923
      %v6996 = vadd.f32 %v6775, %v6924
      %v6997 = vadd.f32 %v6776, %v6925
      %v6998 = vadd.f32 %v6777, %v6926
      %v6999 = vadd.f32 %v6778, %v6927
      %v7000 = vadd.f32 %v6779, %v6928
      %v7001 = vadd.f32 %v6780, %v6929
      %v7002 = vadd.f32 %v6781, %v6930
      %v7003 = vadd.f32 %v6782, %v6931
      %v7004 = vadd.f32 %v6783, %v6932
      %v7005 = vadd.f32 %v6784, %v6933
      %v7006 = vadd.f32 %v6785, %v6934
      %v7007 = vadd.f32 %v6786, %v6935
      %v7008 = vadd.f32 %v6787, %v6936
      %v7009 = vadd.f32 %v6788, %v6937
      %v7010 = vadd.f32 %v6789, %v6938
      %v7011 = vadd.f32 %v6790, %v6939
      %v7012 = vadd.f32 %v6791, %v6940
      %v7013 = vadd.f32 %v6792, %v6941
      %v7014 = vadd.f32 %v6793, %v6942
      %v7015 = vadd.f32 %v6794, %v6943
      %v7016 = vadd.f32 %v6795, %v6944
      %v7017 = vadd.f32 %v6796, %v6945
      %v7018 = vadd.f32 %v6797, %v6946
      %v7019 = vadd.f32 %v6798, %v6947
      %v7020 = vadd.f32 %v6799, %v6948
      %v7021 = vadd.f32 %v6800, %v6949
      %v7022 = vadd.f32 %v6801, %v6950
      %v7023 = vadd.f32 %v6802, %v6951
      %v7024 = vadd.f32 %v6803, %v6952
      %v7025 = vadd.f32 %v6804, %v6953
      %v7026 = vadd.f32 %v6805, %v6954
      %v7027 = vadd.f32 %v6806, %v6955
      %v7028 = vadd.f32 %v6807, %v6956
      %v7029 = vadd.f32 %v6808, %v6957
      %v7030 = vadd.f32 %v6809, %v6958
      %v7031 = vadd.f32 %v6810, %v6959
      %v7032 = vadd.f32 %v6811, %v6960
      %v7033 = vadd.f32 %v6812, %v6961
      %v7034 = vadd.f32 %v6813, %v6962
      %v7035 = vadd.f32 %v6814, %v6963
      %v7036 = vadd.f32 %v6815, %v6964
      %v7037 = vadd.f32 %v6816, %v6965
      %v7038 = vadd.f32 %v6817, %v6966
      %v7039 = vadd.f32 %v6818, %v6967
      %v7040 = vadd.f32 %v6819, %v6968
      %v7041 = vadd.f32 %v6820, %v6969
      %v7042 = vadd.f32 %v6821, %v6970
      %v7043 = vadd.f32 %v6822, %v6971
      %v7044 = vadd.f32 %v6823, %v6972
      %v7045 = vadd.f32 %v6824, %v6973
      %v7046 = vadd.f32 %v6825, %v6974
      %v7047 = vadd.f32 %v6826, %v6975
      %v7048 = vadd.f32 %v6827, %v6976
      %v7049 = vadd.f32 %v6828, %v6977
      %v7050 = vadd.f32 %v6829, %v6978
      %v7051 = vadd.f32 %v6830, %v6979
      %v7052 = vadd.f32 %v6831, %v6980
      %v7053 = vadd.f32 %v6832, %v6981
      %v7054 = vadd.f32 %v6833, %v6982
      %v7055 = vadd.f32 %v6834, %v6983
      %v7056 = vadd.f32 %v6835, %v6984
      %v7057 = vadd.f32 %v6836, %v6985
      %v7058 = vld [vmem:[%s6837 + $0x1] sm:$0xff]
      %v7059 = vld [vmem:[%s6837 + $0x9] sm:$0xff]
      %v7060 = vld [vmem:[%s6837 + $0x11] sm:$0xff]
      %v7061 = vld [vmem:[%s6837 + $0x21] sm:$0xff]
      %v7062 = vld [vmem:[%s6837 + $0x29] sm:$0xff]
      %v7063 = vld [vmem:[%s6837 + $0x31] sm:$0xff]
      %v7064 = vld [vmem:[%s6837 + $0x41] sm:$0xff]
      %v7065 = vld [vmem:[%s6837 + $0x49] sm:$0xff]
      %v7066 = vld [vmem:[%s6837 + $0x51] sm:$0xff]
      %v7067 = vld [vmem:[%s6837 + $0x61] sm:$0xff]
      %v7068 = vld [vmem:[%s6837 + $0x69] sm:$0xff]
      %v7069 = vld [vmem:[%s6837 + $0x71] sm:$0xff]
      %v7070 = vld [vmem:[%s6837 + $0x81] sm:$0xff]
      %v7071 = vld [vmem:[%s6837 + $0x89] sm:$0xff]
      %v7072 = vld [vmem:[%s6837 + $0x91] sm:$0xff]
      %v7073 = vld [vmem:[%s6837 + $0xa1] sm:$0xff]
      %v7074 = vld [vmem:[%s6837 + $0xa9] sm:$0xff]
      %v7075 = vld [vmem:[%s6837 + $0xb1] sm:$0xff]
      %v7076 = vld [vmem:[%s6837 + $0xc1] sm:$0xff]
      %v7077 = vld [vmem:[%s6837 + $0xc9] sm:$0xff]
      %v7078 = vld [vmem:[%s6837 + $0xd1] sm:$0xff]
      %v7079 = vld [vmem:[%s6837 + $0xe1] sm:$0xff]
      %v7080 = vld [vmem:[%s6837 + $0xe9] sm:$0xff]
      %v7081 = vld [vmem:[%s6837 + $0xf1] sm:$0xff]
      %v7082 = vld [vmem:[%s6837 + $0x101] sm:$0xff]
      %v7083 = vld [vmem:[%s6837 + $0x109] sm:$0xff]
      %v7084 = vld [vmem:[%s6837 + $0x111] sm:$0xff]
      %v7085 = vld [vmem:[%s6837 + $0x121] sm:$0xff]
      %v7086 = vld [vmem:[%s6837 + $0x129] sm:$0xff]
      %v7087 = vld [vmem:[%s6837 + $0x131] sm:$0xff]
      %v7088 = vld [vmem:[%s6837 + $0x141] sm:$0xff]
      %v7089 = vld [vmem:[%s6837 + $0x149] sm:$0xff]
      %v7090 = vld [vmem:[%s6837 + $0x151] sm:$0xff]
      %v7091 = vld [vmem:[%s6837 + $0x161] sm:$0xff]
      %v7092 = vld [vmem:[%s6837 + $0x169] sm:$0xff]
      %v7093 = vld [vmem:[%s6837 + $0x171] sm:$0xff]
      %v7094 = vld [vmem:[%s6837 + $0x181] sm:$0xff]
      %v7095 = vld [vmem:[%s6837 + $0x189] sm:$0xff]
      %v7096 = vld [vmem:[%s6837 + $0x191] sm:$0xff]
      %v7097 = vld [vmem:[%s6837 + $0x1a1] sm:$0xff]
      %v7098 = vld [vmem:[%s6837 + $0x1a9] sm:$0xff]
      %v7099 = vld [vmem:[%s6837 + $0x1b1] sm:$0xff]
      %v7100 = vld [vmem:[%s6837 + $0x1c1] sm:$0xff]
      %v7101 = vld [vmem:[%s6837 + $0x1c9] sm:$0xff]
      %v7102 = vld [vmem:[%s6837 + $0x1d1] sm:$0xff]
      %v7103 = vld [vmem:[%s6837 + $0x1e1] sm:$0xff]
      %v7104 = vld [vmem:[%s6837 + $0x1e9] sm:$0xff]
      %v7105 = vld [vmem:[%s6837 + $0x1f1] sm:$0xff]
      %v7106 = vld [vmem:[%s6837 + $0x201] sm:$0xff]
      %v7107 = vld [vmem:[%s6837 + $0x209] sm:$0xff]
      %v7108 = vld [vmem:[%s6837 + $0x211] sm:$0xff]
      %v7109 = vld [vmem:[%s6837 + $0x221] sm:$0xff]
      %v7110 = vld [vmem:[%s6837 + $0x229] sm:$0xff]
      %v7111 = vld [vmem:[%s6837 + $0x231] sm:$0xff]
      %v7112 = vld [vmem:[%s6837 + $0x241] sm:$0xff]
      %v7113 = vld [vmem:[%s6837 + $0x249] sm:$0xff]
      %v7114 = vld [vmem:[%s6837 + $0x251] sm:$0xff]
      %v7115 = vld [vmem:[%s6837 + $0x261] sm:$0xff]
      %v7116 = vld [vmem:[%s6837 + $0x269] sm:$0xff]
      %v7117 = vld [vmem:[%s6837 + $0x271] sm:$0xff]
      %v7118 = vld [vmem:[%s6837 + $0x281] sm:$0xff]
      %v7119 = vld [vmem:[%s6837 + $0x289] sm:$0xff]
      %v7120 = vld [vmem:[%s6837 + $0x291] sm:$0xff]
      %v7121 = vld [vmem:[%s6837 + $0x2a1] sm:$0xff]
      %v7122 = vld [vmem:[%s6837 + $0x2a9] sm:$0xff]
      %v7123 = vld [vmem:[%s6837 + $0x2b1] sm:$0xff]
      %v7124 = vld [vmem:[%s6837 + $0x2c1] sm:$0xff]
      %v7125 = vld [vmem:[%s6837 + $0x2c9] sm:$0xff]
      %v7126 = vld [vmem:[%s6837 + $0x2d1] sm:$0xff]
      %v7127 = vld [vmem:[%s6837 + $0x2e1] sm:$0xff]
      %v7128 = vld [vmem:[%s6837 + $0x2e9] sm:$0xff]
      %v7129 = vld [vmem:[%s6837 + $0x2f1] sm:$0xff]
      %v7130 = vlaneseq
      %v7131 = vshrl.u32 %v7130, 7
      %v7132 = vsub.s32 1, %v7131
      %v7133 = vrot.slane %v5516, %v7132
      %v7134 = vmul.f32 %v7058, %v7133
      %v7135 = vmul.f32 %v7059, %v7133
      %v7136 = vmul.f32 %v7060, %v7133
      %v7137 = vmul.f32 %v7061, %v7133
      %v7138 = vmul.f32 %v7062, %v7133
      %v7139 = vmul.f32 %v7063, %v7133
      %v7140 = vmul.f32 %v7064, %v7133
      %v7141 = vmul.f32 %v7065, %v7133
      %v7142 = vmul.f32 %v7066, %v7133
      %v7143 = vmul.f32 %v7067, %v7133
      %v7144 = vmul.f32 %v7068, %v7133
      %v7145 = vmul.f32 %v7069, %v7133
      %v7146 = vmul.f32 %v7070, %v7133
      %v7147 = vmul.f32 %v7071, %v7133
      %v7148 = vmul.f32 %v7072, %v7133
      %v7149 = vmul.f32 %v7073, %v7133
      %v7150 = vmul.f32 %v7074, %v7133
      %v7151 = vmul.f32 %v7075, %v7133
      %v7152 = vmul.f32 %v7076, %v7133
      %v7153 = vmul.f32 %v7077, %v7133
      %v7154 = vmul.f32 %v7078, %v7133
      %v7155 = vmul.f32 %v7079, %v7133
      %v7156 = vmul.f32 %v7080, %v7133
      %v7157 = vmul.f32 %v7081, %v7133
      %v7158 = vmul.f32 %v7082, %v7133
      %v7159 = vmul.f32 %v7083, %v7133
      %v7160 = vmul.f32 %v7084, %v7133
      %v7161 = vmul.f32 %v7085, %v7133
      %v7162 = vmul.f32 %v7086, %v7133
      %v7163 = vmul.f32 %v7087, %v7133
      %v7164 = vmul.f32 %v7088, %v7133
      %v7165 = vmul.f32 %v7089, %v7133
      %v7166 = vmul.f32 %v7090, %v7133
      %v7167 = vmul.f32 %v7091, %v7133
      %v7168 = vmul.f32 %v7092, %v7133
      %v7169 = vmul.f32 %v7093, %v7133
      %v7170 = vmul.f32 %v7094, %v7133
      %v7171 = vmul.f32 %v7095, %v7133
      %v7172 = vmul.f32 %v7096, %v7133
      %v7173 = vmul.f32 %v7097, %v7133
      %v7174 = vmul.f32 %v7098, %v7133
      %v7175 = vmul.f32 %v7099, %v7133
      %v7176 = vmul.f32 %v7100, %v7133
      %v7177 = vmul.f32 %v7101, %v7133
      %v7178 = vmul.f32 %v7102, %v7133
      %v7179 = vmul.f32 %v7103, %v7133
      %v7180 = vmul.f32 %v7104, %v7133
      %v7181 = vmul.f32 %v7105, %v7133
      %v7182 = vmul.f32 %v7106, %v7133
      %v7183 = vmul.f32 %v7107, %v7133
      %v7184 = vmul.f32 %v7108, %v7133
      %v7185 = vmul.f32 %v7109, %v7133
      %v7186 = vmul.f32 %v7110, %v7133
      %v7187 = vmul.f32 %v7111, %v7133
      %v7188 = vmul.f32 %v7112, %v7133
      %v7189 = vmul.f32 %v7113, %v7133
      %v7190 = vmul.f32 %v7114, %v7133
      %v7191 = vmul.f32 %v7115, %v7133
      %v7192 = vmul.f32 %v7116, %v7133
      %v7193 = vmul.f32 %v7117, %v7133
      %v7194 = vmul.f32 %v7118, %v7133
      %v7195 = vmul.f32 %v7119, %v7133
      %v7196 = vmul.f32 %v7120, %v7133
      %v7197 = vmul.f32 %v7121, %v7133
      %v7198 = vmul.f32 %v7122, %v7133
      %v7199 = vmul.f32 %v7123, %v7133
      %v7200 = vmul.f32 %v7124, %v7133
      %v7201 = vmul.f32 %v7125, %v7133
      %v7202 = vmul.f32 %v7126, %v7133
      %v7203 = vmul.f32 %v7127, %v7133
      %v7204 = vmul.f32 %v7128, %v7133
      %v7205 = vmul.f32 %v7129, %v7133
      %v7206 = vadd.f32 %v6986, %v7134
      %v7207 = vadd.f32 %v6987, %v7135
      %v7208 = vadd.f32 %v6988, %v7136
      %v7209 = vadd.f32 %v6989, %v7137
      %v7210 = vadd.f32 %v6990, %v7138
      %v7211 = vadd.f32 %v6991, %v7139
      %v7212 = vadd.f32 %v6992, %v7140
      %v7213 = vadd.f32 %v6993, %v7141
      %v7214 = vadd.f32 %v6994, %v7142
      %v7215 = vadd.f32 %v6995, %v7143
      %v7216 = vadd.f32 %v6996, %v7144
      %v7217 = vadd.f32 %v6997, %v7145
      %v7218 = vadd.f32 %v6998, %v7146
      %v7219 = vadd.f32 %v6999, %v7147
      %v7220 = vadd.f32 %v7000, %v7148
      %v7221 = vadd.f32 %v7001, %v7149
      %v7222 = vadd.f32 %v7002, %v7150
      %v7223 = vadd.f32 %v7003, %v7151
      %v7224 = vadd.f32 %v7004, %v7152
      %v7225 = vadd.f32 %v7005, %v7153
      %v7226 = vadd.f32 %v7006, %v7154
      %v7227 = vadd.f32 %v7007, %v7155
      %v7228 = vadd.f32 %v7008, %v7156
      %v7229 = vadd.f32 %v7009, %v7157
      %v7230 = vadd.f32 %v7010, %v7158
      %v7231 = vadd.f32 %v7011, %v7159
      %v7232 = vadd.f32 %v7012, %v7160
      %v7233 = vadd.f32 %v7013, %v7161
      %v7234 = vadd.f32 %v7014, %v7162
      %v7235 = vadd.f32 %v7015, %v7163
      %v7236 = vadd.f32 %v7016, %v7164
      %v7237 = vadd.f32 %v7017, %v7165
      %v7238 = vadd.f32 %v7018, %v7166
      %v7239 = vadd.f32 %v7019, %v7167
      %v7240 = vadd.f32 %v7020, %v7168
      %v7241 = vadd.f32 %v7021, %v7169
      %v7242 = vadd.f32 %v7022, %v7170
      %v7243 = vadd.f32 %v7023, %v7171
      %v7244 = vadd.f32 %v7024, %v7172
      %v7245 = vadd.f32 %v7025, %v7173
      %v7246 = vadd.f32 %v7026, %v7174
      %v7247 = vadd.f32 %v7027, %v7175
      %v7248 = vadd.f32 %v7028, %v7176
      %v7249 = vadd.f32 %v7029, %v7177
      %v7250 = vadd.f32 %v7030, %v7178
      %v7251 = vadd.f32 %v7031, %v7179
      %v7252 = vadd.f32 %v7032, %v7180
      %v7253 = vadd.f32 %v7033, %v7181
      %v7254 = vadd.f32 %v7034, %v7182
      %v7255 = vadd.f32 %v7035, %v7183
      %v7256 = vadd.f32 %v7036, %v7184
      %v7257 = vadd.f32 %v7037, %v7185
      %v7258 = vadd.f32 %v7038, %v7186
      %v7259 = vadd.f32 %v7039, %v7187
      %v7260 = vadd.f32 %v7040, %v7188
      %v7261 = vadd.f32 %v7041, %v7189
      %v7262 = vadd.f32 %v7042, %v7190
      %v7263 = vadd.f32 %v7043, %v7191
      %v7264 = vadd.f32 %v7044, %v7192
      %v7265 = vadd.f32 %v7045, %v7193
      %v7266 = vadd.f32 %v7046, %v7194
      %v7267 = vadd.f32 %v7047, %v7195
      %v7268 = vadd.f32 %v7048, %v7196
      %v7269 = vadd.f32 %v7049, %v7197
      %v7270 = vadd.f32 %v7050, %v7198
      %v7271 = vadd.f32 %v7051, %v7199
      %v7272 = vadd.f32 %v7052, %v7200
      %v7273 = vadd.f32 %v7053, %v7201
      %v7274 = vadd.f32 %v7054, %v7202
      %v7275 = vadd.f32 %v7055, %v7203
      %v7276 = vadd.f32 %v7056, %v7204
      %v7277 = vadd.f32 %v7057, %v7205
      %v7278 = vld [vmem:[%s6837 + $0x2] sm:$0xff]
      %v7279 = vld [vmem:[%s6837 + $0xa] sm:$0xff]
      %v7280 = vld [vmem:[%s6837 + $0x12] sm:$0xff]
      %v7281 = vld [vmem:[%s6837 + $0x22] sm:$0xff]
      %v7282 = vld [vmem:[%s6837 + $0x2a] sm:$0xff]
      %v7283 = vld [vmem:[%s6837 + $0x32] sm:$0xff]
      %v7284 = vld [vmem:[%s6837 + $0x42] sm:$0xff]
      %v7285 = vld [vmem:[%s6837 + $0x4a] sm:$0xff]
      %v7286 = vld [vmem:[%s6837 + $0x52] sm:$0xff]
      %v7287 = vld [vmem:[%s6837 + $0x62] sm:$0xff]
      %v7288 = vld [vmem:[%s6837 + $0x6a] sm:$0xff]
      %v7289 = vld [vmem:[%s6837 + $0x72] sm:$0xff]
      %v7290 = vld [vmem:[%s6837 + $0x82] sm:$0xff]
      %v7291 = vld [vmem:[%s6837 + $0x8a] sm:$0xff]
      %v7292 = vld [vmem:[%s6837 + $0x92] sm:$0xff]
      %v7293 = vld [vmem:[%s6837 + $0xa2] sm:$0xff]
      %v7294 = vld [vmem:[%s6837 + $0xaa] sm:$0xff]
      %v7295 = vld [vmem:[%s6837 + $0xb2] sm:$0xff]
      %v7296 = vld [vmem:[%s6837 + $0xc2] sm:$0xff]
      %v7297 = vld [vmem:[%s6837 + $0xca] sm:$0xff]
      %v7298 = vld [vmem:[%s6837 + $0xd2] sm:$0xff]
      %v7299 = vld [vmem:[%s6837 + $0xe2] sm:$0xff]
      %v7300 = vld [vmem:[%s6837 + $0xea] sm:$0xff]
      %v7301 = vld [vmem:[%s6837 + $0xf2] sm:$0xff]
      %v7302 = vld [vmem:[%s6837 + $0x102] sm:$0xff]
      %v7303 = vld [vmem:[%s6837 + $0x10a] sm:$0xff]
      %v7304 = vld [vmem:[%s6837 + $0x112] sm:$0xff]
      %v7305 = vld [vmem:[%s6837 + $0x122] sm:$0xff]
      %v7306 = vld [vmem:[%s6837 + $0x12a] sm:$0xff]
      %v7307 = vld [vmem:[%s6837 + $0x132] sm:$0xff]
      %v7308 = vld [vmem:[%s6837 + $0x142] sm:$0xff]
      %v7309 = vld [vmem:[%s6837 + $0x14a] sm:$0xff]
      %v7310 = vld [vmem:[%s6837 + $0x152] sm:$0xff]
      %v7311 = vld [vmem:[%s6837 + $0x162] sm:$0xff]
      %v7312 = vld [vmem:[%s6837 + $0x16a] sm:$0xff]
      %v7313 = vld [vmem:[%s6837 + $0x172] sm:$0xff]
      %v7314 = vld [vmem:[%s6837 + $0x182] sm:$0xff]
      %v7315 = vld [vmem:[%s6837 + $0x18a] sm:$0xff]
      %v7316 = vld [vmem:[%s6837 + $0x192] sm:$0xff]
      %v7317 = vld [vmem:[%s6837 + $0x1a2] sm:$0xff]
      %v7318 = vld [vmem:[%s6837 + $0x1aa] sm:$0xff]
      %v7319 = vld [vmem:[%s6837 + $0x1b2] sm:$0xff]
      %v7320 = vld [vmem:[%s6837 + $0x1c2] sm:$0xff]
      %v7321 = vld [vmem:[%s6837 + $0x1ca] sm:$0xff]
      %v7322 = vld [vmem:[%s6837 + $0x1d2] sm:$0xff]
      %v7323 = vld [vmem:[%s6837 + $0x1e2] sm:$0xff]
      %v7324 = vld [vmem:[%s6837 + $0x1ea] sm:$0xff]
      %v7325 = vld [vmem:[%s6837 + $0x1f2] sm:$0xff]
      %v7326 = vld [vmem:[%s6837 + $0x202] sm:$0xff]
      %v7327 = vld [vmem:[%s6837 + $0x20a] sm:$0xff]
      %v7328 = vld [vmem:[%s6837 + $0x212] sm:$0xff]
      %v7329 = vld [vmem:[%s6837 + $0x222] sm:$0xff]
      %v7330 = vld [vmem:[%s6837 + $0x22a] sm:$0xff]
      %v7331 = vld [vmem:[%s6837 + $0x232] sm:$0xff]
      %v7332 = vld [vmem:[%s6837 + $0x242] sm:$0xff]
      %v7333 = vld [vmem:[%s6837 + $0x24a] sm:$0xff]
      %v7334 = vld [vmem:[%s6837 + $0x252] sm:$0xff]
      %v7335 = vld [vmem:[%s6837 + $0x262] sm:$0xff]
      %v7336 = vld [vmem:[%s6837 + $0x26a] sm:$0xff]
      %v7337 = vld [vmem:[%s6837 + $0x272] sm:$0xff]
      %v7338 = vld [vmem:[%s6837 + $0x282] sm:$0xff]
      %v7339 = vld [vmem:[%s6837 + $0x28a] sm:$0xff]
      %v7340 = vld [vmem:[%s6837 + $0x292] sm:$0xff]
      %v7341 = vld [vmem:[%s6837 + $0x2a2] sm:$0xff]
      %v7342 = vld [vmem:[%s6837 + $0x2aa] sm:$0xff]
      %v7343 = vld [vmem:[%s6837 + $0x2b2] sm:$0xff]
      %v7344 = vld [vmem:[%s6837 + $0x2c2] sm:$0xff]
      %v7345 = vld [vmem:[%s6837 + $0x2ca] sm:$0xff]
      %v7346 = vld [vmem:[%s6837 + $0x2d2] sm:$0xff]
      %v7347 = vld [vmem:[%s6837 + $0x2e2] sm:$0xff]
      %v7348 = vld [vmem:[%s6837 + $0x2ea] sm:$0xff]
      %v7349 = vld [vmem:[%s6837 + $0x2f2] sm:$0xff]
      %v7350 = vlaneseq
      %v7351 = vshrl.u32 %v7350, 7
      %v7352 = vsub.s32 2, %v7351
      %v7353 = vrot.slane %v5516, %v7352
      %v7354 = vmul.f32 %v7278, %v7353
      %v7355 = vmul.f32 %v7279, %v7353
      %v7356 = vmul.f32 %v7280, %v7353
      %v7357 = vmul.f32 %v7281, %v7353
      %v7358 = vmul.f32 %v7282, %v7353
      %v7359 = vmul.f32 %v7283, %v7353
      %v7360 = vmul.f32 %v7284, %v7353
      %v7361 = vmul.f32 %v7285, %v7353
      %v7362 = vmul.f32 %v7286, %v7353
      %v7363 = vmul.f32 %v7287, %v7353
      %v7364 = vmul.f32 %v7288, %v7353
      %v7365 = vmul.f32 %v7289, %v7353
      %v7366 = vmul.f32 %v7290, %v7353
      %v7367 = vmul.f32 %v7291, %v7353
      %v7368 = vmul.f32 %v7292, %v7353
      %v7369 = vmul.f32 %v7293, %v7353
      %v7370 = vmul.f32 %v7294, %v7353
      %v7371 = vmul.f32 %v7295, %v7353
      %v7372 = vmul.f32 %v7296, %v7353
      %v7373 = vmul.f32 %v7297, %v7353
      %v7374 = vmul.f32 %v7298, %v7353
      %v7375 = vmul.f32 %v7299, %v7353
      %v7376 = vmul.f32 %v7300, %v7353
      %v7377 = vmul.f32 %v7301, %v7353
      %v7378 = vmul.f32 %v7302, %v7353
      %v7379 = vmul.f32 %v7303, %v7353
      %v7380 = vmul.f32 %v7304, %v7353
      %v7381 = vmul.f32 %v7305, %v7353
      %v7382 = vmul.f32 %v7306, %v7353
      %v7383 = vmul.f32 %v7307, %v7353
      %v7384 = vmul.f32 %v7308, %v7353
      %v7385 = vmul.f32 %v7309, %v7353
      %v7386 = vmul.f32 %v7310, %v7353
      %v7387 = vmul.f32 %v7311, %v7353
      %v7388 = vmul.f32 %v7312, %v7353
      %v7389 = vmul.f32 %v7313, %v7353
      %v7390 = vmul.f32 %v7314, %v7353
      %v7391 = vmul.f32 %v7315, %v7353
      %v7392 = vmul.f32 %v7316, %v7353
      %v7393 = vmul.f32 %v7317, %v7353
      %v7394 = vmul.f32 %v7318, %v7353
      %v7395 = vmul.f32 %v7319, %v7353
      %v7396 = vmul.f32 %v7320, %v7353
      %v7397 = vmul.f32 %v7321, %v7353
      %v7398 = vmul.f32 %v7322, %v7353
      %v7399 = vmul.f32 %v7323, %v7353
      %v7400 = vmul.f32 %v7324, %v7353
      %v7401 = vmul.f32 %v7325, %v7353
      %v7402 = vmul.f32 %v7326, %v7353
      %v7403 = vmul.f32 %v7327, %v7353
      %v7404 = vmul.f32 %v7328, %v7353
      %v7405 = vmul.f32 %v7329, %v7353
      %v7406 = vmul.f32 %v7330, %v7353
      %v7407 = vmul.f32 %v7331, %v7353
      %v7408 = vmul.f32 %v7332, %v7353
      %v7409 = vmul.f32 %v7333, %v7353
      %v7410 = vmul.f32 %v7334, %v7353
      %v7411 = vmul.f32 %v7335, %v7353
      %v7412 = vmul.f32 %v7336, %v7353
      %v7413 = vmul.f32 %v7337, %v7353
      %v7414 = vmul.f32 %v7338, %v7353
      %v7415 = vmul.f32 %v7339, %v7353
      %v7416 = vmul.f32 %v7340, %v7353
      %v7417 = vmul.f32 %v7341, %v7353
      %v7418 = vmul.f32 %v7342, %v7353
      %v7419 = vmul.f32 %v7343, %v7353
      %v7420 = vmul.f32 %v7344, %v7353
      %v7421 = vmul.f32 %v7345, %v7353
      %v7422 = vmul.f32 %v7346, %v7353
      %v7423 = vmul.f32 %v7347, %v7353
      %v7424 = vmul.f32 %v7348, %v7353
      %v7425 = vmul.f32 %v7349, %v7353
      %v7426 = vadd.f32 %v7206, %v7354
      %v7427 = vadd.f32 %v7207, %v7355
      %v7428 = vadd.f32 %v7208, %v7356
      %v7429 = vadd.f32 %v7209, %v7357
      %v7430 = vadd.f32 %v7210, %v7358
      %v7431 = vadd.f32 %v7211, %v7359
      %v7432 = vadd.f32 %v7212, %v7360
      %v7433 = vadd.f32 %v7213, %v7361
      %v7434 = vadd.f32 %v7214, %v7362
      %v7435 = vadd.f32 %v7215, %v7363
      %v7436 = vadd.f32 %v7216, %v7364
      %v7437 = vadd.f32 %v7217, %v7365
      %v7438 = vadd.f32 %v7218, %v7366
      %v7439 = vadd.f32 %v7219, %v7367
      %v7440 = vadd.f32 %v7220, %v7368
      %v7441 = vadd.f32 %v7221, %v7369
      %v7442 = vadd.f32 %v7222, %v7370
      %v7443 = vadd.f32 %v7223, %v7371
      %v7444 = vadd.f32 %v7224, %v7372
      %v7445 = vadd.f32 %v7225, %v7373
      %v7446 = vadd.f32 %v7226, %v7374
      %v7447 = vadd.f32 %v7227, %v7375
      %v7448 = vadd.f32 %v7228, %v7376
      %v7449 = vadd.f32 %v7229, %v7377
      %v7450 = vadd.f32 %v7230, %v7378
      %v7451 = vadd.f32 %v7231, %v7379
      %v7452 = vadd.f32 %v7232, %v7380
      %v7453 = vadd.f32 %v7233, %v7381
      %v7454 = vadd.f32 %v7234, %v7382
      %v7455 = vadd.f32 %v7235, %v7383
      %v7456 = vadd.f32 %v7236, %v7384
      %v7457 = vadd.f32 %v7237, %v7385
      %v7458 = vadd.f32 %v7238, %v7386
      %v7459 = vadd.f32 %v7239, %v7387
      %v7460 = vadd.f32 %v7240, %v7388
      %v7461 = vadd.f32 %v7241, %v7389
      %v7462 = vadd.f32 %v7242, %v7390
      %v7463 = vadd.f32 %v7243, %v7391
      %v7464 = vadd.f32 %v7244, %v7392
      %v7465 = vadd.f32 %v7245, %v7393
      %v7466 = vadd.f32 %v7246, %v7394
      %v7467 = vadd.f32 %v7247, %v7395
      %v7468 = vadd.f32 %v7248, %v7396
      %v7469 = vadd.f32 %v7249, %v7397
      %v7470 = vadd.f32 %v7250, %v7398
      %v7471 = vadd.f32 %v7251, %v7399
      %v7472 = vadd.f32 %v7252, %v7400
      %v7473 = vadd.f32 %v7253, %v7401
      %v7474 = vadd.f32 %v7254, %v7402
      %v7475 = vadd.f32 %v7255, %v7403
      %v7476 = vadd.f32 %v7256, %v7404
      %v7477 = vadd.f32 %v7257, %v7405
      %v7478 = vadd.f32 %v7258, %v7406
      %v7479 = vadd.f32 %v7259, %v7407
      %v7480 = vadd.f32 %v7260, %v7408
      %v7481 = vadd.f32 %v7261, %v7409
      %v7482 = vadd.f32 %v7262, %v7410
      %v7483 = vadd.f32 %v7263, %v7411
      %v7484 = vadd.f32 %v7264, %v7412
      %v7485 = vadd.f32 %v7265, %v7413
      %v7486 = vadd.f32 %v7266, %v7414
      %v7487 = vadd.f32 %v7267, %v7415
      %v7488 = vadd.f32 %v7268, %v7416
      %v7489 = vadd.f32 %v7269, %v7417
      %v7490 = vadd.f32 %v7270, %v7418
      %v7491 = vadd.f32 %v7271, %v7419
      %v7492 = vadd.f32 %v7272, %v7420
      %v7493 = vadd.f32 %v7273, %v7421
      %v7494 = vadd.f32 %v7274, %v7422
      %v7495 = vadd.f32 %v7275, %v7423
      %v7496 = vadd.f32 %v7276, %v7424
      %v7497 = vadd.f32 %v7277, %v7425
      %v7498 = vld [vmem:[%s7] sm:$0x1]
      %v7500 = vlaneseq
      %v7501 = vshrl.u32 %v7500, 7
      %v7502 = vsub.s32 0, %v7501
      %v7503 = vrot.slane %v7498, %v7502
      %v7505 = vadd.f32 %v7426, %v7503
      %v7506 = vadd.f32 %v7427, %v7503
      %v7507 = vadd.f32 %v7428, %v7503
      %v7508 = vadd.f32 %v7429, %v7503
      %v7509 = vadd.f32 %v7430, %v7503
      %v7510 = vadd.f32 %v7431, %v7503
      %v7511 = vadd.f32 %v7432, %v7503
      %v7512 = vadd.f32 %v7433, %v7503
      %v7513 = vadd.f32 %v7434, %v7503
      %v7514 = vadd.f32 %v7435, %v7503
      %v7515 = vadd.f32 %v7436, %v7503
      %v7516 = vadd.f32 %v7437, %v7503
      %v7517 = vadd.f32 %v7438, %v7503
      %v7518 = vadd.f32 %v7439, %v7503
      %v7519 = vadd.f32 %v7440, %v7503
      %v7520 = vadd.f32 %v7441, %v7503
      %v7521 = vadd.f32 %v7442, %v7503
      %v7522 = vadd.f32 %v7443, %v7503
      %v7523 = vadd.f32 %v7444, %v7503
      %v7524 = vadd.f32 %v7445, %v7503
      %v7525 = vadd.f32 %v7446, %v7503
      %v7526 = vadd.f32 %v7447, %v7503
      %v7527 = vadd.f32 %v7448, %v7503
      %v7528 = vadd.f32 %v7449, %v7503
      %v7529 = vadd.f32 %v7450, %v7503
      %v7530 = vadd.f32 %v7451, %v7503
      %v7531 = vadd.f32 %v7452, %v7503
      %v7532 = vadd.f32 %v7453, %v7503
      %v7533 = vadd.f32 %v7454, %v7503
      %v7534 = vadd.f32 %v7455, %v7503
      %v7535 = vadd.f32 %v7456, %v7503
      %v7536 = vadd.f32 %v7457, %v7503
      %v7537 = vadd.f32 %v7458, %v7503
      %v7538 = vadd.f32 %v7459, %v7503
      %v7539 = vadd.f32 %v7460, %v7503
      %v7540 = vadd.f32 %v7461, %v7503
      %v7541 = vadd.f32 %v7462, %v7503
      %v7542 = vadd.f32 %v7463, %v7503
      %v7543 = vadd.f32 %v7464, %v7503
      %v7544 = vadd.f32 %v7465, %v7503
      %v7545 = vadd.f32 %v7466, %v7503
      %v7546 = vadd.f32 %v7467, %v7503
      %v7547 = vadd.f32 %v7468, %v7503
      %v7548 = vadd.f32 %v7469, %v7503
      %v7549 = vadd.f32 %v7470, %v7503
      %v7550 = vadd.f32 %v7471, %v7503
      %v7551 = vadd.f32 %v7472, %v7503
      %v7552 = vadd.f32 %v7473, %v7503
      %v7553 = vadd.f32 %v7474, %v7503
      %v7554 = vadd.f32 %v7475, %v7503
      %v7555 = vadd.f32 %v7476, %v7503
      %v7556 = vadd.f32 %v7477, %v7503
      %v7557 = vadd.f32 %v7478, %v7503
      %v7558 = vadd.f32 %v7479, %v7503
      %v7559 = vadd.f32 %v7480, %v7503
      %v7560 = vadd.f32 %v7481, %v7503
      %v7561 = vadd.f32 %v7482, %v7503
      %v7562 = vadd.f32 %v7483, %v7503
      %v7563 = vadd.f32 %v7484, %v7503
      %v7564 = vadd.f32 %v7485, %v7503
      %v7565 = vadd.f32 %v7486, %v7503
      %v7566 = vadd.f32 %v7487, %v7503
      %v7567 = vadd.f32 %v7488, %v7503
      %v7568 = vadd.f32 %v7489, %v7503
      %v7569 = vadd.f32 %v7490, %v7503
      %v7570 = vadd.f32 %v7491, %v7503
      %v7571 = vadd.f32 %v7492, %v7503
      %v7572 = vadd.f32 %v7493, %v7503
      %v7573 = vadd.f32 %v7494, %v7503
      %v7574 = vadd.f32 %v7495, %v7503
      %v7575 = vadd.f32 %v7496, %v7503
      %v7576 = vadd.f32 %v7497, %v7503
      %v7577 = vxor.u32 %v7505, 2147483648
      %v7578 = vxor.u32 %v7506, 2147483648
      %v7579 = vxor.u32 %v7507, 2147483648
      %v7580 = vxor.u32 %v7508, 2147483648
      %v7581 = vxor.u32 %v7509, 2147483648
      %v7582 = vxor.u32 %v7510, 2147483648
      %v7583 = vxor.u32 %v7511, 2147483648
      %v7584 = vxor.u32 %v7512, 2147483648
      %v7585 = vxor.u32 %v7513, 2147483648
      %v7586 = vxor.u32 %v7514, 2147483648
      %v7587 = vxor.u32 %v7515, 2147483648
      %v7588 = vxor.u32 %v7516, 2147483648
      %v7589 = vxor.u32 %v7517, 2147483648
      %v7590 = vxor.u32 %v7518, 2147483648
      %v7591 = vxor.u32 %v7519, 2147483648
      %v7592 = vxor.u32 %v7520, 2147483648
      %v7593 = vxor.u32 %v7521, 2147483648
      %v7594 = vxor.u32 %v7522, 2147483648
      %v7595 = vxor.u32 %v7523, 2147483648
      %v7596 = vxor.u32 %v7524, 2147483648
      %v7597 = vxor.u32 %v7525, 2147483648
      %v7598 = vxor.u32 %v7526, 2147483648
      %v7599 = vxor.u32 %v7527, 2147483648
      %v7600 = vxor.u32 %v7528, 2147483648
      %v7601 = vxor.u32 %v7529, 2147483648
      %v7602 = vxor.u32 %v7530, 2147483648
      %v7603 = vxor.u32 %v7531, 2147483648
      %v7604 = vxor.u32 %v7532, 2147483648
      %v7605 = vxor.u32 %v7533, 2147483648
      %v7606 = vxor.u32 %v7534, 2147483648
      %v7607 = vxor.u32 %v7535, 2147483648
      %v7608 = vxor.u32 %v7536, 2147483648
      %v7609 = vxor.u32 %v7537, 2147483648
      %v7610 = vxor.u32 %v7538, 2147483648
      %v7611 = vxor.u32 %v7539, 2147483648
      %v7612 = vxor.u32 %v7540, 2147483648
      %v7613 = vxor.u32 %v7541, 2147483648
      %v7614 = vxor.u32 %v7542, 2147483648
      %v7615 = vxor.u32 %v7543, 2147483648
      %v7616 = vxor.u32 %v7544, 2147483648
      %v7617 = vxor.u32 %v7545, 2147483648
      %v7618 = vxor.u32 %v7546, 2147483648
      %v7619 = vxor.u32 %v7547, 2147483648
      %v7620 = vxor.u32 %v7548, 2147483648
      %v7621 = vxor.u32 %v7549, 2147483648
      %v7622 = vxor.u32 %v7550, 2147483648
      %v7623 = vxor.u32 %v7551, 2147483648
      %v7624 = vxor.u32 %v7552, 2147483648
      %v7625 = vxor.u32 %v7553, 2147483648
      %v7626 = vxor.u32 %v7554, 2147483648
      %v7627 = vxor.u32 %v7555, 2147483648
      %v7628 = vxor.u32 %v7556, 2147483648
      %v7629 = vxor.u32 %v7557, 2147483648
      %v7630 = vxor.u32 %v7558, 2147483648
      %v7631 = vxor.u32 %v7559, 2147483648
      %v7632 = vxor.u32 %v7560, 2147483648
      %v7633 = vxor.u32 %v7561, 2147483648
      %v7634 = vxor.u32 %v7562, 2147483648
      %v7635 = vxor.u32 %v7563, 2147483648
      %v7636 = vxor.u32 %v7564, 2147483648
      %v7637 = vxor.u32 %v7565, 2147483648
      %v7638 = vxor.u32 %v7566, 2147483648
      %v7639 = vxor.u32 %v7567, 2147483648
      %v7640 = vxor.u32 %v7568, 2147483648
      %v7641 = vxor.u32 %v7569, 2147483648
      %v7642 = vxor.u32 %v7570, 2147483648
      %v7643 = vxor.u32 %v7571, 2147483648
      %v7644 = vxor.u32 %v7572, 2147483648
      %v7645 = vxor.u32 %v7573, 2147483648
      %v7646 = vxor.u32 %v7574, 2147483648
      %v7647 = vxor.u32 %v7575, 2147483648
      %v7648 = vxor.u32 %v7576, 2147483648
      %v7649 = vmul.f32 %v7577, 1.442695
      %v7650 = vpow.pop %v7649
      %v7651 = vmul.f32 %v7578, 1.442695
      %v7652 = vpow.pop %v7651
      %v7653 = vmul.f32 %v7579, 1.442695
      %v7654 = vpow.pop %v7653
      %v7655 = vmul.f32 %v7580, 1.442695
      %v7656 = vpow.pop %v7655
      %v7657 = vmul.f32 %v7581, 1.442695
      %v7658 = vpow.pop %v7657
      %v7659 = vmul.f32 %v7582, 1.442695
      %v7660 = vpow.pop %v7659
      %v7661 = vmul.f32 %v7583, 1.442695
      %v7662 = vpow.pop %v7661
      %v7663 = vmul.f32 %v7584, 1.442695
      %v7664 = vpow.pop %v7663
      %v7665 = vmul.f32 %v7585, 1.442695
      %v7666 = vpow.pop %v7665
      %v7667 = vmul.f32 %v7586, 1.442695
      %v7668 = vpow.pop %v7667
      %v7669 = vmul.f32 %v7587, 1.442695
      %v7670 = vpow.pop %v7669
      %v7671 = vmul.f32 %v7588, 1.442695
      %v7672 = vpow.pop %v7671
      %v7673 = vmul.f32 %v7589, 1.442695
      %v7674 = vpow.pop %v7673
      %v7675 = vmul.f32 %v7590, 1.442695
      %v7676 = vpow.pop %v7675
      %v7677 = vmul.f32 %v7591, 1.442695
      %v7678 = vpow.pop %v7677
      %v7679 = vmul.f32 %v7592, 1.442695
      %v7680 = vpow.pop %v7679
      %v7681 = vmul.f32 %v7593, 1.442695
      %v7682 = vpow.pop %v7681
      %v7683 = vmul.f32 %v7594, 1.442695
      %v7684 = vpow.pop %v7683
      %v7685 = vmul.f32 %v7595, 1.442695
      %v7686 = vpow.pop %v7685
      %v7687 = vmul.f32 %v7596, 1.442695
      %v7688 = vpow.pop %v7687
      %v7689 = vmul.f32 %v7597, 1.442695
      %v7690 = vpow.pop %v7689
      %v7691 = vmul.f32 %v7598, 1.442695
      %v7692 = vpow.pop %v7691
      %v7693 = vmul.f32 %v7599, 1.442695
      %v7694 = vpow.pop %v7693
      %v7695 = vmul.f32 %v7600, 1.442695
      %v7696 = vpow.pop %v7695
      %v7697 = vmul.f32 %v7601, 1.442695
      %v7698 = vpow.pop %v7697
      %v7699 = vmul.f32 %v7602, 1.442695
      %v7700 = vpow.pop %v7699
      %v7701 = vmul.f32 %v7603, 1.442695
      %v7702 = vpow.pop %v7701
      %v7703 = vmul.f32 %v7604, 1.442695
      %v7704 = vpow.pop %v7703
      %v7705 = vmul.f32 %v7605, 1.442695
      %v7706 = vpow.pop %v7705
      %v7707 = vmul.f32 %v7606, 1.442695
      %v7708 = vpow.pop %v7707
      %v7709 = vmul.f32 %v7607, 1.442695
      %v7710 = vpow.pop %v7709
      %v7711 = vmul.f32 %v7608, 1.442695
      %v7712 = vpow.pop %v7711
      %v7713 = vmul.f32 %v7609, 1.442695
      %v7714 = vpow.pop %v7713
      %v7715 = vmul.f32 %v7610, 1.442695
      %v7716 = vpow.pop %v7715
      %v7717 = vmul.f32 %v7611, 1.442695
      %v7718 = vpow.pop %v7717
      %v7719 = vmul.f32 %v7612, 1.442695
      %v7720 = vpow.pop %v7719
      %v7721 = vmul.f32 %v7613, 1.442695
      %v7722 = vpow.pop %v7721
      %v7723 = vmul.f32 %v7614, 1.442695
      %v7724 = vpow.pop %v7723
      %v7725 = vmul.f32 %v7615, 1.442695
      %v7726 = vpow.pop %v7725
      %v7727 = vmul.f32 %v7616, 1.442695
      %v7728 = vpow.pop %v7727
      %v7729 = vmul.f32 %v7617, 1.442695
      %v7730 = vpow.pop %v7729
      %v7731 = vmul.f32 %v7618, 1.442695
      %v7732 = vpow.pop %v7731
      %v7733 = vmul.f32 %v7619, 1.442695
      %v7734 = vpow.pop %v7733
      %v7735 = vmul.f32 %v7620, 1.442695
      %v7736 = vpow.pop %v7735
      %v7737 = vmul.f32 %v7621, 1.442695
      %v7738 = vpow.pop %v7737
      %v7739 = vmul.f32 %v7622, 1.442695
      %v7740 = vpow.pop %v7739
      %v7741 = vmul.f32 %v7623, 1.442695
      %v7742 = vpow.pop %v7741
      %v7743 = vmul.f32 %v7624, 1.442695
      %v7744 = vpow.pop %v7743
      %v7745 = vmul.f32 %v7625, 1.442695
      %v7746 = vpow.pop %v7745
      %v7747 = vmul.f32 %v7626, 1.442695
      %v7748 = vpow.pop %v7747
      %v7749 = vmul.f32 %v7627, 1.442695
      %v7750 = vpow.pop %v7749
      %v7751 = vmul.f32 %v7628, 1.442695
      %v7752 = vpow.pop %v7751
      %v7753 = vmul.f32 %v7629, 1.442695
      %v7754 = vpow.pop %v7753
      %v7755 = vmul.f32 %v7630, 1.442695
      %v7756 = vpow.pop %v7755
      %v7757 = vmul.f32 %v7631, 1.442695
      %v7758 = vpow.pop %v7757
      %v7759 = vmul.f32 %v7632, 1.442695
      %v7760 = vpow.pop %v7759
      %v7761 = vmul.f32 %v7633, 1.442695
      %v7762 = vpow.pop %v7761
      %v7763 = vmul.f32 %v7634, 1.442695
      %v7764 = vpow.pop %v7763
      %v7765 = vmul.f32 %v7635, 1.442695
      %v7766 = vpow.pop %v7765
      %v7767 = vmul.f32 %v7636, 1.442695
      %v7768 = vpow.pop %v7767
      %v7769 = vmul.f32 %v7637, 1.442695
      %v7770 = vpow.pop %v7769
      %v7771 = vmul.f32 %v7638, 1.442695
      %v7772 = vpow.pop %v7771
      %v7773 = vmul.f32 %v7639, 1.442695
      %v7774 = vpow.pop %v7773
      %v7775 = vmul.f32 %v7640, 1.442695
      %v7776 = vpow.pop %v7775
      %v7777 = vmul.f32 %v7641, 1.442695
      %v7778 = vpow.pop %v7777
      %v7779 = vmul.f32 %v7642, 1.442695
      %v7780 = vpow.pop %v7779
      %v7781 = vmul.f32 %v7643, 1.442695
      %v7782 = vpow.pop %v7781
      %v7783 = vmul.f32 %v7644, 1.442695
      %v7784 = vpow.pop %v7783
      %v7785 = vmul.f32 %v7645, 1.442695
      %v7786 = vpow.pop %v7785
      %v7787 = vmul.f32 %v7646, 1.442695
      %v7788 = vpow.pop %v7787
      %v7789 = vmul.f32 %v7647, 1.442695
      %v7790 = vpow.pop %v7789
      %v7791 = vmul.f32 %v7648, 1.442695
      %v7792 = vpow.pop %v7791
      %v7793 = vadd.f32 %v7650, 1.0
      %v7794 = vadd.f32 %v7652, 1.0
      %v7795 = vadd.f32 %v7654, 1.0
      %v7796 = vadd.f32 %v7656, 1.0
      %v7797 = vadd.f32 %v7658, 1.0
      %v7798 = vadd.f32 %v7660, 1.0
      %v7799 = vadd.f32 %v7662, 1.0
      %v7800 = vadd.f32 %v7664, 1.0
      %v7801 = vadd.f32 %v7666, 1.0
      %v7802 = vadd.f32 %v7668, 1.0
      %v7803 = vadd.f32 %v7670, 1.0
      %v7804 = vadd.f32 %v7672, 1.0
      %v7805 = vadd.f32 %v7674, 1.0
      %v7806 = vadd.f32 %v7676, 1.0
      %v7807 = vadd.f32 %v7678, 1.0
      %v7808 = vadd.f32 %v7680, 1.0
      %v7809 = vadd.f32 %v7682, 1.0
      %v7810 = vadd.f32 %v7684, 1.0
      %v7811 = vadd.f32 %v7686, 1.0
      %v7812 = vadd.f32 %v7688, 1.0
      %v7813 = vadd.f32 %v7690, 1.0
      %v7814 = vadd.f32 %v7692, 1.0
      %v7815 = vadd.f32 %v7694, 1.0
      %v7816 = vadd.f32 %v7696, 1.0
      %v7817 = vadd.f32 %v7698, 1.0
      %v7818 = vadd.f32 %v7700, 1.0
      %v7819 = vadd.f32 %v7702, 1.0
      %v7820 = vadd.f32 %v7704, 1.0
      %v7821 = vadd.f32 %v7706, 1.0
      %v7822 = vadd.f32 %v7708, 1.0
      %v7823 = vadd.f32 %v7710, 1.0
      %v7824 = vadd.f32 %v7712, 1.0
      %v7825 = vadd.f32 %v7714, 1.0
      %v7826 = vadd.f32 %v7716, 1.0
      %v7827 = vadd.f32 %v7718, 1.0
      %v7828 = vadd.f32 %v7720, 1.0
      %v7829 = vadd.f32 %v7722, 1.0
      %v7830 = vadd.f32 %v7724, 1.0
      %v7831 = vadd.f32 %v7726, 1.0
      %v7832 = vadd.f32 %v7728, 1.0
      %v7833 = vadd.f32 %v7730, 1.0
      %v7834 = vadd.f32 %v7732, 1.0
      %v7835 = vadd.f32 %v7734, 1.0
      %v7836 = vadd.f32 %v7736, 1.0
      %v7837 = vadd.f32 %v7738, 1.0
      %v7838 = vadd.f32 %v7740, 1.0
      %v7839 = vadd.f32 %v7742, 1.0
      %v7840 = vadd.f32 %v7744, 1.0
      %v7841 = vadd.f32 %v7746, 1.0
      %v7842 = vadd.f32 %v7748, 1.0
      %v7843 = vadd.f32 %v7750, 1.0
      %v7844 = vadd.f32 %v7752, 1.0
      %v7845 = vadd.f32 %v7754, 1.0
      %v7846 = vadd.f32 %v7756, 1.0
      %v7847 = vadd.f32 %v7758, 1.0
      %v7848 = vadd.f32 %v7760, 1.0
      %v7849 = vadd.f32 %v7762, 1.0
      %v7850 = vadd.f32 %v7764, 1.0
      %v7851 = vadd.f32 %v7766, 1.0
      %v7852 = vadd.f32 %v7768, 1.0
      %v7853 = vadd.f32 %v7770, 1.0
      %v7854 = vadd.f32 %v7772, 1.0
      %v7855 = vadd.f32 %v7774, 1.0
      %v7856 = vadd.f32 %v7776, 1.0
      %v7857 = vadd.f32 %v7778, 1.0
      %v7858 = vadd.f32 %v7780, 1.0
      %v7859 = vadd.f32 %v7782, 1.0
      %v7860 = vadd.f32 %v7784, 1.0
      %v7861 = vadd.f32 %v7786, 1.0
      %v7862 = vadd.f32 %v7788, 1.0
      %v7863 = vadd.f32 %v7790, 1.0
      %v7864 = vadd.f32 %v7792, 1.0
      %v7865 = vrcp.pop %v7793
      %v7866 = vmul.f32 1.0, %v7865
      %v7867 = vrcp.pop %v7794
      %v7868 = vmul.f32 1.0, %v7867
      %v7869 = vrcp.pop %v7795
      %v7870 = vmul.f32 1.0, %v7869
      %v7871 = vrcp.pop %v7796
      %v7872 = vmul.f32 1.0, %v7871
      %v7873 = vrcp.pop %v7797
      %v7874 = vmul.f32 1.0, %v7873
      %v7875 = vrcp.pop %v7798
      %v7876 = vmul.f32 1.0, %v7875
      %v7877 = vrcp.pop %v7799
      %v7878 = vmul.f32 1.0, %v7877
      %v7879 = vrcp.pop %v7800
      %v7880 = vmul.f32 1.0, %v7879
      %v7881 = vrcp.pop %v7801
      %v7882 = vmul.f32 1.0, %v7881
      %v7883 = vrcp.pop %v7802
      %v7884 = vmul.f32 1.0, %v7883
      %v7885 = vrcp.pop %v7803
      %v7886 = vmul.f32 1.0, %v7885
      %v7887 = vrcp.pop %v7804
      %v7888 = vmul.f32 1.0, %v7887
      %v7889 = vrcp.pop %v7805
      %v7890 = vmul.f32 1.0, %v7889
      %v7891 = vrcp.pop %v7806
      %v7892 = vmul.f32 1.0, %v7891
      %v7893 = vrcp.pop %v7807
      %v7894 = vmul.f32 1.0, %v7893
      %v7895 = vrcp.pop %v7808
      %v7896 = vmul.f32 1.0, %v7895
      %v7897 = vrcp.pop %v7809
      %v7898 = vmul.f32 1.0, %v7897
      %v7899 = vrcp.pop %v7810
      %v7900 = vmul.f32 1.0, %v7899
      %v7901 = vrcp.pop %v7811
      %v7902 = vmul.f32 1.0, %v7901
      %v7903 = vrcp.pop %v7812
      %v7904 = vmul.f32 1.0, %v7903
      %v7905 = vrcp.pop %v7813
      %v7906 = vmul.f32 1.0, %v7905
      %v7907 = vrcp.pop %v7814
      %v7908 = vmul.f32 1.0, %v7907
      %v7909 = vrcp.pop %v7815
      %v7910 = vmul.f32 1.0, %v7909
      %v7911 = vrcp.pop %v7816
      %v7912 = vmul.f32 1.0, %v7911
      %v7913 = vrcp.pop %v7817
      %v7914 = vmul.f32 1.0, %v7913
      %v7915 = vrcp.pop %v7818
      %v7916 = vmul.f32 1.0, %v7915
      %v7917 = vrcp.pop %v7819
      %v7918 = vmul.f32 1.0, %v7917
      %v7919 = vrcp.pop %v7820
      %v7920 = vmul.f32 1.0, %v7919
      %v7921 = vrcp.pop %v7821
      %v7922 = vmul.f32 1.0, %v7921
      %v7923 = vrcp.pop %v7822
      %v7924 = vmul.f32 1.0, %v7923
      %v7925 = vrcp.pop %v7823
      %v7926 = vmul.f32 1.0, %v7925
      %v7927 = vrcp.pop %v7824
      %v7928 = vmul.f32 1.0, %v7927
      %v7929 = vrcp.pop %v7825
      %v7930 = vmul.f32 1.0, %v7929
      %v7931 = vrcp.pop %v7826
      %v7932 = vmul.f32 1.0, %v7931
      %v7933 = vrcp.pop %v7827
      %v7934 = vmul.f32 1.0, %v7933
      %v7935 = vrcp.pop %v7828
      %v7936 = vmul.f32 1.0, %v7935
      %v7937 = vrcp.pop %v7829
      %v7938 = vmul.f32 1.0, %v7937
      %v7939 = vrcp.pop %v7830
      %v7940 = vmul.f32 1.0, %v7939
      %v7941 = vrcp.pop %v7831
      %v7942 = vmul.f32 1.0, %v7941
      %v7943 = vrcp.pop %v7832
      %v7944 = vmul.f32 1.0, %v7943
      %v7945 = vrcp.pop %v7833
      %v7946 = vmul.f32 1.0, %v7945
      %v7947 = vrcp.pop %v7834
      %v7948 = vmul.f32 1.0, %v7947
      %v7949 = vrcp.pop %v7835
      %v7950 = vmul.f32 1.0, %v7949
      %v7951 = vrcp.pop %v7836
      %v7952 = vmul.f32 1.0, %v7951
      %v7953 = vrcp.pop %v7837
      %v7954 = vmul.f32 1.0, %v7953
      %v7955 = vrcp.pop %v7838
      %v7956 = vmul.f32 1.0, %v7955
      %v7957 = vrcp.pop %v7839
      %v7958 = vmul.f32 1.0, %v7957
      %v7959 = vrcp.pop %v7840
      %v7960 = vmul.f32 1.0, %v7959
      %v7961 = vrcp.pop %v7841
      %v7962 = vmul.f32 1.0, %v7961
      %v7963 = vrcp.pop %v7842
      %v7964 = vmul.f32 1.0, %v7963
      %v7965 = vrcp.pop %v7843
      %v7966 = vmul.f32 1.0, %v7965
      %v7967 = vrcp.pop %v7844
      %v7968 = vmul.f32 1.0, %v7967
      %v7969 = vrcp.pop %v7845
      %v7970 = vmul.f32 1.0, %v7969
      %v7971 = vrcp.pop %v7846
      %v7972 = vmul.f32 1.0, %v7971
      %v7973 = vrcp.pop %v7847
      %v7974 = vmul.f32 1.0, %v7973
      %v7975 = vrcp.pop %v7848
      %v7976 = vmul.f32 1.0, %v7975
      %v7977 = vrcp.pop %v7849
      %v7978 = vmul.f32 1.0, %v7977
      %v7979 = vrcp.pop %v7850
      %v7980 = vmul.f32 1.0, %v7979
      %v7981 = vrcp.pop %v7851
      %v7982 = vmul.f32 1.0, %v7981
      %v7983 = vrcp.pop %v7852
      %v7984 = vmul.f32 1.0, %v7983
      %v7985 = vrcp.pop %v7853
      %v7986 = vmul.f32 1.0, %v7985
      %v7987 = vrcp.pop %v7854
      %v7988 = vmul.f32 1.0, %v7987
      %v7989 = vrcp.pop %v7855
      %v7990 = vmul.f32 1.0, %v7989
      %v7991 = vrcp.pop %v7856
      %v7992 = vmul.f32 1.0, %v7991
      %v7993 = vrcp.pop %v7857
      %v7994 = vmul.f32 1.0, %v7993
      %v7995 = vrcp.pop %v7858
      %v7996 = vmul.f32 1.0, %v7995
      %v7997 = vrcp.pop %v7859
      %v7998 = vmul.f32 1.0, %v7997
      %v7999 = vrcp.pop %v7860
      %v8000 = vmul.f32 1.0, %v7999
      %v8001 = vrcp.pop %v7861
      %v8002 = vmul.f32 1.0, %v8001
      %v8003 = vrcp.pop %v7862
      %v8004 = vmul.f32 1.0, %v8003
      %v8005 = vrcp.pop %v7863
      %v8006 = vmul.f32 1.0, %v8005
      %v8007 = vrcp.pop %v7864
      %v8008 = vmul.f32 1.0, %v8007
      %v8009 = vmul.f32 %v7505, %v7866
      %v8010 = vmul.f32 %v7506, %v7868
      %v8011 = vmul.f32 %v7507, %v7870
      %v8012 = vmul.f32 %v7508, %v7872
      %v8013 = vmul.f32 %v7509, %v7874
      %v8014 = vmul.f32 %v7510, %v7876
      %v8015 = vmul.f32 %v7511, %v7878
      %v8016 = vmul.f32 %v7512, %v7880
      %v8017 = vmul.f32 %v7513, %v7882
      %v8018 = vmul.f32 %v7514, %v7884
      %v8019 = vmul.f32 %v7515, %v7886
      %v8020 = vmul.f32 %v7516, %v7888
      %v8021 = vmul.f32 %v7517, %v7890
      %v8022 = vmul.f32 %v7518, %v7892
      %v8023 = vmul.f32 %v7519, %v7894
      %v8024 = vmul.f32 %v7520, %v7896
      %v8025 = vmul.f32 %v7521, %v7898
      %v8026 = vmul.f32 %v7522, %v7900
      %v8027 = vmul.f32 %v7523, %v7902
      %v8028 = vmul.f32 %v7524, %v7904
      %v8029 = vmul.f32 %v7525, %v7906
      %v8030 = vmul.f32 %v7526, %v7908
      %v8031 = vmul.f32 %v7527, %v7910
      %v8032 = vmul.f32 %v7528, %v7912
      %v8033 = vmul.f32 %v7529, %v7914
      %v8034 = vmul.f32 %v7530, %v7916
      %v8035 = vmul.f32 %v7531, %v7918
      %v8036 = vmul.f32 %v7532, %v7920
      %v8037 = vmul.f32 %v7533, %v7922
      %v8038 = vmul.f32 %v7534, %v7924
      %v8039 = vmul.f32 %v7535, %v7926
      %v8040 = vmul.f32 %v7536, %v7928
      %v8041 = vmul.f32 %v7537, %v7930
      %v8042 = vmul.f32 %v7538, %v7932
      %v8043 = vmul.f32 %v7539, %v7934
      %v8044 = vmul.f32 %v7540, %v7936
      %v8045 = vmul.f32 %v7541, %v7938
      %v8046 = vmul.f32 %v7542, %v7940
      %v8047 = vmul.f32 %v7543, %v7942
      %v8048 = vmul.f32 %v7544, %v7944
      %v8049 = vmul.f32 %v7545, %v7946
      %v8050 = vmul.f32 %v7546, %v7948
      %v8051 = vmul.f32 %v7547, %v7950
      %v8052 = vmul.f32 %v7548, %v7952
      %v8053 = vmul.f32 %v7549, %v7954
      %v8054 = vmul.f32 %v7550, %v7956
      %v8055 = vmul.f32 %v7551, %v7958
      %v8056 = vmul.f32 %v7552, %v7960
      %v8057 = vmul.f32 %v7553, %v7962
      %v8058 = vmul.f32 %v7554, %v7964
      %v8059 = vmul.f32 %v7555, %v7966
      %v8060 = vmul.f32 %v7556, %v7968
      %v8061 = vmul.f32 %v7557, %v7970
      %v8062 = vmul.f32 %v7558, %v7972
      %v8063 = vmul.f32 %v7559, %v7974
      %v8064 = vmul.f32 %v7560, %v7976
      %v8065 = vmul.f32 %v7561, %v7978
      %v8066 = vmul.f32 %v7562, %v7980
      %v8067 = vmul.f32 %v7563, %v7982
      %v8068 = vmul.f32 %v7564, %v7984
      %v8069 = vmul.f32 %v7565, %v7986
      %v8070 = vmul.f32 %v7566, %v7988
      %v8071 = vmul.f32 %v7567, %v7990
      %v8072 = vmul.f32 %v7568, %v7992
      %v8073 = vmul.f32 %v7569, %v7994
      %v8074 = vmul.f32 %v7570, %v7996
      %v8075 = vmul.f32 %v7571, %v7998
      %v8076 = vmul.f32 %v7572, %v8000
      %v8077 = vmul.f32 %v7573, %v8002
      %v8078 = vmul.f32 %v7574, %v8004
      %v8079 = vmul.f32 %v7575, %v8006
      %v8080 = vmul.f32 %v7576, %v8008
      %8081 = vst.msk [vmem:[%s345] sm:$0xff] %vm5263, %v8009
      %8082 = vst.msk [vmem:[%s345 + $0x8] sm:$0xff] %vm5263, %v8010
      %8083 = vst.msk [vmem:[%s345 + $0x10] sm:$0xff] %vm5263, %v8011
      %8084 = vst.msk [vmem:[%s345 + $0x18] sm:$0xff] %vm5263, %v8012
      %8085 = vst.msk [vmem:[%s345 + $0x20] sm:$0xff] %vm5263, %v8013
      %8086 = vst.msk [vmem:[%s345 + $0x28] sm:$0xff] %vm5263, %v8014
      %8087 = vst.msk [vmem:[%s345 + $0x30] sm:$0xff] %vm5263, %v8015
      %8088 = vst.msk [vmem:[%s345 + $0x38] sm:$0xff] %vm5263, %v8016
      %8089 = vst.msk [vmem:[%s345 + $0x40] sm:$0xff] %vm5263, %v8017
      %8090 = vst.msk [vmem:[%s345 + $0x48] sm:$0xff] %vm5263, %v8018
      %8091 = vst.msk [vmem:[%s345 + $0x50] sm:$0xff] %vm5263, %v8019
      %8092 = vst.msk [vmem:[%s345 + $0x58] sm:$0xff] %vm5263, %v8020
      %8093 = vst.msk [vmem:[%s345 + $0x60] sm:$0xff] %vm5263, %v8021
      %8094 = vst.msk [vmem:[%s345 + $0x68] sm:$0xff] %vm5263, %v8022
      %8095 = vst.msk [vmem:[%s345 + $0x70] sm:$0xff] %vm5263, %v8023
      %8096 = vst.msk [vmem:[%s345 + $0x78] sm:$0xff] %vm5263, %v8024
      %8097 = vst.msk [vmem:[%s345 + $0x80] sm:$0xff] %vm5263, %v8025
      %8098 = vst.msk [vmem:[%s345 + $0x88] sm:$0xff] %vm5263, %v8026
      %8099 = vst.msk [vmem:[%s345 + $0x90] sm:$0xff] %vm5263, %v8027
      %8100 = vst.msk [vmem:[%s345 + $0x98] sm:$0xff] %vm5263, %v8028
      %8101 = vst.msk [vmem:[%s345 + $0xa0] sm:$0xff] %vm5263, %v8029
      %8102 = vst.msk [vmem:[%s345 + $0xa8] sm:$0xff] %vm5263, %v8030
      %8103 = vst.msk [vmem:[%s345 + $0xb0] sm:$0xff] %vm5263, %v8031
      %8104 = vst.msk [vmem:[%s345 + $0xb8] sm:$0xff] %vm5263, %v8032
      %8105 = vst.msk [vmem:[%s345 + $0xc0] sm:$0xff] %vm5263, %v8033
      %8106 = vst.msk [vmem:[%s345 + $0xc8] sm:$0xff] %vm5263, %v8034
      %8107 = vst.msk [vmem:[%s345 + $0xd0] sm:$0xff] %vm5263, %v8035
      %8108 = vst.msk [vmem:[%s345 + $0xd8] sm:$0xff] %vm5263, %v8036
      %8109 = vst.msk [vmem:[%s345 + $0xe0] sm:$0xff] %vm5263, %v8037
      %8110 = vst.msk [vmem:[%s345 + $0xe8] sm:$0xff] %vm5263, %v8038
      %8111 = vst.msk [vmem:[%s345 + $0xf0] sm:$0xff] %vm5263, %v8039
      %8112 = vst.msk [vmem:[%s345 + $0xf8] sm:$0xff] %vm5263, %v8040
      %8113 = vst.msk [vmem:[%s345 + $0x100] sm:$0xff] %vm5263, %v8041
      %8114 = vst.msk [vmem:[%s345 + $0x108] sm:$0xff] %vm5263, %v8042
      %8115 = vst.msk [vmem:[%s345 + $0x110] sm:$0xff] %vm5263, %v8043
      %8116 = vst.msk [vmem:[%s345 + $0x118] sm:$0xff] %vm5263, %v8044
      %8117 = vst.msk [vmem:[%s345 + $0x120] sm:$0xff] %vm5263, %v8045
      %8118 = vst.msk [vmem:[%s345 + $0x128] sm:$0xff] %vm5263, %v8046
      %8119 = vst.msk [vmem:[%s345 + $0x130] sm:$0xff] %vm5263, %v8047
      %8120 = vst.msk [vmem:[%s345 + $0x138] sm:$0xff] %vm5263, %v8048
      %8121 = vst.msk [vmem:[%s345 + $0x140] sm:$0xff] %vm5263, %v8049
      %8122 = vst.msk [vmem:[%s345 + $0x148] sm:$0xff] %vm5263, %v8050
      %8123 = vst.msk [vmem:[%s345 + $0x150] sm:$0xff] %vm5263, %v8051
      %8124 = vst.msk [vmem:[%s345 + $0x158] sm:$0xff] %vm5263, %v8052
      %8125 = vst.msk [vmem:[%s345 + $0x160] sm:$0xff] %vm5263, %v8053
      %8126 = vst.msk [vmem:[%s345 + $0x168] sm:$0xff] %vm5263, %v8054
      %8127 = vst.msk [vmem:[%s345 + $0x170] sm:$0xff] %vm5263, %v8055
      %8128 = vst.msk [vmem:[%s345 + $0x178] sm:$0xff] %vm5263, %v8056
      %8129 = vst.msk [vmem:[%s345 + $0x180] sm:$0xff] %vm5263, %v8057
      %8130 = vst.msk [vmem:[%s345 + $0x188] sm:$0xff] %vm5263, %v8058
      %8131 = vst.msk [vmem:[%s345 + $0x190] sm:$0xff] %vm5263, %v8059
      %8132 = vst.msk [vmem:[%s345 + $0x198] sm:$0xff] %vm5263, %v8060
      %8133 = vst.msk [vmem:[%s345 + $0x1a0] sm:$0xff] %vm5263, %v8061
      %8134 = vst.msk [vmem:[%s345 + $0x1a8] sm:$0xff] %vm5263, %v8062
      %8135 = vst.msk [vmem:[%s345 + $0x1b0] sm:$0xff] %vm5263, %v8063
      %8136 = vst.msk [vmem:[%s345 + $0x1b8] sm:$0xff] %vm5263, %v8064
      %8137 = vst.msk [vmem:[%s345 + $0x1c0] sm:$0xff] %vm5263, %v8065
      %8138 = vst.msk [vmem:[%s345 + $0x1c8] sm:$0xff] %vm5263, %v8066
      %8139 = vst.msk [vmem:[%s345 + $0x1d0] sm:$0xff] %vm5263, %v8067
      %8140 = vst.msk [vmem:[%s345 + $0x1d8] sm:$0xff] %vm5263, %v8068
      %8141 = vst.msk [vmem:[%s345 + $0x1e0] sm:$0xff] %vm5263, %v8069
      %8142 = vst.msk [vmem:[%s345 + $0x1e8] sm:$0xff] %vm5263, %v8070
      %8143 = vst.msk [vmem:[%s345 + $0x1f0] sm:$0xff] %vm5263, %v8071
      %8144 = vst.msk [vmem:[%s345 + $0x1f8] sm:$0xff] %vm5263, %v8072
      %8145 = vst.msk [vmem:[%s345 + $0x200] sm:$0xff] %vm5263, %v8073
      %8146 = vst.msk [vmem:[%s345 + $0x208] sm:$0xff] %vm5263, %v8074
      %8147 = vst.msk [vmem:[%s345 + $0x210] sm:$0xff] %vm5263, %v8075
      %8148 = vst.msk [vmem:[%s345 + $0x218] sm:$0xff] %vm5263, %v8076
      %8149 = vst.msk [vmem:[%s345 + $0x220] sm:$0xff] %vm5263, %v8077
      %8150 = vst.msk [vmem:[%s345 + $0x228] sm:$0xff] %vm5263, %v8078
      %8151 = vst.msk [vmem:[%s345 + $0x230] sm:$0xff] %vm5263, %v8079
      %8152 = vst.msk [vmem:[%s345 + $0x238] sm:$0xff] %vm5263, %v8080
      %p8153 = scmp.lt.s32.totalorder %s21, 1
      %s8154 = scalar_select %p8153, %s21, 1
      %s8155 = smul.addr %s8154, 72
      %s8156 = smul.addr %s8155, 8
      %s8157 = scalar_lea.vmem %s8, %s8156
      %p8158 = scmp.lt.s32.totalorder %s21, 1
      %s8159 = scalar_select %p8158, %s21, 1
      %s8160 = smul.addr %s8159, 72
      %s8161 = smul.addr %s8160, 8
      %s8162 = scalar_lea.vmem %s9, %s8161
      // Predicated region
      $region53: #{tpu_custom_call.1} parent=51 // pred_check
        %p8163 = pneg %p212
      $region54: #{tpu_custom_call.1} parent=51 // pred_check_branch
        %8165 = sbr.rel (%p8163) target = $region56
      $region55: #{tpu_custom_call.1} parent=51 // pred_region
        _
      $region56: #{tpu_custom_call.1} parent=51 // pred_fallthru
        _
      // Predicated region
      $region57: #{tpu_custom_call.1} parent=51 // pred_check
        %p8166 = pneg %p238
      $region58: #{tpu_custom_call.1} parent=51 // pred_check_branch
        %8168 = sbr.rel (%p8166) target = $region60
      $region59: #{tpu_custom_call.1} parent=51 // pred_region
        _
      $region60: #{tpu_custom_call.1} parent=51 // pred_fallthru
        _
    $region52: #{tpu_custom_call.1} parent=5 // pred_fallthru
      _
    %p8169 = scmp.le.s32.totalorder 2, %s16
    // Predicated region
    $region61: #{tpu_custom_call.1} parent=5 // pred_check
      %p8170 = pneg %p8169
    $region62: #{tpu_custom_call.1} parent=5 // pred_check_branch
      %8172 = sbr.rel (%p8170) target = $region64
    $region63: #{tpu_custom_call.1} parent=5 // pred_region
      %s8173 = ssub.s32 %s16, 2
      // Predicated region
      $region65: #{tpu_custom_call.1} parent=63 // pred_check
        %p8174 = pneg %p218
      $region66: #{tpu_custom_call.1} parent=63 // pred_check_branch
        %8176 = sbr.rel (%p8174) target = $region68
      $region67: #{tpu_custom_call.1} parent=63 // pred_region
        %p8177 = scmp.lt.s32.totalorder %s22, 1
        %s8178 = scalar_select %p8177, %s22, 1
        %s8179 = smul.addr %s8178, 72
        %s8180 = smul.addr %s8179, 8
        %s8181 = scalar_lea.vmem %s8, %s8180
      $region68: #{tpu_custom_call.1} parent=63 // pred_fallthru
        _
      // Predicated region
      $region69: #{tpu_custom_call.1} parent=63 // pred_check
        %p8182 = pneg %p244
      $region70: #{tpu_custom_call.1} parent=63 // pred_check_branch
        %8184 = sbr.rel (%p8182) target = $region72
      $region71: #{tpu_custom_call.1} parent=63 // pred_region
        %p8185 = scmp.lt.s32.totalorder %s22, 1
        %s8186 = scalar_select %p8185, %s22, 1
        %s8187 = smul.addr %s8186, 72
        %s8188 = smul.addr %s8187, 8
        %s8189 = scalar_lea.vmem %s9, %s8188
      $region72: #{tpu_custom_call.1} parent=63 // pred_fallthru
        _
    $region64: #{tpu_custom_call.1} parent=5 // pred_fallthru
      _
  $region6: #{tpu_custom_call.1} parent=0 // loop_footer
    %s20 = sadd.s32 1, %s16
  $region7: #{tpu_custom_call.1} parent=0 // loop_footer_branch
    %15 = sbr.rel target = $region3
  $region8: #{tpu_custom_call.1} parent=0 // loop_exit
    _

</llo_original>
